<compile_context>
chip_gen: v7x
topology: tpu7x:2x2x1
jax: 0.10.0
libtpu: 0.0.40
codegen_flags: <defaults>
</compile_context>

<pallas_src>
import math

import jax
import jax.numpy as jnp
from jax.experimental import pallas as pl
from jax.experimental.pallas import tpu as pltpu


def _concate_attention_kernel(x_ref, ub_ref, w_up_ref, w_repr_ref, bias_ref,
                              wv_ref, out_ref, m_sc, l_sc, acc_sc, biasb_sc):
    """One (batch-block, seq-block) grid step.

    x_ref     : (tB, tS, D)   input_repr tile (native dtype)
    ub_ref    : (tB, U+Pd)    concat(usr, prd) for this batch block
    w_up_ref  : (U+Pd, P)     stacked [W_usr; W_prd]
    w_repr_ref: (D, P)
    bias_ref  : (1, P)
    wv_ref    : (1, 1, P)     weight_vector weight (its scalar bias is dropped:
                              softmax is shift-invariant)
    out_ref   : (tB, D)
    scratch   : m_sc (tB,1)  l_sc (tB,1)  acc_sc (tB,D)  biasb_sc (tB,P)  (f32)
    """
    s_idx = pl.program_id(1)

    @pl.when(s_idx == 0)
    def _init():
        # Per-batch-block bias term: fused usr/prd projections + bias (one matmul).
        biasb_sc[...] = (
            jnp.dot(ub_ref[...], w_up_ref[...],
                    preferred_element_type=jnp.float32) + bias_ref[...])
        m_sc[...] = jnp.full_like(m_sc, -jnp.inf)
        l_sc[...] = jnp.zeros_like(l_sc)
        acc_sc[...] = jnp.zeros_like(acc_sc)

    x = x_ref[...]                                   # (tB, tS, D), native dtype
    tB, tS, D = x.shape
    P = w_repr_ref.shape[1]

    # Projection of the sequence tile on the MXU, f32 accumulation.
    h = jnp.dot(x.reshape(tB * tS, D), w_repr_ref[...],
                preferred_element_type=jnp.float32).reshape(tB, tS, P)
    z = h + biasb_sc[...][:, None, :]                # (tB, tS, P)
    t = jnp.tanh(z)

    # attention_score = weight_vector(tanh(z)); scalar bias omitted (no-op under softmax).
    score = jnp.sum(t * wv_ref[...], axis=-1)        # (tB, tS)
    # TODO(synk): optional `mask` arg (masked_fill(mask==0, -1e9)) not wired in;
    #             the module's forward default is mask=None and S tiles are exact.

    # ---- online softmax over the sequence axis --------------------------------
    m_prev = m_sc[...]                                                   # (tB, 1)
    m_new = jnp.maximum(m_prev, jnp.max(score, axis=-1, keepdims=True))  # (tB, 1)
    alpha = jnp.exp(m_prev - m_new)                                      # (tB, 1)
    p = jnp.exp(score - m_new)                                           # (tB, tS)

    l_sc[...] = alpha * l_sc[...] + jnp.sum(p, axis=-1, keepdims=True)
    # Weighted sum of this tile on the MXU: (tB,1,tS) @ (tB,tS,D) -> (tB,1,D).
    wsum = jnp.einsum('bqs,bsd->bqd', p[:, None, :].astype(x.dtype), x,
                      preferred_element_type=jnp.float32)[:, 0, :]       # (tB, D)
    acc_sc[...] = alpha * acc_sc[...] + wsum
    m_sc[...] = m_new

    @pl.when(s_idx == pl.num_programs(1) - 1)
    def _finalize():
        out_ref[...] = (acc_sc[...] *
                        pl.reciprocal(l_sc[...], approx=False)).astype(out_ref.dtype)


def _pick_tile(n, prefer, align):
    """Largest tile <= prefer that divides n and is a multiple of `align`;
    falls back to the full axis (always a legal block_shape)."""
    if n <= prefer:
        return n
    t = prefer - (prefer % align)
    while t >= align:
        if n % t == 0:
            return t
        t -= align
    return n


def concate_attention(input_repr, usr, prd, params, *,
                      block_b=8, block_s=256,
                      vmem_limit_bytes=32 * 1024 * 1024):
    """Pallas wrapper. input_repr:(B,S,D), usr:(B,1,U), prd:(B,1,Pd) -> (B,D)."""
    B, S, D = input_repr.shape
    U = usr.shape[-1]
    Pd = prd.shape[-1]
    P = params["weight_repr"].shape[1]

    tB = _pick_tile(B, block_b, 8)
    tS = _pick_tile(S, block_s, 8)
    nb, ns = B // tB, S // tS

    # Fuse the two tiny usr/prd projections into one matmul: [usr,prd] @ [[W_usr],[W_prd]].
    ub = jnp.concatenate([usr[:, 0, :], prd[:, 0, :]],
                         axis=-1).astype(jnp.float32)                     # (B, U+Pd)
    w_up = jnp.concatenate([params["weight_usr"], params["weight_prd"]],
                           axis=0).astype(jnp.float32)                    # (U+Pd, P)
    w_repr = params["weight_repr"].astype(input_repr.dtype)               # (D, P)
    bias = params["bias"].reshape(1, P).astype(jnp.float32)
    wv = params["wv_weight"].reshape(1, 1, P).astype(jnp.float32)
    # wv_bias intentionally NOT passed: softmax(score + c) == softmax(score).

    grid_spec = pltpu.PrefetchScalarGridSpec(
        num_scalar_prefetch=0,
        grid=(nb, ns),
        in_specs=[
            pl.BlockSpec((tB, tS, D), lambda b, s: (b, s, 0)),   # input_repr tile
            pl.BlockSpec((tB, U + Pd), lambda b, s: (b, 0)),     # concat(usr, prd)
            pl.BlockSpec((U + Pd, P), lambda b, s: (0, 0)),      # stacked [W_usr; W_prd]
            pl.BlockSpec((D, P), lambda b, s: (0, 0)),           # W_repr
            pl.BlockSpec((1, P), lambda b, s: (0, 0)),           # bias
            pl.BlockSpec((1, 1, P), lambda b, s: (0, 0, 0)),     # wv weight
        ],
        out_specs=pl.BlockSpec((tB, D), lambda b, s: (b, 0)),
        scratch_shapes=[
            pltpu.VMEM((tB, 1), jnp.float32),   # running max   m
            pltpu.VMEM((tB, 1), jnp.float32),   # running denom l
            pltpu.VMEM((tB, D), jnp.float32),   # running weighted sum
            pltpu.VMEM((tB, P), jnp.float32),   # per-batch usr/prd/bias term
        ])

    return pl.pallas_call(
        _concate_attention_kernel,
        out_shape=jax.ShapeDtypeStruct((B, D), input_repr.dtype),
        grid_spec=grid_spec,
        compiler_params=pltpu.CompilerParams(
            dimension_semantics=("parallel", "arbitrary"),
            vmem_limit_bytes=vmem_limit_bytes),
    )(input_repr, ub, w_up, w_repr, bias, wv)


def reference(input_repr, usr, prd, params):
    """Pure-JAX replica of the PyTorch forward (mask=None), incl. wv_bias."""
    out_usr = usr @ params["weight_usr"]
    out_prd = prd @ params["weight_prd"]
    out_repr = input_repr @ params["weight_repr"]
    output = out_usr + out_repr + out_prd + params["bias"]
    score = (jnp.tanh(output) @ params["wv_weight"].T + params["wv_bias"])[..., 0]
    attn = jax.nn.softmax(score, axis=1)
    return jnp.sum(input_repr * attn[:, :, None], axis=1)


def init_params(key, input_dim, usr_dim, prd_dim, pre_pooling_dim):
    """Deterministic synthetic init (mirrors kaiming_uniform bounds)."""
    ks = jax.random.split(key, 6)
    P = pre_pooling_dim

    def kaiming(k, shape):
        fan_in = shape[1]                      # torch fan_in for 2-D param (dim 1)
        bound = 1.0 / math.sqrt(fan_in)
        return jax.random.uniform(k, shape, jnp.float32, -bound, bound)

    return {
        "weight_usr": kaiming(ks[0], (usr_dim, P)),
        "weight_prd": kaiming(ks[1], (prd_dim, P)),
        "weight_repr": kaiming(ks[2], (input_dim, P)),
        "bias": jax.random.uniform(ks[3], (P,), jnp.float32,
                                   -1.0 / math.sqrt(P), 1.0 / math.sqrt(P)),
        # nn.Linear(P, 1): weight (1, P), bias (1,)
        "wv_weight": jax.random.uniform(ks[4], (1, P), jnp.float32,
                                        -1.0 / math.sqrt(P), 1.0 / math.sqrt(P)),
        "wv_bias": jax.random.uniform(ks[5], (1,), jnp.float32,
                                      -1.0 / math.sqrt(P), 1.0 / math.sqrt(P)),
    }


if __name__ == "__main__":
    key = jax.random.PRNGKey(0)
    k_in, k_usr, k_prd, k_par = jax.random.split(key, 4)

    # Lane-dense shapes (D_in = P = 128) so output stores are full-width, and
    # a (2, 2) grid so the online-softmax and batch-parallel paths are exercised.
    B, S = 16, 512
    input_dim, usr_dim, prd_dim, pre_pooling_dim = 128, 64, 64, 128

    input_repr = jax.random.normal(k_in, (B, S, input_dim), jnp.float32)
    usr = jax.random.normal(k_usr, (B, 1, usr_dim), jnp.float32)
    prd = jax.random.normal(k_prd, (B, 1, prd_dim), jnp.float32)
    params = init_params(k_par, input_dim, usr_dim, prd_dim, pre_pooling_dim)

    out = concate_attention(input_repr, usr, prd, params)
    out = jax.block_until_ready(out)

    ref = reference(input_repr, usr, prd, params)
    assert out.shape == (B, input_dim), out.shape
    err = jnp.max(jnp.abs(out - ref))
    assert jnp.allclose(out, ref, atol=1e-3, rtol=1e-3), f"max abs err {err}"

    print("KERNEL_OK")
</pallas_src>

<mosaic_0001>
module attributes {stable_mosaic.version = 11 : i64} {
  func.func @_concate_attention_kernel(%arg0: i32, %arg1: i32, %arg2: memref<8x256x128xf32, #tpu.memory_space<vmem>>, %arg3: memref<8x128xf32, #tpu.memory_space<vmem>>, %arg4: memref<128x128xf32, #tpu.memory_space<vmem>>, %arg5: memref<128x128xf32, #tpu.memory_space<vmem>>, %arg6: memref<1x128xf32, #tpu.memory_space<vmem>>, %arg7: memref<1x1x128xf32, #tpu.memory_space<vmem>>, %arg8: memref<8x128xf32, #tpu.memory_space<vmem>>, %arg9: memref<8x1xf32, #tpu.memory_space<vmem>>, %arg10: memref<8x1xf32, #tpu.memory_space<vmem>>, %arg11: memref<8x128xf32, #tpu.memory_space<vmem>>, %arg12: memref<8x128xf32, #tpu.memory_space<vmem>>) attributes {dimension_semantics = [#tpu.dimension_semantics<parallel>, #tpu.dimension_semantics<arbitrary>], iteration_bounds = array<i64: 2, 2>, scalar_prefetch = 0 : i64, scratch_operands = 4 : i64, tpu.core_type = #tpu.core_type<tc>, window_params = [{transform_indices = @transform_0, window_bounds = array<i64: 8, 256, 128>}, {transform_indices = @transform_1, window_bounds = array<i64: 8, 128>}, {pipeline_mode = #tpu.pipeline_mode<synchronous>, transform_indices = @transform_2, window_bounds = array<i64: 128, 128>}, {pipeline_mode = #tpu.pipeline_mode<synchronous>, transform_indices = @transform_3, window_bounds = array<i64: 128, 128>}, {pipeline_mode = #tpu.pipeline_mode<synchronous>, transform_indices = @transform_4, window_bounds = array<i64: 1, 128>}, {pipeline_mode = #tpu.pipeline_mode<synchronous>, transform_indices = @transform_5, window_bounds = array<i64: 1, 1, 128>}, {transform_indices = @transform_6, window_bounds = array<i64: 8, 128>}]} {
    %c0_i32 = arith.constant 0 : i32
    %0 = arith.cmpi eq, %arg1, %c0_i32 : i32
    %1 = arith.extui %0 : i1 to i32
    %c0_i32_0 = arith.constant 0 : i32
    %2 = arith.cmpi ne, %1, %c0_i32_0 : i32
    scf.if %2 {
      %c0_27 = arith.constant 0 : index
      %c0_28 = arith.constant 0 : index
      %44 = vector.load %arg3[%c0_27, %c0_28] : memref<8x128xf32, #tpu.memory_space<vmem>>, vector<8x128xf32>
      %c0_29 = arith.constant 0 : index
      %c0_30 = arith.constant 0 : index
      %45 = vector.load %arg4[%c0_29, %c0_30] : memref<128x128xf32, #tpu.memory_space<vmem>>, vector<128x128xf32>
      %cst_31 = arith.constant dense<0.000000e+00> : vector<8x128xf32>
      %46 = tpu.matmul %44, %45, %cst_31 {dimension_numbers = #tpu.dot_dimension_numbers<[1], [0], [0], [1], [0, 0, 1, 1], [], []>} : vector<8x128xf32>, vector<128x128xf32>, vector<8x128xf32> -> vector<8x128xf32>
      %c0_32 = arith.constant 0 : index
      %c0_33 = arith.constant 0 : index
      %47 = vector.load %arg6[%c0_32, %c0_33] : memref<1x128xf32, #tpu.memory_space<vmem>>, vector<1x128xf32>
      %48 = vector.broadcast %47 : vector<1x128xf32> to vector<8x128xf32>
      %49 = arith.addf %46, %48 : vector<8x128xf32>
      %c0_34 = arith.constant 0 : index
      %c0_35 = arith.constant 0 : index
      %50 = vector.load %arg12[%c0_34, %c0_35] : memref<8x128xf32, #tpu.memory_space<vmem>>, vector<8x128xf32>
      tpu.vector_store %arg12[%c0_34, %c0_35], %49 {strides = array<i32>} : memref<8x128xf32, #tpu.memory_space<vmem>>, vector<8x128xf32>,
      %cst_36 = arith.constant 0xFF800000 : f32
      %51 = vector.broadcast %cst_36 : f32 to vector<8x1xf32>
      %c0_37 = arith.constant 0 : index
      %c0_38 = arith.constant 0 : index
      %52 = vector.load %arg9[%c0_37, %c0_38] : memref<8x1xf32, #tpu.memory_space<vmem>>, vector<8x1xf32>
      tpu.vector_store %arg9[%c0_37, %c0_38], %51 {strides = array<i32>} : memref<8x1xf32, #tpu.memory_space<vmem>>, vector<8x1xf32>,
      %cst_39 = arith.constant 0.000000e+00 : f32
      %53 = vector.broadcast %cst_39 : f32 to vector<8x1xf32>
      %c0_40 = arith.constant 0 : index
      %c0_41 = arith.constant 0 : index
      %54 = vector.load %arg10[%c0_40, %c0_41] : memref<8x1xf32, #tpu.memory_space<vmem>>, vector<8x1xf32>
      tpu.vector_store %arg10[%c0_40, %c0_41], %53 {strides = array<i32>} : memref<8x1xf32, #tpu.memory_space<vmem>>, vector<8x1xf32>,
      %cst_42 = arith.constant 0.000000e+00 : f32
      %55 = vector.broadcast %cst_42 : f32 to vector<8x128xf32>
      %c0_43 = arith.constant 0 : index
      %c0_44 = arith.constant 0 : index
      %56 = vector.load %arg11[%c0_43, %c0_44] : memref<8x128xf32, #tpu.memory_space<vmem>>, vector<8x128xf32>
      tpu.vector_store %arg11[%c0_43, %c0_44], %55 {strides = array<i32>} : memref<8x128xf32, #tpu.memory_space<vmem>>, vector<8x128xf32>,
    } else {
    }
    %c0 = arith.constant 0 : index
    %c0_1 = arith.constant 0 : index
    %c0_2 = arith.constant 0 : index
    %3 = vector.load %arg2[%c0, %c0_1, %c0_2] : memref<8x256x128xf32, #tpu.memory_space<vmem>>, vector<8x256x128xf32>
    %4 = vector.shape_cast %3 : vector<8x256x128xf32> to vector<2048x128xf32>
    %c0_3 = arith.constant 0 : index
    %c0_4 = arith.constant 0 : index
    %5 = vector.load %arg5[%c0_3, %c0_4] : memref<128x128xf32, #tpu.memory_space<vmem>>, vector<128x128xf32>
    %cst = arith.constant dense<0.000000e+00> : vector<2048x128xf32>
    %6 = tpu.matmul %4, %5, %cst {dimension_numbers = #tpu.dot_dimension_numbers<[1], [0], [0], [1], [0, 0, 1, 1], [], []>} : vector<2048x128xf32>, vector<128x128xf32>, vector<2048x128xf32> -> vector<2048x128xf32>
    %7 = vector.shape_cast %6 : vector<2048x128xf32> to vector<8x256x128xf32>
    %c0_5 = arith.constant 0 : index
    %c0_6 = arith.constant 0 : index
    %8 = vector.load %arg12[%c0_5, %c0_6] : memref<8x128xf32, #tpu.memory_space<vmem>>, vector<8x128xf32>
    %9 = vector.shape_cast %8 : vector<8x128xf32> to vector<8x1x128xf32>
    %10 = vector.broadcast %9 : vector<8x1x128xf32> to vector<8x256x128xf32>
    %11 = arith.addf %7, %10 : vector<8x256x128xf32>
    %12 = math.tanh %11 : vector<8x256x128xf32>
    %c0_7 = arith.constant 0 : index
    %c0_8 = arith.constant 0 : index
    %c0_9 = arith.constant 0 : index
    %13 = vector.load %arg7[%c0_7, %c0_8, %c0_9] : memref<1x1x128xf32, #tpu.memory_space<vmem>>, vector<1x1x128xf32>
    %14 = vector.broadcast %13 : vector<1x1x128xf32> to vector<8x256x128xf32>
    %15 = arith.mulf %12, %14 : vector<8x256x128xf32>
    %cst_10 = arith.constant dense<0.000000e+00> : vector<8x256xf32>
    %16 = vector.multi_reduction <add>, %15, %cst_10 [2] : vector<8x256x128xf32> to vector<8x256xf32>
    %c0_11 = arith.constant 0 : index
    %c0_12 = arith.constant 0 : index
    %17 = vector.load %arg9[%c0_11, %c0_12] : memref<8x1xf32, #tpu.memory_space<vmem>>, vector<8x1xf32>
    %cst_13 = arith.constant dense<0xFF800000> : vector<8xf32>
    %18 = vector.multi_reduction <maximumf>, %16, %cst_13 [1] : vector<8x256xf32> to vector<8xf32>
    %19 = vector.shape_cast %18 : vector<8xf32> to vector<8x1xf32>
    %20 = arith.maximumf %17, %19 : vector<8x1xf32>
    %21 = arith.subf %17, %20 : vector<8x1xf32>
    %22 = math.exp %21 : vector<8x1xf32>
    %23 = vector.broadcast %20 : vector<8x1xf32> to vector<8x256xf32>
    %24 = arith.subf %16, %23 : vector<8x256xf32>
    %25 = math.exp %24 : vector<8x256xf32>
    %c0_14 = arith.constant 0 : index
    %c0_15 = arith.constant 0 : index
    %26 = vector.load %arg10[%c0_14, %c0_15] : memref<8x1xf32, #tpu.memory_space<vmem>>, vector<8x1xf32>
    %27 = arith.mulf %22, %26 : vector<8x1xf32>
    %cst_16 = arith.constant dense<0.000000e+00> : vector<8xf32>
    %28 = vector.multi_reduction <add>, %25, %cst_16 [1] : vector<8x256xf32> to vector<8xf32>
    %29 = vector.shape_cast %28 : vector<8xf32> to vector<8x1xf32>
    %30 = arith.addf %27, %29 : vector<8x1xf32>
    %c0_17 = arith.constant 0 : index
    %c0_18 = arith.constant 0 : index
    %31 = vector.load %arg10[%c0_17, %c0_18] : memref<8x1xf32, #tpu.memory_space<vmem>>, vector<8x1xf32>
    tpu.vector_store %arg10[%c0_17, %c0_18], %30 {strides = array<i32>} : memref<8x1xf32, #tpu.memory_space<vmem>>, vector<8x1xf32>,
    %32 = vector.shape_cast %25 : vector<8x256xf32> to vector<8x1x256xf32>
    "tpu.trace_start"() <{level = 10 : i32, message = "bqs,bsd->bqd"}> : () -> ()
    %cst_19 = arith.constant dense<0.000000e+00> : vector<8x1x128xf32>
    %33 = tpu.matmul %32, %3, %cst_19 {dimension_numbers = #tpu.dot_dimension_numbers<[2], [1], [1], [2], [0, 0, 0, 1, 1, 2], [0], [0]>} : vector<8x1x256xf32>, vector<8x256x128xf32>, vector<8x1x128xf32> -> vector<8x1x128xf32>
    "tpu.trace_stop"() : () -> ()
    %34 = vector.shape_cast %33 : vector<8x1x128xf32> to vector<8x128xf32>
    %c0_20 = arith.constant 0 : index
    %c0_21 = arith.constant 0 : index
    %35 = vector.load %arg11[%c0_20, %c0_21] : memref<8x128xf32, #tpu.memory_space<vmem>>, vector<8x128xf32>
    %36 = vector.broadcast %22 : vector<8x1xf32> to vector<8x128xf32>
    %37 = arith.mulf %36, %35 : vector<8x128xf32>
    %38 = arith.addf %37, %34 : vector<8x128xf32>
    %c0_22 = arith.constant 0 : index
    %c0_23 = arith.constant 0 : index
    %39 = vector.load %arg11[%c0_22, %c0_23] : memref<8x128xf32, #tpu.memory_space<vmem>>, vector<8x128xf32>
    tpu.vector_store %arg11[%c0_22, %c0_23], %38 {strides = array<i32>} : memref<8x128xf32, #tpu.memory_space<vmem>>, vector<8x128xf32>,
    %c0_24 = arith.constant 0 : index
    %c0_25 = arith.constant 0 : index
    %40 = vector.load %arg9[%c0_24, %c0_25] : memref<8x1xf32, #tpu.memory_space<vmem>>, vector<8x1xf32>
    tpu.vector_store %arg9[%c0_24, %c0_25], %20 {strides = array<i32>} : memref<8x1xf32, #tpu.memory_space<vmem>>, vector<8x1xf32>,
    %c1_i32 = arith.constant 1 : i32
    %41 = arith.cmpi eq, %arg1, %c1_i32 : i32
    %42 = arith.extui %41 : i1 to i32
    %c0_i32_26 = arith.constant 0 : i32
    %43 = arith.cmpi ne, %42, %c0_i32_26 : i32
    scf.if %43 {
      %c0_27 = arith.constant 0 : index
      %c0_28 = arith.constant 0 : index
      %44 = vector.load %arg11[%c0_27, %c0_28] : memref<8x128xf32, #tpu.memory_space<vmem>>, vector<8x128xf32>
      %c0_29 = arith.constant 0 : index
      %c0_30 = arith.constant 0 : index
      %45 = vector.load %arg10[%c0_29, %c0_30] : memref<8x1xf32, #tpu.memory_space<vmem>>, vector<8x1xf32>
      %46 = tpu.reciprocal %45 : vector<8x1xf32> -> vector<8x1xf32>
      %47 = vector.broadcast %46 : vector<8x1xf32> to vector<8x128xf32>
      %48 = arith.mulf %44, %47 : vector<8x128xf32>
      %c0_31 = arith.constant 0 : index
      %c0_32 = arith.constant 0 : index
      %49 = vector.load %arg8[%c0_31, %c0_32] : memref<8x128xf32, #tpu.memory_space<vmem>>, vector<8x128xf32>
      tpu.vector_store %arg8[%c0_31, %c0_32], %48 {strides = array<i32>} : memref<8x128xf32, #tpu.memory_space<vmem>>, vector<8x128xf32>,
    } else {
    }
    return
  }
  func.func @transform_0(%arg0: i32, %arg1: i32) -> (i32, i32, i32) {
    %c0_i32 = arith.constant 0 : i32
    %c0_i32_0 = arith.constant 0 : i32
    return %arg0, %arg1, %c0_i32 : i32, i32, i32
  }
  func.func @transform_1(%arg0: i32, %arg1: i32) -> (i32, i32) {
    %c0_i32 = arith.constant 0 : i32
    %c0_i32_0 = arith.constant 0 : i32
    return %arg0, %c0_i32 : i32, i32
  }
  func.func @transform_2(%arg0: i32, %arg1: i32) -> (i32, i32) {
    %c0_i32 = arith.constant 0 : i32
    %c0_i32_0 = arith.constant 0 : i32
    %c0_i32_1 = arith.constant 0 : i32
    return %c0_i32, %c0_i32_0 : i32, i32
  }
  func.func @transform_3(%arg0: i32, %arg1: i32) -> (i32, i32) {
    %c0_i32 = arith.constant 0 : i32
    %c0_i32_0 = arith.constant 0 : i32
    %c0_i32_1 = arith.constant 0 : i32
    return %c0_i32, %c0_i32_0 : i32, i32
  }
  func.func @transform_4(%arg0: i32, %arg1: i32) -> (i32, i32) {
    %c0_i32 = arith.constant 0 : i32
    %c0_i32_0 = arith.constant 0 : i32
    %c0_i32_1 = arith.constant 0 : i32
    return %c0_i32, %c0_i32_0 : i32, i32
  }
  func.func @transform_5(%arg0: i32, %arg1: i32) -> (i32, i32, i32) {
    %c0_i32 = arith.constant 0 : i32
    %c0_i32_0 = arith.constant 0 : i32
    %c0_i32_1 = arith.constant 0 : i32
    %c0_i32_2 = arith.constant 0 : i32
    return %c0_i32, %c0_i32_0, %c0_i32_1 : i32, i32, i32
  }
  func.func @transform_6(%arg0: i32, %arg1: i32) -> (i32, i32) {
    %c0_i32 = arith.constant 0 : i32
    %c0_i32_0 = arith.constant 0 : i32
    return %arg0, %c0_i32 : i32, i32
  }
}

</mosaic_0001>

<llo_original>
// kernel: tpu_custom_call.1
$region0: #{tpu_custom_call.1}
  #allocation0 [shape = 'u32[]', space=smem, size = 0x4, offset = 0x4, fixed_abs, tag = 'smem constant byte address 0x4 - core index']
  #allocation1 [shape = 'u32[144,128]{1,0:T(1,128)}', space=vmem, size = 0x12000, scoped, tag = 'internal scratch']
  #allocation2 [shape = 'f32[8,1]{1,0:T(8,128)}', space=vmem, size = 0x1000, scoped, tag = 'scratch operand']
  #allocation3 [shape = 'f32[8,1]{1,0:T(8,128)}', space=vmem, size = 0x1000, scoped, tag = 'scratch operand']
  #allocation4 [shape = 'f32[8,128]{1,0:T(8,128)}', space=vmem, size = 0x1000, scoped, tag = 'scratch operand']
  #allocation5 [shape = 'f32[8,128]{1,0:T(8,128)}', space=vmem, size = 0x1000, scoped, tag = 'scratch operand']
  #allocation18 [shape = 's32[]', space=sflag, size = 0x4, offset = 0, fixed_abs, tag = 'sflag constant byte address 0x0 - dummy sync flag']
  %s0 = inlined_call_operand.hbm [shape: f32[16,512,128], index: 0, kind: input, shape index: {}]
  %s1 = inlined_call_operand.hbm [shape: f32[16,128], index: 1, kind: input, shape index: {}]
  %s2 = inlined_call_operand.hbm [shape: f32[128,128], index: 2, kind: input, shape index: {}]
  %s3 = inlined_call_operand.hbm [shape: f32[128,128], index: 3, kind: input, shape index: {}]
  %s4 = inlined_call_operand.hbm [shape: f32[1,128], index: 4, kind: input, shape index: {}]
  %s5 = inlined_call_operand.hbm [shape: f32[1,1,128], index: 5, kind: input, shape index: {}]
  %s6 = inlined_call_operand.hbm [shape: f32[16,128], index: 6, kind: output, shape index: {}]
  %s7 = sld [smem:[#allocation0]]
  $region89: #{tpu_custom_call.1} parent=0
    _
  %s9 = ssub.s32 1, %s7
  %s10 = scalar_select 0, %s9, %s7
  $region1: #{tpu_custom_call.1} parent=0
    #allocation6 [shape = 'u8[2097152]{0}', space=vmem, size = 0x200000, scoped, tag = 'input window, operand 0']
    #allocation7 [shape = 's32[2]{0}', space=sflag, size = 0x8, scoped, tag = 'scoped memory for tpu_custom_call.1']
    #allocation8 [shape = 's32[2]{0}', space=sflag, size = 0x8, scoped, tag = 'scoped memory for tpu_custom_call.1']
    #allocation9 [shape = 'u8[8192]{0}', space=vmem, size = 0x2000, scoped, tag = 'input window, operand 1']
    #allocation10 [shape = 's32[2]{0}', space=sflag, size = 0x8, scoped, tag = 'scoped memory for tpu_custom_call.1']
    #allocation11 [shape = 'u8[65536]{0}', space=vmem, size = 0x10000, scoped, tag = 'input window, operand 2, single buffered']
    #allocation12 [shape = 'u8[65536]{0}', space=vmem, size = 0x10000, scoped, tag = 'input window, operand 3, single buffered']
    #allocation13 [shape = 's32[1]{0}', space=sflag, size = 0x4, scoped, tag = 'scoped memory for tpu_custom_call.1']
    #allocation14 [shape = 'u8[512]{0}', space=vmem, size = 0x400, scoped, tag = 'input window, operand 4, single buffered']
    #allocation15 [shape = 'u8[512]{0}', space=vmem, size = 0x400, scoped, tag = 'input window, operand 5, single buffered']
    #allocation16 [shape = 's32[1]{0}', space=sflag, size = 0x4, scoped, tag = 'scoped memory for tpu_custom_call.1']
    #allocation17 [shape = 'u8[8192]{0}', space=vmem, size = 0x2000, scoped, tag = 'output window, operand 0']
    %11 = vsyncpa [#allocation7], 0
    %s12 = scalar_lea.sflag [#allocation7], 1
    %13 = vsyncpa %s12, 0
    %14 = vsyncpa [#allocation10], 0
    %s15 = scalar_lea.sflag [#allocation10], 1
    %16 = vsyncpa %s15, 0
    %17 = vsyncpa [#allocation13], 0
    %18 = vsyncpa [#allocation16], 0
    %19 = vsyncpa [#allocation8], 0
    %s20 = scalar_lea.sflag [#allocation8], 1
    %21 = vsyncpa %s20, 0
    loop: start=0, step=1, limit=6
    $region2: #{tpu_custom_call.1} parent=1 // loop_pre_header
      _
    $region3: #{tpu_custom_call.1} parent=1 // loop_header
      %s23 = sphi 0, %s27
      %p24 = scmp.ge.s32.totalorder %s23, 6
      %s30 = sphi 0, %s42
      %s31 = sphi 0, %s38
      %s32 = sphi 0, %s30
      %s33 = sphi 0, %s31
      %s34 = sphi 0, %s32
      %s35 = sphi 0, %s33
      %s47 = sphi 0, %s49
      %s50 = sphi 0, %s47
      %s51 = sphi 0, %s50
      %s67 = sphi 0, %s51
      %s73 = sphi 0, %s75
      %s76 = sphi 0, %s73
      %s77 = sphi 0, %s76
      %s93 = sphi 0, %s77
      %s97 = sphi 0, %s97
      %s99 = sphi 0, %s97
      %s100 = sphi 0, %s99
      %s114 = sphi 0, %s100
      %s118 = sphi 0, %s118
      %s120 = sphi 0, %s118
      %s121 = sphi 0, %s120
      %s135 = sphi 0, %s121
      %s139 = sphi 0, %s139
      %s141 = sphi 0, %s139
      %s142 = sphi 0, %s141
      %s156 = sphi 0, %s142
      %s160 = sphi 0, %s160
      %s162 = sphi 0, %s160
      %s163 = sphi 0, %s162
      %s177 = sphi 0, %s163
      %s183 = sphi 0, %s185
      %s186 = sphi 0, %s183
      %s187 = sphi 0, %s186
      %s203 = sphi 0, %s187
    $region4: #{tpu_custom_call.1} parent=1 // loop_header_branch
      %26 = sbr.rel (%p24) target = $region8
    $region5: #{tpu_custom_call.1} parent=1 // loop_body
      %s28 = ssub.s32 %s23, 1
      %s29 = ssub.s32 %s23, 2
      %s36 = sadd.s32 1, %s31
      %p37 = scmp.ge.s32.totalorder %s36, 2
      %s38 = scalar_select %p37, 0, %s36
      %s39 = sadd.s32 1, %s30
      %s40 = scalar_select %p37, %s39, %s30
      %p41 = scmp.ge.s32.totalorder %s40, 2
      %s42 = scalar_select %p41, 0, %s40
      %s43 = ssub.s32 %s30, %s42
      %s44 = ssub.s32 %s31, %s38
      %s45 = sor.u32 %s43, %s44
      %p46 = scmp.eq.s32.totalorder %s45, 0
      %s48 = sadd.s32 %s47, 1
      %s49 = scalar_select %p46, %s47, %s48
      %p52 = pneg %p46
      %p53 = scmp.eq.s32.totalorder %s23, 3
      %p54 = por %p52, %p53
      %p55 = scmp.ne.s32.totalorder %s47, %s50
      %p56 = scmp.eq.s32.totalorder %s23, 0
      %p57 = por %p55, %p56
      %p58 = scmp.ne.s32.totalorder %s47, %s50
      %p59 = scmp.eq.s32.totalorder %s28, 3
      %p60 = por %p58, %p59
      %p61 = scmp.ne.s32.totalorder %s50, %s51
      %p62 = scmp.eq.s32.totalorder %s28, 0
      %p63 = por %p61, %p62
      %p64 = scmp.ne.s32.totalorder %s50, %s51
      %p65 = scmp.eq.s32.totalorder %s29, 3
      %p66 = por %p64, %p65
      %p68 = scmp.ne.s32.totalorder %s51, %s67
      %p69 = scmp.eq.s32.totalorder %s29, 0
      %p70 = por %p68, %p69
      %s71 = ssub.s32 %s30, %s42
      %p72 = scmp.eq.s32.totalorder %s71, 0
      %s74 = sadd.s32 %s73, 1
      %s75 = scalar_select %p72, %s73, %s74
      %p78 = pneg %p72
      %p79 = scmp.eq.s32.totalorder %s23, 3
      %p80 = por %p78, %p79
      %p81 = scmp.ne.s32.totalorder %s73, %s76
      %p82 = scmp.eq.s32.totalorder %s23, 0
      %p83 = por %p81, %p82
      %p84 = scmp.ne.s32.totalorder %s73, %s76
      %p85 = scmp.eq.s32.totalorder %s28, 3
      %p86 = por %p84, %p85
      %p87 = scmp.ne.s32.totalorder %s76, %s77
      %p88 = scmp.eq.s32.totalorder %s28, 0
      %p89 = por %p87, %p88
      %p90 = scmp.ne.s32.totalorder %s76, %s77
      %p91 = scmp.eq.s32.totalorder %s29, 3
      %p92 = por %p90, %p91
      %p94 = scmp.ne.s32.totalorder %s77, %s93
      %p95 = scmp.eq.s32.totalorder %s29, 0
      %p96 = por %p94, %p95
      %s98 = sadd.s32 %s97, 1
      %p101 = scmp.eq.s32.totalorder %s23, 3
      %p102 = scmp.ne.s32.totalorder %s97, %s99
      %p103 = scmp.eq.s32.totalorder %s23, 0
      %p104 = por %p102, %p103
      %p105 = scmp.ne.s32.totalorder %s97, %s99
      %p106 = scmp.eq.s32.totalorder %s28, 3
      %p107 = por %p105, %p106
      %p108 = scmp.ne.s32.totalorder %s99, %s100
      %p109 = scmp.eq.s32.totalorder %s28, 0
      %p110 = por %p108, %p109
      %p111 = scmp.ne.s32.totalorder %s99, %s100
      %p112 = scmp.eq.s32.totalorder %s29, 3
      %p113 = por %p111, %p112
      %p115 = scmp.ne.s32.totalorder %s100, %s114
      %p116 = scmp.eq.s32.totalorder %s29, 0
      %p117 = por %p115, %p116
      %s119 = sadd.s32 %s118, 1
      %p122 = scmp.eq.s32.totalorder %s23, 3
      %p123 = scmp.ne.s32.totalorder %s118, %s120
      %p124 = scmp.eq.s32.totalorder %s23, 0
      %p125 = por %p123, %p124
      %p126 = scmp.ne.s32.totalorder %s118, %s120
      %p127 = scmp.eq.s32.totalorder %s28, 3
      %p128 = por %p126, %p127
      %p129 = scmp.ne.s32.totalorder %s120, %s121
      %p130 = scmp.eq.s32.totalorder %s28, 0
      %p131 = por %p129, %p130
      %p132 = scmp.ne.s32.totalorder %s120, %s121
      %p133 = scmp.eq.s32.totalorder %s29, 3
      %p134 = por %p132, %p133
      %p136 = scmp.ne.s32.totalorder %s121, %s135
      %p137 = scmp.eq.s32.totalorder %s29, 0
      %p138 = por %p136, %p137
      %s140 = sadd.s32 %s139, 1
      %p143 = scmp.eq.s32.totalorder %s23, 3
      %p144 = scmp.ne.s32.totalorder %s139, %s141
      %p145 = scmp.eq.s32.totalorder %s23, 0
      %p146 = por %p144, %p145
      %p147 = scmp.ne.s32.totalorder %s139, %s141
      %p148 = scmp.eq.s32.totalorder %s28, 3
      %p149 = por %p147, %p148
      %p150 = scmp.ne.s32.totalorder %s141, %s142
      %p151 = scmp.eq.s32.totalorder %s28, 0
      %p152 = por %p150, %p151
      %p153 = scmp.ne.s32.totalorder %s141, %s142
      %p154 = scmp.eq.s32.totalorder %s29, 3
      %p155 = por %p153, %p154
      %p157 = scmp.ne.s32.totalorder %s142, %s156
      %p158 = scmp.eq.s32.totalorder %s29, 0
      %p159 = por %p157, %p158
      %s161 = sadd.s32 %s160, 1
      %p164 = scmp.eq.s32.totalorder %s23, 3
      %p165 = scmp.ne.s32.totalorder %s160, %s162
      %p166 = scmp.eq.s32.totalorder %s23, 0
      %p167 = por %p165, %p166
      %p168 = scmp.ne.s32.totalorder %s160, %s162
      %p169 = scmp.eq.s32.totalorder %s28, 3
      %p170 = por %p168, %p169
      %p171 = scmp.ne.s32.totalorder %s162, %s163
      %p172 = scmp.eq.s32.totalorder %s28, 0
      %p173 = por %p171, %p172
      %p174 = scmp.ne.s32.totalorder %s162, %s163
      %p175 = scmp.eq.s32.totalorder %s29, 3
      %p176 = por %p174, %p175
      %p178 = scmp.ne.s32.totalorder %s163, %s177
      %p179 = scmp.eq.s32.totalorder %s29, 0
      %p180 = por %p178, %p179
      %s181 = ssub.s32 %s30, %s42
      %p182 = scmp.eq.s32.totalorder %s181, 0
      %s184 = sadd.s32 %s183, 1
      %s185 = scalar_select %p182, %s183, %s184
      %p188 = pneg %p182
      %p189 = scmp.eq.s32.totalorder %s23, 3
      %p190 = por %p188, %p189
      %p191 = scmp.ne.s32.totalorder %s183, %s186
      %p192 = scmp.eq.s32.totalorder %s23, 0
      %p193 = por %p191, %p192
      %p194 = scmp.ne.s32.totalorder %s183, %s186
      %p195 = scmp.eq.s32.totalorder %s28, 3
      %p196 = por %p194, %p195
      %p197 = scmp.ne.s32.totalorder %s186, %s187
      %p198 = scmp.eq.s32.totalorder %s28, 0
      %p199 = por %p197, %p198
      %p200 = scmp.ne.s32.totalorder %s186, %s187
      %p201 = scmp.eq.s32.totalorder %s29, 3
      %p202 = por %p200, %p201
      %p204 = scmp.ne.s32.totalorder %s187, %s203
      %p205 = scmp.eq.s32.totalorder %s29, 0
      %p206 = por %p204, %p205
      %p207 = scmp.le.s32.totalorder 1, %s23
      %p208 = scmp.lt.s32.totalorder %s23, 5
      %p209 = pnand %p207, %p208
      %p210 = pneg %p209
      // Predicated region
      $region9: #{tpu_custom_call.1} parent=5 // pred_check
        _
      $region10: #{tpu_custom_call.1} parent=5 // pred_check_branch
        %212 = sbr.rel (%p209) target = $region12
      $region11: #{tpu_custom_call.1} parent=5 // pred_region
        %s213 = ssub.s32 %s23, 1
        // Predicated region
        $region13: #{tpu_custom_call.1} parent=11 // pred_check
          %p214 = pneg %p110
        $region14: #{tpu_custom_call.1} parent=11 // pred_check_branch
          %216 = sbr.rel (%p214) target = $region16
        $region15: #{tpu_custom_call.1} parent=11 // pred_region
          %s218 = ssub.s32 2048, 2048
          %219 = vsyncadd [#allocation10], %s218
          %s220 = sshll.u32 [#allocation11], 4
          %s221 = int_to_ptr.vmem [resolvable:$true] %s220
          %226 = dma.hbm_to_vmem [thread:$0]  %s2, 2048, %s221, [#allocation10], 128, 128, 8
        $region16: #{tpu_custom_call.1} parent=11 // pred_fallthru
          _
        // Predicated region
        $region17: #{tpu_custom_call.1} parent=11 // pred_check
          %p227 = pneg %p131
        $region18: #{tpu_custom_call.1} parent=11 // pred_check_branch
          %229 = sbr.rel (%p227) target = $region20
        $region19: #{tpu_custom_call.1} parent=11 // pred_region
          %s231 = ssub.s32 2048, 2048
          %232 = vsyncadd [#allocation13], %s231
          %s233 = sshll.u32 [#allocation12], 4
          %s234 = int_to_ptr.vmem [resolvable:$true] %s233
          %239 = dma.hbm_to_vmem [thread:$0]  %s3, 2048, %s234, [#allocation13], 128, 128, 8
        $region20: #{tpu_custom_call.1} parent=11 // pred_fallthru
          _
        // Predicated region
        $region21: #{tpu_custom_call.1} parent=11 // pred_check
          %p240 = pneg %p152
        $region22: #{tpu_custom_call.1} parent=11 // pred_check_branch
          %242 = sbr.rel (%p240) target = $region24
        $region23: #{tpu_custom_call.1} parent=11 // pred_region
          %s244 = ssub.s32 16, 16
          %245 = vsyncadd [#allocation13], %s244
          %s247 = sshll.u32 [#allocation14], 4
          %s248 = int_to_ptr.vmem [resolvable:$true] %s247
          %250 = dma.hbm_to_vmem [thread:$0]  %s4, 16, %s248, [#allocation13]
        $region24: #{tpu_custom_call.1} parent=11 // pred_fallthru
          _
        // Predicated region
        $region25: #{tpu_custom_call.1} parent=11 // pred_check
          %p251 = pneg %p173
        $region26: #{tpu_custom_call.1} parent=11 // pred_check_branch
          %253 = sbr.rel (%p251) target = $region28
        $region27: #{tpu_custom_call.1} parent=11 // pred_region
          %s255 = ssub.s32 16, 16
          %256 = vsyncadd [#allocation16], %s255
          %s258 = sshll.u32 [#allocation15], 4
          %s259 = int_to_ptr.vmem [resolvable:$true] %s258
          %261 = dma.hbm_to_vmem [thread:$0]  %s5, 16, %s259, [#allocation16]
        $region28: #{tpu_custom_call.1} parent=11 // pred_fallthru
          _
      $region12: #{tpu_custom_call.1} parent=5 // pred_fallthru
        _
      %p262 = scmp.lt.s32.totalorder %s23, 4
      // Predicated region
      $region29: #{tpu_custom_call.1} parent=5 // pred_check
        %p263 = pneg %p262
      $region30: #{tpu_custom_call.1} parent=5 // pred_check_branch
        %265 = sbr.rel (%p263) target = $region32
      $region31: #{tpu_custom_call.1} parent=5 // pred_region
        // Predicated region
        $region33: #{tpu_custom_call.1} parent=31 // pred_check
          %p266 = pneg %p57
        $region34: #{tpu_custom_call.1} parent=31 // pred_check_branch
          %268 = sbr.rel (%p266) target = $region36
        $region35: #{tpu_custom_call.1} parent=31 // pred_region
          #allocation19 [shape = 'u32[6]{0}', space=smem, size = 0x18, scoped, tag = 'DMA stride descriptor']
          %s269 = sand.u32 %s47, 1
          %s270 = scalar_lea.sflag [#allocation7], %s269
          %s271 = sand.u32 %s47, 1
          %s272 = smul.addr %s271, 2048
          %s273 = scalar_lea.vmem [#allocation6], %s272
          %s274 = smul.u32 8, %s30
          %s275 = smul.u32 32, %s31
          %s277 = ssub.s32 32768, 32768
          %278 = vsyncadd %s270, %s277
          %s279 = smul.addr %s274, 64
          %s280 = sadd.s32 %s275, %s279
          %s281 = smul.addr %s280, 128
          %s282 = scalar_lea.hbm %s0, %s281
          %s284 = sshll.u32 1, 14
          %s285 = sxor.u32 4294967295, %s284
          %s287 = sld [smem:[#allocation0]]
          %s288 = sadd.s32 2, %s287
          %s290 = sshll.u32 7, 26
          %s291 = sxor.u32 4294967295, %s290
          %s292 = sand.u32 0, %s291
          %s293 = sshll.u32 %s288, 26
          %s294 = sor.u32 %s292, %s293
          %s295 = sshll.u32 %s273, 4
          %s296 = int_to_ptr.vmem [resolvable:$true] %s295
          %302 = sst [smem:[#allocation19]] 8192
          %s303 = scalar_lea.smem [#allocation19], 1
          %304 = sst [smem:[%s303]] 4096
          %s305 = scalar_lea.smem [#allocation19], 2
          %306 = sst [smem:[%s305]] 32
          %s307 = scalar_lea.smem [#allocation19], 3
          %308 = sst [smem:[%s307]] 128
          %s309 = scalar_lea.smem [#allocation19], 4
          %310 = sst [smem:[%s309]] 128
          %s311 = scalar_lea.smem [#allocation19], 5
          %312 = sst [smem:[%s311]] 8
          %314 = dma.general %s282, 32768, %s296, %s270, [#allocation18], [#allocation19], %s294, 0
        $region36: #{tpu_custom_call.1} parent=31 // pred_fallthru
          _
        // Predicated region
        $region37: #{tpu_custom_call.1} parent=31 // pred_check
          %p315 = pneg %p83
        $region38: #{tpu_custom_call.1} parent=31 // pred_check_branch
          %317 = sbr.rel (%p315) target = $region40
        $region39: #{tpu_custom_call.1} parent=31 // pred_region
          %s318 = sand.u32 %s23, 1
          %s319 = scalar_lea.sflag [#allocation10], %s318
          %s320 = sand.u32 %s73, 1
          %s321 = smul.addr %s320, 8
          %s322 = scalar_lea.vmem [#allocation9], %s321
          %s324 = ssub.s32 128, 128
          %325 = vsyncadd %s319, %s324
          %s326 = smul.addr %s30, 128
          %s327 = scalar_lea.hbm %s1, %s326
          %s329 = sshll.u32 %s322, 4
          %s330 = int_to_ptr.vmem [resolvable:$true] %s329
          %332 = dma.hbm_to_vmem [thread:$0]  %s327, 128, %s330, %s319
        $region40: #{tpu_custom_call.1} parent=31 // pred_fallthru
          _
      $region32: #{tpu_custom_call.1} parent=5 // pred_fallthru
        _
      %p333 = scmp.le.s32.totalorder 1, %s23
      %p334 = scmp.lt.s32.totalorder %s23, 5
      %p335 = pnand %p333, %p334
      %p336 = pneg %p335
      // Predicated region
      $region41: #{tpu_custom_call.1} parent=5 // pred_check
        _
      $region42: #{tpu_custom_call.1} parent=5 // pred_check_branch
        %338 = sbr.rel (%p335) target = $region44
      $region43: #{tpu_custom_call.1} parent=5 // pred_region
        %s339 = ssub.s32 %s23, 1
        %s340 = sand.u32 %s50, 1
        %s341 = scalar_lea.sflag [#allocation7], %s340
        %s342 = sand.u32 %s50, 1
        %s343 = smul.addr %s342, 2048
        %s344 = scalar_lea.vmem [#allocation6], %s343
        // Predicated region
        $region45: #{tpu_custom_call.1} parent=43 // pred_check
          %p345 = pneg %p63
        $region46: #{tpu_custom_call.1} parent=43 // pred_check_branch
          %347 = sbr.rel (%p345) target = $region48
        $region47: #{tpu_custom_call.1} parent=43 // pred_region
          %348 = dma.done %s341, 32768
        $region48: #{tpu_custom_call.1} parent=43 // pred_fallthru
          _
        %s349 = sand.u32 %s28, 1
        %s350 = scalar_lea.sflag [#allocation10], %s349
        %s351 = sand.u32 %s76, 1
        %s352 = smul.addr %s351, 8
        %s353 = scalar_lea.vmem [#allocation9], %s352
        // Predicated region
        $region49: #{tpu_custom_call.1} parent=43 // pred_check
          %p354 = pneg %p89
        $region50: #{tpu_custom_call.1} parent=43 // pred_check_branch
          %356 = sbr.rel (%p354) target = $region52
        $region51: #{tpu_custom_call.1} parent=43 // pred_region
          %357 = dma.done %s350, 128
        $region52: #{tpu_custom_call.1} parent=43 // pred_fallthru
          _
        // Predicated region
        $region53: #{tpu_custom_call.1} parent=43 // pred_check
          %p358 = pneg %p110
        $region54: #{tpu_custom_call.1} parent=43 // pred_check_branch
          %360 = sbr.rel (%p358) target = $region56
        $region55: #{tpu_custom_call.1} parent=43 // pred_region
          %361 = dma.done [#allocation10], 2048
        $region56: #{tpu_custom_call.1} parent=43 // pred_fallthru
          _
        // Predicated region
        $region57: #{tpu_custom_call.1} parent=43 // pred_check
          %p362 = pneg %p131
        $region58: #{tpu_custom_call.1} parent=43 // pred_check_branch
          %364 = sbr.rel (%p362) target = $region60
        $region59: #{tpu_custom_call.1} parent=43 // pred_region
          %365 = dma.done [#allocation13], 2048
        $region60: #{tpu_custom_call.1} parent=43 // pred_fallthru
          _
        // Predicated region
        $region61: #{tpu_custom_call.1} parent=43 // pred_check
          %p366 = pneg %p152
        $region62: #{tpu_custom_call.1} parent=43 // pred_check_branch
          %368 = sbr.rel (%p366) target = $region64
        $region63: #{tpu_custom_call.1} parent=43 // pred_region
          %369 = dma.done [#allocation13], 16
        $region64: #{tpu_custom_call.1} parent=43 // pred_fallthru
          _
        // Predicated region
        $region65: #{tpu_custom_call.1} parent=43 // pred_check
          %p370 = pneg %p173
        $region66: #{tpu_custom_call.1} parent=43 // pred_check_branch
          %372 = sbr.rel (%p370) target = $region68
        $region67: #{tpu_custom_call.1} parent=43 // pred_region
          %373 = dma.done [#allocation16], 16
        $region68: #{tpu_custom_call.1} parent=43 // pred_fallthru
          _
        %s374 = sand.u32 %s50, 1
        %s375 = scalar_lea.sflag [#allocation7], %s374
        %s376 = sand.u32 %s50, 1
        %s377 = smul.addr %s376, 2048
        %s378 = scalar_lea.vmem [#allocation6], %s377
        %p379 = pneg %p63
        %p380 = pneg %p60
        %s381 = sand.u32 %s28, 1
        %s382 = scalar_lea.sflag [#allocation10], %s381
        %s383 = sand.u32 %s76, 1
        %s384 = smul.addr %s383, 8
        %s385 = scalar_lea.vmem [#allocation9], %s384
        %p386 = pneg %p89
        %p387 = pneg %p86
        %p388 = pneg %p110
        %p389 = pneg %p107
        %p390 = pneg %p131
        %p391 = pneg %p128
        %p392 = pneg %p152
        %p393 = pneg %p149
        %p394 = pneg %p173
        %p395 = pneg %p170
        %p396 = pneg %p199
        %p397 = pneg %p196
        %s398 = sand.u32 %s186, 1
        %s399 = scalar_lea.sflag [#allocation8], %s398
        %s400 = sand.u32 %s186, 1
        %s401 = smul.addr %s400, 8
        %s402 = scalar_lea.vmem [#allocation17], %s401
        %s403 = smul.u32 8, %s32
        %s404 = smul.u32 32, %s33
        %p405 = scmp.eq.s32.totalorder %s33, 0
        // Predicated region
        $region69: #{tpu_custom_call.1} parent=43 // pred_check
          %p406 = pneg %p405
        $region70: #{tpu_custom_call.1} parent=43 // pred_check_branch
          %408 = sbr.rel (%p406) target = $region72
        $region71: #{tpu_custom_call.1} parent=43 // pred_region
          %v409 = vld [vmem:[%s353] sm:$0xff]
          %v410 = vld [vmem:[#allocation11] sm:$0xff]
          %v411 = vld [vmem:[#allocation11 + $0x8] sm:$0xff]
          %v412 = vld [vmem:[#allocation11 + $0x10] sm:$0xff]
          %v413 = vld [vmem:[#allocation11 + $0x18] sm:$0xff]
          %v414 = vld [vmem:[#allocation11 + $0x20] sm:$0xff]
          %v415 = vld [vmem:[#allocation11 + $0x28] sm:$0xff]
          %v416 = vld [vmem:[#allocation11 + $0x30] sm:$0xff]
          %v417 = vld [vmem:[#allocation11 + $0x38] sm:$0xff]
          %v418 = vld [vmem:[#allocation11 + $0x40] sm:$0xff]
          %v419 = vld [vmem:[#allocation11 + $0x48] sm:$0xff]
          %v420 = vld [vmem:[#allocation11 + $0x50] sm:$0xff]
          %v421 = vld [vmem:[#allocation11 + $0x58] sm:$0xff]
          %v422 = vld [vmem:[#allocation11 + $0x60] sm:$0xff]
          %v423 = vld [vmem:[#allocation11 + $0x68] sm:$0xff]
          %v424 = vld [vmem:[#allocation11 + $0x70] sm:$0xff]
          %v425 = vld [vmem:[#allocation11 + $0x78] sm:$0xff]
          %v426 = vld [vmem:[#allocation14] sm:$0x1]
          %v428 = vlaneseq
          %v429 = vshrl.u32 %v428, 7
          %v430 = vsub.s32 0, %v429
          %v431 = vrot.slane %v426, %v430
          %433 = vmatprep.subr.mxu0 0.0
          %434 = vmatpush1.msra.mxu0 %v410
          %435 = vmatprep.subr.mxu0 0.0
          %436 = vmatpush1.msra.mxu0 %v411
          %437 = vmatprep.subr.mxu0 0.0
          %438 = vmatpush1.msra.mxu0 %v412
          %439 = vmatprep.subr.mxu0 0.0
          %440 = vmatpush1.msra.mxu0 %v413
          %441 = vmatprep.subr.mxu0 0.0
          %442 = vmatpush1.msra.mxu0 %v414
          %443 = vmatprep.subr.mxu0 0.0
          %444 = vmatpush1.msra.mxu0 %v415
          %445 = vmatprep.subr.mxu0 0.0
          %446 = vmatpush1.msra.mxu0 %v416
          %447 = vmatprep.subr.mxu0 0.0
          %448 = vmatpush1.msra.mxu0 %v417
          %449 = vmatprep.subr.mxu0 0.0
          %450 = vmatpush1.msra.mxu0 %v418
          %451 = vmatprep.subr.mxu0 0.0
          %452 = vmatpush1.msra.mxu0 %v419
          %453 = vmatprep.subr.mxu0 0.0
          %454 = vmatpush1.msra.mxu0 %v420
          %455 = vmatprep.subr.mxu0 0.0
          %456 = vmatpush1.msra.mxu0 %v421
          %457 = vmatprep.subr.mxu0 0.0
          %458 = vmatpush1.msra.mxu0 %v422
          %459 = vmatprep.subr.mxu0 0.0
          %460 = vmatpush1.msra.mxu0 %v423
          %461 = vmatprep.subr.mxu0 0.0
          %462 = vmatpush1.msra.mxu0 %v424
          %463 = vmatprep.subr.mxu0 0.0
          %464 = vmatpush1.msra.mxu0 %v425
          %465 = vmatprep.subr.mxu0 0.0
          %466 = vmatpush1.msra.mxu0 0.0
          %467 = vmatprep.subr.mxu0 0.0
          %468 = vmatpush1.msra.mxu0 0.0
          %469 = vmatprep.subr.mxu0 0.0
          %470 = vmatpush1.msra.mxu0 0.0
          %471 = vmatprep.subr.mxu0 0.0
          %472 = vmatpush1.msra.mxu0 0.0
          %473 = vmatprep.subr.mxu0 0.0
          %474 = vmatpush1.msra.mxu0 0.0
          %475 = vmatprep.subr.mxu0 0.0
          %476 = vmatpush1.msra.mxu0 0.0
          %477 = vmatprep.subr.mxu0 0.0
          %478 = vmatpush1.msra.mxu0 0.0
          %479 = vmatprep.subr.mxu0 0.0
          %480 = vmatpush1.msra.mxu0 0.0
          %481 = vmatprep.subr.mxu0 0.0
          %482 = vmatpush1.msra.mxu0 0.0
          %483 = vmatprep.subr.mxu0 0.0
          %484 = vmatpush1.msra.mxu0 0.0
          %485 = vmatprep.subr.mxu0 0.0
          %486 = vmatpush1.msra.mxu0 0.0
          %487 = vmatprep.subr.mxu0 0.0
          %488 = vmatpush1.msra.mxu0 0.0
          %489 = vmatprep.subr.mxu0 0.0
          %490 = vmatpush1.msra.mxu0 0.0
          %491 = vmatprep.subr.mxu0 0.0
          %492 = vmatpush1.msra.mxu0 0.0
          %493 = vmatprep.subr.mxu0 0.0
          %494 = vmatpush1.msra.mxu0 0.0
          %495 = vmatprep.subr.mxu0 0.0
          %496 = vmatpush1.msra.mxu0 0.0
          %497 = vmatprep.mubr.f32.mxu0 0.0
          %498 = vmatmul.mubr.f32.gmra.mrb[0].mxu0 %v409
          %v499 = vpop.f32.mrb[0].mxu0
          %v500 = vadd.f32 %v431, %v499
          %v501 = vpop.f32.mrb[0].mxu0
          %502 = vdwg.mxu0
          %503 = vst [vmem:[#allocation5] sm:$0xff] %v500
          %vm504 = vcmask 7168
          %505 = vst.msk [vmem:[#allocation2] sm:$0xff] %vm504, -inf
          %506 = vst.msk [vmem:[#allocation3] sm:$0xff] %vm504, 0.0
          %507 = vst [vmem:[#allocation4] sm:$0xff] 0.0
        $region72: #{tpu_custom_call.1} parent=43 // pred_fallthru
          _
        %v508 = vld [vmem:[%s344] sm:$0xff]
        %v509 = vld [vmem:[%s344 + $0x8] sm:$0xff]
        %v510 = vld [vmem:[%s344 + $0x10] sm:$0xff]
        %v511 = vld [vmem:[%s344 + $0x18] sm:$0xff]
        %v512 = vld [vmem:[%s344 + $0x20] sm:$0xff]
        %v513 = vld [vmem:[%s344 + $0x28] sm:$0xff]
        %v514 = vld [vmem:[%s344 + $0x30] sm:$0xff]
        %v515 = vld [vmem:[%s344 + $0x38] sm:$0xff]
        %v516 = vld [vmem:[%s344 + $0x40] sm:$0xff]
        %v517 = vld [vmem:[%s344 + $0x48] sm:$0xff]
        %v518 = vld [vmem:[%s344 + $0x50] sm:$0xff]
        %v519 = vld [vmem:[%s344 + $0x58] sm:$0xff]
        %v520 = vld [vmem:[%s344 + $0x60] sm:$0xff]
        %v521 = vld [vmem:[%s344 + $0x68] sm:$0xff]
        %v522 = vld [vmem:[%s344 + $0x70] sm:$0xff]
        %v523 = vld [vmem:[%s344 + $0x78] sm:$0xff]
        %v524 = vld [vmem:[%s344 + $0x80] sm:$0xff]
        %v525 = vld [vmem:[%s344 + $0x88] sm:$0xff]
        %v526 = vld [vmem:[%s344 + $0x90] sm:$0xff]
        %v527 = vld [vmem:[%s344 + $0x98] sm:$0xff]
        %v528 = vld [vmem:[%s344 + $0xa0] sm:$0xff]
        %v529 = vld [vmem:[%s344 + $0xa8] sm:$0xff]
        %v530 = vld [vmem:[%s344 + $0xb0] sm:$0xff]
        %v531 = vld [vmem:[%s344 + $0xb8] sm:$0xff]
        %v532 = vld [vmem:[%s344 + $0xc0] sm:$0xff]
        %v533 = vld [vmem:[%s344 + $0xc8] sm:$0xff]
        %v534 = vld [vmem:[%s344 + $0xd0] sm:$0xff]
        %v535 = vld [vmem:[%s344 + $0xd8] sm:$0xff]
        %v536 = vld [vmem:[%s344 + $0xe0] sm:$0xff]
        %v537 = vld [vmem:[%s344 + $0xe8] sm:$0xff]
        %v538 = vld [vmem:[%s344 + $0xf0] sm:$0xff]
        %v539 = vld [vmem:[%s344 + $0xf8] sm:$0xff]
        %v540 = vld [vmem:[%s344 + $0x100] sm:$0xff]
        %v541 = vld [vmem:[%s344 + $0x108] sm:$0xff]
        %v542 = vld [vmem:[%s344 + $0x110] sm:$0xff]
        %v543 = vld [vmem:[%s344 + $0x118] sm:$0xff]
        %v544 = vld [vmem:[%s344 + $0x120] sm:$0xff]
        %v545 = vld [vmem:[%s344 + $0x128] sm:$0xff]
        %v546 = vld [vmem:[%s344 + $0x130] sm:$0xff]
        %v547 = vld [vmem:[%s344 + $0x138] sm:$0xff]
        %v548 = vld [vmem:[%s344 + $0x140] sm:$0xff]
        %v549 = vld [vmem:[%s344 + $0x148] sm:$0xff]
        %v550 = vld [vmem:[%s344 + $0x150] sm:$0xff]
        %v551 = vld [vmem:[%s344 + $0x158] sm:$0xff]
        %v552 = vld [vmem:[%s344 + $0x160] sm:$0xff]
        %v553 = vld [vmem:[%s344 + $0x168] sm:$0xff]
        %v554 = vld [vmem:[%s344 + $0x170] sm:$0xff]
        %v555 = vld [vmem:[%s344 + $0x178] sm:$0xff]
        %v556 = vld [vmem:[%s344 + $0x180] sm:$0xff]
        %v557 = vld [vmem:[%s344 + $0x188] sm:$0xff]
        %v558 = vld [vmem:[%s344 + $0x190] sm:$0xff]
        %v559 = vld [vmem:[%s344 + $0x198] sm:$0xff]
        %v560 = vld [vmem:[%s344 + $0x1a0] sm:$0xff]
        %v561 = vld [vmem:[%s344 + $0x1a8] sm:$0xff]
        %v562 = vld [vmem:[%s344 + $0x1b0] sm:$0xff]
        %v563 = vld [vmem:[%s344 + $0x1b8] sm:$0xff]
        %v564 = vld [vmem:[%s344 + $0x1c0] sm:$0xff]
        %v565 = vld [vmem:[%s344 + $0x1c8] sm:$0xff]
        %v566 = vld [vmem:[%s344 + $0x1d0] sm:$0xff]
        %v567 = vld [vmem:[%s344 + $0x1d8] sm:$0xff]
        %v568 = vld [vmem:[%s344 + $0x1e0] sm:$0xff]
        %v569 = vld [vmem:[%s344 + $0x1e8] sm:$0xff]
        %v570 = vld [vmem:[%s344 + $0x1f0] sm:$0xff]
        %v571 = vld [vmem:[%s344 + $0x1f8] sm:$0xff]
        %v572 = vld [vmem:[%s344 + $0x200] sm:$0xff]
        %v573 = vld [vmem:[%s344 + $0x208] sm:$0xff]
        %v574 = vld [vmem:[%s344 + $0x210] sm:$0xff]
        %v575 = vld [vmem:[%s344 + $0x218] sm:$0xff]
        %v576 = vld [vmem:[%s344 + $0x220] sm:$0xff]
        %v577 = vld [vmem:[%s344 + $0x228] sm:$0xff]
        %v578 = vld [vmem:[%s344 + $0x230] sm:$0xff]
        %v579 = vld [vmem:[%s344 + $0x238] sm:$0xff]
        %v580 = vld [vmem:[%s344 + $0x240] sm:$0xff]
        %v581 = vld [vmem:[%s344 + $0x248] sm:$0xff]
        %v582 = vld [vmem:[%s344 + $0x250] sm:$0xff]
        %v583 = vld [vmem:[%s344 + $0x258] sm:$0xff]
        %v584 = vld [vmem:[%s344 + $0x260] sm:$0xff]
        %v585 = vld [vmem:[%s344 + $0x268] sm:$0xff]
        %v586 = vld [vmem:[%s344 + $0x270] sm:$0xff]
        %v587 = vld [vmem:[%s344 + $0x278] sm:$0xff]
        %v588 = vld [vmem:[%s344 + $0x280] sm:$0xff]
        %v589 = vld [vmem:[%s344 + $0x288] sm:$0xff]
        %v590 = vld [vmem:[%s344 + $0x290] sm:$0xff]
        %v591 = vld [vmem:[%s344 + $0x298] sm:$0xff]
        %v592 = vld [vmem:[%s344 + $0x2a0] sm:$0xff]
        %v593 = vld [vmem:[%s344 + $0x2a8] sm:$0xff]
        %v594 = vld [vmem:[%s344 + $0x2b0] sm:$0xff]
        %v595 = vld [vmem:[%s344 + $0x2b8] sm:$0xff]
        %v596 = vld [vmem:[%s344 + $0x2c0] sm:$0xff]
        %v597 = vld [vmem:[%s344 + $0x2c8] sm:$0xff]
        %v598 = vld [vmem:[%s344 + $0x2d0] sm:$0xff]
        %v599 = vld [vmem:[%s344 + $0x2d8] sm:$0xff]
        %v600 = vld [vmem:[%s344 + $0x2e0] sm:$0xff]
        %v601 = vld [vmem:[%s344 + $0x2e8] sm:$0xff]
        %v602 = vld [vmem:[%s344 + $0x2f0] sm:$0xff]
        %v603 = vld [vmem:[%s344 + $0x2f8] sm:$0xff]
        %v604 = vld [vmem:[%s344 + $0x300] sm:$0xff]
        %v605 = vld [vmem:[%s344 + $0x308] sm:$0xff]
        %v606 = vld [vmem:[%s344 + $0x310] sm:$0xff]
        %v607 = vld [vmem:[%s344 + $0x318] sm:$0xff]
        %v608 = vld [vmem:[%s344 + $0x320] sm:$0xff]
        %v609 = vld [vmem:[%s344 + $0x328] sm:$0xff]
        %v610 = vld [vmem:[%s344 + $0x330] sm:$0xff]
        %v611 = vld [vmem:[%s344 + $0x338] sm:$0xff]
        %v612 = vld [vmem:[%s344 + $0x340] sm:$0xff]
        %v613 = vld [vmem:[%s344 + $0x348] sm:$0xff]
        %v614 = vld [vmem:[%s344 + $0x350] sm:$0xff]
        %v615 = vld [vmem:[%s344 + $0x358] sm:$0xff]
        %v616 = vld [vmem:[%s344 + $0x360] sm:$0xff]
        %v617 = vld [vmem:[%s344 + $0x368] sm:$0xff]
        %v618 = vld [vmem:[%s344 + $0x370] sm:$0xff]
        %v619 = vld [vmem:[%s344 + $0x378] sm:$0xff]
        %v620 = vld [vmem:[%s344 + $0x380] sm:$0xff]
        %v621 = vld [vmem:[%s344 + $0x388] sm:$0xff]
        %v622 = vld [vmem:[%s344 + $0x390] sm:$0xff]
        %v623 = vld [vmem:[%s344 + $0x398] sm:$0xff]
        %v624 = vld [vmem:[%s344 + $0x3a0] sm:$0xff]
        %v625 = vld [vmem:[%s344 + $0x3a8] sm:$0xff]
        %v626 = vld [vmem:[%s344 + $0x3b0] sm:$0xff]
        %v627 = vld [vmem:[%s344 + $0x3b8] sm:$0xff]
        %v628 = vld [vmem:[%s344 + $0x3c0] sm:$0xff]
        %v629 = vld [vmem:[%s344 + $0x3c8] sm:$0xff]
        %v630 = vld [vmem:[%s344 + $0x3d0] sm:$0xff]
        %v631 = vld [vmem:[%s344 + $0x3d8] sm:$0xff]
        %v632 = vld [vmem:[%s344 + $0x3e0] sm:$0xff]
        %v633 = vld [vmem:[%s344 + $0x3e8] sm:$0xff]
        %v634 = vld [vmem:[%s344 + $0x3f0] sm:$0xff]
        %v635 = vld [vmem:[%s344 + $0x3f8] sm:$0xff]
        %v636 = vld [vmem:[%s344 + $0x400] sm:$0xff]
        %v637 = vld [vmem:[%s344 + $0x408] sm:$0xff]
        %v638 = vld [vmem:[%s344 + $0x410] sm:$0xff]
        %v639 = vld [vmem:[%s344 + $0x418] sm:$0xff]
        %v640 = vld [vmem:[%s344 + $0x420] sm:$0xff]
        %v641 = vld [vmem:[%s344 + $0x428] sm:$0xff]
        %v642 = vld [vmem:[%s344 + $0x430] sm:$0xff]
        %v643 = vld [vmem:[%s344 + $0x438] sm:$0xff]
        %v644 = vld [vmem:[%s344 + $0x440] sm:$0xff]
        %v645 = vld [vmem:[%s344 + $0x448] sm:$0xff]
        %v646 = vld [vmem:[%s344 + $0x450] sm:$0xff]
        %v647 = vld [vmem:[%s344 + $0x458] sm:$0xff]
        %v648 = vld [vmem:[%s344 + $0x460] sm:$0xff]
        %v649 = vld [vmem:[%s344 + $0x468] sm:$0xff]
        %v650 = vld [vmem:[%s344 + $0x470] sm:$0xff]
        %v651 = vld [vmem:[%s344 + $0x478] sm:$0xff]
        %v652 = vld [vmem:[%s344 + $0x480] sm:$0xff]
        %v653 = vld [vmem:[%s344 + $0x488] sm:$0xff]
        %v654 = vld [vmem:[%s344 + $0x490] sm:$0xff]
        %v655 = vld [vmem:[%s344 + $0x498] sm:$0xff]
        %v656 = vld [vmem:[%s344 + $0x4a0] sm:$0xff]
        %v657 = vld [vmem:[%s344 + $0x4a8] sm:$0xff]
        %v658 = vld [vmem:[%s344 + $0x4b0] sm:$0xff]
        %v659 = vld [vmem:[%s344 + $0x4b8] sm:$0xff]
        %v660 = vld [vmem:[%s344 + $0x4c0] sm:$0xff]
        %v661 = vld [vmem:[%s344 + $0x4c8] sm:$0xff]
        %v662 = vld [vmem:[%s344 + $0x4d0] sm:$0xff]
        %v663 = vld [vmem:[%s344 + $0x4d8] sm:$0xff]
        %v664 = vld [vmem:[%s344 + $0x4e0] sm:$0xff]
        %v665 = vld [vmem:[%s344 + $0x4e8] sm:$0xff]
        %v666 = vld [vmem:[%s344 + $0x4f0] sm:$0xff]
        %v667 = vld [vmem:[%s344 + $0x4f8] sm:$0xff]
        %v668 = vld [vmem:[%s344 + $0x500] sm:$0xff]
        %v669 = vld [vmem:[%s344 + $0x508] sm:$0xff]
        %v670 = vld [vmem:[%s344 + $0x510] sm:$0xff]
        %v671 = vld [vmem:[%s344 + $0x518] sm:$0xff]
        %v672 = vld [vmem:[%s344 + $0x520] sm:$0xff]
        %v673 = vld [vmem:[%s344 + $0x528] sm:$0xff]
        %v674 = vld [vmem:[%s344 + $0x530] sm:$0xff]
        %v675 = vld [vmem:[%s344 + $0x538] sm:$0xff]
        %v676 = vld [vmem:[%s344 + $0x540] sm:$0xff]
        %v677 = vld [vmem:[%s344 + $0x548] sm:$0xff]
        %v678 = vld [vmem:[%s344 + $0x550] sm:$0xff]
        %v679 = vld [vmem:[%s344 + $0x558] sm:$0xff]
        %v680 = vld [vmem:[%s344 + $0x560] sm:$0xff]
        %v681 = vld [vmem:[%s344 + $0x568] sm:$0xff]
        %v682 = vld [vmem:[%s344 + $0x570] sm:$0xff]
        %v683 = vld [vmem:[%s344 + $0x578] sm:$0xff]
        %v684 = vld [vmem:[%s344 + $0x580] sm:$0xff]
        %v685 = vld [vmem:[%s344 + $0x588] sm:$0xff]
        %v686 = vld [vmem:[%s344 + $0x590] sm:$0xff]
        %v687 = vld [vmem:[%s344 + $0x598] sm:$0xff]
        %v688 = vld [vmem:[%s344 + $0x5a0] sm:$0xff]
        %v689 = vld [vmem:[%s344 + $0x5a8] sm:$0xff]
        %v690 = vld [vmem:[%s344 + $0x5b0] sm:$0xff]
        %v691 = vld [vmem:[%s344 + $0x5b8] sm:$0xff]
        %v692 = vld [vmem:[%s344 + $0x5c0] sm:$0xff]
        %v693 = vld [vmem:[%s344 + $0x5c8] sm:$0xff]
        %v694 = vld [vmem:[%s344 + $0x5d0] sm:$0xff]
        %v695 = vld [vmem:[%s344 + $0x5d8] sm:$0xff]
        %v696 = vld [vmem:[%s344 + $0x5e0] sm:$0xff]
        %v697 = vld [vmem:[%s344 + $0x5e8] sm:$0xff]
        %v698 = vld [vmem:[%s344 + $0x5f0] sm:$0xff]
        %v699 = vld [vmem:[%s344 + $0x5f8] sm:$0xff]
        %v700 = vld [vmem:[%s344 + $0x600] sm:$0xff]
        %v701 = vld [vmem:[%s344 + $0x608] sm:$0xff]
        %v702 = vld [vmem:[%s344 + $0x610] sm:$0xff]
        %v703 = vld [vmem:[%s344 + $0x618] sm:$0xff]
        %v704 = vld [vmem:[%s344 + $0x620] sm:$0xff]
        %v705 = vld [vmem:[%s344 + $0x628] sm:$0xff]
        %v706 = vld [vmem:[%s344 + $0x630] sm:$0xff]
        %v707 = vld [vmem:[%s344 + $0x638] sm:$0xff]
        %v708 = vld [vmem:[%s344 + $0x640] sm:$0xff]
        %v709 = vld [vmem:[%s344 + $0x648] sm:$0xff]
        %v710 = vld [vmem:[%s344 + $0x650] sm:$0xff]
        %v711 = vld [vmem:[%s344 + $0x658] sm:$0xff]
        %v712 = vld [vmem:[%s344 + $0x660] sm:$0xff]
        %v713 = vld [vmem:[%s344 + $0x668] sm:$0xff]
        %v714 = vld [vmem:[%s344 + $0x670] sm:$0xff]
        %v715 = vld [vmem:[%s344 + $0x678] sm:$0xff]
        %v716 = vld [vmem:[%s344 + $0x680] sm:$0xff]
        %v717 = vld [vmem:[%s344 + $0x688] sm:$0xff]
        %v718 = vld [vmem:[%s344 + $0x690] sm:$0xff]
        %v719 = vld [vmem:[%s344 + $0x698] sm:$0xff]
        %v720 = vld [vmem:[%s344 + $0x6a0] sm:$0xff]
        %v721 = vld [vmem:[%s344 + $0x6a8] sm:$0xff]
        %v722 = vld [vmem:[%s344 + $0x6b0] sm:$0xff]
        %v723 = vld [vmem:[%s344 + $0x6b8] sm:$0xff]
        %v724 = vld [vmem:[%s344 + $0x6c0] sm:$0xff]
        %v725 = vld [vmem:[%s344 + $0x6c8] sm:$0xff]
        %v726 = vld [vmem:[%s344 + $0x6d0] sm:$0xff]
        %v727 = vld [vmem:[%s344 + $0x6d8] sm:$0xff]
        %v728 = vld [vmem:[%s344 + $0x6e0] sm:$0xff]
        %v729 = vld [vmem:[%s344 + $0x6e8] sm:$0xff]
        %v730 = vld [vmem:[%s344 + $0x6f0] sm:$0xff]
        %v731 = vld [vmem:[%s344 + $0x6f8] sm:$0xff]
        %v732 = vld [vmem:[%s344 + $0x700] sm:$0xff]
        %v733 = vld [vmem:[%s344 + $0x708] sm:$0xff]
        %v734 = vld [vmem:[%s344 + $0x710] sm:$0xff]
        %v735 = vld [vmem:[%s344 + $0x718] sm:$0xff]
        %v736 = vld [vmem:[%s344 + $0x720] sm:$0xff]
        %v737 = vld [vmem:[%s344 + $0x728] sm:$0xff]
        %v738 = vld [vmem:[%s344 + $0x730] sm:$0xff]
        %v739 = vld [vmem:[%s344 + $0x738] sm:$0xff]
        %v740 = vld [vmem:[%s344 + $0x740] sm:$0xff]
        %v741 = vld [vmem:[%s344 + $0x748] sm:$0xff]
        %v742 = vld [vmem:[%s344 + $0x750] sm:$0xff]
        %v743 = vld [vmem:[%s344 + $0x758] sm:$0xff]
        %v744 = vld [vmem:[%s344 + $0x760] sm:$0xff]
        %v745 = vld [vmem:[%s344 + $0x768] sm:$0xff]
        %v746 = vld [vmem:[%s344 + $0x770] sm:$0xff]
        %v747 = vld [vmem:[%s344 + $0x778] sm:$0xff]
        %v748 = vld [vmem:[%s344 + $0x780] sm:$0xff]
        %v749 = vld [vmem:[%s344 + $0x788] sm:$0xff]
        %v750 = vld [vmem:[%s344 + $0x790] sm:$0xff]
        %v751 = vld [vmem:[%s344 + $0x798] sm:$0xff]
        %v752 = vld [vmem:[%s344 + $0x7a0] sm:$0xff]
        %v753 = vld [vmem:[%s344 + $0x7a8] sm:$0xff]
        %v754 = vld [vmem:[%s344 + $0x7b0] sm:$0xff]
        %v755 = vld [vmem:[%s344 + $0x7b8] sm:$0xff]
        %v756 = vld [vmem:[%s344 + $0x7c0] sm:$0xff]
        %v757 = vld [vmem:[%s344 + $0x7c8] sm:$0xff]
        %v758 = vld [vmem:[%s344 + $0x7d0] sm:$0xff]
        %v759 = vld [vmem:[%s344 + $0x7d8] sm:$0xff]
        %v760 = vld [vmem:[%s344 + $0x7e0] sm:$0xff]
        %v761 = vld [vmem:[%s344 + $0x7e8] sm:$0xff]
        %v762 = vld [vmem:[%s344 + $0x7f0] sm:$0xff]
        %v763 = vld [vmem:[%s344 + $0x7f8] sm:$0xff]
        %v764 = vld [vmem:[#allocation12] sm:$0xff]
        %v765 = vld [vmem:[#allocation12 + $0x8] sm:$0xff]
        %v766 = vld [vmem:[#allocation12 + $0x10] sm:$0xff]
        %v767 = vld [vmem:[#allocation12 + $0x18] sm:$0xff]
        %v768 = vld [vmem:[#allocation12 + $0x20] sm:$0xff]
        %v769 = vld [vmem:[#allocation12 + $0x28] sm:$0xff]
        %v770 = vld [vmem:[#allocation12 + $0x30] sm:$0xff]
        %v771 = vld [vmem:[#allocation12 + $0x38] sm:$0xff]
        %v772 = vld [vmem:[#allocation12 + $0x40] sm:$0xff]
        %v773 = vld [vmem:[#allocation12 + $0x48] sm:$0xff]
        %v774 = vld [vmem:[#allocation12 + $0x50] sm:$0xff]
        %v775 = vld [vmem:[#allocation12 + $0x58] sm:$0xff]
        %v776 = vld [vmem:[#allocation12 + $0x60] sm:$0xff]
        %v777 = vld [vmem:[#allocation12 + $0x68] sm:$0xff]
        %v778 = vld [vmem:[#allocation12 + $0x70] sm:$0xff]
        %v779 = vld [vmem:[#allocation12 + $0x78] sm:$0xff]
        %780 = vmatprep.subr.mxu0 0.0
        %781 = vmatpush1.msra.mxu0 %v764
        %782 = vmatprep.subr.mxu0 0.0
        %783 = vmatpush1.msra.mxu0 %v765
        %784 = vmatprep.subr.mxu0 0.0
        %785 = vmatpush1.msra.mxu0 %v766
        %786 = vmatprep.subr.mxu0 0.0
        %787 = vmatpush1.msra.mxu0 %v767
        %788 = vmatprep.subr.mxu0 0.0
        %789 = vmatpush1.msra.mxu0 %v768
        %790 = vmatprep.subr.mxu0 0.0
        %791 = vmatpush1.msra.mxu0 %v769
        %792 = vmatprep.subr.mxu0 0.0
        %793 = vmatpush1.msra.mxu0 %v770
        %794 = vmatprep.subr.mxu0 0.0
        %795 = vmatpush1.msra.mxu0 %v771
        %796 = vmatprep.subr.mxu0 0.0
        %797 = vmatpush1.msra.mxu0 %v772
        %798 = vmatprep.subr.mxu0 0.0
        %799 = vmatpush1.msra.mxu0 %v773
        %800 = vmatprep.subr.mxu0 0.0
        %801 = vmatpush1.msra.mxu0 %v774
        %802 = vmatprep.subr.mxu0 0.0
        %803 = vmatpush1.msra.mxu0 %v775
        %804 = vmatprep.subr.mxu0 0.0
        %805 = vmatpush1.msra.mxu0 %v776
        %806 = vmatprep.subr.mxu0 0.0
        %807 = vmatpush1.msra.mxu0 %v777
        %808 = vmatprep.subr.mxu0 0.0
        %809 = vmatpush1.msra.mxu0 %v778
        %810 = vmatprep.subr.mxu0 0.0
        %811 = vmatpush1.msra.mxu0 %v779
        %812 = vmatprep.subr.mxu0 0.0
        %813 = vmatpush1.msra.mxu0 0.0
        %814 = vmatprep.subr.mxu0 0.0
        %815 = vmatpush1.msra.mxu0 0.0
        %816 = vmatprep.subr.mxu0 0.0
        %817 = vmatpush1.msra.mxu0 0.0
        %818 = vmatprep.subr.mxu0 0.0
        %819 = vmatpush1.msra.mxu0 0.0
        %820 = vmatprep.subr.mxu0 0.0
        %821 = vmatpush1.msra.mxu0 0.0
        %822 = vmatprep.subr.mxu0 0.0
        %823 = vmatpush1.msra.mxu0 0.0
        %824 = vmatprep.subr.mxu0 0.0
        %825 = vmatpush1.msra.mxu0 0.0
        %826 = vmatprep.subr.mxu0 0.0
        %827 = vmatpush1.msra.mxu0 0.0
        %828 = vmatprep.subr.mxu0 0.0
        %829 = vmatpush1.msra.mxu0 0.0
        %830 = vmatprep.subr.mxu0 0.0
        %831 = vmatpush1.msra.mxu0 0.0
        %832 = vmatprep.subr.mxu0 0.0
        %833 = vmatpush1.msra.mxu0 0.0
        %834 = vmatprep.subr.mxu0 0.0
        %835 = vmatpush1.msra.mxu0 0.0
        %836 = vmatprep.subr.mxu0 0.0
        %837 = vmatpush1.msra.mxu0 0.0
        %838 = vmatprep.subr.mxu0 0.0
        %839 = vmatpush1.msra.mxu0 0.0
        %840 = vmatprep.subr.mxu0 0.0
        %841 = vmatpush1.msra.mxu0 0.0
        %842 = vmatprep.subr.mxu0 0.0
        %843 = vmatpush1.msra.mxu0 0.0
        %844 = vmatprep.mubr.f32.mxu0 0.0
        %845 = vmatmul.mubr.f32.gmra.mrb[0].mxu0 %v508
        %v846 = vpop.f32.mrb[0].mxu0
        %v847 = vadd.f32 0.0, %v846
        %v848 = vpop.f32.mrb[0].mxu0
        %849 = vmatprep.mubr.f32.mxu0 0.0
        %850 = vmatmul.mubr.f32.gmra.mrb[0].mxu0 %v509
        %v851 = vpop.f32.mrb[0].mxu0
        %v852 = vadd.f32 0.0, %v851
        %v853 = vpop.f32.mrb[0].mxu0
        %854 = vmatprep.mubr.f32.mxu0 0.0
        %855 = vmatmul.mubr.f32.gmra.mrb[0].mxu0 %v510
        %v856 = vpop.f32.mrb[0].mxu0
        %v857 = vadd.f32 0.0, %v856
        %v858 = vpop.f32.mrb[0].mxu0
        %859 = vmatprep.mubr.f32.mxu0 0.0
        %860 = vmatmul.mubr.f32.gmra.mrb[0].mxu0 %v511
        %v861 = vpop.f32.mrb[0].mxu0
        %v862 = vadd.f32 0.0, %v861
        %v863 = vpop.f32.mrb[0].mxu0
        %864 = vmatprep.mubr.f32.mxu0 0.0
        %865 = vmatmul.mubr.f32.gmra.mrb[0].mxu0 %v512
        %v866 = vpop.f32.mrb[0].mxu0
        %v867 = vadd.f32 0.0, %v866
        %v868 = vpop.f32.mrb[0].mxu0
        %869 = vmatprep.mubr.f32.mxu0 0.0
        %870 = vmatmul.mubr.f32.gmra.mrb[0].mxu0 %v513
        %v871 = vpop.f32.mrb[0].mxu0
        %v872 = vadd.f32 0.0, %v871
        %v873 = vpop.f32.mrb[0].mxu0
        %874 = vmatprep.mubr.f32.mxu0 0.0
        %875 = vmatmul.mubr.f32.gmra.mrb[0].mxu0 %v514
        %v876 = vpop.f32.mrb[0].mxu0
        %v877 = vadd.f32 0.0, %v876
        %v878 = vpop.f32.mrb[0].mxu0
        %879 = vmatprep.mubr.f32.mxu0 0.0
        %880 = vmatmul.mubr.f32.gmra.mrb[0].mxu0 %v515
        %v881 = vpop.f32.mrb[0].mxu0
        %v882 = vadd.f32 0.0, %v881
        %v883 = vpop.f32.mrb[0].mxu0
        %884 = vmatprep.mubr.f32.mxu0 0.0
        %885 = vmatmul.mubr.f32.gmra.mrb[0].mxu0 %v516
        %v886 = vpop.f32.mrb[0].mxu0
        %v887 = vadd.f32 0.0, %v886
        %v888 = vpop.f32.mrb[0].mxu0
        %889 = vmatprep.mubr.f32.mxu0 0.0
        %890 = vmatmul.mubr.f32.gmra.mrb[0].mxu0 %v517
        %v891 = vpop.f32.mrb[0].mxu0
        %v892 = vadd.f32 0.0, %v891
        %v893 = vpop.f32.mrb[0].mxu0
        %894 = vmatprep.mubr.f32.mxu0 0.0
        %895 = vmatmul.mubr.f32.gmra.mrb[0].mxu0 %v518
        %v896 = vpop.f32.mrb[0].mxu0
        %v897 = vadd.f32 0.0, %v896
        %v898 = vpop.f32.mrb[0].mxu0
        %899 = vmatprep.mubr.f32.mxu0 0.0
        %900 = vmatmul.mubr.f32.gmra.mrb[0].mxu0 %v519
        %v901 = vpop.f32.mrb[0].mxu0
        %v902 = vadd.f32 0.0, %v901
        %v903 = vpop.f32.mrb[0].mxu0
        %904 = vmatprep.mubr.f32.mxu0 0.0
        %905 = vmatmul.mubr.f32.gmra.mrb[0].mxu0 %v520
        %v906 = vpop.f32.mrb[0].mxu0
        %v907 = vadd.f32 0.0, %v906
        %v908 = vpop.f32.mrb[0].mxu0
        %909 = vmatprep.mubr.f32.mxu0 0.0
        %910 = vmatmul.mubr.f32.gmra.mrb[0].mxu0 %v521
        %v911 = vpop.f32.mrb[0].mxu0
        %v912 = vadd.f32 0.0, %v911
        %v913 = vpop.f32.mrb[0].mxu0
        %914 = vmatprep.mubr.f32.mxu0 0.0
        %915 = vmatmul.mubr.f32.gmra.mrb[0].mxu0 %v522
        %v916 = vpop.f32.mrb[0].mxu0
        %v917 = vadd.f32 0.0, %v916
        %v918 = vpop.f32.mrb[0].mxu0
        %919 = vmatprep.mubr.f32.mxu0 0.0
        %920 = vmatmul.mubr.f32.gmra.mrb[0].mxu0 %v523
        %v921 = vpop.f32.mrb[0].mxu0
        %v922 = vadd.f32 0.0, %v921
        %v923 = vpop.f32.mrb[0].mxu0
        %924 = vmatprep.mubr.f32.mxu0 0.0
        %925 = vmatmul.mubr.f32.gmra.mrb[0].mxu0 %v524
        %v926 = vpop.f32.mrb[0].mxu0
        %v927 = vadd.f32 0.0, %v926
        %v928 = vpop.f32.mrb[0].mxu0
        %929 = vmatprep.mubr.f32.mxu0 0.0
        %930 = vmatmul.mubr.f32.gmra.mrb[0].mxu0 %v525
        %v931 = vpop.f32.mrb[0].mxu0
        %v932 = vadd.f32 0.0, %v931
        %v933 = vpop.f32.mrb[0].mxu0
        %934 = vmatprep.mubr.f32.mxu0 0.0
        %935 = vmatmul.mubr.f32.gmra.mrb[0].mxu0 %v526
        %v936 = vpop.f32.mrb[0].mxu0
        %v937 = vadd.f32 0.0, %v936
        %v938 = vpop.f32.mrb[0].mxu0
        %939 = vmatprep.mubr.f32.mxu0 0.0
        %940 = vmatmul.mubr.f32.gmra.mrb[0].mxu0 %v527
        %v941 = vpop.f32.mrb[0].mxu0
        %v942 = vadd.f32 0.0, %v941
        %v943 = vpop.f32.mrb[0].mxu0
        %944 = vmatprep.mubr.f32.mxu0 0.0
        %945 = vmatmul.mubr.f32.gmra.mrb[0].mxu0 %v528
        %v946 = vpop.f32.mrb[0].mxu0
        %v947 = vadd.f32 0.0, %v946
        %v948 = vpop.f32.mrb[0].mxu0
        %949 = vmatprep.mubr.f32.mxu0 0.0
        %950 = vmatmul.mubr.f32.gmra.mrb[0].mxu0 %v529
        %v951 = vpop.f32.mrb[0].mxu0
        %v952 = vadd.f32 0.0, %v951
        %v953 = vpop.f32.mrb[0].mxu0
        %954 = vmatprep.mubr.f32.mxu0 0.0
        %955 = vmatmul.mubr.f32.gmra.mrb[0].mxu0 %v530
        %v956 = vpop.f32.mrb[0].mxu0
        %v957 = vadd.f32 0.0, %v956
        %v958 = vpop.f32.mrb[0].mxu0
        %959 = vmatprep.mubr.f32.mxu0 0.0
        %960 = vmatmul.mubr.f32.gmra.mrb[0].mxu0 %v531
        %v961 = vpop.f32.mrb[0].mxu0
        %v962 = vadd.f32 0.0, %v961
        %v963 = vpop.f32.mrb[0].mxu0
        %964 = vmatprep.mubr.f32.mxu0 0.0
        %965 = vmatmul.mubr.f32.gmra.mrb[0].mxu0 %v532
        %v966 = vpop.f32.mrb[0].mxu0
        %v967 = vadd.f32 0.0, %v966
        %v968 = vpop.f32.mrb[0].mxu0
        %969 = vmatprep.mubr.f32.mxu0 0.0
        %970 = vmatmul.mubr.f32.gmra.mrb[0].mxu0 %v533
        %v971 = vpop.f32.mrb[0].mxu0
        %v972 = vadd.f32 0.0, %v971
        %v973 = vpop.f32.mrb[0].mxu0
        %974 = vmatprep.mubr.f32.mxu0 0.0
        %975 = vmatmul.mubr.f32.gmra.mrb[0].mxu0 %v534
        %v976 = vpop.f32.mrb[0].mxu0
        %v977 = vadd.f32 0.0, %v976
        %v978 = vpop.f32.mrb[0].mxu0
        %979 = vmatprep.mubr.f32.mxu0 0.0
        %980 = vmatmul.mubr.f32.gmra.mrb[0].mxu0 %v535
        %v981 = vpop.f32.mrb[0].mxu0
        %v982 = vadd.f32 0.0, %v981
        %v983 = vpop.f32.mrb[0].mxu0
        %984 = vmatprep.mubr.f32.mxu0 0.0
        %985 = vmatmul.mubr.f32.gmra.mrb[0].mxu0 %v536
        %v986 = vpop.f32.mrb[0].mxu0
        %v987 = vadd.f32 0.0, %v986
        %v988 = vpop.f32.mrb[0].mxu0
        %989 = vmatprep.mubr.f32.mxu0 0.0
        %990 = vmatmul.mubr.f32.gmra.mrb[0].mxu0 %v537
        %v991 = vpop.f32.mrb[0].mxu0
        %v992 = vadd.f32 0.0, %v991
        %v993 = vpop.f32.mrb[0].mxu0
        %994 = vmatprep.mubr.f32.mxu0 0.0
        %995 = vmatmul.mubr.f32.gmra.mrb[0].mxu0 %v538
        %v996 = vpop.f32.mrb[0].mxu0
        %v997 = vadd.f32 0.0, %v996
        %v998 = vpop.f32.mrb[0].mxu0
        %999 = vmatprep.mubr.f32.mxu0 0.0
        %1000 = vmatmul.mubr.f32.gmra.mrb[0].mxu0 %v539
        %v1001 = vpop.f32.mrb[0].mxu0
        %v1002 = vadd.f32 0.0, %v1001
        %v1003 = vpop.f32.mrb[0].mxu0
        %1004 = vmatprep.mubr.f32.mxu0 0.0
        %1005 = vmatmul.mubr.f32.gmra.mrb[0].mxu0 %v540
        %v1006 = vpop.f32.mrb[0].mxu0
        %v1007 = vadd.f32 0.0, %v1006
        %v1008 = vpop.f32.mrb[0].mxu0
        %1009 = vmatprep.mubr.f32.mxu0 0.0
        %1010 = vmatmul.mubr.f32.gmra.mrb[0].mxu0 %v541
        %v1011 = vpop.f32.mrb[0].mxu0
        %v1012 = vadd.f32 0.0, %v1011
        %v1013 = vpop.f32.mrb[0].mxu0
        %1014 = vmatprep.mubr.f32.mxu0 0.0
        %1015 = vmatmul.mubr.f32.gmra.mrb[0].mxu0 %v542
        %v1016 = vpop.f32.mrb[0].mxu0
        %v1017 = vadd.f32 0.0, %v1016
        %v1018 = vpop.f32.mrb[0].mxu0
        %1019 = vmatprep.mubr.f32.mxu0 0.0
        %1020 = vmatmul.mubr.f32.gmra.mrb[0].mxu0 %v543
        %v1021 = vpop.f32.mrb[0].mxu0
        %v1022 = vadd.f32 0.0, %v1021
        %v1023 = vpop.f32.mrb[0].mxu0
        %1024 = vmatprep.mubr.f32.mxu0 0.0
        %1025 = vmatmul.mubr.f32.gmra.mrb[0].mxu0 %v544
        %v1026 = vpop.f32.mrb[0].mxu0
        %v1027 = vadd.f32 0.0, %v1026
        %v1028 = vpop.f32.mrb[0].mxu0
        %1029 = vmatprep.mubr.f32.mxu0 0.0
        %1030 = vmatmul.mubr.f32.gmra.mrb[0].mxu0 %v545
        %v1031 = vpop.f32.mrb[0].mxu0
        %v1032 = vadd.f32 0.0, %v1031
        %v1033 = vpop.f32.mrb[0].mxu0
        %1034 = vmatprep.mubr.f32.mxu0 0.0
        %1035 = vmatmul.mubr.f32.gmra.mrb[0].mxu0 %v546
        %v1036 = vpop.f32.mrb[0].mxu0
        %v1037 = vadd.f32 0.0, %v1036
        %v1038 = vpop.f32.mrb[0].mxu0
        %1039 = vmatprep.mubr.f32.mxu0 0.0
        %1040 = vmatmul.mubr.f32.gmra.mrb[0].mxu0 %v547
        %v1041 = vpop.f32.mrb[0].mxu0
        %v1042 = vadd.f32 0.0, %v1041
        %v1043 = vpop.f32.mrb[0].mxu0
        %1044 = vmatprep.mubr.f32.mxu0 0.0
        %1045 = vmatmul.mubr.f32.gmra.mrb[0].mxu0 %v548
        %v1046 = vpop.f32.mrb[0].mxu0
        %v1047 = vadd.f32 0.0, %v1046
        %v1048 = vpop.f32.mrb[0].mxu0
        %1049 = vmatprep.mubr.f32.mxu0 0.0
        %1050 = vmatmul.mubr.f32.gmra.mrb[0].mxu0 %v549
        %v1051 = vpop.f32.mrb[0].mxu0
        %v1052 = vadd.f32 0.0, %v1051
        %v1053 = vpop.f32.mrb[0].mxu0
        %1054 = vmatprep.mubr.f32.mxu0 0.0
        %1055 = vmatmul.mubr.f32.gmra.mrb[0].mxu0 %v550
        %v1056 = vpop.f32.mrb[0].mxu0
        %v1057 = vadd.f32 0.0, %v1056
        %v1058 = vpop.f32.mrb[0].mxu0
        %1059 = vmatprep.mubr.f32.mxu0 0.0
        %1060 = vmatmul.mubr.f32.gmra.mrb[0].mxu0 %v551
        %v1061 = vpop.f32.mrb[0].mxu0
        %v1062 = vadd.f32 0.0, %v1061
        %v1063 = vpop.f32.mrb[0].mxu0
        %1064 = vmatprep.mubr.f32.mxu0 0.0
        %1065 = vmatmul.mubr.f32.gmra.mrb[0].mxu0 %v552
        %v1066 = vpop.f32.mrb[0].mxu0
        %v1067 = vadd.f32 0.0, %v1066
        %v1068 = vpop.f32.mrb[0].mxu0
        %1069 = vmatprep.mubr.f32.mxu0 0.0
        %1070 = vmatmul.mubr.f32.gmra.mrb[0].mxu0 %v553
        %v1071 = vpop.f32.mrb[0].mxu0
        %v1072 = vadd.f32 0.0, %v1071
        %v1073 = vpop.f32.mrb[0].mxu0
        %1074 = vmatprep.mubr.f32.mxu0 0.0
        %1075 = vmatmul.mubr.f32.gmra.mrb[0].mxu0 %v554
        %v1076 = vpop.f32.mrb[0].mxu0
        %v1077 = vadd.f32 0.0, %v1076
        %v1078 = vpop.f32.mrb[0].mxu0
        %1079 = vmatprep.mubr.f32.mxu0 0.0
        %1080 = vmatmul.mubr.f32.gmra.mrb[0].mxu0 %v555
        %v1081 = vpop.f32.mrb[0].mxu0
        %v1082 = vadd.f32 0.0, %v1081
        %v1083 = vpop.f32.mrb[0].mxu0
        %1084 = vmatprep.mubr.f32.mxu0 0.0
        %1085 = vmatmul.mubr.f32.gmra.mrb[0].mxu0 %v556
        %v1086 = vpop.f32.mrb[0].mxu0
        %v1087 = vadd.f32 0.0, %v1086
        %v1088 = vpop.f32.mrb[0].mxu0
        %1089 = vmatprep.mubr.f32.mxu0 0.0
        %1090 = vmatmul.mubr.f32.gmra.mrb[0].mxu0 %v557
        %v1091 = vpop.f32.mrb[0].mxu0
        %v1092 = vadd.f32 0.0, %v1091
        %v1093 = vpop.f32.mrb[0].mxu0
        %1094 = vmatprep.mubr.f32.mxu0 0.0
        %1095 = vmatmul.mubr.f32.gmra.mrb[0].mxu0 %v558
        %v1096 = vpop.f32.mrb[0].mxu0
        %v1097 = vadd.f32 0.0, %v1096
        %v1098 = vpop.f32.mrb[0].mxu0
        %1099 = vmatprep.mubr.f32.mxu0 0.0
        %1100 = vmatmul.mubr.f32.gmra.mrb[0].mxu0 %v559
        %v1101 = vpop.f32.mrb[0].mxu0
        %v1102 = vadd.f32 0.0, %v1101
        %v1103 = vpop.f32.mrb[0].mxu0
        %1104 = vmatprep.mubr.f32.mxu0 0.0
        %1105 = vmatmul.mubr.f32.gmra.mrb[0].mxu0 %v560
        %v1106 = vpop.f32.mrb[0].mxu0
        %v1107 = vadd.f32 0.0, %v1106
        %v1108 = vpop.f32.mrb[0].mxu0
        %1109 = vmatprep.mubr.f32.mxu0 0.0
        %1110 = vmatmul.mubr.f32.gmra.mrb[0].mxu0 %v561
        %v1111 = vpop.f32.mrb[0].mxu0
        %v1112 = vadd.f32 0.0, %v1111
        %v1113 = vpop.f32.mrb[0].mxu0
        %1114 = vmatprep.mubr.f32.mxu0 0.0
        %1115 = vmatmul.mubr.f32.gmra.mrb[0].mxu0 %v562
        %v1116 = vpop.f32.mrb[0].mxu0
        %v1117 = vadd.f32 0.0, %v1116
        %v1118 = vpop.f32.mrb[0].mxu0
        %1119 = vmatprep.mubr.f32.mxu0 0.0
        %1120 = vmatmul.mubr.f32.gmra.mrb[0].mxu0 %v563
        %v1121 = vpop.f32.mrb[0].mxu0
        %v1122 = vadd.f32 0.0, %v1121
        %v1123 = vpop.f32.mrb[0].mxu0
        %1124 = vmatprep.mubr.f32.mxu0 0.0
        %1125 = vmatmul.mubr.f32.gmra.mrb[0].mxu0 %v564
        %v1126 = vpop.f32.mrb[0].mxu0
        %v1127 = vadd.f32 0.0, %v1126
        %v1128 = vpop.f32.mrb[0].mxu0
        %1129 = vmatprep.mubr.f32.mxu0 0.0
        %1130 = vmatmul.mubr.f32.gmra.mrb[0].mxu0 %v565
        %v1131 = vpop.f32.mrb[0].mxu0
        %v1132 = vadd.f32 0.0, %v1131
        %v1133 = vpop.f32.mrb[0].mxu0
        %1134 = vmatprep.mubr.f32.mxu0 0.0
        %1135 = vmatmul.mubr.f32.gmra.mrb[0].mxu0 %v566
        %v1136 = vpop.f32.mrb[0].mxu0
        %v1137 = vadd.f32 0.0, %v1136
        %v1138 = vpop.f32.mrb[0].mxu0
        %1139 = vmatprep.mubr.f32.mxu0 0.0
        %1140 = vmatmul.mubr.f32.gmra.mrb[0].mxu0 %v567
        %v1141 = vpop.f32.mrb[0].mxu0
        %v1142 = vadd.f32 0.0, %v1141
        %v1143 = vpop.f32.mrb[0].mxu0
        %1144 = vmatprep.mubr.f32.mxu0 0.0
        %1145 = vmatmul.mubr.f32.gmra.mrb[0].mxu0 %v568
        %v1146 = vpop.f32.mrb[0].mxu0
        %v1147 = vadd.f32 0.0, %v1146
        %v1148 = vpop.f32.mrb[0].mxu0
        %1149 = vmatprep.mubr.f32.mxu0 0.0
        %1150 = vmatmul.mubr.f32.gmra.mrb[0].mxu0 %v569
        %v1151 = vpop.f32.mrb[0].mxu0
        %v1152 = vadd.f32 0.0, %v1151
        %v1153 = vpop.f32.mrb[0].mxu0
        %1154 = vmatprep.mubr.f32.mxu0 0.0
        %1155 = vmatmul.mubr.f32.gmra.mrb[0].mxu0 %v570
        %v1156 = vpop.f32.mrb[0].mxu0
        %v1157 = vadd.f32 0.0, %v1156
        %v1158 = vpop.f32.mrb[0].mxu0
        %1159 = vmatprep.mubr.f32.mxu0 0.0
        %1160 = vmatmul.mubr.f32.gmra.mrb[0].mxu0 %v571
        %v1161 = vpop.f32.mrb[0].mxu0
        %v1162 = vadd.f32 0.0, %v1161
        %v1163 = vpop.f32.mrb[0].mxu0
        %1164 = vmatprep.mubr.f32.mxu0 0.0
        %1165 = vmatmul.mubr.f32.gmra.mrb[0].mxu0 %v572
        %v1166 = vpop.f32.mrb[0].mxu0
        %v1167 = vadd.f32 0.0, %v1166
        %v1168 = vpop.f32.mrb[0].mxu0
        %1169 = vmatprep.mubr.f32.mxu0 0.0
        %1170 = vmatmul.mubr.f32.gmra.mrb[0].mxu0 %v573
        %v1171 = vpop.f32.mrb[0].mxu0
        %v1172 = vadd.f32 0.0, %v1171
        %v1173 = vpop.f32.mrb[0].mxu0
        %1174 = vmatprep.mubr.f32.mxu0 0.0
        %1175 = vmatmul.mubr.f32.gmra.mrb[0].mxu0 %v574
        %v1176 = vpop.f32.mrb[0].mxu0
        %v1177 = vadd.f32 0.0, %v1176
        %v1178 = vpop.f32.mrb[0].mxu0
        %1179 = vmatprep.mubr.f32.mxu0 0.0
        %1180 = vmatmul.mubr.f32.gmra.mrb[0].mxu0 %v575
        %v1181 = vpop.f32.mrb[0].mxu0
        %v1182 = vadd.f32 0.0, %v1181
        %v1183 = vpop.f32.mrb[0].mxu0
        %1184 = vmatprep.mubr.f32.mxu0 0.0
        %1185 = vmatmul.mubr.f32.gmra.mrb[0].mxu0 %v576
        %v1186 = vpop.f32.mrb[0].mxu0
        %v1187 = vadd.f32 0.0, %v1186
        %v1188 = vpop.f32.mrb[0].mxu0
        %1189 = vmatprep.mubr.f32.mxu0 0.0
        %1190 = vmatmul.mubr.f32.gmra.mrb[0].mxu0 %v577
        %v1191 = vpop.f32.mrb[0].mxu0
        %v1192 = vadd.f32 0.0, %v1191
        %v1193 = vpop.f32.mrb[0].mxu0
        %1194 = vmatprep.mubr.f32.mxu0 0.0
        %1195 = vmatmul.mubr.f32.gmra.mrb[0].mxu0 %v578
        %v1196 = vpop.f32.mrb[0].mxu0
        %v1197 = vadd.f32 0.0, %v1196
        %v1198 = vpop.f32.mrb[0].mxu0
        %1199 = vmatprep.mubr.f32.mxu0 0.0
        %1200 = vmatmul.mubr.f32.gmra.mrb[0].mxu0 %v579
        %v1201 = vpop.f32.mrb[0].mxu0
        %v1202 = vadd.f32 0.0, %v1201
        %v1203 = vpop.f32.mrb[0].mxu0
        %1204 = vmatprep.mubr.f32.mxu0 0.0
        %1205 = vmatmul.mubr.f32.gmra.mrb[0].mxu0 %v580
        %v1206 = vpop.f32.mrb[0].mxu0
        %v1207 = vadd.f32 0.0, %v1206
        %v1208 = vpop.f32.mrb[0].mxu0
        %1209 = vmatprep.mubr.f32.mxu0 0.0
        %1210 = vmatmul.mubr.f32.gmra.mrb[0].mxu0 %v581
        %v1211 = vpop.f32.mrb[0].mxu0
        %v1212 = vadd.f32 0.0, %v1211
        %v1213 = vpop.f32.mrb[0].mxu0
        %1214 = vmatprep.mubr.f32.mxu0 0.0
        %1215 = vmatmul.mubr.f32.gmra.mrb[0].mxu0 %v582
        %v1216 = vpop.f32.mrb[0].mxu0
        %v1217 = vadd.f32 0.0, %v1216
        %v1218 = vpop.f32.mrb[0].mxu0
        %1219 = vmatprep.mubr.f32.mxu0 0.0
        %1220 = vmatmul.mubr.f32.gmra.mrb[0].mxu0 %v583
        %v1221 = vpop.f32.mrb[0].mxu0
        %v1222 = vadd.f32 0.0, %v1221
        %v1223 = vpop.f32.mrb[0].mxu0
        %1224 = vmatprep.mubr.f32.mxu0 0.0
        %1225 = vmatmul.mubr.f32.gmra.mrb[0].mxu0 %v584
        %v1226 = vpop.f32.mrb[0].mxu0
        %v1227 = vadd.f32 0.0, %v1226
        %v1228 = vpop.f32.mrb[0].mxu0
        %1229 = vmatprep.mubr.f32.mxu0 0.0
        %1230 = vmatmul.mubr.f32.gmra.mrb[0].mxu0 %v585
        %v1231 = vpop.f32.mrb[0].mxu0
        %v1232 = vadd.f32 0.0, %v1231
        %v1233 = vpop.f32.mrb[0].mxu0
        %1234 = vmatprep.mubr.f32.mxu0 0.0
        %1235 = vmatmul.mubr.f32.gmra.mrb[0].mxu0 %v586
        %v1236 = vpop.f32.mrb[0].mxu0
        %v1237 = vadd.f32 0.0, %v1236
        %v1238 = vpop.f32.mrb[0].mxu0
        %1239 = vmatprep.mubr.f32.mxu0 0.0
        %1240 = vmatmul.mubr.f32.gmra.mrb[0].mxu0 %v587
        %v1241 = vpop.f32.mrb[0].mxu0
        %v1242 = vadd.f32 0.0, %v1241
        %v1243 = vpop.f32.mrb[0].mxu0
        %1244 = vmatprep.mubr.f32.mxu0 0.0
        %1245 = vmatmul.mubr.f32.gmra.mrb[0].mxu0 %v588
        %v1246 = vpop.f32.mrb[0].mxu0
        %v1247 = vadd.f32 0.0, %v1246
        %v1248 = vpop.f32.mrb[0].mxu0
        %1249 = vmatprep.mubr.f32.mxu0 0.0
        %1250 = vmatmul.mubr.f32.gmra.mrb[0].mxu0 %v589
        %v1251 = vpop.f32.mrb[0].mxu0
        %v1252 = vadd.f32 0.0, %v1251
        %v1253 = vpop.f32.mrb[0].mxu0
        %1254 = vmatprep.mubr.f32.mxu0 0.0
        %1255 = vmatmul.mubr.f32.gmra.mrb[0].mxu0 %v590
        %v1256 = vpop.f32.mrb[0].mxu0
        %v1257 = vadd.f32 0.0, %v1256
        %v1258 = vpop.f32.mrb[0].mxu0
        %1259 = vmatprep.mubr.f32.mxu0 0.0
        %1260 = vmatmul.mubr.f32.gmra.mrb[0].mxu0 %v591
        %v1261 = vpop.f32.mrb[0].mxu0
        %v1262 = vadd.f32 0.0, %v1261
        %v1263 = vpop.f32.mrb[0].mxu0
        %1264 = vmatprep.mubr.f32.mxu0 0.0
        %1265 = vmatmul.mubr.f32.gmra.mrb[0].mxu0 %v592
        %v1266 = vpop.f32.mrb[0].mxu0
        %v1267 = vadd.f32 0.0, %v1266
        %v1268 = vpop.f32.mrb[0].mxu0
        %1269 = vmatprep.mubr.f32.mxu0 0.0
        %1270 = vmatmul.mubr.f32.gmra.mrb[0].mxu0 %v593
        %v1271 = vpop.f32.mrb[0].mxu0
        %v1272 = vadd.f32 0.0, %v1271
        %v1273 = vpop.f32.mrb[0].mxu0
        %1274 = vmatprep.mubr.f32.mxu0 0.0
        %1275 = vmatmul.mubr.f32.gmra.mrb[0].mxu0 %v594
        %v1276 = vpop.f32.mrb[0].mxu0
        %v1277 = vadd.f32 0.0, %v1276
        %v1278 = vpop.f32.mrb[0].mxu0
        %1279 = vmatprep.mubr.f32.mxu0 0.0
        %1280 = vmatmul.mubr.f32.gmra.mrb[0].mxu0 %v595
        %v1281 = vpop.f32.mrb[0].mxu0
        %v1282 = vadd.f32 0.0, %v1281
        %v1283 = vpop.f32.mrb[0].mxu0
        %1284 = vmatprep.mubr.f32.mxu0 0.0
        %1285 = vmatmul.mubr.f32.gmra.mrb[0].mxu0 %v596
        %v1286 = vpop.f32.mrb[0].mxu0
        %v1287 = vadd.f32 0.0, %v1286
        %v1288 = vpop.f32.mrb[0].mxu0
        %1289 = vmatprep.mubr.f32.mxu0 0.0
        %1290 = vmatmul.mubr.f32.gmra.mrb[0].mxu0 %v597
        %v1291 = vpop.f32.mrb[0].mxu0
        %v1292 = vadd.f32 0.0, %v1291
        %v1293 = vpop.f32.mrb[0].mxu0
        %1294 = vmatprep.mubr.f32.mxu0 0.0
        %1295 = vmatmul.mubr.f32.gmra.mrb[0].mxu0 %v598
        %v1296 = vpop.f32.mrb[0].mxu0
        %v1297 = vadd.f32 0.0, %v1296
        %v1298 = vpop.f32.mrb[0].mxu0
        %1299 = vmatprep.mubr.f32.mxu0 0.0
        %1300 = vmatmul.mubr.f32.gmra.mrb[0].mxu0 %v599
        %v1301 = vpop.f32.mrb[0].mxu0
        %v1302 = vadd.f32 0.0, %v1301
        %v1303 = vpop.f32.mrb[0].mxu0
        %1304 = vmatprep.mubr.f32.mxu0 0.0
        %1305 = vmatmul.mubr.f32.gmra.mrb[0].mxu0 %v600
        %v1306 = vpop.f32.mrb[0].mxu0
        %v1307 = vadd.f32 0.0, %v1306
        %v1308 = vpop.f32.mrb[0].mxu0
        %1309 = vmatprep.mubr.f32.mxu0 0.0
        %1310 = vmatmul.mubr.f32.gmra.mrb[0].mxu0 %v601
        %v1311 = vpop.f32.mrb[0].mxu0
        %v1312 = vadd.f32 0.0, %v1311
        %v1313 = vpop.f32.mrb[0].mxu0
        %1314 = vmatprep.mubr.f32.mxu0 0.0
        %1315 = vmatmul.mubr.f32.gmra.mrb[0].mxu0 %v602
        %v1316 = vpop.f32.mrb[0].mxu0
        %v1317 = vadd.f32 0.0, %v1316
        %v1318 = vpop.f32.mrb[0].mxu0
        %1319 = vmatprep.mubr.f32.mxu0 0.0
        %1320 = vmatmul.mubr.f32.gmra.mrb[0].mxu0 %v603
        %v1321 = vpop.f32.mrb[0].mxu0
        %v1322 = vadd.f32 0.0, %v1321
        %v1323 = vpop.f32.mrb[0].mxu0
        %1324 = vmatprep.mubr.f32.mxu0 0.0
        %1325 = vmatmul.mubr.f32.gmra.mrb[0].mxu0 %v604
        %v1326 = vpop.f32.mrb[0].mxu0
        %v1327 = vadd.f32 0.0, %v1326
        %v1328 = vpop.f32.mrb[0].mxu0
        %1329 = vmatprep.mubr.f32.mxu0 0.0
        %1330 = vmatmul.mubr.f32.gmra.mrb[0].mxu0 %v605
        %v1331 = vpop.f32.mrb[0].mxu0
        %v1332 = vadd.f32 0.0, %v1331
        %v1333 = vpop.f32.mrb[0].mxu0
        %1334 = vmatprep.mubr.f32.mxu0 0.0
        %1335 = vmatmul.mubr.f32.gmra.mrb[0].mxu0 %v606
        %v1336 = vpop.f32.mrb[0].mxu0
        %v1337 = vadd.f32 0.0, %v1336
        %v1338 = vpop.f32.mrb[0].mxu0
        %1339 = vmatprep.mubr.f32.mxu0 0.0
        %1340 = vmatmul.mubr.f32.gmra.mrb[0].mxu0 %v607
        %v1341 = vpop.f32.mrb[0].mxu0
        %v1342 = vadd.f32 0.0, %v1341
        %v1343 = vpop.f32.mrb[0].mxu0
        %1344 = vmatprep.mubr.f32.mxu0 0.0
        %1345 = vmatmul.mubr.f32.gmra.mrb[0].mxu0 %v608
        %v1346 = vpop.f32.mrb[0].mxu0
        %v1347 = vadd.f32 0.0, %v1346
        %v1348 = vpop.f32.mrb[0].mxu0
        %1349 = vmatprep.mubr.f32.mxu0 0.0
        %1350 = vmatmul.mubr.f32.gmra.mrb[0].mxu0 %v609
        %v1351 = vpop.f32.mrb[0].mxu0
        %v1352 = vadd.f32 0.0, %v1351
        %v1353 = vpop.f32.mrb[0].mxu0
        %1354 = vmatprep.mubr.f32.mxu0 0.0
        %1355 = vmatmul.mubr.f32.gmra.mrb[0].mxu0 %v610
        %v1356 = vpop.f32.mrb[0].mxu0
        %v1357 = vadd.f32 0.0, %v1356
        %v1358 = vpop.f32.mrb[0].mxu0
        %1359 = vmatprep.mubr.f32.mxu0 0.0
        %1360 = vmatmul.mubr.f32.gmra.mrb[0].mxu0 %v611
        %v1361 = vpop.f32.mrb[0].mxu0
        %v1362 = vadd.f32 0.0, %v1361
        %v1363 = vpop.f32.mrb[0].mxu0
        %1364 = vmatprep.mubr.f32.mxu0 0.0
        %1365 = vmatmul.mubr.f32.gmra.mrb[0].mxu0 %v612
        %v1366 = vpop.f32.mrb[0].mxu0
        %v1367 = vadd.f32 0.0, %v1366
        %v1368 = vpop.f32.mrb[0].mxu0
        %1369 = vmatprep.mubr.f32.mxu0 0.0
        %1370 = vmatmul.mubr.f32.gmra.mrb[0].mxu0 %v613
        %v1371 = vpop.f32.mrb[0].mxu0
        %v1372 = vadd.f32 0.0, %v1371
        %v1373 = vpop.f32.mrb[0].mxu0
        %1374 = vmatprep.mubr.f32.mxu0 0.0
        %1375 = vmatmul.mubr.f32.gmra.mrb[0].mxu0 %v614
        %v1376 = vpop.f32.mrb[0].mxu0
        %v1377 = vadd.f32 0.0, %v1376
        %v1378 = vpop.f32.mrb[0].mxu0
        %1379 = vmatprep.mubr.f32.mxu0 0.0
        %1380 = vmatmul.mubr.f32.gmra.mrb[0].mxu0 %v615
        %v1381 = vpop.f32.mrb[0].mxu0
        %v1382 = vadd.f32 0.0, %v1381
        %v1383 = vpop.f32.mrb[0].mxu0
        %1384 = vmatprep.mubr.f32.mxu0 0.0
        %1385 = vmatmul.mubr.f32.gmra.mrb[0].mxu0 %v616
        %v1386 = vpop.f32.mrb[0].mxu0
        %v1387 = vadd.f32 0.0, %v1386
        %v1388 = vpop.f32.mrb[0].mxu0
        %1389 = vmatprep.mubr.f32.mxu0 0.0
        %1390 = vmatmul.mubr.f32.gmra.mrb[0].mxu0 %v617
        %v1391 = vpop.f32.mrb[0].mxu0
        %v1392 = vadd.f32 0.0, %v1391
        %v1393 = vpop.f32.mrb[0].mxu0
        %1394 = vmatprep.mubr.f32.mxu0 0.0
        %1395 = vmatmul.mubr.f32.gmra.mrb[0].mxu0 %v618
        %v1396 = vpop.f32.mrb[0].mxu0
        %v1397 = vadd.f32 0.0, %v1396
        %v1398 = vpop.f32.mrb[0].mxu0
        %1399 = vmatprep.mubr.f32.mxu0 0.0
        %1400 = vmatmul.mubr.f32.gmra.mrb[0].mxu0 %v619
        %v1401 = vpop.f32.mrb[0].mxu0
        %v1402 = vadd.f32 0.0, %v1401
        %v1403 = vpop.f32.mrb[0].mxu0
        %1404 = vmatprep.mubr.f32.mxu0 0.0
        %1405 = vmatmul.mubr.f32.gmra.mrb[0].mxu0 %v620
        %v1406 = vpop.f32.mrb[0].mxu0
        %v1407 = vadd.f32 0.0, %v1406
        %v1408 = vpop.f32.mrb[0].mxu0
        %1409 = vmatprep.mubr.f32.mxu0 0.0
        %1410 = vmatmul.mubr.f32.gmra.mrb[0].mxu0 %v621
        %v1411 = vpop.f32.mrb[0].mxu0
        %v1412 = vadd.f32 0.0, %v1411
        %v1413 = vpop.f32.mrb[0].mxu0
        %1414 = vmatprep.mubr.f32.mxu0 0.0
        %1415 = vmatmul.mubr.f32.gmra.mrb[0].mxu0 %v622
        %v1416 = vpop.f32.mrb[0].mxu0
        %v1417 = vadd.f32 0.0, %v1416
        %v1418 = vpop.f32.mrb[0].mxu0
        %1419 = vmatprep.mubr.f32.mxu0 0.0
        %1420 = vmatmul.mubr.f32.gmra.mrb[0].mxu0 %v623
        %v1421 = vpop.f32.mrb[0].mxu0
        %v1422 = vadd.f32 0.0, %v1421
        %v1423 = vpop.f32.mrb[0].mxu0
        %1424 = vmatprep.mubr.f32.mxu0 0.0
        %1425 = vmatmul.mubr.f32.gmra.mrb[0].mxu0 %v624
        %v1426 = vpop.f32.mrb[0].mxu0
        %v1427 = vadd.f32 0.0, %v1426
        %v1428 = vpop.f32.mrb[0].mxu0
        %1429 = vmatprep.mubr.f32.mxu0 0.0
        %1430 = vmatmul.mubr.f32.gmra.mrb[0].mxu0 %v625
        %v1431 = vpop.f32.mrb[0].mxu0
        %v1432 = vadd.f32 0.0, %v1431
        %v1433 = vpop.f32.mrb[0].mxu0
        %1434 = vmatprep.mubr.f32.mxu0 0.0
        %1435 = vmatmul.mubr.f32.gmra.mrb[0].mxu0 %v626
        %v1436 = vpop.f32.mrb[0].mxu0
        %v1437 = vadd.f32 0.0, %v1436
        %v1438 = vpop.f32.mrb[0].mxu0
        %1439 = vmatprep.mubr.f32.mxu0 0.0
        %1440 = vmatmul.mubr.f32.gmra.mrb[0].mxu0 %v627
        %v1441 = vpop.f32.mrb[0].mxu0
        %v1442 = vadd.f32 0.0, %v1441
        %v1443 = vpop.f32.mrb[0].mxu0
        %1444 = vmatprep.mubr.f32.mxu0 0.0
        %1445 = vmatmul.mubr.f32.gmra.mrb[0].mxu0 %v628
        %v1446 = vpop.f32.mrb[0].mxu0
        %v1447 = vadd.f32 0.0, %v1446
        %v1448 = vpop.f32.mrb[0].mxu0
        %1449 = vmatprep.mubr.f32.mxu0 0.0
        %1450 = vmatmul.mubr.f32.gmra.mrb[0].mxu0 %v629
        %v1451 = vpop.f32.mrb[0].mxu0
        %v1452 = vadd.f32 0.0, %v1451
        %v1453 = vpop.f32.mrb[0].mxu0
        %1454 = vmatprep.mubr.f32.mxu0 0.0
        %1455 = vmatmul.mubr.f32.gmra.mrb[0].mxu0 %v630
        %v1456 = vpop.f32.mrb[0].mxu0
        %v1457 = vadd.f32 0.0, %v1456
        %v1458 = vpop.f32.mrb[0].mxu0
        %1459 = vmatprep.mubr.f32.mxu0 0.0
        %1460 = vmatmul.mubr.f32.gmra.mrb[0].mxu0 %v631
        %v1461 = vpop.f32.mrb[0].mxu0
        %v1462 = vadd.f32 0.0, %v1461
        %v1463 = vpop.f32.mrb[0].mxu0
        %1464 = vmatprep.mubr.f32.mxu0 0.0
        %1465 = vmatmul.mubr.f32.gmra.mrb[0].mxu0 %v632
        %v1466 = vpop.f32.mrb[0].mxu0
        %v1467 = vadd.f32 0.0, %v1466
        %v1468 = vpop.f32.mrb[0].mxu0
        %1469 = vmatprep.mubr.f32.mxu0 0.0
        %1470 = vmatmul.mubr.f32.gmra.mrb[0].mxu0 %v633
        %v1471 = vpop.f32.mrb[0].mxu0
        %v1472 = vadd.f32 0.0, %v1471
        %v1473 = vpop.f32.mrb[0].mxu0
        %1474 = vmatprep.mubr.f32.mxu0 0.0
        %1475 = vmatmul.mubr.f32.gmra.mrb[0].mxu0 %v634
        %v1476 = vpop.f32.mrb[0].mxu0
        %v1477 = vadd.f32 0.0, %v1476
        %v1478 = vpop.f32.mrb[0].mxu0
        %1479 = vmatprep.mubr.f32.mxu0 0.0
        %1480 = vmatmul.mubr.f32.gmra.mrb[0].mxu0 %v635
        %v1481 = vpop.f32.mrb[0].mxu0
        %v1482 = vadd.f32 0.0, %v1481
        %v1483 = vpop.f32.mrb[0].mxu0
        %1484 = vmatprep.mubr.f32.mxu0 0.0
        %1485 = vmatmul.mubr.f32.gmra.mrb[0].mxu0 %v636
        %v1486 = vpop.f32.mrb[0].mxu0
        %v1487 = vadd.f32 0.0, %v1486
        %v1488 = vpop.f32.mrb[0].mxu0
        %1489 = vmatprep.mubr.f32.mxu0 0.0
        %1490 = vmatmul.mubr.f32.gmra.mrb[0].mxu0 %v637
        %v1491 = vpop.f32.mrb[0].mxu0
        %v1492 = vadd.f32 0.0, %v1491
        %v1493 = vpop.f32.mrb[0].mxu0
        %1494 = vmatprep.mubr.f32.mxu0 0.0
        %1495 = vmatmul.mubr.f32.gmra.mrb[0].mxu0 %v638
        %v1496 = vpop.f32.mrb[0].mxu0
        %v1497 = vadd.f32 0.0, %v1496
        %v1498 = vpop.f32.mrb[0].mxu0
        %1499 = vmatprep.mubr.f32.mxu0 0.0
        %1500 = vmatmul.mubr.f32.gmra.mrb[0].mxu0 %v639
        %v1501 = vpop.f32.mrb[0].mxu0
        %v1502 = vadd.f32 0.0, %v1501
        %v1503 = vpop.f32.mrb[0].mxu0
        %1504 = vmatprep.mubr.f32.mxu0 0.0
        %1505 = vmatmul.mubr.f32.gmra.mrb[0].mxu0 %v640
        %v1506 = vpop.f32.mrb[0].mxu0
        %v1507 = vadd.f32 0.0, %v1506
        %v1508 = vpop.f32.mrb[0].mxu0
        %1509 = vmatprep.mubr.f32.mxu0 0.0
        %1510 = vmatmul.mubr.f32.gmra.mrb[0].mxu0 %v641
        %v1511 = vpop.f32.mrb[0].mxu0
        %v1512 = vadd.f32 0.0, %v1511
        %v1513 = vpop.f32.mrb[0].mxu0
        %1514 = vmatprep.mubr.f32.mxu0 0.0
        %1515 = vmatmul.mubr.f32.gmra.mrb[0].mxu0 %v642
        %v1516 = vpop.f32.mrb[0].mxu0
        %v1517 = vadd.f32 0.0, %v1516
        %v1518 = vpop.f32.mrb[0].mxu0
        %1519 = vmatprep.mubr.f32.mxu0 0.0
        %1520 = vmatmul.mubr.f32.gmra.mrb[0].mxu0 %v643
        %v1521 = vpop.f32.mrb[0].mxu0
        %v1522 = vadd.f32 0.0, %v1521
        %v1523 = vpop.f32.mrb[0].mxu0
        %1524 = vmatprep.mubr.f32.mxu0 0.0
        %1525 = vmatmul.mubr.f32.gmra.mrb[0].mxu0 %v644
        %v1526 = vpop.f32.mrb[0].mxu0
        %v1527 = vadd.f32 0.0, %v1526
        %v1528 = vpop.f32.mrb[0].mxu0
        %1529 = vmatprep.mubr.f32.mxu0 0.0
        %1530 = vmatmul.mubr.f32.gmra.mrb[0].mxu0 %v645
        %v1531 = vpop.f32.mrb[0].mxu0
        %v1532 = vadd.f32 0.0, %v1531
        %v1533 = vpop.f32.mrb[0].mxu0
        %1534 = vmatprep.mubr.f32.mxu0 0.0
        %1535 = vmatmul.mubr.f32.gmra.mrb[0].mxu0 %v646
        %v1536 = vpop.f32.mrb[0].mxu0
        %v1537 = vadd.f32 0.0, %v1536
        %v1538 = vpop.f32.mrb[0].mxu0
        %1539 = vmatprep.mubr.f32.mxu0 0.0
        %1540 = vmatmul.mubr.f32.gmra.mrb[0].mxu0 %v647
        %v1541 = vpop.f32.mrb[0].mxu0
        %v1542 = vadd.f32 0.0, %v1541
        %v1543 = vpop.f32.mrb[0].mxu0
        %1544 = vmatprep.mubr.f32.mxu0 0.0
        %1545 = vmatmul.mubr.f32.gmra.mrb[0].mxu0 %v648
        %v1546 = vpop.f32.mrb[0].mxu0
        %v1547 = vadd.f32 0.0, %v1546
        %v1548 = vpop.f32.mrb[0].mxu0
        %1549 = vmatprep.mubr.f32.mxu0 0.0
        %1550 = vmatmul.mubr.f32.gmra.mrb[0].mxu0 %v649
        %v1551 = vpop.f32.mrb[0].mxu0
        %v1552 = vadd.f32 0.0, %v1551
        %v1553 = vpop.f32.mrb[0].mxu0
        %1554 = vmatprep.mubr.f32.mxu0 0.0
        %1555 = vmatmul.mubr.f32.gmra.mrb[0].mxu0 %v650
        %v1556 = vpop.f32.mrb[0].mxu0
        %v1557 = vadd.f32 0.0, %v1556
        %v1558 = vpop.f32.mrb[0].mxu0
        %1559 = vmatprep.mubr.f32.mxu0 0.0
        %1560 = vmatmul.mubr.f32.gmra.mrb[0].mxu0 %v651
        %v1561 = vpop.f32.mrb[0].mxu0
        %v1562 = vadd.f32 0.0, %v1561
        %v1563 = vpop.f32.mrb[0].mxu0
        %1564 = vmatprep.mubr.f32.mxu0 0.0
        %1565 = vmatmul.mubr.f32.gmra.mrb[0].mxu0 %v652
        %v1566 = vpop.f32.mrb[0].mxu0
        %v1567 = vadd.f32 0.0, %v1566
        %v1568 = vpop.f32.mrb[0].mxu0
        %1569 = vmatprep.mubr.f32.mxu0 0.0
        %1570 = vmatmul.mubr.f32.gmra.mrb[0].mxu0 %v653
        %v1571 = vpop.f32.mrb[0].mxu0
        %v1572 = vadd.f32 0.0, %v1571
        %v1573 = vpop.f32.mrb[0].mxu0
        %1574 = vmatprep.mubr.f32.mxu0 0.0
        %1575 = vmatmul.mubr.f32.gmra.mrb[0].mxu0 %v654
        %v1576 = vpop.f32.mrb[0].mxu0
        %v1577 = vadd.f32 0.0, %v1576
        %v1578 = vpop.f32.mrb[0].mxu0
        %1579 = vmatprep.mubr.f32.mxu0 0.0
        %1580 = vmatmul.mubr.f32.gmra.mrb[0].mxu0 %v655
        %v1581 = vpop.f32.mrb[0].mxu0
        %v1582 = vadd.f32 0.0, %v1581
        %v1583 = vpop.f32.mrb[0].mxu0
        %1584 = vmatprep.mubr.f32.mxu0 0.0
        %1585 = vmatmul.mubr.f32.gmra.mrb[0].mxu0 %v656
        %v1586 = vpop.f32.mrb[0].mxu0
        %v1587 = vadd.f32 0.0, %v1586
        %v1588 = vpop.f32.mrb[0].mxu0
        %1589 = vmatprep.mubr.f32.mxu0 0.0
        %1590 = vmatmul.mubr.f32.gmra.mrb[0].mxu0 %v657
        %v1591 = vpop.f32.mrb[0].mxu0
        %v1592 = vadd.f32 0.0, %v1591
        %v1593 = vpop.f32.mrb[0].mxu0
        %1594 = vmatprep.mubr.f32.mxu0 0.0
        %1595 = vmatmul.mubr.f32.gmra.mrb[0].mxu0 %v658
        %v1596 = vpop.f32.mrb[0].mxu0
        %v1597 = vadd.f32 0.0, %v1596
        %v1598 = vpop.f32.mrb[0].mxu0
        %1599 = vmatprep.mubr.f32.mxu0 0.0
        %1600 = vmatmul.mubr.f32.gmra.mrb[0].mxu0 %v659
        %v1601 = vpop.f32.mrb[0].mxu0
        %v1602 = vadd.f32 0.0, %v1601
        %v1603 = vpop.f32.mrb[0].mxu0
        %1604 = vmatprep.mubr.f32.mxu0 0.0
        %1605 = vmatmul.mubr.f32.gmra.mrb[0].mxu0 %v660
        %v1606 = vpop.f32.mrb[0].mxu0
        %v1607 = vadd.f32 0.0, %v1606
        %v1608 = vpop.f32.mrb[0].mxu0
        %1609 = vmatprep.mubr.f32.mxu0 0.0
        %1610 = vmatmul.mubr.f32.gmra.mrb[0].mxu0 %v661
        %v1611 = vpop.f32.mrb[0].mxu0
        %v1612 = vadd.f32 0.0, %v1611
        %v1613 = vpop.f32.mrb[0].mxu0
        %1614 = vmatprep.mubr.f32.mxu0 0.0
        %1615 = vmatmul.mubr.f32.gmra.mrb[0].mxu0 %v662
        %v1616 = vpop.f32.mrb[0].mxu0
        %v1617 = vadd.f32 0.0, %v1616
        %v1618 = vpop.f32.mrb[0].mxu0
        %1619 = vmatprep.mubr.f32.mxu0 0.0
        %1620 = vmatmul.mubr.f32.gmra.mrb[0].mxu0 %v663
        %v1621 = vpop.f32.mrb[0].mxu0
        %v1622 = vadd.f32 0.0, %v1621
        %v1623 = vpop.f32.mrb[0].mxu0
        %1624 = vmatprep.mubr.f32.mxu0 0.0
        %1625 = vmatmul.mubr.f32.gmra.mrb[0].mxu0 %v664
        %v1626 = vpop.f32.mrb[0].mxu0
        %v1627 = vadd.f32 0.0, %v1626
        %v1628 = vpop.f32.mrb[0].mxu0
        %1629 = vmatprep.mubr.f32.mxu0 0.0
        %1630 = vmatmul.mubr.f32.gmra.mrb[0].mxu0 %v665
        %v1631 = vpop.f32.mrb[0].mxu0
        %v1632 = vadd.f32 0.0, %v1631
        %v1633 = vpop.f32.mrb[0].mxu0
        %1634 = vmatprep.mubr.f32.mxu0 0.0
        %1635 = vmatmul.mubr.f32.gmra.mrb[0].mxu0 %v666
        %v1636 = vpop.f32.mrb[0].mxu0
        %v1637 = vadd.f32 0.0, %v1636
        %v1638 = vpop.f32.mrb[0].mxu0
        %1639 = vmatprep.mubr.f32.mxu0 0.0
        %1640 = vmatmul.mubr.f32.gmra.mrb[0].mxu0 %v667
        %v1641 = vpop.f32.mrb[0].mxu0
        %v1642 = vadd.f32 0.0, %v1641
        %v1643 = vpop.f32.mrb[0].mxu0
        %1644 = vmatprep.mubr.f32.mxu0 0.0
        %1645 = vmatmul.mubr.f32.gmra.mrb[0].mxu0 %v668
        %v1646 = vpop.f32.mrb[0].mxu0
        %v1647 = vadd.f32 0.0, %v1646
        %v1648 = vpop.f32.mrb[0].mxu0
        %1649 = vmatprep.mubr.f32.mxu0 0.0
        %1650 = vmatmul.mubr.f32.gmra.mrb[0].mxu0 %v669
        %v1651 = vpop.f32.mrb[0].mxu0
        %v1652 = vadd.f32 0.0, %v1651
        %v1653 = vpop.f32.mrb[0].mxu0
        %1654 = vmatprep.mubr.f32.mxu0 0.0
        %1655 = vmatmul.mubr.f32.gmra.mrb[0].mxu0 %v670
        %v1656 = vpop.f32.mrb[0].mxu0
        %v1657 = vadd.f32 0.0, %v1656
        %v1658 = vpop.f32.mrb[0].mxu0
        %1659 = vmatprep.mubr.f32.mxu0 0.0
        %1660 = vmatmul.mubr.f32.gmra.mrb[0].mxu0 %v671
        %v1661 = vpop.f32.mrb[0].mxu0
        %v1662 = vadd.f32 0.0, %v1661
        %v1663 = vpop.f32.mrb[0].mxu0
        %1664 = vmatprep.mubr.f32.mxu0 0.0
        %1665 = vmatmul.mubr.f32.gmra.mrb[0].mxu0 %v672
        %v1666 = vpop.f32.mrb[0].mxu0
        %v1667 = vadd.f32 0.0, %v1666
        %v1668 = vpop.f32.mrb[0].mxu0
        %1669 = vmatprep.mubr.f32.mxu0 0.0
        %1670 = vmatmul.mubr.f32.gmra.mrb[0].mxu0 %v673
        %v1671 = vpop.f32.mrb[0].mxu0
        %v1672 = vadd.f32 0.0, %v1671
        %v1673 = vpop.f32.mrb[0].mxu0
        %1674 = vmatprep.mubr.f32.mxu0 0.0
        %1675 = vmatmul.mubr.f32.gmra.mrb[0].mxu0 %v674
        %v1676 = vpop.f32.mrb[0].mxu0
        %v1677 = vadd.f32 0.0, %v1676
        %v1678 = vpop.f32.mrb[0].mxu0
        %1679 = vmatprep.mubr.f32.mxu0 0.0
        %1680 = vmatmul.mubr.f32.gmra.mrb[0].mxu0 %v675
        %v1681 = vpop.f32.mrb[0].mxu0
        %v1682 = vadd.f32 0.0, %v1681
        %v1683 = vpop.f32.mrb[0].mxu0
        %1684 = vmatprep.mubr.f32.mxu0 0.0
        %1685 = vmatmul.mubr.f32.gmra.mrb[0].mxu0 %v676
        %v1686 = vpop.f32.mrb[0].mxu0
        %v1687 = vadd.f32 0.0, %v1686
        %v1688 = vpop.f32.mrb[0].mxu0
        %1689 = vmatprep.mubr.f32.mxu0 0.0
        %1690 = vmatmul.mubr.f32.gmra.mrb[0].mxu0 %v677
        %v1691 = vpop.f32.mrb[0].mxu0
        %v1692 = vadd.f32 0.0, %v1691
        %v1693 = vpop.f32.mrb[0].mxu0
        %1694 = vmatprep.mubr.f32.mxu0 0.0
        %1695 = vmatmul.mubr.f32.gmra.mrb[0].mxu0 %v678
        %v1696 = vpop.f32.mrb[0].mxu0
        %v1697 = vadd.f32 0.0, %v1696
        %v1698 = vpop.f32.mrb[0].mxu0
        %1699 = vmatprep.mubr.f32.mxu0 0.0
        %1700 = vmatmul.mubr.f32.gmra.mrb[0].mxu0 %v679
        %v1701 = vpop.f32.mrb[0].mxu0
        %v1702 = vadd.f32 0.0, %v1701
        %v1703 = vpop.f32.mrb[0].mxu0
        %1704 = vmatprep.mubr.f32.mxu0 0.0
        %1705 = vmatmul.mubr.f32.gmra.mrb[0].mxu0 %v680
        %v1706 = vpop.f32.mrb[0].mxu0
        %v1707 = vadd.f32 0.0, %v1706
        %v1708 = vpop.f32.mrb[0].mxu0
        %1709 = vmatprep.mubr.f32.mxu0 0.0
        %1710 = vmatmul.mubr.f32.gmra.mrb[0].mxu0 %v681
        %v1711 = vpop.f32.mrb[0].mxu0
        %v1712 = vadd.f32 0.0, %v1711
        %v1713 = vpop.f32.mrb[0].mxu0
        %1714 = vmatprep.mubr.f32.mxu0 0.0
        %1715 = vmatmul.mubr.f32.gmra.mrb[0].mxu0 %v682
        %v1716 = vpop.f32.mrb[0].mxu0
        %v1717 = vadd.f32 0.0, %v1716
        %v1718 = vpop.f32.mrb[0].mxu0
        %1719 = vmatprep.mubr.f32.mxu0 0.0
        %1720 = vmatmul.mubr.f32.gmra.mrb[0].mxu0 %v683
        %v1721 = vpop.f32.mrb[0].mxu0
        %v1722 = vadd.f32 0.0, %v1721
        %v1723 = vpop.f32.mrb[0].mxu0
        %1724 = vmatprep.mubr.f32.mxu0 0.0
        %1725 = vmatmul.mubr.f32.gmra.mrb[0].mxu0 %v684
        %v1726 = vpop.f32.mrb[0].mxu0
        %v1727 = vadd.f32 0.0, %v1726
        %v1728 = vpop.f32.mrb[0].mxu0
        %1729 = vmatprep.mubr.f32.mxu0 0.0
        %1730 = vmatmul.mubr.f32.gmra.mrb[0].mxu0 %v685
        %v1731 = vpop.f32.mrb[0].mxu0
        %v1732 = vadd.f32 0.0, %v1731
        %v1733 = vpop.f32.mrb[0].mxu0
        %1734 = vmatprep.mubr.f32.mxu0 0.0
        %1735 = vmatmul.mubr.f32.gmra.mrb[0].mxu0 %v686
        %v1736 = vpop.f32.mrb[0].mxu0
        %v1737 = vadd.f32 0.0, %v1736
        %v1738 = vpop.f32.mrb[0].mxu0
        %1739 = vmatprep.mubr.f32.mxu0 0.0
        %1740 = vmatmul.mubr.f32.gmra.mrb[0].mxu0 %v687
        %v1741 = vpop.f32.mrb[0].mxu0
        %v1742 = vadd.f32 0.0, %v1741
        %v1743 = vpop.f32.mrb[0].mxu0
        %1744 = vmatprep.mubr.f32.mxu0 0.0
        %1745 = vmatmul.mubr.f32.gmra.mrb[0].mxu0 %v688
        %v1746 = vpop.f32.mrb[0].mxu0
        %v1747 = vadd.f32 0.0, %v1746
        %v1748 = vpop.f32.mrb[0].mxu0
        %1749 = vmatprep.mubr.f32.mxu0 0.0
        %1750 = vmatmul.mubr.f32.gmra.mrb[0].mxu0 %v689
        %v1751 = vpop.f32.mrb[0].mxu0
        %v1752 = vadd.f32 0.0, %v1751
        %v1753 = vpop.f32.mrb[0].mxu0
        %1754 = vmatprep.mubr.f32.mxu0 0.0
        %1755 = vmatmul.mubr.f32.gmra.mrb[0].mxu0 %v690
        %v1756 = vpop.f32.mrb[0].mxu0
        %v1757 = vadd.f32 0.0, %v1756
        %v1758 = vpop.f32.mrb[0].mxu0
        %1759 = vmatprep.mubr.f32.mxu0 0.0
        %1760 = vmatmul.mubr.f32.gmra.mrb[0].mxu0 %v691
        %v1761 = vpop.f32.mrb[0].mxu0
        %v1762 = vadd.f32 0.0, %v1761
        %v1763 = vpop.f32.mrb[0].mxu0
        %1764 = vmatprep.mubr.f32.mxu0 0.0
        %1765 = vmatmul.mubr.f32.gmra.mrb[0].mxu0 %v692
        %v1766 = vpop.f32.mrb[0].mxu0
        %v1767 = vadd.f32 0.0, %v1766
        %v1768 = vpop.f32.mrb[0].mxu0
        %1769 = vmatprep.mubr.f32.mxu0 0.0
        %1770 = vmatmul.mubr.f32.gmra.mrb[0].mxu0 %v693
        %v1771 = vpop.f32.mrb[0].mxu0
        %v1772 = vadd.f32 0.0, %v1771
        %v1773 = vpop.f32.mrb[0].mxu0
        %1774 = vmatprep.mubr.f32.mxu0 0.0
        %1775 = vmatmul.mubr.f32.gmra.mrb[0].mxu0 %v694
        %v1776 = vpop.f32.mrb[0].mxu0
        %v1777 = vadd.f32 0.0, %v1776
        %v1778 = vpop.f32.mrb[0].mxu0
        %1779 = vmatprep.mubr.f32.mxu0 0.0
        %1780 = vmatmul.mubr.f32.gmra.mrb[0].mxu0 %v695
        %v1781 = vpop.f32.mrb[0].mxu0
        %v1782 = vadd.f32 0.0, %v1781
        %v1783 = vpop.f32.mrb[0].mxu0
        %1784 = vmatprep.mubr.f32.mxu0 0.0
        %1785 = vmatmul.mubr.f32.gmra.mrb[0].mxu0 %v696
        %v1786 = vpop.f32.mrb[0].mxu0
        %v1787 = vadd.f32 0.0, %v1786
        %v1788 = vpop.f32.mrb[0].mxu0
        %1789 = vmatprep.mubr.f32.mxu0 0.0
        %1790 = vmatmul.mubr.f32.gmra.mrb[0].mxu0 %v697
        %v1791 = vpop.f32.mrb[0].mxu0
        %v1792 = vadd.f32 0.0, %v1791
        %v1793 = vpop.f32.mrb[0].mxu0
        %1794 = vmatprep.mubr.f32.mxu0 0.0
        %1795 = vmatmul.mubr.f32.gmra.mrb[0].mxu0 %v698
        %v1796 = vpop.f32.mrb[0].mxu0
        %v1797 = vadd.f32 0.0, %v1796
        %v1798 = vpop.f32.mrb[0].mxu0
        %1799 = vmatprep.mubr.f32.mxu0 0.0
        %1800 = vmatmul.mubr.f32.gmra.mrb[0].mxu0 %v699
        %v1801 = vpop.f32.mrb[0].mxu0
        %v1802 = vadd.f32 0.0, %v1801
        %v1803 = vpop.f32.mrb[0].mxu0
        %1804 = vmatprep.mubr.f32.mxu0 0.0
        %1805 = vmatmul.mubr.f32.gmra.mrb[0].mxu0 %v700
        %v1806 = vpop.f32.mrb[0].mxu0
        %v1807 = vadd.f32 0.0, %v1806
        %v1808 = vpop.f32.mrb[0].mxu0
        %1809 = vmatprep.mubr.f32.mxu0 0.0
        %1810 = vmatmul.mubr.f32.gmra.mrb[0].mxu0 %v701
        %v1811 = vpop.f32.mrb[0].mxu0
        %v1812 = vadd.f32 0.0, %v1811
        %v1813 = vpop.f32.mrb[0].mxu0
        %1814 = vmatprep.mubr.f32.mxu0 0.0
        %1815 = vmatmul.mubr.f32.gmra.mrb[0].mxu0 %v702
        %v1816 = vpop.f32.mrb[0].mxu0
        %v1817 = vadd.f32 0.0, %v1816
        %v1818 = vpop.f32.mrb[0].mxu0
        %1819 = vmatprep.mubr.f32.mxu0 0.0
        %1820 = vmatmul.mubr.f32.gmra.mrb[0].mxu0 %v703
        %v1821 = vpop.f32.mrb[0].mxu0
        %v1822 = vadd.f32 0.0, %v1821
        %v1823 = vpop.f32.mrb[0].mxu0
        %1824 = vmatprep.mubr.f32.mxu0 0.0
        %1825 = vmatmul.mubr.f32.gmra.mrb[0].mxu0 %v704
        %v1826 = vpop.f32.mrb[0].mxu0
        %v1827 = vadd.f32 0.0, %v1826
        %v1828 = vpop.f32.mrb[0].mxu0
        %1829 = vmatprep.mubr.f32.mxu0 0.0
        %1830 = vmatmul.mubr.f32.gmra.mrb[0].mxu0 %v705
        %v1831 = vpop.f32.mrb[0].mxu0
        %v1832 = vadd.f32 0.0, %v1831
        %v1833 = vpop.f32.mrb[0].mxu0
        %1834 = vmatprep.mubr.f32.mxu0 0.0
        %1835 = vmatmul.mubr.f32.gmra.mrb[0].mxu0 %v706
        %v1836 = vpop.f32.mrb[0].mxu0
        %v1837 = vadd.f32 0.0, %v1836
        %v1838 = vpop.f32.mrb[0].mxu0
        %1839 = vmatprep.mubr.f32.mxu0 0.0
        %1840 = vmatmul.mubr.f32.gmra.mrb[0].mxu0 %v707
        %v1841 = vpop.f32.mrb[0].mxu0
        %v1842 = vadd.f32 0.0, %v1841
        %v1843 = vpop.f32.mrb[0].mxu0
        %1844 = vmatprep.mubr.f32.mxu0 0.0
        %1845 = vmatmul.mubr.f32.gmra.mrb[0].mxu0 %v708
        %v1846 = vpop.f32.mrb[0].mxu0
        %v1847 = vadd.f32 0.0, %v1846
        %v1848 = vpop.f32.mrb[0].mxu0
        %1849 = vmatprep.mubr.f32.mxu0 0.0
        %1850 = vmatmul.mubr.f32.gmra.mrb[0].mxu0 %v709
        %v1851 = vpop.f32.mrb[0].mxu0
        %v1852 = vadd.f32 0.0, %v1851
        %v1853 = vpop.f32.mrb[0].mxu0
        %1854 = vmatprep.mubr.f32.mxu0 0.0
        %1855 = vmatmul.mubr.f32.gmra.mrb[0].mxu0 %v710
        %v1856 = vpop.f32.mrb[0].mxu0
        %v1857 = vadd.f32 0.0, %v1856
        %v1858 = vpop.f32.mrb[0].mxu0
        %1859 = vmatprep.mubr.f32.mxu0 0.0
        %1860 = vmatmul.mubr.f32.gmra.mrb[0].mxu0 %v711
        %v1861 = vpop.f32.mrb[0].mxu0
        %v1862 = vadd.f32 0.0, %v1861
        %v1863 = vpop.f32.mrb[0].mxu0
        %1864 = vmatprep.mubr.f32.mxu0 0.0
        %1865 = vmatmul.mubr.f32.gmra.mrb[0].mxu0 %v712
        %v1866 = vpop.f32.mrb[0].mxu0
        %v1867 = vadd.f32 0.0, %v1866
        %v1868 = vpop.f32.mrb[0].mxu0
        %1869 = vmatprep.mubr.f32.mxu0 0.0
        %1870 = vmatmul.mubr.f32.gmra.mrb[0].mxu0 %v713
        %v1871 = vpop.f32.mrb[0].mxu0
        %v1872 = vadd.f32 0.0, %v1871
        %v1873 = vpop.f32.mrb[0].mxu0
        %1874 = vmatprep.mubr.f32.mxu0 0.0
        %1875 = vmatmul.mubr.f32.gmra.mrb[0].mxu0 %v714
        %v1876 = vpop.f32.mrb[0].mxu0
        %v1877 = vadd.f32 0.0, %v1876
        %v1878 = vpop.f32.mrb[0].mxu0
        %1879 = vmatprep.mubr.f32.mxu0 0.0
        %1880 = vmatmul.mubr.f32.gmra.mrb[0].mxu0 %v715
        %v1881 = vpop.f32.mrb[0].mxu0
        %v1882 = vadd.f32 0.0, %v1881
        %v1883 = vpop.f32.mrb[0].mxu0
        %1884 = vmatprep.mubr.f32.mxu0 0.0
        %1885 = vmatmul.mubr.f32.gmra.mrb[0].mxu0 %v716
        %v1886 = vpop.f32.mrb[0].mxu0
        %v1887 = vadd.f32 0.0, %v1886
        %v1888 = vpop.f32.mrb[0].mxu0
        %1889 = vmatprep.mubr.f32.mxu0 0.0
        %1890 = vmatmul.mubr.f32.gmra.mrb[0].mxu0 %v717
        %v1891 = vpop.f32.mrb[0].mxu0
        %v1892 = vadd.f32 0.0, %v1891
        %v1893 = vpop.f32.mrb[0].mxu0
        %1894 = vmatprep.mubr.f32.mxu0 0.0
        %1895 = vmatmul.mubr.f32.gmra.mrb[0].mxu0 %v718
        %v1896 = vpop.f32.mrb[0].mxu0
        %v1897 = vadd.f32 0.0, %v1896
        %v1898 = vpop.f32.mrb[0].mxu0
        %1899 = vmatprep.mubr.f32.mxu0 0.0
        %1900 = vmatmul.mubr.f32.gmra.mrb[0].mxu0 %v719
        %v1901 = vpop.f32.mrb[0].mxu0
        %v1902 = vadd.f32 0.0, %v1901
        %v1903 = vpop.f32.mrb[0].mxu0
        %1904 = vmatprep.mubr.f32.mxu0 0.0
        %1905 = vmatmul.mubr.f32.gmra.mrb[0].mxu0 %v720
        %v1906 = vpop.f32.mrb[0].mxu0
        %v1907 = vadd.f32 0.0, %v1906
        %v1908 = vpop.f32.mrb[0].mxu0
        %1909 = vmatprep.mubr.f32.mxu0 0.0
        %1910 = vmatmul.mubr.f32.gmra.mrb[0].mxu0 %v721
        %v1911 = vpop.f32.mrb[0].mxu0
        %v1912 = vadd.f32 0.0, %v1911
        %v1913 = vpop.f32.mrb[0].mxu0
        %1914 = vmatprep.mubr.f32.mxu0 0.0
        %1915 = vmatmul.mubr.f32.gmra.mrb[0].mxu0 %v722
        %v1916 = vpop.f32.mrb[0].mxu0
        %v1917 = vadd.f32 0.0, %v1916
        %v1918 = vpop.f32.mrb[0].mxu0
        %1919 = vmatprep.mubr.f32.mxu0 0.0
        %1920 = vmatmul.mubr.f32.gmra.mrb[0].mxu0 %v723
        %v1921 = vpop.f32.mrb[0].mxu0
        %v1922 = vadd.f32 0.0, %v1921
        %v1923 = vpop.f32.mrb[0].mxu0
        %1924 = vmatprep.mubr.f32.mxu0 0.0
        %1925 = vmatmul.mubr.f32.gmra.mrb[0].mxu0 %v724
        %v1926 = vpop.f32.mrb[0].mxu0
        %v1927 = vadd.f32 0.0, %v1926
        %v1928 = vpop.f32.mrb[0].mxu0
        %1929 = vmatprep.mubr.f32.mxu0 0.0
        %1930 = vmatmul.mubr.f32.gmra.mrb[0].mxu0 %v725
        %v1931 = vpop.f32.mrb[0].mxu0
        %v1932 = vadd.f32 0.0, %v1931
        %v1933 = vpop.f32.mrb[0].mxu0
        %1934 = vmatprep.mubr.f32.mxu0 0.0
        %1935 = vmatmul.mubr.f32.gmra.mrb[0].mxu0 %v726
        %v1936 = vpop.f32.mrb[0].mxu0
        %v1937 = vadd.f32 0.0, %v1936
        %v1938 = vpop.f32.mrb[0].mxu0
        %1939 = vmatprep.mubr.f32.mxu0 0.0
        %1940 = vmatmul.mubr.f32.gmra.mrb[0].mxu0 %v727
        %v1941 = vpop.f32.mrb[0].mxu0
        %v1942 = vadd.f32 0.0, %v1941
        %v1943 = vpop.f32.mrb[0].mxu0
        %1944 = vmatprep.mubr.f32.mxu0 0.0
        %1945 = vmatmul.mubr.f32.gmra.mrb[0].mxu0 %v728
        %v1946 = vpop.f32.mrb[0].mxu0
        %v1947 = vadd.f32 0.0, %v1946
        %v1948 = vpop.f32.mrb[0].mxu0
        %1949 = vmatprep.mubr.f32.mxu0 0.0
        %1950 = vmatmul.mubr.f32.gmra.mrb[0].mxu0 %v729
        %v1951 = vpop.f32.mrb[0].mxu0
        %v1952 = vadd.f32 0.0, %v1951
        %v1953 = vpop.f32.mrb[0].mxu0
        %1954 = vmatprep.mubr.f32.mxu0 0.0
        %1955 = vmatmul.mubr.f32.gmra.mrb[0].mxu0 %v730
        %v1956 = vpop.f32.mrb[0].mxu0
        %v1957 = vadd.f32 0.0, %v1956
        %v1958 = vpop.f32.mrb[0].mxu0
        %1959 = vmatprep.mubr.f32.mxu0 0.0
        %1960 = vmatmul.mubr.f32.gmra.mrb[0].mxu0 %v731
        %v1961 = vpop.f32.mrb[0].mxu0
        %v1962 = vadd.f32 0.0, %v1961
        %v1963 = vpop.f32.mrb[0].mxu0
        %1964 = vmatprep.mubr.f32.mxu0 0.0
        %1965 = vmatmul.mubr.f32.gmra.mrb[0].mxu0 %v732
        %v1966 = vpop.f32.mrb[0].mxu0
        %v1967 = vadd.f32 0.0, %v1966
        %v1968 = vpop.f32.mrb[0].mxu0
        %1969 = vmatprep.mubr.f32.mxu0 0.0
        %1970 = vmatmul.mubr.f32.gmra.mrb[0].mxu0 %v733
        %v1971 = vpop.f32.mrb[0].mxu0
        %v1972 = vadd.f32 0.0, %v1971
        %v1973 = vpop.f32.mrb[0].mxu0
        %1974 = vmatprep.mubr.f32.mxu0 0.0
        %1975 = vmatmul.mubr.f32.gmra.mrb[0].mxu0 %v734
        %v1976 = vpop.f32.mrb[0].mxu0
        %v1977 = vadd.f32 0.0, %v1976
        %v1978 = vpop.f32.mrb[0].mxu0
        %1979 = vmatprep.mubr.f32.mxu0 0.0
        %1980 = vmatmul.mubr.f32.gmra.mrb[0].mxu0 %v735
        %v1981 = vpop.f32.mrb[0].mxu0
        %v1982 = vadd.f32 0.0, %v1981
        %v1983 = vpop.f32.mrb[0].mxu0
        %1984 = vmatprep.mubr.f32.mxu0 0.0
        %1985 = vmatmul.mubr.f32.gmra.mrb[0].mxu0 %v736
        %v1986 = vpop.f32.mrb[0].mxu0
        %v1987 = vadd.f32 0.0, %v1986
        %v1988 = vpop.f32.mrb[0].mxu0
        %1989 = vmatprep.mubr.f32.mxu0 0.0
        %1990 = vmatmul.mubr.f32.gmra.mrb[0].mxu0 %v737
        %v1991 = vpop.f32.mrb[0].mxu0
        %v1992 = vadd.f32 0.0, %v1991
        %v1993 = vpop.f32.mrb[0].mxu0
        %1994 = vmatprep.mubr.f32.mxu0 0.0
        %1995 = vmatmul.mubr.f32.gmra.mrb[0].mxu0 %v738
        %v1996 = vpop.f32.mrb[0].mxu0
        %v1997 = vadd.f32 0.0, %v1996
        %v1998 = vpop.f32.mrb[0].mxu0
        %1999 = vmatprep.mubr.f32.mxu0 0.0
        %2000 = vmatmul.mubr.f32.gmra.mrb[0].mxu0 %v739
        %v2001 = vpop.f32.mrb[0].mxu0
        %v2002 = vadd.f32 0.0, %v2001
        %v2003 = vpop.f32.mrb[0].mxu0
        %2004 = vmatprep.mubr.f32.mxu0 0.0
        %2005 = vmatmul.mubr.f32.gmra.mrb[0].mxu0 %v740
        %v2006 = vpop.f32.mrb[0].mxu0
        %v2007 = vadd.f32 0.0, %v2006
        %v2008 = vpop.f32.mrb[0].mxu0
        %2009 = vmatprep.mubr.f32.mxu0 0.0
        %2010 = vmatmul.mubr.f32.gmra.mrb[0].mxu0 %v741
        %v2011 = vpop.f32.mrb[0].mxu0
        %v2012 = vadd.f32 0.0, %v2011
        %v2013 = vpop.f32.mrb[0].mxu0
        %2014 = vmatprep.mubr.f32.mxu0 0.0
        %2015 = vmatmul.mubr.f32.gmra.mrb[0].mxu0 %v742
        %v2016 = vpop.f32.mrb[0].mxu0
        %v2017 = vadd.f32 0.0, %v2016
        %v2018 = vpop.f32.mrb[0].mxu0
        %2019 = vmatprep.mubr.f32.mxu0 0.0
        %2020 = vmatmul.mubr.f32.gmra.mrb[0].mxu0 %v743
        %v2021 = vpop.f32.mrb[0].mxu0
        %v2022 = vadd.f32 0.0, %v2021
        %v2023 = vpop.f32.mrb[0].mxu0
        %2024 = vmatprep.mubr.f32.mxu0 0.0
        %2025 = vmatmul.mubr.f32.gmra.mrb[0].mxu0 %v744
        %v2026 = vpop.f32.mrb[0].mxu0
        %v2027 = vadd.f32 0.0, %v2026
        %v2028 = vpop.f32.mrb[0].mxu0
        %2029 = vmatprep.mubr.f32.mxu0 0.0
        %2030 = vmatmul.mubr.f32.gmra.mrb[0].mxu0 %v745
        %v2031 = vpop.f32.mrb[0].mxu0
        %v2032 = vadd.f32 0.0, %v2031
        %v2033 = vpop.f32.mrb[0].mxu0
        %2034 = vmatprep.mubr.f32.mxu0 0.0
        %2035 = vmatmul.mubr.f32.gmra.mrb[0].mxu0 %v746
        %v2036 = vpop.f32.mrb[0].mxu0
        %v2037 = vadd.f32 0.0, %v2036
        %v2038 = vpop.f32.mrb[0].mxu0
        %2039 = vmatprep.mubr.f32.mxu0 0.0
        %2040 = vmatmul.mubr.f32.gmra.mrb[0].mxu0 %v747
        %v2041 = vpop.f32.mrb[0].mxu0
        %v2042 = vadd.f32 0.0, %v2041
        %v2043 = vpop.f32.mrb[0].mxu0
        %2044 = vmatprep.mubr.f32.mxu0 0.0
        %2045 = vmatmul.mubr.f32.gmra.mrb[0].mxu0 %v748
        %v2046 = vpop.f32.mrb[0].mxu0
        %v2047 = vadd.f32 0.0, %v2046
        %v2048 = vpop.f32.mrb[0].mxu0
        %2049 = vmatprep.mubr.f32.mxu0 0.0
        %2050 = vmatmul.mubr.f32.gmra.mrb[0].mxu0 %v749
        %v2051 = vpop.f32.mrb[0].mxu0
        %v2052 = vadd.f32 0.0, %v2051
        %v2053 = vpop.f32.mrb[0].mxu0
        %2054 = vmatprep.mubr.f32.mxu0 0.0
        %2055 = vmatmul.mubr.f32.gmra.mrb[0].mxu0 %v750
        %v2056 = vpop.f32.mrb[0].mxu0
        %v2057 = vadd.f32 0.0, %v2056
        %v2058 = vpop.f32.mrb[0].mxu0
        %2059 = vmatprep.mubr.f32.mxu0 0.0
        %2060 = vmatmul.mubr.f32.gmra.mrb[0].mxu0 %v751
        %v2061 = vpop.f32.mrb[0].mxu0
        %v2062 = vadd.f32 0.0, %v2061
        %v2063 = vpop.f32.mrb[0].mxu0
        %2064 = vmatprep.mubr.f32.mxu0 0.0
        %2065 = vmatmul.mubr.f32.gmra.mrb[0].mxu0 %v752
        %v2066 = vpop.f32.mrb[0].mxu0
        %v2067 = vadd.f32 0.0, %v2066
        %v2068 = vpop.f32.mrb[0].mxu0
        %2069 = vmatprep.mubr.f32.mxu0 0.0
        %2070 = vmatmul.mubr.f32.gmra.mrb[0].mxu0 %v753
        %v2071 = vpop.f32.mrb[0].mxu0
        %v2072 = vadd.f32 0.0, %v2071
        %v2073 = vpop.f32.mrb[0].mxu0
        %2074 = vmatprep.mubr.f32.mxu0 0.0
        %2075 = vmatmul.mubr.f32.gmra.mrb[0].mxu0 %v754
        %v2076 = vpop.f32.mrb[0].mxu0
        %v2077 = vadd.f32 0.0, %v2076
        %v2078 = vpop.f32.mrb[0].mxu0
        %2079 = vmatprep.mubr.f32.mxu0 0.0
        %2080 = vmatmul.mubr.f32.gmra.mrb[0].mxu0 %v755
        %v2081 = vpop.f32.mrb[0].mxu0
        %v2082 = vadd.f32 0.0, %v2081
        %v2083 = vpop.f32.mrb[0].mxu0
        %2084 = vmatprep.mubr.f32.mxu0 0.0
        %2085 = vmatmul.mubr.f32.gmra.mrb[0].mxu0 %v756
        %v2086 = vpop.f32.mrb[0].mxu0
        %v2087 = vadd.f32 0.0, %v2086
        %v2088 = vpop.f32.mrb[0].mxu0
        %2089 = vmatprep.mubr.f32.mxu0 0.0
        %2090 = vmatmul.mubr.f32.gmra.mrb[0].mxu0 %v757
        %v2091 = vpop.f32.mrb[0].mxu0
        %v2092 = vadd.f32 0.0, %v2091
        %v2093 = vpop.f32.mrb[0].mxu0
        %2094 = vmatprep.mubr.f32.mxu0 0.0
        %2095 = vmatmul.mubr.f32.gmra.mrb[0].mxu0 %v758
        %v2096 = vpop.f32.mrb[0].mxu0
        %v2097 = vadd.f32 0.0, %v2096
        %v2098 = vpop.f32.mrb[0].mxu0
        %2099 = vmatprep.mubr.f32.mxu0 0.0
        %2100 = vmatmul.mubr.f32.gmra.mrb[0].mxu0 %v759
        %v2101 = vpop.f32.mrb[0].mxu0
        %v2102 = vadd.f32 0.0, %v2101
        %v2103 = vpop.f32.mrb[0].mxu0
        %2104 = vmatprep.mubr.f32.mxu0 0.0
        %2105 = vmatmul.mubr.f32.gmra.mrb[0].mxu0 %v760
        %v2106 = vpop.f32.mrb[0].mxu0
        %v2107 = vadd.f32 0.0, %v2106
        %v2108 = vpop.f32.mrb[0].mxu0
        %2109 = vmatprep.mubr.f32.mxu0 0.0
        %2110 = vmatmul.mubr.f32.gmra.mrb[0].mxu0 %v761
        %v2111 = vpop.f32.mrb[0].mxu0
        %v2112 = vadd.f32 0.0, %v2111
        %v2113 = vpop.f32.mrb[0].mxu0
        %2114 = vmatprep.mubr.f32.mxu0 0.0
        %2115 = vmatmul.mubr.f32.gmra.mrb[0].mxu0 %v762
        %v2116 = vpop.f32.mrb[0].mxu0
        %v2117 = vadd.f32 0.0, %v2116
        %v2118 = vpop.f32.mrb[0].mxu0
        %2119 = vmatprep.mubr.f32.mxu0 0.0
        %2120 = vmatmul.mubr.f32.gmra.mrb[0].mxu0 %v763
        %v2121 = vpop.f32.mrb[0].mxu0
        %v2122 = vadd.f32 0.0, %v2121
        %v2123 = vpop.f32.mrb[0].mxu0
        %2124 = vdwg.mxu0
        %v2125 = vld [vmem:[#allocation5] sm:$0xff]
        %v2127 = vcombine.high %v2125, %v2125
        %v2129 = vunpack.c.l.s4 1966171168
        %v2130 = vunpack.c.0.s8 %v2129
        %v2131 = vlaneseq
        %v2132 = vshrl.u32 %v2131, 7
        %v2133 = vsub.s32 %v2130, %v2132
        %v2134 = vrot.slane %v2125, %v2133
        %v2136 = vunpack.c.l.s4 1966171168
        %v2137 = vunpack.c.0.s8 %v2136
        %v2138 = vlaneseq
        %v2139 = vshrl.u32 %v2138, 7
        %v2140 = vsub.s32 %v2137, %v2139
        %v2141 = vrot.slane %v2127, %v2140
        %v2142 = vcombine.high %v2134, %v2134
        %v2143 = vcombine.high %v2141, %v2141
        %v2145 = vunpack.c.l.s4 1966171168
        %v2146 = vunpack.c.0.s8 %v2145
        %v2147 = vlaneseq
        %v2148 = vshrl.u32 %v2147, 7
        %v2149 = vsub.s32 %v2146, %v2148
        %v2150 = vrot.slane %v2134, %v2149
        %v2152 = vunpack.c.l.s4 1966171168
        %v2153 = vunpack.c.0.s8 %v2152
        %v2154 = vlaneseq
        %v2155 = vshrl.u32 %v2154, 7
        %v2156 = vsub.s32 %v2153, %v2155
        %v2157 = vrot.slane %v2141, %v2156
        %v2159 = vunpack.c.l.s4 1966171168
        %v2160 = vunpack.c.0.s8 %v2159
        %v2161 = vlaneseq
        %v2162 = vshrl.u32 %v2161, 7
        %v2163 = vsub.s32 %v2160, %v2162
        %v2164 = vrot.slane %v2142, %v2163
        %v2166 = vunpack.c.l.s4 1966171168
        %v2167 = vunpack.c.0.s8 %v2166
        %v2168 = vlaneseq
        %v2169 = vshrl.u32 %v2168, 7
        %v2170 = vsub.s32 %v2167, %v2169
        %v2171 = vrot.slane %v2143, %v2170
        %v2172 = vcombine.high %v2150, %v2150
        %v2173 = vcombine.high %v2157, %v2157
        %v2174 = vcombine.high %v2164, %v2164
        %v2175 = vcombine.high %v2171, %v2171
        %v2176 = vlaneseq
        %v2177 = vshrl.u32 %v2176, 7
        %v2178 = vsub.s32 0, %v2177
        %v2179 = vrot.slane %v2150, %v2178
        %v2180 = vlaneseq
        %v2181 = vshrl.u32 %v2180, 7
        %v2182 = vsub.s32 0, %v2181
        %v2183 = vrot.slane %v2164, %v2182
        %v2184 = vlaneseq
        %v2185 = vshrl.u32 %v2184, 7
        %v2186 = vsub.s32 0, %v2185
        %v2187 = vrot.slane %v2172, %v2186
        %v2188 = vlaneseq
        %v2189 = vshrl.u32 %v2188, 7
        %v2190 = vsub.s32 0, %v2189
        %v2191 = vrot.slane %v2174, %v2190
        %v2192 = vlaneseq
        %v2193 = vshrl.u32 %v2192, 7
        %v2194 = vsub.s32 0, %v2193
        %v2195 = vrot.slane %v2157, %v2194
        %v2196 = vlaneseq
        %v2197 = vshrl.u32 %v2196, 7
        %v2198 = vsub.s32 0, %v2197
        %v2199 = vrot.slane %v2171, %v2198
        %v2200 = vlaneseq
        %v2201 = vshrl.u32 %v2200, 7
        %v2202 = vsub.s32 0, %v2201
        %v2203 = vrot.slane %v2173, %v2202
        %v2204 = vlaneseq
        %v2205 = vshrl.u32 %v2204, 7
        %v2206 = vsub.s32 0, %v2205
        %v2207 = vrot.slane %v2175, %v2206
        %v2216 = vadd.f32 %v847, %v2179
        %v2217 = vadd.f32 %v852, %v2179
        %v2218 = vadd.f32 %v857, %v2179
        %v2219 = vadd.f32 %v862, %v2179
        %v2220 = vadd.f32 %v867, %v2179
        %v2221 = vadd.f32 %v872, %v2179
        %v2222 = vadd.f32 %v877, %v2179
        %v2223 = vadd.f32 %v882, %v2179
        %v2224 = vadd.f32 %v887, %v2179
        %v2225 = vadd.f32 %v892, %v2179
        %v2226 = vadd.f32 %v897, %v2179
        %v2227 = vadd.f32 %v902, %v2179
        %v2228 = vadd.f32 %v907, %v2179
        %v2229 = vadd.f32 %v912, %v2179
        %v2230 = vadd.f32 %v917, %v2179
        %v2231 = vadd.f32 %v922, %v2179
        %v2232 = vadd.f32 %v927, %v2179
        %v2233 = vadd.f32 %v932, %v2179
        %v2234 = vadd.f32 %v937, %v2179
        %v2235 = vadd.f32 %v942, %v2179
        %v2236 = vadd.f32 %v947, %v2179
        %v2237 = vadd.f32 %v952, %v2179
        %v2238 = vadd.f32 %v957, %v2179
        %v2239 = vadd.f32 %v962, %v2179
        %v2240 = vadd.f32 %v967, %v2179
        %v2241 = vadd.f32 %v972, %v2179
        %v2242 = vadd.f32 %v977, %v2179
        %v2243 = vadd.f32 %v982, %v2179
        %v2244 = vadd.f32 %v987, %v2179
        %v2245 = vadd.f32 %v992, %v2179
        %v2246 = vadd.f32 %v997, %v2179
        %v2247 = vadd.f32 %v1002, %v2179
        %v2248 = vadd.f32 %v1007, %v2183
        %v2249 = vadd.f32 %v1012, %v2183
        %v2250 = vadd.f32 %v1017, %v2183
        %v2251 = vadd.f32 %v1022, %v2183
        %v2252 = vadd.f32 %v1027, %v2183
        %v2253 = vadd.f32 %v1032, %v2183
        %v2254 = vadd.f32 %v1037, %v2183
        %v2255 = vadd.f32 %v1042, %v2183
        %v2256 = vadd.f32 %v1047, %v2183
        %v2257 = vadd.f32 %v1052, %v2183
        %v2258 = vadd.f32 %v1057, %v2183
        %v2259 = vadd.f32 %v1062, %v2183
        %v2260 = vadd.f32 %v1067, %v2183
        %v2261 = vadd.f32 %v1072, %v2183
        %v2262 = vadd.f32 %v1077, %v2183
        %v2263 = vadd.f32 %v1082, %v2183
        %v2264 = vadd.f32 %v1087, %v2183
        %v2265 = vadd.f32 %v1092, %v2183
        %v2266 = vadd.f32 %v1097, %v2183
        %v2267 = vadd.f32 %v1102, %v2183
        %v2268 = vadd.f32 %v1107, %v2183
        %v2269 = vadd.f32 %v1112, %v2183
        %v2270 = vadd.f32 %v1117, %v2183
        %v2271 = vadd.f32 %v1122, %v2183
        %v2272 = vadd.f32 %v1127, %v2183
        %v2273 = vadd.f32 %v1132, %v2183
        %v2274 = vadd.f32 %v1137, %v2183
        %v2275 = vadd.f32 %v1142, %v2183
        %v2276 = vadd.f32 %v1147, %v2183
        %v2277 = vadd.f32 %v1152, %v2183
        %v2278 = vadd.f32 %v1157, %v2183
        %v2279 = vadd.f32 %v1162, %v2183
        %v2280 = vadd.f32 %v1167, %v2187
        %v2281 = vadd.f32 %v1172, %v2187
        %v2282 = vadd.f32 %v1177, %v2187
        %v2283 = vadd.f32 %v1182, %v2187
        %v2284 = vadd.f32 %v1187, %v2187
        %v2285 = vadd.f32 %v1192, %v2187
        %v2286 = vadd.f32 %v1197, %v2187
        %v2287 = vadd.f32 %v1202, %v2187
        %v2288 = vadd.f32 %v1207, %v2187
        %v2289 = vadd.f32 %v1212, %v2187
        %v2290 = vadd.f32 %v1217, %v2187
        %v2291 = vadd.f32 %v1222, %v2187
        %v2292 = vadd.f32 %v1227, %v2187
        %v2293 = vadd.f32 %v1232, %v2187
        %v2294 = vadd.f32 %v1237, %v2187
        %v2295 = vadd.f32 %v1242, %v2187
        %v2296 = vadd.f32 %v1247, %v2187
        %v2297 = vadd.f32 %v1252, %v2187
        %v2298 = vadd.f32 %v1257, %v2187
        %v2299 = vadd.f32 %v1262, %v2187
        %v2300 = vadd.f32 %v1267, %v2187
        %v2301 = vadd.f32 %v1272, %v2187
        %v2302 = vadd.f32 %v1277, %v2187
        %v2303 = vadd.f32 %v1282, %v2187
        %v2304 = vadd.f32 %v1287, %v2187
        %v2305 = vadd.f32 %v1292, %v2187
        %v2306 = vadd.f32 %v1297, %v2187
        %v2307 = vadd.f32 %v1302, %v2187
        %v2308 = vadd.f32 %v1307, %v2187
        %v2309 = vadd.f32 %v1312, %v2187
        %v2310 = vadd.f32 %v1317, %v2187
        %v2311 = vadd.f32 %v1322, %v2187
        %v2312 = vadd.f32 %v1327, %v2191
        %v2313 = vadd.f32 %v1332, %v2191
        %v2314 = vadd.f32 %v1337, %v2191
        %v2315 = vadd.f32 %v1342, %v2191
        %v2316 = vadd.f32 %v1347, %v2191
        %v2317 = vadd.f32 %v1352, %v2191
        %v2318 = vadd.f32 %v1357, %v2191
        %v2319 = vadd.f32 %v1362, %v2191
        %v2320 = vadd.f32 %v1367, %v2191
        %v2321 = vadd.f32 %v1372, %v2191
        %v2322 = vadd.f32 %v1377, %v2191
        %v2323 = vadd.f32 %v1382, %v2191
        %v2324 = vadd.f32 %v1387, %v2191
        %v2325 = vadd.f32 %v1392, %v2191
        %v2326 = vadd.f32 %v1397, %v2191
        %v2327 = vadd.f32 %v1402, %v2191
        %v2328 = vadd.f32 %v1407, %v2191
        %v2329 = vadd.f32 %v1412, %v2191
        %v2330 = vadd.f32 %v1417, %v2191
        %v2331 = vadd.f32 %v1422, %v2191
        %v2332 = vadd.f32 %v1427, %v2191
        %v2333 = vadd.f32 %v1432, %v2191
        %v2334 = vadd.f32 %v1437, %v2191
        %v2335 = vadd.f32 %v1442, %v2191
        %v2336 = vadd.f32 %v1447, %v2191
        %v2337 = vadd.f32 %v1452, %v2191
        %v2338 = vadd.f32 %v1457, %v2191
        %v2339 = vadd.f32 %v1462, %v2191
        %v2340 = vadd.f32 %v1467, %v2191
        %v2341 = vadd.f32 %v1472, %v2191
        %v2342 = vadd.f32 %v1477, %v2191
        %v2343 = vadd.f32 %v1482, %v2191
        %v2344 = vadd.f32 %v1487, %v2195
        %v2345 = vadd.f32 %v1492, %v2195
        %v2346 = vadd.f32 %v1497, %v2195
        %v2347 = vadd.f32 %v1502, %v2195
        %v2348 = vadd.f32 %v1507, %v2195
        %v2349 = vadd.f32 %v1512, %v2195
        %v2350 = vadd.f32 %v1517, %v2195
        %v2351 = vadd.f32 %v1522, %v2195
        %v2352 = vadd.f32 %v1527, %v2195
        %v2353 = vadd.f32 %v1532, %v2195
        %v2354 = vadd.f32 %v1537, %v2195
        %v2355 = vadd.f32 %v1542, %v2195
        %v2356 = vadd.f32 %v1547, %v2195
        %v2357 = vadd.f32 %v1552, %v2195
        %v2358 = vadd.f32 %v1557, %v2195
        %v2359 = vadd.f32 %v1562, %v2195
        %v2360 = vadd.f32 %v1567, %v2195
        %v2361 = vadd.f32 %v1572, %v2195
        %v2362 = vadd.f32 %v1577, %v2195
        %v2363 = vadd.f32 %v1582, %v2195
        %v2364 = vadd.f32 %v1587, %v2195
        %v2365 = vadd.f32 %v1592, %v2195
        %v2366 = vadd.f32 %v1597, %v2195
        %v2367 = vadd.f32 %v1602, %v2195
        %v2368 = vadd.f32 %v1607, %v2195
        %v2369 = vadd.f32 %v1612, %v2195
        %v2370 = vadd.f32 %v1617, %v2195
        %v2371 = vadd.f32 %v1622, %v2195
        %v2372 = vadd.f32 %v1627, %v2195
        %v2373 = vadd.f32 %v1632, %v2195
        %v2374 = vadd.f32 %v1637, %v2195
        %v2375 = vadd.f32 %v1642, %v2195
        %v2376 = vadd.f32 %v1647, %v2199
        %v2377 = vadd.f32 %v1652, %v2199
        %v2378 = vadd.f32 %v1657, %v2199
        %v2379 = vadd.f32 %v1662, %v2199
        %v2380 = vadd.f32 %v1667, %v2199
        %v2381 = vadd.f32 %v1672, %v2199
        %v2382 = vadd.f32 %v1677, %v2199
        %v2383 = vadd.f32 %v1682, %v2199
        %v2384 = vadd.f32 %v1687, %v2199
        %v2385 = vadd.f32 %v1692, %v2199
        %v2386 = vadd.f32 %v1697, %v2199
        %v2387 = vadd.f32 %v1702, %v2199
        %v2388 = vadd.f32 %v1707, %v2199
        %v2389 = vadd.f32 %v1712, %v2199
        %v2390 = vadd.f32 %v1717, %v2199
        %v2391 = vadd.f32 %v1722, %v2199
        %v2392 = vadd.f32 %v1727, %v2199
        %v2393 = vadd.f32 %v1732, %v2199
        %v2394 = vadd.f32 %v1737, %v2199
        %v2395 = vadd.f32 %v1742, %v2199
        %v2396 = vadd.f32 %v1747, %v2199
        %v2397 = vadd.f32 %v1752, %v2199
        %v2398 = vadd.f32 %v1757, %v2199
        %v2399 = vadd.f32 %v1762, %v2199
        %v2400 = vadd.f32 %v1767, %v2199
        %v2401 = vadd.f32 %v1772, %v2199
        %v2402 = vadd.f32 %v1777, %v2199
        %v2403 = vadd.f32 %v1782, %v2199
        %v2404 = vadd.f32 %v1787, %v2199
        %v2405 = vadd.f32 %v1792, %v2199
        %v2406 = vadd.f32 %v1797, %v2199
        %v2407 = vadd.f32 %v1802, %v2199
        %v2408 = vadd.f32 %v1807, %v2203
        %v2409 = vadd.f32 %v1812, %v2203
        %v2410 = vadd.f32 %v1817, %v2203
        %v2411 = vadd.f32 %v1822, %v2203
        %v2412 = vadd.f32 %v1827, %v2203
        %v2413 = vadd.f32 %v1832, %v2203
        %v2414 = vadd.f32 %v1837, %v2203
        %v2415 = vadd.f32 %v1842, %v2203
        %v2416 = vadd.f32 %v1847, %v2203
        %v2417 = vadd.f32 %v1852, %v2203
        %v2418 = vadd.f32 %v1857, %v2203
        %v2419 = vadd.f32 %v1862, %v2203
        %v2420 = vadd.f32 %v1867, %v2203
        %v2421 = vadd.f32 %v1872, %v2203
        %v2422 = vadd.f32 %v1877, %v2203
        %v2423 = vadd.f32 %v1882, %v2203
        %v2424 = vadd.f32 %v1887, %v2203
        %v2425 = vadd.f32 %v1892, %v2203
        %v2426 = vadd.f32 %v1897, %v2203
        %v2427 = vadd.f32 %v1902, %v2203
        %v2428 = vadd.f32 %v1907, %v2203
        %v2429 = vadd.f32 %v1912, %v2203
        %v2430 = vadd.f32 %v1917, %v2203
        %v2431 = vadd.f32 %v1922, %v2203
        %v2432 = vadd.f32 %v1927, %v2203
        %v2433 = vadd.f32 %v1932, %v2203
        %v2434 = vadd.f32 %v1937, %v2203
        %v2435 = vadd.f32 %v1942, %v2203
        %v2436 = vadd.f32 %v1947, %v2203
        %v2437 = vadd.f32 %v1952, %v2203
        %v2438 = vadd.f32 %v1957, %v2203
        %v2439 = vadd.f32 %v1962, %v2203
        %v2440 = vadd.f32 %v1967, %v2207
        %v2441 = vadd.f32 %v1972, %v2207
        %v2442 = vadd.f32 %v1977, %v2207
        %v2443 = vadd.f32 %v1982, %v2207
        %v2444 = vadd.f32 %v1987, %v2207
        %v2445 = vadd.f32 %v1992, %v2207
        %v2446 = vadd.f32 %v1997, %v2207
        %v2447 = vadd.f32 %v2002, %v2207
        %v2448 = vadd.f32 %v2007, %v2207
        %v2449 = vadd.f32 %v2012, %v2207
        %v2450 = vadd.f32 %v2017, %v2207
        %v2451 = vadd.f32 %v2022, %v2207
        %v2452 = vadd.f32 %v2027, %v2207
        %v2453 = vadd.f32 %v2032, %v2207
        %v2454 = vadd.f32 %v2037, %v2207
        %v2455 = vadd.f32 %v2042, %v2207
        %v2456 = vadd.f32 %v2047, %v2207
        %v2457 = vadd.f32 %v2052, %v2207
        %v2458 = vadd.f32 %v2057, %v2207
        %v2459 = vadd.f32 %v2062, %v2207
        %v2460 = vadd.f32 %v2067, %v2207
        %v2461 = vadd.f32 %v2072, %v2207
        %v2462 = vadd.f32 %v2077, %v2207
        %v2463 = vadd.f32 %v2082, %v2207
        %v2464 = vadd.f32 %v2087, %v2207
        %v2465 = vadd.f32 %v2092, %v2207
        %v2466 = vadd.f32 %v2097, %v2207
        %v2467 = vadd.f32 %v2102, %v2207
        %v2468 = vadd.f32 %v2107, %v2207
        %v2469 = vadd.f32 %v2112, %v2207
        %v2470 = vadd.f32 %v2117, %v2207
        %v2471 = vadd.f32 %v2122, %v2207
        %v2472 = vtanh.pop %v2216
        %v2473 = vtanh.pop %v2217
        %v2474 = vtanh.pop %v2218
        %v2475 = vtanh.pop %v2219
        %v2476 = vtanh.pop %v2220
        %v2477 = vtanh.pop %v2221
        %v2478 = vtanh.pop %v2222
        %v2479 = vtanh.pop %v2223
        %v2480 = vtanh.pop %v2224
        %v2481 = vtanh.pop %v2225
        %v2482 = vtanh.pop %v2226
        %v2483 = vtanh.pop %v2227
        %v2484 = vtanh.pop %v2228
        %v2485 = vtanh.pop %v2229
        %v2486 = vtanh.pop %v2230
        %v2487 = vtanh.pop %v2231
        %v2488 = vtanh.pop %v2232
        %v2489 = vtanh.pop %v2233
        %v2490 = vtanh.pop %v2234
        %v2491 = vtanh.pop %v2235
        %v2492 = vtanh.pop %v2236
        %v2493 = vtanh.pop %v2237
        %v2494 = vtanh.pop %v2238
        %v2495 = vtanh.pop %v2239
        %v2496 = vtanh.pop %v2240
        %v2497 = vtanh.pop %v2241
        %v2498 = vtanh.pop %v2242
        %v2499 = vtanh.pop %v2243
        %v2500 = vtanh.pop %v2244
        %v2501 = vtanh.pop %v2245
        %v2502 = vtanh.pop %v2246
        %v2503 = vtanh.pop %v2247
        %v2504 = vtanh.pop %v2248
        %v2505 = vtanh.pop %v2249
        %v2506 = vtanh.pop %v2250
        %v2507 = vtanh.pop %v2251
        %v2508 = vtanh.pop %v2252
        %v2509 = vtanh.pop %v2253
        %v2510 = vtanh.pop %v2254
        %v2511 = vtanh.pop %v2255
        %v2512 = vtanh.pop %v2256
        %v2513 = vtanh.pop %v2257
        %v2514 = vtanh.pop %v2258
        %v2515 = vtanh.pop %v2259
        %v2516 = vtanh.pop %v2260
        %v2517 = vtanh.pop %v2261
        %v2518 = vtanh.pop %v2262
        %v2519 = vtanh.pop %v2263
        %v2520 = vtanh.pop %v2264
        %v2521 = vtanh.pop %v2265
        %v2522 = vtanh.pop %v2266
        %v2523 = vtanh.pop %v2267
        %v2524 = vtanh.pop %v2268
        %v2525 = vtanh.pop %v2269
        %v2526 = vtanh.pop %v2270
        %v2527 = vtanh.pop %v2271
        %v2528 = vtanh.pop %v2272
        %v2529 = vtanh.pop %v2273
        %v2530 = vtanh.pop %v2274
        %v2531 = vtanh.pop %v2275
        %v2532 = vtanh.pop %v2276
        %v2533 = vtanh.pop %v2277
        %v2534 = vtanh.pop %v2278
        %v2535 = vtanh.pop %v2279
        %v2536 = vtanh.pop %v2280
        %v2537 = vtanh.pop %v2281
        %v2538 = vtanh.pop %v2282
        %v2539 = vtanh.pop %v2283
        %v2540 = vtanh.pop %v2284
        %v2541 = vtanh.pop %v2285
        %v2542 = vtanh.pop %v2286
        %v2543 = vtanh.pop %v2287
        %v2544 = vtanh.pop %v2288
        %v2545 = vtanh.pop %v2289
        %v2546 = vtanh.pop %v2290
        %v2547 = vtanh.pop %v2291
        %v2548 = vtanh.pop %v2292
        %v2549 = vtanh.pop %v2293
        %v2550 = vtanh.pop %v2294
        %v2551 = vtanh.pop %v2295
        %v2552 = vtanh.pop %v2296
        %v2553 = vtanh.pop %v2297
        %v2554 = vtanh.pop %v2298
        %v2555 = vtanh.pop %v2299
        %v2556 = vtanh.pop %v2300
        %v2557 = vtanh.pop %v2301
        %v2558 = vtanh.pop %v2302
        %v2559 = vtanh.pop %v2303
        %v2560 = vtanh.pop %v2304
        %v2561 = vtanh.pop %v2305
        %v2562 = vtanh.pop %v2306
        %v2563 = vtanh.pop %v2307
        %v2564 = vtanh.pop %v2308
        %v2565 = vtanh.pop %v2309
        %v2566 = vtanh.pop %v2310
        %v2567 = vtanh.pop %v2311
        %v2568 = vtanh.pop %v2312
        %v2569 = vtanh.pop %v2313
        %v2570 = vtanh.pop %v2314
        %v2571 = vtanh.pop %v2315
        %v2572 = vtanh.pop %v2316
        %v2573 = vtanh.pop %v2317
        %v2574 = vtanh.pop %v2318
        %v2575 = vtanh.pop %v2319
        %v2576 = vtanh.pop %v2320
        %v2577 = vtanh.pop %v2321
        %v2578 = vtanh.pop %v2322
        %v2579 = vtanh.pop %v2323
        %v2580 = vtanh.pop %v2324
        %v2581 = vtanh.pop %v2325
        %v2582 = vtanh.pop %v2326
        %v2583 = vtanh.pop %v2327
        %v2584 = vtanh.pop %v2328
        %v2585 = vtanh.pop %v2329
        %v2586 = vtanh.pop %v2330
        %v2587 = vtanh.pop %v2331
        %v2588 = vtanh.pop %v2332
        %v2589 = vtanh.pop %v2333
        %v2590 = vtanh.pop %v2334
        %v2591 = vtanh.pop %v2335
        %v2592 = vtanh.pop %v2336
        %v2593 = vtanh.pop %v2337
        %v2594 = vtanh.pop %v2338
        %v2595 = vtanh.pop %v2339
        %v2596 = vtanh.pop %v2340
        %v2597 = vtanh.pop %v2341
        %v2598 = vtanh.pop %v2342
        %v2599 = vtanh.pop %v2343
        %v2600 = vtanh.pop %v2344
        %v2601 = vtanh.pop %v2345
        %v2602 = vtanh.pop %v2346
        %v2603 = vtanh.pop %v2347
        %v2604 = vtanh.pop %v2348
        %v2605 = vtanh.pop %v2349
        %v2606 = vtanh.pop %v2350
        %v2607 = vtanh.pop %v2351
        %v2608 = vtanh.pop %v2352
        %v2609 = vtanh.pop %v2353
        %v2610 = vtanh.pop %v2354
        %v2611 = vtanh.pop %v2355
        %v2612 = vtanh.pop %v2356
        %v2613 = vtanh.pop %v2357
        %v2614 = vtanh.pop %v2358
        %v2615 = vtanh.pop %v2359
        %v2616 = vtanh.pop %v2360
        %v2617 = vtanh.pop %v2361
        %v2618 = vtanh.pop %v2362
        %v2619 = vtanh.pop %v2363
        %v2620 = vtanh.pop %v2364
        %v2621 = vtanh.pop %v2365
        %v2622 = vtanh.pop %v2366
        %v2623 = vtanh.pop %v2367
        %v2624 = vtanh.pop %v2368
        %v2625 = vtanh.pop %v2369
        %v2626 = vtanh.pop %v2370
        %v2627 = vtanh.pop %v2371
        %v2628 = vtanh.pop %v2372
        %v2629 = vtanh.pop %v2373
        %v2630 = vtanh.pop %v2374
        %v2631 = vtanh.pop %v2375
        %v2632 = vtanh.pop %v2376
        %v2633 = vtanh.pop %v2377
        %v2634 = vtanh.pop %v2378
        %v2635 = vtanh.pop %v2379
        %v2636 = vtanh.pop %v2380
        %v2637 = vtanh.pop %v2381
        %v2638 = vtanh.pop %v2382
        %v2639 = vtanh.pop %v2383
        %v2640 = vtanh.pop %v2384
        %v2641 = vtanh.pop %v2385
        %v2642 = vtanh.pop %v2386
        %v2643 = vtanh.pop %v2387
        %v2644 = vtanh.pop %v2388
        %v2645 = vtanh.pop %v2389
        %v2646 = vtanh.pop %v2390
        %v2647 = vtanh.pop %v2391
        %v2648 = vtanh.pop %v2392
        %v2649 = vtanh.pop %v2393
        %v2650 = vtanh.pop %v2394
        %v2651 = vtanh.pop %v2395
        %v2652 = vtanh.pop %v2396
        %v2653 = vtanh.pop %v2397
        %v2654 = vtanh.pop %v2398
        %v2655 = vtanh.pop %v2399
        %v2656 = vtanh.pop %v2400
        %v2657 = vtanh.pop %v2401
        %v2658 = vtanh.pop %v2402
        %v2659 = vtanh.pop %v2403
        %v2660 = vtanh.pop %v2404
        %v2661 = vtanh.pop %v2405
        %v2662 = vtanh.pop %v2406
        %v2663 = vtanh.pop %v2407
        %v2664 = vtanh.pop %v2408
        %v2665 = vtanh.pop %v2409
        %v2666 = vtanh.pop %v2410
        %v2667 = vtanh.pop %v2411
        %v2668 = vtanh.pop %v2412
        %v2669 = vtanh.pop %v2413
        %v2670 = vtanh.pop %v2414
        %v2671 = vtanh.pop %v2415
        %v2672 = vtanh.pop %v2416
        %v2673 = vtanh.pop %v2417
        %v2674 = vtanh.pop %v2418
        %v2675 = vtanh.pop %v2419
        %v2676 = vtanh.pop %v2420
        %v2677 = vtanh.pop %v2421
        %v2678 = vtanh.pop %v2422
        %v2679 = vtanh.pop %v2423
        %v2680 = vtanh.pop %v2424
        %v2681 = vtanh.pop %v2425
        %v2682 = vtanh.pop %v2426
        %v2683 = vtanh.pop %v2427
        %v2684 = vtanh.pop %v2428
        %v2685 = vtanh.pop %v2429
        %v2686 = vtanh.pop %v2430
        %v2687 = vtanh.pop %v2431
        %v2688 = vtanh.pop %v2432
        %v2689 = vtanh.pop %v2433
        %v2690 = vtanh.pop %v2434
        %v2691 = vtanh.pop %v2435
        %v2692 = vtanh.pop %v2436
        %v2693 = vtanh.pop %v2437
        %v2694 = vtanh.pop %v2438
        %v2695 = vtanh.pop %v2439
        %v2696 = vtanh.pop %v2440
        %v2697 = vtanh.pop %v2441
        %v2698 = vtanh.pop %v2442
        %v2699 = vtanh.pop %v2443
        %v2700 = vtanh.pop %v2444
        %v2701 = vtanh.pop %v2445
        %v2702 = vtanh.pop %v2446
        %v2703 = vtanh.pop %v2447
        %v2704 = vtanh.pop %v2448
        %v2705 = vtanh.pop %v2449
        %v2706 = vtanh.pop %v2450
        %v2707 = vtanh.pop %v2451
        %v2708 = vtanh.pop %v2452
        %v2709 = vtanh.pop %v2453
        %v2710 = vtanh.pop %v2454
        %v2711 = vtanh.pop %v2455
        %v2712 = vtanh.pop %v2456
        %v2713 = vtanh.pop %v2457
        %v2714 = vtanh.pop %v2458
        %v2715 = vtanh.pop %v2459
        %v2716 = vtanh.pop %v2460
        %v2717 = vtanh.pop %v2461
        %v2718 = vtanh.pop %v2462
        %v2719 = vtanh.pop %v2463
        %v2720 = vtanh.pop %v2464
        %v2721 = vtanh.pop %v2465
        %v2722 = vtanh.pop %v2466
        %v2723 = vtanh.pop %v2467
        %v2724 = vtanh.pop %v2468
        %v2725 = vtanh.pop %v2469
        %v2726 = vtanh.pop %v2470
        %v2727 = vtanh.pop %v2471
        %v2728 = vld [vmem:[#allocation15] sm:$0x1]
        %v2730 = vlaneseq
        %v2731 = vshrl.u32 %v2730, 7
        %v2732 = vsub.s32 0, %v2731
        %v2733 = vrot.slane %v2728, %v2732
        %v2735 = vmul.f32 %v2472, %v2733
        %v2736 = vmul.f32 %v2473, %v2733
        %v2737 = vmul.f32 %v2474, %v2733
        %v2738 = vmul.f32 %v2475, %v2733
        %v2739 = vmul.f32 %v2476, %v2733
        %v2740 = vmul.f32 %v2477, %v2733
        %v2741 = vmul.f32 %v2478, %v2733
        %v2742 = vmul.f32 %v2479, %v2733
        %v2743 = vmul.f32 %v2480, %v2733
        %v2744 = vmul.f32 %v2481, %v2733
        %v2745 = vmul.f32 %v2482, %v2733
        %v2746 = vmul.f32 %v2483, %v2733
        %v2747 = vmul.f32 %v2484, %v2733
        %v2748 = vmul.f32 %v2485, %v2733
        %v2749 = vmul.f32 %v2486, %v2733
        %v2750 = vmul.f32 %v2487, %v2733
        %v2751 = vmul.f32 %v2488, %v2733
        %v2752 = vmul.f32 %v2489, %v2733
        %v2753 = vmul.f32 %v2490, %v2733
        %v2754 = vmul.f32 %v2491, %v2733
        %v2755 = vmul.f32 %v2492, %v2733
        %v2756 = vmul.f32 %v2493, %v2733
        %v2757 = vmul.f32 %v2494, %v2733
        %v2758 = vmul.f32 %v2495, %v2733
        %v2759 = vmul.f32 %v2496, %v2733
        %v2760 = vmul.f32 %v2497, %v2733
        %v2761 = vmul.f32 %v2498, %v2733
        %v2762 = vmul.f32 %v2499, %v2733
        %v2763 = vmul.f32 %v2500, %v2733
        %v2764 = vmul.f32 %v2501, %v2733
        %v2765 = vmul.f32 %v2502, %v2733
        %v2766 = vmul.f32 %v2503, %v2733
        %v2767 = vmul.f32 %v2504, %v2733
        %v2768 = vmul.f32 %v2505, %v2733
        %v2769 = vmul.f32 %v2506, %v2733
        %v2770 = vmul.f32 %v2507, %v2733
        %v2771 = vmul.f32 %v2508, %v2733
        %v2772 = vmul.f32 %v2509, %v2733
        %v2773 = vmul.f32 %v2510, %v2733
        %v2774 = vmul.f32 %v2511, %v2733
        %v2775 = vmul.f32 %v2512, %v2733
        %v2776 = vmul.f32 %v2513, %v2733
        %v2777 = vmul.f32 %v2514, %v2733
        %v2778 = vmul.f32 %v2515, %v2733
        %v2779 = vmul.f32 %v2516, %v2733
        %v2780 = vmul.f32 %v2517, %v2733
        %v2781 = vmul.f32 %v2518, %v2733
        %v2782 = vmul.f32 %v2519, %v2733
        %v2783 = vmul.f32 %v2520, %v2733
        %v2784 = vmul.f32 %v2521, %v2733
        %v2785 = vmul.f32 %v2522, %v2733
        %v2786 = vmul.f32 %v2523, %v2733
        %v2787 = vmul.f32 %v2524, %v2733
        %v2788 = vmul.f32 %v2525, %v2733
        %v2789 = vmul.f32 %v2526, %v2733
        %v2790 = vmul.f32 %v2527, %v2733
        %v2791 = vmul.f32 %v2528, %v2733
        %v2792 = vmul.f32 %v2529, %v2733
        %v2793 = vmul.f32 %v2530, %v2733
        %v2794 = vmul.f32 %v2531, %v2733
        %v2795 = vmul.f32 %v2532, %v2733
        %v2796 = vmul.f32 %v2533, %v2733
        %v2797 = vmul.f32 %v2534, %v2733
        %v2798 = vmul.f32 %v2535, %v2733
        %v2799 = vmul.f32 %v2536, %v2733
        %v2800 = vmul.f32 %v2537, %v2733
        %v2801 = vmul.f32 %v2538, %v2733
        %v2802 = vmul.f32 %v2539, %v2733
        %v2803 = vmul.f32 %v2540, %v2733
        %v2804 = vmul.f32 %v2541, %v2733
        %v2805 = vmul.f32 %v2542, %v2733
        %v2806 = vmul.f32 %v2543, %v2733
        %v2807 = vmul.f32 %v2544, %v2733
        %v2808 = vmul.f32 %v2545, %v2733
        %v2809 = vmul.f32 %v2546, %v2733
        %v2810 = vmul.f32 %v2547, %v2733
        %v2811 = vmul.f32 %v2548, %v2733
        %v2812 = vmul.f32 %v2549, %v2733
        %v2813 = vmul.f32 %v2550, %v2733
        %v2814 = vmul.f32 %v2551, %v2733
        %v2815 = vmul.f32 %v2552, %v2733
        %v2816 = vmul.f32 %v2553, %v2733
        %v2817 = vmul.f32 %v2554, %v2733
        %v2818 = vmul.f32 %v2555, %v2733
        %v2819 = vmul.f32 %v2556, %v2733
        %v2820 = vmul.f32 %v2557, %v2733
        %v2821 = vmul.f32 %v2558, %v2733
        %v2822 = vmul.f32 %v2559, %v2733
        %v2823 = vmul.f32 %v2560, %v2733
        %v2824 = vmul.f32 %v2561, %v2733
        %v2825 = vmul.f32 %v2562, %v2733
        %v2826 = vmul.f32 %v2563, %v2733
        %v2827 = vmul.f32 %v2564, %v2733
        %v2828 = vmul.f32 %v2565, %v2733
        %v2829 = vmul.f32 %v2566, %v2733
        %v2830 = vmul.f32 %v2567, %v2733
        %v2831 = vmul.f32 %v2568, %v2733
        %v2832 = vmul.f32 %v2569, %v2733
        %v2833 = vmul.f32 %v2570, %v2733
        %v2834 = vmul.f32 %v2571, %v2733
        %v2835 = vmul.f32 %v2572, %v2733
        %v2836 = vmul.f32 %v2573, %v2733
        %v2837 = vmul.f32 %v2574, %v2733
        %v2838 = vmul.f32 %v2575, %v2733
        %v2839 = vmul.f32 %v2576, %v2733
        %v2840 = vmul.f32 %v2577, %v2733
        %v2841 = vmul.f32 %v2578, %v2733
        %v2842 = vmul.f32 %v2579, %v2733
        %v2843 = vmul.f32 %v2580, %v2733
        %v2844 = vmul.f32 %v2581, %v2733
        %v2845 = vmul.f32 %v2582, %v2733
        %v2846 = vmul.f32 %v2583, %v2733
        %v2847 = vmul.f32 %v2584, %v2733
        %v2848 = vmul.f32 %v2585, %v2733
        %v2849 = vmul.f32 %v2586, %v2733
        %v2850 = vmul.f32 %v2587, %v2733
        %v2851 = vmul.f32 %v2588, %v2733
        %v2852 = vmul.f32 %v2589, %v2733
        %v2853 = vmul.f32 %v2590, %v2733
        %v2854 = vmul.f32 %v2591, %v2733
        %v2855 = vmul.f32 %v2592, %v2733
        %v2856 = vmul.f32 %v2593, %v2733
        %v2857 = vmul.f32 %v2594, %v2733
        %v2858 = vmul.f32 %v2595, %v2733
        %v2859 = vmul.f32 %v2596, %v2733
        %v2860 = vmul.f32 %v2597, %v2733
        %v2861 = vmul.f32 %v2598, %v2733
        %v2862 = vmul.f32 %v2599, %v2733
        %v2863 = vmul.f32 %v2600, %v2733
        %v2864 = vmul.f32 %v2601, %v2733
        %v2865 = vmul.f32 %v2602, %v2733
        %v2866 = vmul.f32 %v2603, %v2733
        %v2867 = vmul.f32 %v2604, %v2733
        %v2868 = vmul.f32 %v2605, %v2733
        %v2869 = vmul.f32 %v2606, %v2733
        %v2870 = vmul.f32 %v2607, %v2733
        %v2871 = vmul.f32 %v2608, %v2733
        %v2872 = vmul.f32 %v2609, %v2733
        %v2873 = vmul.f32 %v2610, %v2733
        %v2874 = vmul.f32 %v2611, %v2733
        %v2875 = vmul.f32 %v2612, %v2733
        %v2876 = vmul.f32 %v2613, %v2733
        %v2877 = vmul.f32 %v2614, %v2733
        %v2878 = vmul.f32 %v2615, %v2733
        %v2879 = vmul.f32 %v2616, %v2733
        %v2880 = vmul.f32 %v2617, %v2733
        %v2881 = vmul.f32 %v2618, %v2733
        %v2882 = vmul.f32 %v2619, %v2733
        %v2883 = vmul.f32 %v2620, %v2733
        %v2884 = vmul.f32 %v2621, %v2733
        %v2885 = vmul.f32 %v2622, %v2733
        %v2886 = vmul.f32 %v2623, %v2733
        %v2887 = vmul.f32 %v2624, %v2733
        %v2888 = vmul.f32 %v2625, %v2733
        %v2889 = vmul.f32 %v2626, %v2733
        %v2890 = vmul.f32 %v2627, %v2733
        %v2891 = vmul.f32 %v2628, %v2733
        %v2892 = vmul.f32 %v2629, %v2733
        %v2893 = vmul.f32 %v2630, %v2733
        %v2894 = vmul.f32 %v2631, %v2733
        %v2895 = vmul.f32 %v2632, %v2733
        %v2896 = vmul.f32 %v2633, %v2733
        %v2897 = vmul.f32 %v2634, %v2733
        %v2898 = vmul.f32 %v2635, %v2733
        %v2899 = vmul.f32 %v2636, %v2733
        %v2900 = vmul.f32 %v2637, %v2733
        %v2901 = vmul.f32 %v2638, %v2733
        %v2902 = vmul.f32 %v2639, %v2733
        %v2903 = vmul.f32 %v2640, %v2733
        %v2904 = vmul.f32 %v2641, %v2733
        %v2905 = vmul.f32 %v2642, %v2733
        %v2906 = vmul.f32 %v2643, %v2733
        %v2907 = vmul.f32 %v2644, %v2733
        %v2908 = vmul.f32 %v2645, %v2733
        %v2909 = vmul.f32 %v2646, %v2733
        %v2910 = vmul.f32 %v2647, %v2733
        %v2911 = vmul.f32 %v2648, %v2733
        %v2912 = vmul.f32 %v2649, %v2733
        %v2913 = vmul.f32 %v2650, %v2733
        %v2914 = vmul.f32 %v2651, %v2733
        %v2915 = vmul.f32 %v2652, %v2733
        %v2916 = vmul.f32 %v2653, %v2733
        %v2917 = vmul.f32 %v2654, %v2733
        %v2918 = vmul.f32 %v2655, %v2733
        %v2919 = vmul.f32 %v2656, %v2733
        %v2920 = vmul.f32 %v2657, %v2733
        %v2921 = vmul.f32 %v2658, %v2733
        %v2922 = vmul.f32 %v2659, %v2733
        %v2923 = vmul.f32 %v2660, %v2733
        %v2924 = vmul.f32 %v2661, %v2733
        %v2925 = vmul.f32 %v2662, %v2733
        %v2926 = vmul.f32 %v2663, %v2733
        %v2927 = vmul.f32 %v2664, %v2733
        %v2928 = vmul.f32 %v2665, %v2733
        %v2929 = vmul.f32 %v2666, %v2733
        %v2930 = vmul.f32 %v2667, %v2733
        %v2931 = vmul.f32 %v2668, %v2733
        %v2932 = vmul.f32 %v2669, %v2733
        %v2933 = vmul.f32 %v2670, %v2733
        %v2934 = vmul.f32 %v2671, %v2733
        %v2935 = vmul.f32 %v2672, %v2733
        %v2936 = vmul.f32 %v2673, %v2733
        %v2937 = vmul.f32 %v2674, %v2733
        %v2938 = vmul.f32 %v2675, %v2733
        %v2939 = vmul.f32 %v2676, %v2733
        %v2940 = vmul.f32 %v2677, %v2733
        %v2941 = vmul.f32 %v2678, %v2733
        %v2942 = vmul.f32 %v2679, %v2733
        %v2943 = vmul.f32 %v2680, %v2733
        %v2944 = vmul.f32 %v2681, %v2733
        %v2945 = vmul.f32 %v2682, %v2733
        %v2946 = vmul.f32 %v2683, %v2733
        %v2947 = vmul.f32 %v2684, %v2733
        %v2948 = vmul.f32 %v2685, %v2733
        %v2949 = vmul.f32 %v2686, %v2733
        %v2950 = vmul.f32 %v2687, %v2733
        %v2951 = vmul.f32 %v2688, %v2733
        %v2952 = vmul.f32 %v2689, %v2733
        %v2953 = vmul.f32 %v2690, %v2733
        %v2954 = vmul.f32 %v2691, %v2733
        %v2955 = vmul.f32 %v2692, %v2733
        %v2956 = vmul.f32 %v2693, %v2733
        %v2957 = vmul.f32 %v2694, %v2733
        %v2958 = vmul.f32 %v2695, %v2733
        %v2959 = vmul.f32 %v2696, %v2733
        %v2960 = vmul.f32 %v2697, %v2733
        %v2961 = vmul.f32 %v2698, %v2733
        %v2962 = vmul.f32 %v2699, %v2733
        %v2963 = vmul.f32 %v2700, %v2733
        %v2964 = vmul.f32 %v2701, %v2733
        %v2965 = vmul.f32 %v2702, %v2733
        %v2966 = vmul.f32 %v2703, %v2733
        %v2967 = vmul.f32 %v2704, %v2733
        %v2968 = vmul.f32 %v2705, %v2733
        %v2969 = vmul.f32 %v2706, %v2733
        %v2970 = vmul.f32 %v2707, %v2733
        %v2971 = vmul.f32 %v2708, %v2733
        %v2972 = vmul.f32 %v2709, %v2733
        %v2973 = vmul.f32 %v2710, %v2733
        %v2974 = vmul.f32 %v2711, %v2733
        %v2975 = vmul.f32 %v2712, %v2733
        %v2976 = vmul.f32 %v2713, %v2733
        %v2977 = vmul.f32 %v2714, %v2733
        %v2978 = vmul.f32 %v2715, %v2733
        %v2979 = vmul.f32 %v2716, %v2733
        %v2980 = vmul.f32 %v2717, %v2733
        %v2981 = vmul.f32 %v2718, %v2733
        %v2982 = vmul.f32 %v2719, %v2733
        %v2983 = vmul.f32 %v2720, %v2733
        %v2984 = vmul.f32 %v2721, %v2733
        %v2985 = vmul.f32 %v2722, %v2733
        %v2986 = vmul.f32 %v2723, %v2733
        %v2987 = vmul.f32 %v2724, %v2733
        %v2988 = vmul.f32 %v2725, %v2733
        %v2989 = vmul.f32 %v2726, %v2733
        %v2990 = vmul.f32 %v2727, %v2733
        %2991 = vadd.xlane.f32.xlu0 %v2735
        %v2992 = vpop.xlane.xlu0 %2991
        %2993 = vadd.xlane.f32.xlu0 %v2736
        %v2994 = vpop.xlane.xlu0 %2993
        %2995 = vadd.xlane.f32.xlu0 %v2737
        %v2996 = vpop.xlane.xlu0 %2995
        %2997 = vadd.xlane.f32.xlu0 %v2738
        %v2998 = vpop.xlane.xlu0 %2997
        %2999 = vadd.xlane.f32.xlu0 %v2739
        %v3000 = vpop.xlane.xlu0 %2999
        %3001 = vadd.xlane.f32.xlu0 %v2740
        %v3002 = vpop.xlane.xlu0 %3001
        %3003 = vadd.xlane.f32.xlu0 %v2741
        %v3004 = vpop.xlane.xlu0 %3003
        %3005 = vadd.xlane.f32.xlu0 %v2742
        %v3006 = vpop.xlane.xlu0 %3005
        %3007 = vadd.xlane.f32.xlu0 %v2743
        %v3008 = vpop.xlane.xlu0 %3007
        %3009 = vadd.xlane.f32.xlu0 %v2744
        %v3010 = vpop.xlane.xlu0 %3009
        %3011 = vadd.xlane.f32.xlu0 %v2745
        %v3012 = vpop.xlane.xlu0 %3011
        %3013 = vadd.xlane.f32.xlu0 %v2746
        %v3014 = vpop.xlane.xlu0 %3013
        %3015 = vadd.xlane.f32.xlu0 %v2747
        %v3016 = vpop.xlane.xlu0 %3015
        %3017 = vadd.xlane.f32.xlu0 %v2748
        %v3018 = vpop.xlane.xlu0 %3017
        %3019 = vadd.xlane.f32.xlu0 %v2749
        %v3020 = vpop.xlane.xlu0 %3019
        %3021 = vadd.xlane.f32.xlu0 %v2750
        %v3022 = vpop.xlane.xlu0 %3021
        %3023 = vadd.xlane.f32.xlu0 %v2751
        %v3024 = vpop.xlane.xlu0 %3023
        %3025 = vadd.xlane.f32.xlu0 %v2752
        %v3026 = vpop.xlane.xlu0 %3025
        %3027 = vadd.xlane.f32.xlu0 %v2753
        %v3028 = vpop.xlane.xlu0 %3027
        %3029 = vadd.xlane.f32.xlu0 %v2754
        %v3030 = vpop.xlane.xlu0 %3029
        %3031 = vadd.xlane.f32.xlu0 %v2755
        %v3032 = vpop.xlane.xlu0 %3031
        %3033 = vadd.xlane.f32.xlu0 %v2756
        %v3034 = vpop.xlane.xlu0 %3033
        %3035 = vadd.xlane.f32.xlu0 %v2757
        %v3036 = vpop.xlane.xlu0 %3035
        %3037 = vadd.xlane.f32.xlu0 %v2758
        %v3038 = vpop.xlane.xlu0 %3037
        %3039 = vadd.xlane.f32.xlu0 %v2759
        %v3040 = vpop.xlane.xlu0 %3039
        %3041 = vadd.xlane.f32.xlu0 %v2760
        %v3042 = vpop.xlane.xlu0 %3041
        %3043 = vadd.xlane.f32.xlu0 %v2761
        %v3044 = vpop.xlane.xlu0 %3043
        %3045 = vadd.xlane.f32.xlu0 %v2762
        %v3046 = vpop.xlane.xlu0 %3045
        %3047 = vadd.xlane.f32.xlu0 %v2763
        %v3048 = vpop.xlane.xlu0 %3047
        %3049 = vadd.xlane.f32.xlu0 %v2764
        %v3050 = vpop.xlane.xlu0 %3049
        %3051 = vadd.xlane.f32.xlu0 %v2765
        %v3052 = vpop.xlane.xlu0 %3051
        %3053 = vadd.xlane.f32.xlu0 %v2766
        %v3054 = vpop.xlane.xlu0 %3053
        %3055 = vadd.xlane.f32.xlu0 %v2767
        %v3056 = vpop.xlane.xlu0 %3055
        %3057 = vadd.xlane.f32.xlu0 %v2768
        %v3058 = vpop.xlane.xlu0 %3057
        %3059 = vadd.xlane.f32.xlu0 %v2769
        %v3060 = vpop.xlane.xlu0 %3059
        %3061 = vadd.xlane.f32.xlu0 %v2770
        %v3062 = vpop.xlane.xlu0 %3061
        %3063 = vadd.xlane.f32.xlu0 %v2771
        %v3064 = vpop.xlane.xlu0 %3063
        %3065 = vadd.xlane.f32.xlu0 %v2772
        %v3066 = vpop.xlane.xlu0 %3065
        %3067 = vadd.xlane.f32.xlu0 %v2773
        %v3068 = vpop.xlane.xlu0 %3067
        %3069 = vadd.xlane.f32.xlu0 %v2774
        %v3070 = vpop.xlane.xlu0 %3069
        %3071 = vadd.xlane.f32.xlu0 %v2775
        %v3072 = vpop.xlane.xlu0 %3071
        %3073 = vadd.xlane.f32.xlu0 %v2776
        %v3074 = vpop.xlane.xlu0 %3073
        %3075 = vadd.xlane.f32.xlu0 %v2777
        %v3076 = vpop.xlane.xlu0 %3075
        %3077 = vadd.xlane.f32.xlu0 %v2778
        %v3078 = vpop.xlane.xlu0 %3077
        %3079 = vadd.xlane.f32.xlu0 %v2779
        %v3080 = vpop.xlane.xlu0 %3079
        %3081 = vadd.xlane.f32.xlu0 %v2780
        %v3082 = vpop.xlane.xlu0 %3081
        %3083 = vadd.xlane.f32.xlu0 %v2781
        %v3084 = vpop.xlane.xlu0 %3083
        %3085 = vadd.xlane.f32.xlu0 %v2782
        %v3086 = vpop.xlane.xlu0 %3085
        %3087 = vadd.xlane.f32.xlu0 %v2783
        %v3088 = vpop.xlane.xlu0 %3087
        %3089 = vadd.xlane.f32.xlu0 %v2784
        %v3090 = vpop.xlane.xlu0 %3089
        %3091 = vadd.xlane.f32.xlu0 %v2785
        %v3092 = vpop.xlane.xlu0 %3091
        %3093 = vadd.xlane.f32.xlu0 %v2786
        %v3094 = vpop.xlane.xlu0 %3093
        %3095 = vadd.xlane.f32.xlu0 %v2787
        %v3096 = vpop.xlane.xlu0 %3095
        %3097 = vadd.xlane.f32.xlu0 %v2788
        %v3098 = vpop.xlane.xlu0 %3097
        %3099 = vadd.xlane.f32.xlu0 %v2789
        %v3100 = vpop.xlane.xlu0 %3099
        %3101 = vadd.xlane.f32.xlu0 %v2790
        %v3102 = vpop.xlane.xlu0 %3101
        %3103 = vadd.xlane.f32.xlu0 %v2791
        %v3104 = vpop.xlane.xlu0 %3103
        %3105 = vadd.xlane.f32.xlu0 %v2792
        %v3106 = vpop.xlane.xlu0 %3105
        %3107 = vadd.xlane.f32.xlu0 %v2793
        %v3108 = vpop.xlane.xlu0 %3107
        %3109 = vadd.xlane.f32.xlu0 %v2794
        %v3110 = vpop.xlane.xlu0 %3109
        %3111 = vadd.xlane.f32.xlu0 %v2795
        %v3112 = vpop.xlane.xlu0 %3111
        %3113 = vadd.xlane.f32.xlu0 %v2796
        %v3114 = vpop.xlane.xlu0 %3113
        %3115 = vadd.xlane.f32.xlu0 %v2797
        %v3116 = vpop.xlane.xlu0 %3115
        %3117 = vadd.xlane.f32.xlu0 %v2798
        %v3118 = vpop.xlane.xlu0 %3117
        %3119 = vadd.xlane.f32.xlu0 %v2799
        %v3120 = vpop.xlane.xlu0 %3119
        %3121 = vadd.xlane.f32.xlu0 %v2800
        %v3122 = vpop.xlane.xlu0 %3121
        %3123 = vadd.xlane.f32.xlu0 %v2801
        %v3124 = vpop.xlane.xlu0 %3123
        %3125 = vadd.xlane.f32.xlu0 %v2802
        %v3126 = vpop.xlane.xlu0 %3125
        %3127 = vadd.xlane.f32.xlu0 %v2803
        %v3128 = vpop.xlane.xlu0 %3127
        %3129 = vadd.xlane.f32.xlu0 %v2804
        %v3130 = vpop.xlane.xlu0 %3129
        %3131 = vadd.xlane.f32.xlu0 %v2805
        %v3132 = vpop.xlane.xlu0 %3131
        %3133 = vadd.xlane.f32.xlu0 %v2806
        %v3134 = vpop.xlane.xlu0 %3133
        %3135 = vadd.xlane.f32.xlu0 %v2807
        %v3136 = vpop.xlane.xlu0 %3135
        %3137 = vadd.xlane.f32.xlu0 %v2808
        %v3138 = vpop.xlane.xlu0 %3137
        %3139 = vadd.xlane.f32.xlu0 %v2809
        %v3140 = vpop.xlane.xlu0 %3139
        %3141 = vadd.xlane.f32.xlu0 %v2810
        %v3142 = vpop.xlane.xlu0 %3141
        %3143 = vadd.xlane.f32.xlu0 %v2811
        %v3144 = vpop.xlane.xlu0 %3143
        %3145 = vadd.xlane.f32.xlu0 %v2812
        %v3146 = vpop.xlane.xlu0 %3145
        %3147 = vadd.xlane.f32.xlu0 %v2813
        %v3148 = vpop.xlane.xlu0 %3147
        %3149 = vadd.xlane.f32.xlu0 %v2814
        %v3150 = vpop.xlane.xlu0 %3149
        %3151 = vadd.xlane.f32.xlu0 %v2815
        %v3152 = vpop.xlane.xlu0 %3151
        %3153 = vadd.xlane.f32.xlu0 %v2816
        %v3154 = vpop.xlane.xlu0 %3153
        %3155 = vadd.xlane.f32.xlu0 %v2817
        %v3156 = vpop.xlane.xlu0 %3155
        %3157 = vadd.xlane.f32.xlu0 %v2818
        %v3158 = vpop.xlane.xlu0 %3157
        %3159 = vadd.xlane.f32.xlu0 %v2819
        %v3160 = vpop.xlane.xlu0 %3159
        %3161 = vadd.xlane.f32.xlu0 %v2820
        %v3162 = vpop.xlane.xlu0 %3161
        %3163 = vadd.xlane.f32.xlu0 %v2821
        %v3164 = vpop.xlane.xlu0 %3163
        %3165 = vadd.xlane.f32.xlu0 %v2822
        %v3166 = vpop.xlane.xlu0 %3165
        %3167 = vadd.xlane.f32.xlu0 %v2823
        %v3168 = vpop.xlane.xlu0 %3167
        %3169 = vadd.xlane.f32.xlu0 %v2824
        %v3170 = vpop.xlane.xlu0 %3169
        %3171 = vadd.xlane.f32.xlu0 %v2825
        %v3172 = vpop.xlane.xlu0 %3171
        %3173 = vadd.xlane.f32.xlu0 %v2826
        %v3174 = vpop.xlane.xlu0 %3173
        %3175 = vadd.xlane.f32.xlu0 %v2827
        %v3176 = vpop.xlane.xlu0 %3175
        %3177 = vadd.xlane.f32.xlu0 %v2828
        %v3178 = vpop.xlane.xlu0 %3177
        %3179 = vadd.xlane.f32.xlu0 %v2829
        %v3180 = vpop.xlane.xlu0 %3179
        %3181 = vadd.xlane.f32.xlu0 %v2830
        %v3182 = vpop.xlane.xlu0 %3181
        %3183 = vadd.xlane.f32.xlu0 %v2831
        %v3184 = vpop.xlane.xlu0 %3183
        %3185 = vadd.xlane.f32.xlu0 %v2832
        %v3186 = vpop.xlane.xlu0 %3185
        %3187 = vadd.xlane.f32.xlu0 %v2833
        %v3188 = vpop.xlane.xlu0 %3187
        %3189 = vadd.xlane.f32.xlu0 %v2834
        %v3190 = vpop.xlane.xlu0 %3189
        %3191 = vadd.xlane.f32.xlu0 %v2835
        %v3192 = vpop.xlane.xlu0 %3191
        %3193 = vadd.xlane.f32.xlu0 %v2836
        %v3194 = vpop.xlane.xlu0 %3193
        %3195 = vadd.xlane.f32.xlu0 %v2837
        %v3196 = vpop.xlane.xlu0 %3195
        %3197 = vadd.xlane.f32.xlu0 %v2838
        %v3198 = vpop.xlane.xlu0 %3197
        %3199 = vadd.xlane.f32.xlu0 %v2839
        %v3200 = vpop.xlane.xlu0 %3199
        %3201 = vadd.xlane.f32.xlu0 %v2840
        %v3202 = vpop.xlane.xlu0 %3201
        %3203 = vadd.xlane.f32.xlu0 %v2841
        %v3204 = vpop.xlane.xlu0 %3203
        %3205 = vadd.xlane.f32.xlu0 %v2842
        %v3206 = vpop.xlane.xlu0 %3205
        %3207 = vadd.xlane.f32.xlu0 %v2843
        %v3208 = vpop.xlane.xlu0 %3207
        %3209 = vadd.xlane.f32.xlu0 %v2844
        %v3210 = vpop.xlane.xlu0 %3209
        %3211 = vadd.xlane.f32.xlu0 %v2845
        %v3212 = vpop.xlane.xlu0 %3211
        %3213 = vadd.xlane.f32.xlu0 %v2846
        %v3214 = vpop.xlane.xlu0 %3213
        %3215 = vadd.xlane.f32.xlu0 %v2847
        %v3216 = vpop.xlane.xlu0 %3215
        %3217 = vadd.xlane.f32.xlu0 %v2848
        %v3218 = vpop.xlane.xlu0 %3217
        %3219 = vadd.xlane.f32.xlu0 %v2849
        %v3220 = vpop.xlane.xlu0 %3219
        %3221 = vadd.xlane.f32.xlu0 %v2850
        %v3222 = vpop.xlane.xlu0 %3221
        %3223 = vadd.xlane.f32.xlu0 %v2851
        %v3224 = vpop.xlane.xlu0 %3223
        %3225 = vadd.xlane.f32.xlu0 %v2852
        %v3226 = vpop.xlane.xlu0 %3225
        %3227 = vadd.xlane.f32.xlu0 %v2853
        %v3228 = vpop.xlane.xlu0 %3227
        %3229 = vadd.xlane.f32.xlu0 %v2854
        %v3230 = vpop.xlane.xlu0 %3229
        %3231 = vadd.xlane.f32.xlu0 %v2855
        %v3232 = vpop.xlane.xlu0 %3231
        %3233 = vadd.xlane.f32.xlu0 %v2856
        %v3234 = vpop.xlane.xlu0 %3233
        %3235 = vadd.xlane.f32.xlu0 %v2857
        %v3236 = vpop.xlane.xlu0 %3235
        %3237 = vadd.xlane.f32.xlu0 %v2858
        %v3238 = vpop.xlane.xlu0 %3237
        %3239 = vadd.xlane.f32.xlu0 %v2859
        %v3240 = vpop.xlane.xlu0 %3239
        %3241 = vadd.xlane.f32.xlu0 %v2860
        %v3242 = vpop.xlane.xlu0 %3241
        %3243 = vadd.xlane.f32.xlu0 %v2861
        %v3244 = vpop.xlane.xlu0 %3243
        %3245 = vadd.xlane.f32.xlu0 %v2862
        %v3246 = vpop.xlane.xlu0 %3245
        %3247 = vadd.xlane.f32.xlu0 %v2863
        %v3248 = vpop.xlane.xlu0 %3247
        %3249 = vadd.xlane.f32.xlu0 %v2864
        %v3250 = vpop.xlane.xlu0 %3249
        %3251 = vadd.xlane.f32.xlu0 %v2865
        %v3252 = vpop.xlane.xlu0 %3251
        %3253 = vadd.xlane.f32.xlu0 %v2866
        %v3254 = vpop.xlane.xlu0 %3253
        %3255 = vadd.xlane.f32.xlu0 %v2867
        %v3256 = vpop.xlane.xlu0 %3255
        %3257 = vadd.xlane.f32.xlu0 %v2868
        %v3258 = vpop.xlane.xlu0 %3257
        %3259 = vadd.xlane.f32.xlu0 %v2869
        %v3260 = vpop.xlane.xlu0 %3259
        %3261 = vadd.xlane.f32.xlu0 %v2870
        %v3262 = vpop.xlane.xlu0 %3261
        %3263 = vadd.xlane.f32.xlu0 %v2871
        %v3264 = vpop.xlane.xlu0 %3263
        %3265 = vadd.xlane.f32.xlu0 %v2872
        %v3266 = vpop.xlane.xlu0 %3265
        %3267 = vadd.xlane.f32.xlu0 %v2873
        %v3268 = vpop.xlane.xlu0 %3267
        %3269 = vadd.xlane.f32.xlu0 %v2874
        %v3270 = vpop.xlane.xlu0 %3269
        %3271 = vadd.xlane.f32.xlu0 %v2875
        %v3272 = vpop.xlane.xlu0 %3271
        %3273 = vadd.xlane.f32.xlu0 %v2876
        %v3274 = vpop.xlane.xlu0 %3273
        %3275 = vadd.xlane.f32.xlu0 %v2877
        %v3276 = vpop.xlane.xlu0 %3275
        %3277 = vadd.xlane.f32.xlu0 %v2878
        %v3278 = vpop.xlane.xlu0 %3277
        %3279 = vadd.xlane.f32.xlu0 %v2879
        %v3280 = vpop.xlane.xlu0 %3279
        %3281 = vadd.xlane.f32.xlu0 %v2880
        %v3282 = vpop.xlane.xlu0 %3281
        %3283 = vadd.xlane.f32.xlu0 %v2881
        %v3284 = vpop.xlane.xlu0 %3283
        %3285 = vadd.xlane.f32.xlu0 %v2882
        %v3286 = vpop.xlane.xlu0 %3285
        %3287 = vadd.xlane.f32.xlu0 %v2883
        %v3288 = vpop.xlane.xlu0 %3287
        %3289 = vadd.xlane.f32.xlu0 %v2884
        %v3290 = vpop.xlane.xlu0 %3289
        %3291 = vadd.xlane.f32.xlu0 %v2885
        %v3292 = vpop.xlane.xlu0 %3291
        %3293 = vadd.xlane.f32.xlu0 %v2886
        %v3294 = vpop.xlane.xlu0 %3293
        %3295 = vadd.xlane.f32.xlu0 %v2887
        %v3296 = vpop.xlane.xlu0 %3295
        %3297 = vadd.xlane.f32.xlu0 %v2888
        %v3298 = vpop.xlane.xlu0 %3297
        %3299 = vadd.xlane.f32.xlu0 %v2889
        %v3300 = vpop.xlane.xlu0 %3299
        %3301 = vadd.xlane.f32.xlu0 %v2890
        %v3302 = vpop.xlane.xlu0 %3301
        %3303 = vadd.xlane.f32.xlu0 %v2891
        %v3304 = vpop.xlane.xlu0 %3303
        %3305 = vadd.xlane.f32.xlu0 %v2892
        %v3306 = vpop.xlane.xlu0 %3305
        %3307 = vadd.xlane.f32.xlu0 %v2893
        %v3308 = vpop.xlane.xlu0 %3307
        %3309 = vadd.xlane.f32.xlu0 %v2894
        %v3310 = vpop.xlane.xlu0 %3309
        %3311 = vadd.xlane.f32.xlu0 %v2895
        %v3312 = vpop.xlane.xlu0 %3311
        %3313 = vadd.xlane.f32.xlu0 %v2896
        %v3314 = vpop.xlane.xlu0 %3313
        %3315 = vadd.xlane.f32.xlu0 %v2897
        %v3316 = vpop.xlane.xlu0 %3315
        %3317 = vadd.xlane.f32.xlu0 %v2898
        %v3318 = vpop.xlane.xlu0 %3317
        %3319 = vadd.xlane.f32.xlu0 %v2899
        %v3320 = vpop.xlane.xlu0 %3319
        %3321 = vadd.xlane.f32.xlu0 %v2900
        %v3322 = vpop.xlane.xlu0 %3321
        %3323 = vadd.xlane.f32.xlu0 %v2901
        %v3324 = vpop.xlane.xlu0 %3323
        %3325 = vadd.xlane.f32.xlu0 %v2902
        %v3326 = vpop.xlane.xlu0 %3325
        %3327 = vadd.xlane.f32.xlu0 %v2903
        %v3328 = vpop.xlane.xlu0 %3327
        %3329 = vadd.xlane.f32.xlu0 %v2904
        %v3330 = vpop.xlane.xlu0 %3329
        %3331 = vadd.xlane.f32.xlu0 %v2905
        %v3332 = vpop.xlane.xlu0 %3331
        %3333 = vadd.xlane.f32.xlu0 %v2906
        %v3334 = vpop.xlane.xlu0 %3333
        %3335 = vadd.xlane.f32.xlu0 %v2907
        %v3336 = vpop.xlane.xlu0 %3335
        %3337 = vadd.xlane.f32.xlu0 %v2908
        %v3338 = vpop.xlane.xlu0 %3337
        %3339 = vadd.xlane.f32.xlu0 %v2909
        %v3340 = vpop.xlane.xlu0 %3339
        %3341 = vadd.xlane.f32.xlu0 %v2910
        %v3342 = vpop.xlane.xlu0 %3341
        %3343 = vadd.xlane.f32.xlu0 %v2911
        %v3344 = vpop.xlane.xlu0 %3343
        %3345 = vadd.xlane.f32.xlu0 %v2912
        %v3346 = vpop.xlane.xlu0 %3345
        %3347 = vadd.xlane.f32.xlu0 %v2913
        %v3348 = vpop.xlane.xlu0 %3347
        %3349 = vadd.xlane.f32.xlu0 %v2914
        %v3350 = vpop.xlane.xlu0 %3349
        %3351 = vadd.xlane.f32.xlu0 %v2915
        %v3352 = vpop.xlane.xlu0 %3351
        %3353 = vadd.xlane.f32.xlu0 %v2916
        %v3354 = vpop.xlane.xlu0 %3353
        %3355 = vadd.xlane.f32.xlu0 %v2917
        %v3356 = vpop.xlane.xlu0 %3355
        %3357 = vadd.xlane.f32.xlu0 %v2918
        %v3358 = vpop.xlane.xlu0 %3357
        %3359 = vadd.xlane.f32.xlu0 %v2919
        %v3360 = vpop.xlane.xlu0 %3359
        %3361 = vadd.xlane.f32.xlu0 %v2920
        %v3362 = vpop.xlane.xlu0 %3361
        %3363 = vadd.xlane.f32.xlu0 %v2921
        %v3364 = vpop.xlane.xlu0 %3363
        %3365 = vadd.xlane.f32.xlu0 %v2922
        %v3366 = vpop.xlane.xlu0 %3365
        %3367 = vadd.xlane.f32.xlu0 %v2923
        %v3368 = vpop.xlane.xlu0 %3367
        %3369 = vadd.xlane.f32.xlu0 %v2924
        %v3370 = vpop.xlane.xlu0 %3369
        %3371 = vadd.xlane.f32.xlu0 %v2925
        %v3372 = vpop.xlane.xlu0 %3371
        %3373 = vadd.xlane.f32.xlu0 %v2926
        %v3374 = vpop.xlane.xlu0 %3373
        %3375 = vadd.xlane.f32.xlu0 %v2927
        %v3376 = vpop.xlane.xlu0 %3375
        %3377 = vadd.xlane.f32.xlu0 %v2928
        %v3378 = vpop.xlane.xlu0 %3377
        %3379 = vadd.xlane.f32.xlu0 %v2929
        %v3380 = vpop.xlane.xlu0 %3379
        %3381 = vadd.xlane.f32.xlu0 %v2930
        %v3382 = vpop.xlane.xlu0 %3381
        %3383 = vadd.xlane.f32.xlu0 %v2931
        %v3384 = vpop.xlane.xlu0 %3383
        %3385 = vadd.xlane.f32.xlu0 %v2932
        %v3386 = vpop.xlane.xlu0 %3385
        %3387 = vadd.xlane.f32.xlu0 %v2933
        %v3388 = vpop.xlane.xlu0 %3387
        %3389 = vadd.xlane.f32.xlu0 %v2934
        %v3390 = vpop.xlane.xlu0 %3389
        %3391 = vadd.xlane.f32.xlu0 %v2935
        %v3392 = vpop.xlane.xlu0 %3391
        %3393 = vadd.xlane.f32.xlu0 %v2936
        %v3394 = vpop.xlane.xlu0 %3393
        %3395 = vadd.xlane.f32.xlu0 %v2937
        %v3396 = vpop.xlane.xlu0 %3395
        %3397 = vadd.xlane.f32.xlu0 %v2938
        %v3398 = vpop.xlane.xlu0 %3397
        %3399 = vadd.xlane.f32.xlu0 %v2939
        %v3400 = vpop.xlane.xlu0 %3399
        %3401 = vadd.xlane.f32.xlu0 %v2940
        %v3402 = vpop.xlane.xlu0 %3401
        %3403 = vadd.xlane.f32.xlu0 %v2941
        %v3404 = vpop.xlane.xlu0 %3403
        %3405 = vadd.xlane.f32.xlu0 %v2942
        %v3406 = vpop.xlane.xlu0 %3405
        %3407 = vadd.xlane.f32.xlu0 %v2943
        %v3408 = vpop.xlane.xlu0 %3407
        %3409 = vadd.xlane.f32.xlu0 %v2944
        %v3410 = vpop.xlane.xlu0 %3409
        %3411 = vadd.xlane.f32.xlu0 %v2945
        %v3412 = vpop.xlane.xlu0 %3411
        %3413 = vadd.xlane.f32.xlu0 %v2946
        %v3414 = vpop.xlane.xlu0 %3413
        %3415 = vadd.xlane.f32.xlu0 %v2947
        %v3416 = vpop.xlane.xlu0 %3415
        %3417 = vadd.xlane.f32.xlu0 %v2948
        %v3418 = vpop.xlane.xlu0 %3417
        %3419 = vadd.xlane.f32.xlu0 %v2949
        %v3420 = vpop.xlane.xlu0 %3419
        %3421 = vadd.xlane.f32.xlu0 %v2950
        %v3422 = vpop.xlane.xlu0 %3421
        %3423 = vadd.xlane.f32.xlu0 %v2951
        %v3424 = vpop.xlane.xlu0 %3423
        %3425 = vadd.xlane.f32.xlu0 %v2952
        %v3426 = vpop.xlane.xlu0 %3425
        %3427 = vadd.xlane.f32.xlu0 %v2953
        %v3428 = vpop.xlane.xlu0 %3427
        %3429 = vadd.xlane.f32.xlu0 %v2954
        %v3430 = vpop.xlane.xlu0 %3429
        %3431 = vadd.xlane.f32.xlu0 %v2955
        %v3432 = vpop.xlane.xlu0 %3431
        %3433 = vadd.xlane.f32.xlu0 %v2956
        %v3434 = vpop.xlane.xlu0 %3433
        %3435 = vadd.xlane.f32.xlu0 %v2957
        %v3436 = vpop.xlane.xlu0 %3435
        %3437 = vadd.xlane.f32.xlu0 %v2958
        %v3438 = vpop.xlane.xlu0 %3437
        %3439 = vadd.xlane.f32.xlu0 %v2959
        %v3440 = vpop.xlane.xlu0 %3439
        %3441 = vadd.xlane.f32.xlu0 %v2960
        %v3442 = vpop.xlane.xlu0 %3441
        %3443 = vadd.xlane.f32.xlu0 %v2961
        %v3444 = vpop.xlane.xlu0 %3443
        %3445 = vadd.xlane.f32.xlu0 %v2962
        %v3446 = vpop.xlane.xlu0 %3445
        %3447 = vadd.xlane.f32.xlu0 %v2963
        %v3448 = vpop.xlane.xlu0 %3447
        %3449 = vadd.xlane.f32.xlu0 %v2964
        %v3450 = vpop.xlane.xlu0 %3449
        %3451 = vadd.xlane.f32.xlu0 %v2965
        %v3452 = vpop.xlane.xlu0 %3451
        %3453 = vadd.xlane.f32.xlu0 %v2966
        %v3454 = vpop.xlane.xlu0 %3453
        %3455 = vadd.xlane.f32.xlu0 %v2967
        %v3456 = vpop.xlane.xlu0 %3455
        %3457 = vadd.xlane.f32.xlu0 %v2968
        %v3458 = vpop.xlane.xlu0 %3457
        %3459 = vadd.xlane.f32.xlu0 %v2969
        %v3460 = vpop.xlane.xlu0 %3459
        %3461 = vadd.xlane.f32.xlu0 %v2970
        %v3462 = vpop.xlane.xlu0 %3461
        %3463 = vadd.xlane.f32.xlu0 %v2971
        %v3464 = vpop.xlane.xlu0 %3463
        %3465 = vadd.xlane.f32.xlu0 %v2972
        %v3466 = vpop.xlane.xlu0 %3465
        %3467 = vadd.xlane.f32.xlu0 %v2973
        %v3468 = vpop.xlane.xlu0 %3467
        %3469 = vadd.xlane.f32.xlu0 %v2974
        %v3470 = vpop.xlane.xlu0 %3469
        %3471 = vadd.xlane.f32.xlu0 %v2975
        %v3472 = vpop.xlane.xlu0 %3471
        %3473 = vadd.xlane.f32.xlu0 %v2976
        %v3474 = vpop.xlane.xlu0 %3473
        %3475 = vadd.xlane.f32.xlu0 %v2977
        %v3476 = vpop.xlane.xlu0 %3475
        %3477 = vadd.xlane.f32.xlu0 %v2978
        %v3478 = vpop.xlane.xlu0 %3477
        %3479 = vadd.xlane.f32.xlu0 %v2979
        %v3480 = vpop.xlane.xlu0 %3479
        %3481 = vadd.xlane.f32.xlu0 %v2980
        %v3482 = vpop.xlane.xlu0 %3481
        %3483 = vadd.xlane.f32.xlu0 %v2981
        %v3484 = vpop.xlane.xlu0 %3483
        %3485 = vadd.xlane.f32.xlu0 %v2982
        %v3486 = vpop.xlane.xlu0 %3485
        %3487 = vadd.xlane.f32.xlu0 %v2983
        %v3488 = vpop.xlane.xlu0 %3487
        %3489 = vadd.xlane.f32.xlu0 %v2984
        %v3490 = vpop.xlane.xlu0 %3489
        %3491 = vadd.xlane.f32.xlu0 %v2985
        %v3492 = vpop.xlane.xlu0 %3491
        %3493 = vadd.xlane.f32.xlu0 %v2986
        %v3494 = vpop.xlane.xlu0 %3493
        %3495 = vadd.xlane.f32.xlu0 %v2987
        %v3496 = vpop.xlane.xlu0 %3495
        %3497 = vadd.xlane.f32.xlu0 %v2988
        %v3498 = vpop.xlane.xlu0 %3497
        %3499 = vadd.xlane.f32.xlu0 %v2989
        %v3500 = vpop.xlane.xlu0 %3499
        %3501 = vadd.xlane.f32.xlu0 %v2990
        %v3502 = vpop.xlane.xlu0 %3501
        %v3503 = vld [vmem:[#allocation2] sm:$0xff]
        %v3760 = vlaneseq
        %v3761 = vand.u32 %v3760, 127
        %v3762 = vlaneseq
        %v3763 = vshrl.u32 %v3762, 7
        %v3764 = vsub.s32 %v3761, %v3763
        %v3765 = vrot.slane %v2992, %v3764
        %v3766 = vadd.s32 %v3761, 4294967288
        %v3767 = vlaneseq
        %v3768 = vshrl.u32 %v3767, 7
        %v3769 = vsub.s32 %v3766, %v3768
        %v3770 = vrot.slane %v2994, %v3769
        %vm3771 = vcmask 130112
        %v3772 = vsel %vm3771, %v3770, %v3765
        %v3773 = vadd.s32 %v3761, 4294967280
        %v3774 = vlaneseq
        %v3775 = vshrl.u32 %v3774, 7
        %v3776 = vsub.s32 %v3773, %v3775
        %v3777 = vrot.slane %v2996, %v3776
        %vm3778 = vcmask 195712
        %v3779 = vsel %vm3778, %v3777, %v3772
        %v3780 = vadd.s32 %v3761, 4294967272
        %v3781 = vlaneseq
        %v3782 = vshrl.u32 %v3781, 7
        %v3783 = vsub.s32 %v3780, %v3782
        %v3784 = vrot.slane %v2998, %v3783
        %vm3785 = vcmask 261312
        %v3786 = vsel %vm3785, %v3784, %v3779
        %v3787 = vadd.s32 %v3761, 4294967264
        %v3788 = vlaneseq
        %v3789 = vshrl.u32 %v3788, 7
        %v3790 = vsub.s32 %v3787, %v3789
        %v3791 = vrot.slane %v3000, %v3790
        %vm3792 = vcmask 326912
        %v3793 = vsel %vm3792, %v3791, %v3786
        %v3794 = vadd.s32 %v3761, 4294967256
        %v3795 = vlaneseq
        %v3796 = vshrl.u32 %v3795, 7
        %v3797 = vsub.s32 %v3794, %v3796
        %v3798 = vrot.slane %v3002, %v3797
        %vm3799 = vcmask 392512
        %v3800 = vsel %vm3799, %v3798, %v3793
        %v3801 = vadd.s32 %v3761, 4294967248
        %v3802 = vlaneseq
        %v3803 = vshrl.u32 %v3802, 7
        %v3804 = vsub.s32 %v3801, %v3803
        %v3805 = vrot.slane %v3004, %v3804
        %vm3806 = vcmask 458112
        %v3807 = vsel %vm3806, %v3805, %v3800
        %v3808 = vadd.s32 %v3761, 4294967240
        %v3809 = vlaneseq
        %v3810 = vshrl.u32 %v3809, 7
        %v3811 = vsub.s32 %v3808, %v3810
        %v3812 = vrot.slane %v3006, %v3811
        %vm3813 = vcmask 523712
        %v3814 = vsel %vm3813, %v3812, %v3807
        %v3815 = vadd.s32 %v3761, 4294967232
        %v3816 = vlaneseq
        %v3817 = vshrl.u32 %v3816, 7
        %v3818 = vsub.s32 %v3815, %v3817
        %v3819 = vrot.slane %v3008, %v3818
        %vm3820 = vcmask 589312
        %v3821 = vsel %vm3820, %v3819, %v3814
        %v3822 = vadd.s32 %v3761, 4294967224
        %v3823 = vlaneseq
        %v3824 = vshrl.u32 %v3823, 7
        %v3825 = vsub.s32 %v3822, %v3824
        %v3826 = vrot.slane %v3010, %v3825
        %vm3827 = vcmask 654912
        %v3828 = vsel %vm3827, %v3826, %v3821
        %v3829 = vadd.s32 %v3761, 4294967216
        %v3830 = vlaneseq
        %v3831 = vshrl.u32 %v3830, 7
        %v3832 = vsub.s32 %v3829, %v3831
        %v3833 = vrot.slane %v3012, %v3832
        %vm3834 = vcmask 720512
        %v3835 = vsel %vm3834, %v3833, %v3828
        %v3836 = vadd.s32 %v3761, 4294967208
        %v3837 = vlaneseq
        %v3838 = vshrl.u32 %v3837, 7
        %v3839 = vsub.s32 %v3836, %v3838
        %v3840 = vrot.slane %v3014, %v3839
        %vm3841 = vcmask 786112
        %v3842 = vsel %vm3841, %v3840, %v3835
        %v3843 = vadd.s32 %v3761, 4294967200
        %v3844 = vlaneseq
        %v3845 = vshrl.u32 %v3844, 7
        %v3846 = vsub.s32 %v3843, %v3845
        %v3847 = vrot.slane %v3016, %v3846
        %vm3848 = vcmask 851712
        %v3849 = vsel %vm3848, %v3847, %v3842
        %v3850 = vadd.s32 %v3761, 4294967192
        %v3851 = vlaneseq
        %v3852 = vshrl.u32 %v3851, 7
        %v3853 = vsub.s32 %v3850, %v3852
        %v3854 = vrot.slane %v3018, %v3853
        %vm3855 = vcmask 917312
        %v3856 = vsel %vm3855, %v3854, %v3849
        %v3857 = vadd.s32 %v3761, 4294967184
        %v3858 = vlaneseq
        %v3859 = vshrl.u32 %v3858, 7
        %v3860 = vsub.s32 %v3857, %v3859
        %v3861 = vrot.slane %v3020, %v3860
        %vm3862 = vcmask 982912
        %v3863 = vsel %vm3862, %v3861, %v3856
        %v3864 = vadd.s32 %v3761, 4294967176
        %v3865 = vlaneseq
        %v3866 = vshrl.u32 %v3865, 7
        %v3867 = vsub.s32 %v3864, %v3866
        %v3868 = vrot.slane %v3022, %v3867
        %vm3869 = vcmask 1048512
        %v3870 = vsel %vm3869, %v3868, %v3863
        %v3871 = vlaneseq
        %v3872 = vshrl.u32 %v3871, 7
        %v3873 = vsub.s32 %v3761, %v3872
        %v3874 = vrot.slane %v3024, %v3873
        %v3875 = vlaneseq
        %v3876 = vshrl.u32 %v3875, 7
        %v3877 = vsub.s32 %v3766, %v3876
        %v3878 = vrot.slane %v3026, %v3877
        %v3879 = vsel %vm3771, %v3878, %v3874
        %v3880 = vlaneseq
        %v3881 = vshrl.u32 %v3880, 7
        %v3882 = vsub.s32 %v3773, %v3881
        %v3883 = vrot.slane %v3028, %v3882
        %v3884 = vsel %vm3778, %v3883, %v3879
        %v3885 = vlaneseq
        %v3886 = vshrl.u32 %v3885, 7
        %v3887 = vsub.s32 %v3780, %v3886
        %v3888 = vrot.slane %v3030, %v3887
        %v3889 = vsel %vm3785, %v3888, %v3884
        %v3890 = vlaneseq
        %v3891 = vshrl.u32 %v3890, 7
        %v3892 = vsub.s32 %v3787, %v3891
        %v3893 = vrot.slane %v3032, %v3892
        %v3894 = vsel %vm3792, %v3893, %v3889
        %v3895 = vlaneseq
        %v3896 = vshrl.u32 %v3895, 7
        %v3897 = vsub.s32 %v3794, %v3896
        %v3898 = vrot.slane %v3034, %v3897
        %v3899 = vsel %vm3799, %v3898, %v3894
        %v3900 = vlaneseq
        %v3901 = vshrl.u32 %v3900, 7
        %v3902 = vsub.s32 %v3801, %v3901
        %v3903 = vrot.slane %v3036, %v3902
        %v3904 = vsel %vm3806, %v3903, %v3899
        %v3905 = vlaneseq
        %v3906 = vshrl.u32 %v3905, 7
        %v3907 = vsub.s32 %v3808, %v3906
        %v3908 = vrot.slane %v3038, %v3907
        %v3909 = vsel %vm3813, %v3908, %v3904
        %v3910 = vlaneseq
        %v3911 = vshrl.u32 %v3910, 7
        %v3912 = vsub.s32 %v3815, %v3911
        %v3913 = vrot.slane %v3040, %v3912
        %v3914 = vsel %vm3820, %v3913, %v3909
        %v3915 = vlaneseq
        %v3916 = vshrl.u32 %v3915, 7
        %v3917 = vsub.s32 %v3822, %v3916
        %v3918 = vrot.slane %v3042, %v3917
        %v3919 = vsel %vm3827, %v3918, %v3914
        %v3920 = vlaneseq
        %v3921 = vshrl.u32 %v3920, 7
        %v3922 = vsub.s32 %v3829, %v3921
        %v3923 = vrot.slane %v3044, %v3922
        %v3924 = vsel %vm3834, %v3923, %v3919
        %v3925 = vlaneseq
        %v3926 = vshrl.u32 %v3925, 7
        %v3927 = vsub.s32 %v3836, %v3926
        %v3928 = vrot.slane %v3046, %v3927
        %v3929 = vsel %vm3841, %v3928, %v3924
        %v3930 = vlaneseq
        %v3931 = vshrl.u32 %v3930, 7
        %v3932 = vsub.s32 %v3843, %v3931
        %v3933 = vrot.slane %v3048, %v3932
        %v3934 = vsel %vm3848, %v3933, %v3929
        %v3935 = vlaneseq
        %v3936 = vshrl.u32 %v3935, 7
        %v3937 = vsub.s32 %v3850, %v3936
        %v3938 = vrot.slane %v3050, %v3937
        %v3939 = vsel %vm3855, %v3938, %v3934
        %v3940 = vlaneseq
        %v3941 = vshrl.u32 %v3940, 7
        %v3942 = vsub.s32 %v3857, %v3941
        %v3943 = vrot.slane %v3052, %v3942
        %v3944 = vsel %vm3862, %v3943, %v3939
        %v3945 = vlaneseq
        %v3946 = vshrl.u32 %v3945, 7
        %v3947 = vsub.s32 %v3864, %v3946
        %v3948 = vrot.slane %v3054, %v3947
        %v3949 = vsel %vm3869, %v3948, %v3944
        %v3950 = vlaneseq
        %v3951 = vshrl.u32 %v3950, 7
        %v3952 = vsub.s32 %v3761, %v3951
        %v3953 = vrot.slane %v3056, %v3952
        %v3954 = vlaneseq
        %v3955 = vshrl.u32 %v3954, 7
        %v3956 = vsub.s32 %v3766, %v3955
        %v3957 = vrot.slane %v3058, %v3956
        %v3958 = vsel %vm3771, %v3957, %v3953
        %v3959 = vlaneseq
        %v3960 = vshrl.u32 %v3959, 7
        %v3961 = vsub.s32 %v3773, %v3960
        %v3962 = vrot.slane %v3060, %v3961
        %v3963 = vsel %vm3778, %v3962, %v3958
        %v3964 = vlaneseq
        %v3965 = vshrl.u32 %v3964, 7
        %v3966 = vsub.s32 %v3780, %v3965
        %v3967 = vrot.slane %v3062, %v3966
        %v3968 = vsel %vm3785, %v3967, %v3963
        %v3969 = vlaneseq
        %v3970 = vshrl.u32 %v3969, 7
        %v3971 = vsub.s32 %v3787, %v3970
        %v3972 = vrot.slane %v3064, %v3971
        %v3973 = vsel %vm3792, %v3972, %v3968
        %v3974 = vlaneseq
        %v3975 = vshrl.u32 %v3974, 7
        %v3976 = vsub.s32 %v3794, %v3975
        %v3977 = vrot.slane %v3066, %v3976
        %v3978 = vsel %vm3799, %v3977, %v3973
        %v3979 = vlaneseq
        %v3980 = vshrl.u32 %v3979, 7
        %v3981 = vsub.s32 %v3801, %v3980
        %v3982 = vrot.slane %v3068, %v3981
        %v3983 = vsel %vm3806, %v3982, %v3978
        %v3984 = vlaneseq
        %v3985 = vshrl.u32 %v3984, 7
        %v3986 = vsub.s32 %v3808, %v3985
        %v3987 = vrot.slane %v3070, %v3986
        %v3988 = vsel %vm3813, %v3987, %v3983
        %v3989 = vlaneseq
        %v3990 = vshrl.u32 %v3989, 7
        %v3991 = vsub.s32 %v3815, %v3990
        %v3992 = vrot.slane %v3072, %v3991
        %v3993 = vsel %vm3820, %v3992, %v3988
        %v3994 = vlaneseq
        %v3995 = vshrl.u32 %v3994, 7
        %v3996 = vsub.s32 %v3822, %v3995
        %v3997 = vrot.slane %v3074, %v3996
        %v3998 = vsel %vm3827, %v3997, %v3993
        %v3999 = vlaneseq
        %v4000 = vshrl.u32 %v3999, 7
        %v4001 = vsub.s32 %v3829, %v4000
        %v4002 = vrot.slane %v3076, %v4001
        %v4003 = vsel %vm3834, %v4002, %v3998
        %v4004 = vlaneseq
        %v4005 = vshrl.u32 %v4004, 7
        %v4006 = vsub.s32 %v3836, %v4005
        %v4007 = vrot.slane %v3078, %v4006
        %v4008 = vsel %vm3841, %v4007, %v4003
        %v4009 = vlaneseq
        %v4010 = vshrl.u32 %v4009, 7
        %v4011 = vsub.s32 %v3843, %v4010
        %v4012 = vrot.slane %v3080, %v4011
        %v4013 = vsel %vm3848, %v4012, %v4008
        %v4014 = vlaneseq
        %v4015 = vshrl.u32 %v4014, 7
        %v4016 = vsub.s32 %v3850, %v4015
        %v4017 = vrot.slane %v3082, %v4016
        %v4018 = vsel %vm3855, %v4017, %v4013
        %v4019 = vlaneseq
        %v4020 = vshrl.u32 %v4019, 7
        %v4021 = vsub.s32 %v3857, %v4020
        %v4022 = vrot.slane %v3084, %v4021
        %v4023 = vsel %vm3862, %v4022, %v4018
        %v4024 = vlaneseq
        %v4025 = vshrl.u32 %v4024, 7
        %v4026 = vsub.s32 %v3864, %v4025
        %v4027 = vrot.slane %v3086, %v4026
        %v4028 = vsel %vm3869, %v4027, %v4023
        %v4029 = vlaneseq
        %v4030 = vshrl.u32 %v4029, 7
        %v4031 = vsub.s32 %v3761, %v4030
        %v4032 = vrot.slane %v3088, %v4031
        %v4033 = vlaneseq
        %v4034 = vshrl.u32 %v4033, 7
        %v4035 = vsub.s32 %v3766, %v4034
        %v4036 = vrot.slane %v3090, %v4035
        %v4037 = vsel %vm3771, %v4036, %v4032
        %v4038 = vlaneseq
        %v4039 = vshrl.u32 %v4038, 7
        %v4040 = vsub.s32 %v3773, %v4039
        %v4041 = vrot.slane %v3092, %v4040
        %v4042 = vsel %vm3778, %v4041, %v4037
        %v4043 = vlaneseq
        %v4044 = vshrl.u32 %v4043, 7
        %v4045 = vsub.s32 %v3780, %v4044
        %v4046 = vrot.slane %v3094, %v4045
        %v4047 = vsel %vm3785, %v4046, %v4042
        %v4048 = vlaneseq
        %v4049 = vshrl.u32 %v4048, 7
        %v4050 = vsub.s32 %v3787, %v4049
        %v4051 = vrot.slane %v3096, %v4050
        %v4052 = vsel %vm3792, %v4051, %v4047
        %v4053 = vlaneseq
        %v4054 = vshrl.u32 %v4053, 7
        %v4055 = vsub.s32 %v3794, %v4054
        %v4056 = vrot.slane %v3098, %v4055
        %v4057 = vsel %vm3799, %v4056, %v4052
        %v4058 = vlaneseq
        %v4059 = vshrl.u32 %v4058, 7
        %v4060 = vsub.s32 %v3801, %v4059
        %v4061 = vrot.slane %v3100, %v4060
        %v4062 = vsel %vm3806, %v4061, %v4057
        %v4063 = vlaneseq
        %v4064 = vshrl.u32 %v4063, 7
        %v4065 = vsub.s32 %v3808, %v4064
        %v4066 = vrot.slane %v3102, %v4065
        %v4067 = vsel %vm3813, %v4066, %v4062
        %v4068 = vlaneseq
        %v4069 = vshrl.u32 %v4068, 7
        %v4070 = vsub.s32 %v3815, %v4069
        %v4071 = vrot.slane %v3104, %v4070
        %v4072 = vsel %vm3820, %v4071, %v4067
        %v4073 = vlaneseq
        %v4074 = vshrl.u32 %v4073, 7
        %v4075 = vsub.s32 %v3822, %v4074
        %v4076 = vrot.slane %v3106, %v4075
        %v4077 = vsel %vm3827, %v4076, %v4072
        %v4078 = vlaneseq
        %v4079 = vshrl.u32 %v4078, 7
        %v4080 = vsub.s32 %v3829, %v4079
        %v4081 = vrot.slane %v3108, %v4080
        %v4082 = vsel %vm3834, %v4081, %v4077
        %v4083 = vlaneseq
        %v4084 = vshrl.u32 %v4083, 7
        %v4085 = vsub.s32 %v3836, %v4084
        %v4086 = vrot.slane %v3110, %v4085
        %v4087 = vsel %vm3841, %v4086, %v4082
        %v4088 = vlaneseq
        %v4089 = vshrl.u32 %v4088, 7
        %v4090 = vsub.s32 %v3843, %v4089
        %v4091 = vrot.slane %v3112, %v4090
        %v4092 = vsel %vm3848, %v4091, %v4087
        %v4093 = vlaneseq
        %v4094 = vshrl.u32 %v4093, 7
        %v4095 = vsub.s32 %v3850, %v4094
        %v4096 = vrot.slane %v3114, %v4095
        %v4097 = vsel %vm3855, %v4096, %v4092
        %v4098 = vlaneseq
        %v4099 = vshrl.u32 %v4098, 7
        %v4100 = vsub.s32 %v3857, %v4099
        %v4101 = vrot.slane %v3116, %v4100
        %v4102 = vsel %vm3862, %v4101, %v4097
        %v4103 = vlaneseq
        %v4104 = vshrl.u32 %v4103, 7
        %v4105 = vsub.s32 %v3864, %v4104
        %v4106 = vrot.slane %v3118, %v4105
        %v4107 = vsel %vm3869, %v4106, %v4102
        %v4108 = vlaneseq
        %v4109 = vshrl.u32 %v4108, 7
        %v4110 = vsub.s32 %v3761, %v4109
        %v4111 = vrot.slane %v3120, %v4110
        %v4112 = vlaneseq
        %v4113 = vshrl.u32 %v4112, 7
        %v4114 = vsub.s32 %v3766, %v4113
        %v4115 = vrot.slane %v3122, %v4114
        %v4116 = vsel %vm3771, %v4115, %v4111
        %v4117 = vlaneseq
        %v4118 = vshrl.u32 %v4117, 7
        %v4119 = vsub.s32 %v3773, %v4118
        %v4120 = vrot.slane %v3124, %v4119
        %v4121 = vsel %vm3778, %v4120, %v4116
        %v4122 = vlaneseq
        %v4123 = vshrl.u32 %v4122, 7
        %v4124 = vsub.s32 %v3780, %v4123
        %v4125 = vrot.slane %v3126, %v4124
        %v4126 = vsel %vm3785, %v4125, %v4121
        %v4127 = vlaneseq
        %v4128 = vshrl.u32 %v4127, 7
        %v4129 = vsub.s32 %v3787, %v4128
        %v4130 = vrot.slane %v3128, %v4129
        %v4131 = vsel %vm3792, %v4130, %v4126
        %v4132 = vlaneseq
        %v4133 = vshrl.u32 %v4132, 7
        %v4134 = vsub.s32 %v3794, %v4133
        %v4135 = vrot.slane %v3130, %v4134
        %v4136 = vsel %vm3799, %v4135, %v4131
        %v4137 = vlaneseq
        %v4138 = vshrl.u32 %v4137, 7
        %v4139 = vsub.s32 %v3801, %v4138
        %v4140 = vrot.slane %v3132, %v4139
        %v4141 = vsel %vm3806, %v4140, %v4136
        %v4142 = vlaneseq
        %v4143 = vshrl.u32 %v4142, 7
        %v4144 = vsub.s32 %v3808, %v4143
        %v4145 = vrot.slane %v3134, %v4144
        %v4146 = vsel %vm3813, %v4145, %v4141
        %v4147 = vlaneseq
        %v4148 = vshrl.u32 %v4147, 7
        %v4149 = vsub.s32 %v3815, %v4148
        %v4150 = vrot.slane %v3136, %v4149
        %v4151 = vsel %vm3820, %v4150, %v4146
        %v4152 = vlaneseq
        %v4153 = vshrl.u32 %v4152, 7
        %v4154 = vsub.s32 %v3822, %v4153
        %v4155 = vrot.slane %v3138, %v4154
        %v4156 = vsel %vm3827, %v4155, %v4151
        %v4157 = vlaneseq
        %v4158 = vshrl.u32 %v4157, 7
        %v4159 = vsub.s32 %v3829, %v4158
        %v4160 = vrot.slane %v3140, %v4159
        %v4161 = vsel %vm3834, %v4160, %v4156
        %v4162 = vlaneseq
        %v4163 = vshrl.u32 %v4162, 7
        %v4164 = vsub.s32 %v3836, %v4163
        %v4165 = vrot.slane %v3142, %v4164
        %v4166 = vsel %vm3841, %v4165, %v4161
        %v4167 = vlaneseq
        %v4168 = vshrl.u32 %v4167, 7
        %v4169 = vsub.s32 %v3843, %v4168
        %v4170 = vrot.slane %v3144, %v4169
        %v4171 = vsel %vm3848, %v4170, %v4166
        %v4172 = vlaneseq
        %v4173 = vshrl.u32 %v4172, 7
        %v4174 = vsub.s32 %v3850, %v4173
        %v4175 = vrot.slane %v3146, %v4174
        %v4176 = vsel %vm3855, %v4175, %v4171
        %v4177 = vlaneseq
        %v4178 = vshrl.u32 %v4177, 7
        %v4179 = vsub.s32 %v3857, %v4178
        %v4180 = vrot.slane %v3148, %v4179
        %v4181 = vsel %vm3862, %v4180, %v4176
        %v4182 = vlaneseq
        %v4183 = vshrl.u32 %v4182, 7
        %v4184 = vsub.s32 %v3864, %v4183
        %v4185 = vrot.slane %v3150, %v4184
        %v4186 = vsel %vm3869, %v4185, %v4181
        %v4187 = vlaneseq
        %v4188 = vshrl.u32 %v4187, 7
        %v4189 = vsub.s32 %v3761, %v4188
        %v4190 = vrot.slane %v3152, %v4189
        %v4191 = vlaneseq
        %v4192 = vshrl.u32 %v4191, 7
        %v4193 = vsub.s32 %v3766, %v4192
        %v4194 = vrot.slane %v3154, %v4193
        %v4195 = vsel %vm3771, %v4194, %v4190
        %v4196 = vlaneseq
        %v4197 = vshrl.u32 %v4196, 7
        %v4198 = vsub.s32 %v3773, %v4197
        %v4199 = vrot.slane %v3156, %v4198
        %v4200 = vsel %vm3778, %v4199, %v4195
        %v4201 = vlaneseq
        %v4202 = vshrl.u32 %v4201, 7
        %v4203 = vsub.s32 %v3780, %v4202
        %v4204 = vrot.slane %v3158, %v4203
        %v4205 = vsel %vm3785, %v4204, %v4200
        %v4206 = vlaneseq
        %v4207 = vshrl.u32 %v4206, 7
        %v4208 = vsub.s32 %v3787, %v4207
        %v4209 = vrot.slane %v3160, %v4208
        %v4210 = vsel %vm3792, %v4209, %v4205
        %v4211 = vlaneseq
        %v4212 = vshrl.u32 %v4211, 7
        %v4213 = vsub.s32 %v3794, %v4212
        %v4214 = vrot.slane %v3162, %v4213
        %v4215 = vsel %vm3799, %v4214, %v4210
        %v4216 = vlaneseq
        %v4217 = vshrl.u32 %v4216, 7
        %v4218 = vsub.s32 %v3801, %v4217
        %v4219 = vrot.slane %v3164, %v4218
        %v4220 = vsel %vm3806, %v4219, %v4215
        %v4221 = vlaneseq
        %v4222 = vshrl.u32 %v4221, 7
        %v4223 = vsub.s32 %v3808, %v4222
        %v4224 = vrot.slane %v3166, %v4223
        %v4225 = vsel %vm3813, %v4224, %v4220
        %v4226 = vlaneseq
        %v4227 = vshrl.u32 %v4226, 7
        %v4228 = vsub.s32 %v3815, %v4227
        %v4229 = vrot.slane %v3168, %v4228
        %v4230 = vsel %vm3820, %v4229, %v4225
        %v4231 = vlaneseq
        %v4232 = vshrl.u32 %v4231, 7
        %v4233 = vsub.s32 %v3822, %v4232
        %v4234 = vrot.slane %v3170, %v4233
        %v4235 = vsel %vm3827, %v4234, %v4230
        %v4236 = vlaneseq
        %v4237 = vshrl.u32 %v4236, 7
        %v4238 = vsub.s32 %v3829, %v4237
        %v4239 = vrot.slane %v3172, %v4238
        %v4240 = vsel %vm3834, %v4239, %v4235
        %v4241 = vlaneseq
        %v4242 = vshrl.u32 %v4241, 7
        %v4243 = vsub.s32 %v3836, %v4242
        %v4244 = vrot.slane %v3174, %v4243
        %v4245 = vsel %vm3841, %v4244, %v4240
        %v4246 = vlaneseq
        %v4247 = vshrl.u32 %v4246, 7
        %v4248 = vsub.s32 %v3843, %v4247
        %v4249 = vrot.slane %v3176, %v4248
        %v4250 = vsel %vm3848, %v4249, %v4245
        %v4251 = vlaneseq
        %v4252 = vshrl.u32 %v4251, 7
        %v4253 = vsub.s32 %v3850, %v4252
        %v4254 = vrot.slane %v3178, %v4253
        %v4255 = vsel %vm3855, %v4254, %v4250
        %v4256 = vlaneseq
        %v4257 = vshrl.u32 %v4256, 7
        %v4258 = vsub.s32 %v3857, %v4257
        %v4259 = vrot.slane %v3180, %v4258
        %v4260 = vsel %vm3862, %v4259, %v4255
        %v4261 = vlaneseq
        %v4262 = vshrl.u32 %v4261, 7
        %v4263 = vsub.s32 %v3864, %v4262
        %v4264 = vrot.slane %v3182, %v4263
        %v4265 = vsel %vm3869, %v4264, %v4260
        %v4266 = vlaneseq
        %v4267 = vshrl.u32 %v4266, 7
        %v4268 = vsub.s32 %v3761, %v4267
        %v4269 = vrot.slane %v3184, %v4268
        %v4270 = vlaneseq
        %v4271 = vshrl.u32 %v4270, 7
        %v4272 = vsub.s32 %v3766, %v4271
        %v4273 = vrot.slane %v3186, %v4272
        %v4274 = vsel %vm3771, %v4273, %v4269
        %v4275 = vlaneseq
        %v4276 = vshrl.u32 %v4275, 7
        %v4277 = vsub.s32 %v3773, %v4276
        %v4278 = vrot.slane %v3188, %v4277
        %v4279 = vsel %vm3778, %v4278, %v4274
        %v4280 = vlaneseq
        %v4281 = vshrl.u32 %v4280, 7
        %v4282 = vsub.s32 %v3780, %v4281
        %v4283 = vrot.slane %v3190, %v4282
        %v4284 = vsel %vm3785, %v4283, %v4279
        %v4285 = vlaneseq
        %v4286 = vshrl.u32 %v4285, 7
        %v4287 = vsub.s32 %v3787, %v4286
        %v4288 = vrot.slane %v3192, %v4287
        %v4289 = vsel %vm3792, %v4288, %v4284
        %v4290 = vlaneseq
        %v4291 = vshrl.u32 %v4290, 7
        %v4292 = vsub.s32 %v3794, %v4291
        %v4293 = vrot.slane %v3194, %v4292
        %v4294 = vsel %vm3799, %v4293, %v4289
        %v4295 = vlaneseq
        %v4296 = vshrl.u32 %v4295, 7
        %v4297 = vsub.s32 %v3801, %v4296
        %v4298 = vrot.slane %v3196, %v4297
        %v4299 = vsel %vm3806, %v4298, %v4294
        %v4300 = vlaneseq
        %v4301 = vshrl.u32 %v4300, 7
        %v4302 = vsub.s32 %v3808, %v4301
        %v4303 = vrot.slane %v3198, %v4302
        %v4304 = vsel %vm3813, %v4303, %v4299
        %v4305 = vlaneseq
        %v4306 = vshrl.u32 %v4305, 7
        %v4307 = vsub.s32 %v3815, %v4306
        %v4308 = vrot.slane %v3200, %v4307
        %v4309 = vsel %vm3820, %v4308, %v4304
        %v4310 = vlaneseq
        %v4311 = vshrl.u32 %v4310, 7
        %v4312 = vsub.s32 %v3822, %v4311
        %v4313 = vrot.slane %v3202, %v4312
        %v4314 = vsel %vm3827, %v4313, %v4309
        %v4315 = vlaneseq
        %v4316 = vshrl.u32 %v4315, 7
        %v4317 = vsub.s32 %v3829, %v4316
        %v4318 = vrot.slane %v3204, %v4317
        %v4319 = vsel %vm3834, %v4318, %v4314
        %v4320 = vlaneseq
        %v4321 = vshrl.u32 %v4320, 7
        %v4322 = vsub.s32 %v3836, %v4321
        %v4323 = vrot.slane %v3206, %v4322
        %v4324 = vsel %vm3841, %v4323, %v4319
        %v4325 = vlaneseq
        %v4326 = vshrl.u32 %v4325, 7
        %v4327 = vsub.s32 %v3843, %v4326
        %v4328 = vrot.slane %v3208, %v4327
        %v4329 = vsel %vm3848, %v4328, %v4324
        %v4330 = vlaneseq
        %v4331 = vshrl.u32 %v4330, 7
        %v4332 = vsub.s32 %v3850, %v4331
        %v4333 = vrot.slane %v3210, %v4332
        %v4334 = vsel %vm3855, %v4333, %v4329
        %v4335 = vlaneseq
        %v4336 = vshrl.u32 %v4335, 7
        %v4337 = vsub.s32 %v3857, %v4336
        %v4338 = vrot.slane %v3212, %v4337
        %v4339 = vsel %vm3862, %v4338, %v4334
        %v4340 = vlaneseq
        %v4341 = vshrl.u32 %v4340, 7
        %v4342 = vsub.s32 %v3864, %v4341
        %v4343 = vrot.slane %v3214, %v4342
        %v4344 = vsel %vm3869, %v4343, %v4339
        %v4345 = vlaneseq
        %v4346 = vshrl.u32 %v4345, 7
        %v4347 = vsub.s32 %v3761, %v4346
        %v4348 = vrot.slane %v3216, %v4347
        %v4349 = vlaneseq
        %v4350 = vshrl.u32 %v4349, 7
        %v4351 = vsub.s32 %v3766, %v4350
        %v4352 = vrot.slane %v3218, %v4351
        %v4353 = vsel %vm3771, %v4352, %v4348
        %v4354 = vlaneseq
        %v4355 = vshrl.u32 %v4354, 7
        %v4356 = vsub.s32 %v3773, %v4355
        %v4357 = vrot.slane %v3220, %v4356
        %v4358 = vsel %vm3778, %v4357, %v4353
        %v4359 = vlaneseq
        %v4360 = vshrl.u32 %v4359, 7
        %v4361 = vsub.s32 %v3780, %v4360
        %v4362 = vrot.slane %v3222, %v4361
        %v4363 = vsel %vm3785, %v4362, %v4358
        %v4364 = vlaneseq
        %v4365 = vshrl.u32 %v4364, 7
        %v4366 = vsub.s32 %v3787, %v4365
        %v4367 = vrot.slane %v3224, %v4366
        %v4368 = vsel %vm3792, %v4367, %v4363
        %v4369 = vlaneseq
        %v4370 = vshrl.u32 %v4369, 7
        %v4371 = vsub.s32 %v3794, %v4370
        %v4372 = vrot.slane %v3226, %v4371
        %v4373 = vsel %vm3799, %v4372, %v4368
        %v4374 = vlaneseq
        %v4375 = vshrl.u32 %v4374, 7
        %v4376 = vsub.s32 %v3801, %v4375
        %v4377 = vrot.slane %v3228, %v4376
        %v4378 = vsel %vm3806, %v4377, %v4373
        %v4379 = vlaneseq
        %v4380 = vshrl.u32 %v4379, 7
        %v4381 = vsub.s32 %v3808, %v4380
        %v4382 = vrot.slane %v3230, %v4381
        %v4383 = vsel %vm3813, %v4382, %v4378
        %v4384 = vlaneseq
        %v4385 = vshrl.u32 %v4384, 7
        %v4386 = vsub.s32 %v3815, %v4385
        %v4387 = vrot.slane %v3232, %v4386
        %v4388 = vsel %vm3820, %v4387, %v4383
        %v4389 = vlaneseq
        %v4390 = vshrl.u32 %v4389, 7
        %v4391 = vsub.s32 %v3822, %v4390
        %v4392 = vrot.slane %v3234, %v4391
        %v4393 = vsel %vm3827, %v4392, %v4388
        %v4394 = vlaneseq
        %v4395 = vshrl.u32 %v4394, 7
        %v4396 = vsub.s32 %v3829, %v4395
        %v4397 = vrot.slane %v3236, %v4396
        %v4398 = vsel %vm3834, %v4397, %v4393
        %v4399 = vlaneseq
        %v4400 = vshrl.u32 %v4399, 7
        %v4401 = vsub.s32 %v3836, %v4400
        %v4402 = vrot.slane %v3238, %v4401
        %v4403 = vsel %vm3841, %v4402, %v4398
        %v4404 = vlaneseq
        %v4405 = vshrl.u32 %v4404, 7
        %v4406 = vsub.s32 %v3843, %v4405
        %v4407 = vrot.slane %v3240, %v4406
        %v4408 = vsel %vm3848, %v4407, %v4403
        %v4409 = vlaneseq
        %v4410 = vshrl.u32 %v4409, 7
        %v4411 = vsub.s32 %v3850, %v4410
        %v4412 = vrot.slane %v3242, %v4411
        %v4413 = vsel %vm3855, %v4412, %v4408
        %v4414 = vlaneseq
        %v4415 = vshrl.u32 %v4414, 7
        %v4416 = vsub.s32 %v3857, %v4415
        %v4417 = vrot.slane %v3244, %v4416
        %v4418 = vsel %vm3862, %v4417, %v4413
        %v4419 = vlaneseq
        %v4420 = vshrl.u32 %v4419, 7
        %v4421 = vsub.s32 %v3864, %v4420
        %v4422 = vrot.slane %v3246, %v4421
        %v4423 = vsel %vm3869, %v4422, %v4418
        %v4424 = vlaneseq
        %v4425 = vshrl.u32 %v4424, 7
        %v4426 = vsub.s32 %v3761, %v4425
        %v4427 = vrot.slane %v3248, %v4426
        %v4428 = vlaneseq
        %v4429 = vshrl.u32 %v4428, 7
        %v4430 = vsub.s32 %v3766, %v4429
        %v4431 = vrot.slane %v3250, %v4430
        %v4432 = vsel %vm3771, %v4431, %v4427
        %v4433 = vlaneseq
        %v4434 = vshrl.u32 %v4433, 7
        %v4435 = vsub.s32 %v3773, %v4434
        %v4436 = vrot.slane %v3252, %v4435
        %v4437 = vsel %vm3778, %v4436, %v4432
        %v4438 = vlaneseq
        %v4439 = vshrl.u32 %v4438, 7
        %v4440 = vsub.s32 %v3780, %v4439
        %v4441 = vrot.slane %v3254, %v4440
        %v4442 = vsel %vm3785, %v4441, %v4437
        %v4443 = vlaneseq
        %v4444 = vshrl.u32 %v4443, 7
        %v4445 = vsub.s32 %v3787, %v4444
        %v4446 = vrot.slane %v3256, %v4445
        %v4447 = vsel %vm3792, %v4446, %v4442
        %v4448 = vlaneseq
        %v4449 = vshrl.u32 %v4448, 7
        %v4450 = vsub.s32 %v3794, %v4449
        %v4451 = vrot.slane %v3258, %v4450
        %v4452 = vsel %vm3799, %v4451, %v4447
        %v4453 = vlaneseq
        %v4454 = vshrl.u32 %v4453, 7
        %v4455 = vsub.s32 %v3801, %v4454
        %v4456 = vrot.slane %v3260, %v4455
        %v4457 = vsel %vm3806, %v4456, %v4452
        %v4458 = vlaneseq
        %v4459 = vshrl.u32 %v4458, 7
        %v4460 = vsub.s32 %v3808, %v4459
        %v4461 = vrot.slane %v3262, %v4460
        %v4462 = vsel %vm3813, %v4461, %v4457
        %v4463 = vlaneseq
        %v4464 = vshrl.u32 %v4463, 7
        %v4465 = vsub.s32 %v3815, %v4464
        %v4466 = vrot.slane %v3264, %v4465
        %v4467 = vsel %vm3820, %v4466, %v4462
        %v4468 = vlaneseq
        %v4469 = vshrl.u32 %v4468, 7
        %v4470 = vsub.s32 %v3822, %v4469
        %v4471 = vrot.slane %v3266, %v4470
        %v4472 = vsel %vm3827, %v4471, %v4467
        %v4473 = vlaneseq
        %v4474 = vshrl.u32 %v4473, 7
        %v4475 = vsub.s32 %v3829, %v4474
        %v4476 = vrot.slane %v3268, %v4475
        %v4477 = vsel %vm3834, %v4476, %v4472
        %v4478 = vlaneseq
        %v4479 = vshrl.u32 %v4478, 7
        %v4480 = vsub.s32 %v3836, %v4479
        %v4481 = vrot.slane %v3270, %v4480
        %v4482 = vsel %vm3841, %v4481, %v4477
        %v4483 = vlaneseq
        %v4484 = vshrl.u32 %v4483, 7
        %v4485 = vsub.s32 %v3843, %v4484
        %v4486 = vrot.slane %v3272, %v4485
        %v4487 = vsel %vm3848, %v4486, %v4482
        %v4488 = vlaneseq
        %v4489 = vshrl.u32 %v4488, 7
        %v4490 = vsub.s32 %v3850, %v4489
        %v4491 = vrot.slane %v3274, %v4490
        %v4492 = vsel %vm3855, %v4491, %v4487
        %v4493 = vlaneseq
        %v4494 = vshrl.u32 %v4493, 7
        %v4495 = vsub.s32 %v3857, %v4494
        %v4496 = vrot.slane %v3276, %v4495
        %v4497 = vsel %vm3862, %v4496, %v4492
        %v4498 = vlaneseq
        %v4499 = vshrl.u32 %v4498, 7
        %v4500 = vsub.s32 %v3864, %v4499
        %v4501 = vrot.slane %v3278, %v4500
        %v4502 = vsel %vm3869, %v4501, %v4497
        %v4503 = vlaneseq
        %v4504 = vshrl.u32 %v4503, 7
        %v4505 = vsub.s32 %v3761, %v4504
        %v4506 = vrot.slane %v3280, %v4505
        %v4507 = vlaneseq
        %v4508 = vshrl.u32 %v4507, 7
        %v4509 = vsub.s32 %v3766, %v4508
        %v4510 = vrot.slane %v3282, %v4509
        %v4511 = vsel %vm3771, %v4510, %v4506
        %v4512 = vlaneseq
        %v4513 = vshrl.u32 %v4512, 7
        %v4514 = vsub.s32 %v3773, %v4513
        %v4515 = vrot.slane %v3284, %v4514
        %v4516 = vsel %vm3778, %v4515, %v4511
        %v4517 = vlaneseq
        %v4518 = vshrl.u32 %v4517, 7
        %v4519 = vsub.s32 %v3780, %v4518
        %v4520 = vrot.slane %v3286, %v4519
        %v4521 = vsel %vm3785, %v4520, %v4516
        %v4522 = vlaneseq
        %v4523 = vshrl.u32 %v4522, 7
        %v4524 = vsub.s32 %v3787, %v4523
        %v4525 = vrot.slane %v3288, %v4524
        %v4526 = vsel %vm3792, %v4525, %v4521
        %v4527 = vlaneseq
        %v4528 = vshrl.u32 %v4527, 7
        %v4529 = vsub.s32 %v3794, %v4528
        %v4530 = vrot.slane %v3290, %v4529
        %v4531 = vsel %vm3799, %v4530, %v4526
        %v4532 = vlaneseq
        %v4533 = vshrl.u32 %v4532, 7
        %v4534 = vsub.s32 %v3801, %v4533
        %v4535 = vrot.slane %v3292, %v4534
        %v4536 = vsel %vm3806, %v4535, %v4531
        %v4537 = vlaneseq
        %v4538 = vshrl.u32 %v4537, 7
        %v4539 = vsub.s32 %v3808, %v4538
        %v4540 = vrot.slane %v3294, %v4539
        %v4541 = vsel %vm3813, %v4540, %v4536
        %v4542 = vlaneseq
        %v4543 = vshrl.u32 %v4542, 7
        %v4544 = vsub.s32 %v3815, %v4543
        %v4545 = vrot.slane %v3296, %v4544
        %v4546 = vsel %vm3820, %v4545, %v4541
        %v4547 = vlaneseq
        %v4548 = vshrl.u32 %v4547, 7
        %v4549 = vsub.s32 %v3822, %v4548
        %v4550 = vrot.slane %v3298, %v4549
        %v4551 = vsel %vm3827, %v4550, %v4546
        %v4552 = vlaneseq
        %v4553 = vshrl.u32 %v4552, 7
        %v4554 = vsub.s32 %v3829, %v4553
        %v4555 = vrot.slane %v3300, %v4554
        %v4556 = vsel %vm3834, %v4555, %v4551
        %v4557 = vlaneseq
        %v4558 = vshrl.u32 %v4557, 7
        %v4559 = vsub.s32 %v3836, %v4558
        %v4560 = vrot.slane %v3302, %v4559
        %v4561 = vsel %vm3841, %v4560, %v4556
        %v4562 = vlaneseq
        %v4563 = vshrl.u32 %v4562, 7
        %v4564 = vsub.s32 %v3843, %v4563
        %v4565 = vrot.slane %v3304, %v4564
        %v4566 = vsel %vm3848, %v4565, %v4561
        %v4567 = vlaneseq
        %v4568 = vshrl.u32 %v4567, 7
        %v4569 = vsub.s32 %v3850, %v4568
        %v4570 = vrot.slane %v3306, %v4569
        %v4571 = vsel %vm3855, %v4570, %v4566
        %v4572 = vlaneseq
        %v4573 = vshrl.u32 %v4572, 7
        %v4574 = vsub.s32 %v3857, %v4573
        %v4575 = vrot.slane %v3308, %v4574
        %v4576 = vsel %vm3862, %v4575, %v4571
        %v4577 = vlaneseq
        %v4578 = vshrl.u32 %v4577, 7
        %v4579 = vsub.s32 %v3864, %v4578
        %v4580 = vrot.slane %v3310, %v4579
        %v4581 = vsel %vm3869, %v4580, %v4576
        %v4582 = vlaneseq
        %v4583 = vshrl.u32 %v4582, 7
        %v4584 = vsub.s32 %v3761, %v4583
        %v4585 = vrot.slane %v3312, %v4584
        %v4586 = vlaneseq
        %v4587 = vshrl.u32 %v4586, 7
        %v4588 = vsub.s32 %v3766, %v4587
        %v4589 = vrot.slane %v3314, %v4588
        %v4590 = vsel %vm3771, %v4589, %v4585
        %v4591 = vlaneseq
        %v4592 = vshrl.u32 %v4591, 7
        %v4593 = vsub.s32 %v3773, %v4592
        %v4594 = vrot.slane %v3316, %v4593
        %v4595 = vsel %vm3778, %v4594, %v4590
        %v4596 = vlaneseq
        %v4597 = vshrl.u32 %v4596, 7
        %v4598 = vsub.s32 %v3780, %v4597
        %v4599 = vrot.slane %v3318, %v4598
        %v4600 = vsel %vm3785, %v4599, %v4595
        %v4601 = vlaneseq
        %v4602 = vshrl.u32 %v4601, 7
        %v4603 = vsub.s32 %v3787, %v4602
        %v4604 = vrot.slane %v3320, %v4603
        %v4605 = vsel %vm3792, %v4604, %v4600
        %v4606 = vlaneseq
        %v4607 = vshrl.u32 %v4606, 7
        %v4608 = vsub.s32 %v3794, %v4607
        %v4609 = vrot.slane %v3322, %v4608
        %v4610 = vsel %vm3799, %v4609, %v4605
        %v4611 = vlaneseq
        %v4612 = vshrl.u32 %v4611, 7
        %v4613 = vsub.s32 %v3801, %v4612
        %v4614 = vrot.slane %v3324, %v4613
        %v4615 = vsel %vm3806, %v4614, %v4610
        %v4616 = vlaneseq
        %v4617 = vshrl.u32 %v4616, 7
        %v4618 = vsub.s32 %v3808, %v4617
        %v4619 = vrot.slane %v3326, %v4618
        %v4620 = vsel %vm3813, %v4619, %v4615
        %v4621 = vlaneseq
        %v4622 = vshrl.u32 %v4621, 7
        %v4623 = vsub.s32 %v3815, %v4622
        %v4624 = vrot.slane %v3328, %v4623
        %v4625 = vsel %vm3820, %v4624, %v4620
        %v4626 = vlaneseq
        %v4627 = vshrl.u32 %v4626, 7
        %v4628 = vsub.s32 %v3822, %v4627
        %v4629 = vrot.slane %v3330, %v4628
        %v4630 = vsel %vm3827, %v4629, %v4625
        %v4631 = vlaneseq
        %v4632 = vshrl.u32 %v4631, 7
        %v4633 = vsub.s32 %v3829, %v4632
        %v4634 = vrot.slane %v3332, %v4633
        %v4635 = vsel %vm3834, %v4634, %v4630
        %v4636 = vlaneseq
        %v4637 = vshrl.u32 %v4636, 7
        %v4638 = vsub.s32 %v3836, %v4637
        %v4639 = vrot.slane %v3334, %v4638
        %v4640 = vsel %vm3841, %v4639, %v4635
        %v4641 = vlaneseq
        %v4642 = vshrl.u32 %v4641, 7
        %v4643 = vsub.s32 %v3843, %v4642
        %v4644 = vrot.slane %v3336, %v4643
        %v4645 = vsel %vm3848, %v4644, %v4640
        %v4646 = vlaneseq
        %v4647 = vshrl.u32 %v4646, 7
        %v4648 = vsub.s32 %v3850, %v4647
        %v4649 = vrot.slane %v3338, %v4648
        %v4650 = vsel %vm3855, %v4649, %v4645
        %v4651 = vlaneseq
        %v4652 = vshrl.u32 %v4651, 7
        %v4653 = vsub.s32 %v3857, %v4652
        %v4654 = vrot.slane %v3340, %v4653
        %v4655 = vsel %vm3862, %v4654, %v4650
        %v4656 = vlaneseq
        %v4657 = vshrl.u32 %v4656, 7
        %v4658 = vsub.s32 %v3864, %v4657
        %v4659 = vrot.slane %v3342, %v4658
        %v4660 = vsel %vm3869, %v4659, %v4655
        %v4661 = vlaneseq
        %v4662 = vshrl.u32 %v4661, 7
        %v4663 = vsub.s32 %v3761, %v4662
        %v4664 = vrot.slane %v3344, %v4663
        %v4665 = vlaneseq
        %v4666 = vshrl.u32 %v4665, 7
        %v4667 = vsub.s32 %v3766, %v4666
        %v4668 = vrot.slane %v3346, %v4667
        %v4669 = vsel %vm3771, %v4668, %v4664
        %v4670 = vlaneseq
        %v4671 = vshrl.u32 %v4670, 7
        %v4672 = vsub.s32 %v3773, %v4671
        %v4673 = vrot.slane %v3348, %v4672
        %v4674 = vsel %vm3778, %v4673, %v4669
        %v4675 = vlaneseq
        %v4676 = vshrl.u32 %v4675, 7
        %v4677 = vsub.s32 %v3780, %v4676
        %v4678 = vrot.slane %v3350, %v4677
        %v4679 = vsel %vm3785, %v4678, %v4674
        %v4680 = vlaneseq
        %v4681 = vshrl.u32 %v4680, 7
        %v4682 = vsub.s32 %v3787, %v4681
        %v4683 = vrot.slane %v3352, %v4682
        %v4684 = vsel %vm3792, %v4683, %v4679
        %v4685 = vlaneseq
        %v4686 = vshrl.u32 %v4685, 7
        %v4687 = vsub.s32 %v3794, %v4686
        %v4688 = vrot.slane %v3354, %v4687
        %v4689 = vsel %vm3799, %v4688, %v4684
        %v4690 = vlaneseq
        %v4691 = vshrl.u32 %v4690, 7
        %v4692 = vsub.s32 %v3801, %v4691
        %v4693 = vrot.slane %v3356, %v4692
        %v4694 = vsel %vm3806, %v4693, %v4689
        %v4695 = vlaneseq
        %v4696 = vshrl.u32 %v4695, 7
        %v4697 = vsub.s32 %v3808, %v4696
        %v4698 = vrot.slane %v3358, %v4697
        %v4699 = vsel %vm3813, %v4698, %v4694
        %v4700 = vlaneseq
        %v4701 = vshrl.u32 %v4700, 7
        %v4702 = vsub.s32 %v3815, %v4701
        %v4703 = vrot.slane %v3360, %v4702
        %v4704 = vsel %vm3820, %v4703, %v4699
        %v4705 = vlaneseq
        %v4706 = vshrl.u32 %v4705, 7
        %v4707 = vsub.s32 %v3822, %v4706
        %v4708 = vrot.slane %v3362, %v4707
        %v4709 = vsel %vm3827, %v4708, %v4704
        %v4710 = vlaneseq
        %v4711 = vshrl.u32 %v4710, 7
        %v4712 = vsub.s32 %v3829, %v4711
        %v4713 = vrot.slane %v3364, %v4712
        %v4714 = vsel %vm3834, %v4713, %v4709
        %v4715 = vlaneseq
        %v4716 = vshrl.u32 %v4715, 7
        %v4717 = vsub.s32 %v3836, %v4716
        %v4718 = vrot.slane %v3366, %v4717
        %v4719 = vsel %vm3841, %v4718, %v4714
        %v4720 = vlaneseq
        %v4721 = vshrl.u32 %v4720, 7
        %v4722 = vsub.s32 %v3843, %v4721
        %v4723 = vrot.slane %v3368, %v4722
        %v4724 = vsel %vm3848, %v4723, %v4719
        %v4725 = vlaneseq
        %v4726 = vshrl.u32 %v4725, 7
        %v4727 = vsub.s32 %v3850, %v4726
        %v4728 = vrot.slane %v3370, %v4727
        %v4729 = vsel %vm3855, %v4728, %v4724
        %v4730 = vlaneseq
        %v4731 = vshrl.u32 %v4730, 7
        %v4732 = vsub.s32 %v3857, %v4731
        %v4733 = vrot.slane %v3372, %v4732
        %v4734 = vsel %vm3862, %v4733, %v4729
        %v4735 = vlaneseq
        %v4736 = vshrl.u32 %v4735, 7
        %v4737 = vsub.s32 %v3864, %v4736
        %v4738 = vrot.slane %v3374, %v4737
        %v4739 = vsel %vm3869, %v4738, %v4734
        %v4740 = vlaneseq
        %v4741 = vshrl.u32 %v4740, 7
        %v4742 = vsub.s32 %v3761, %v4741
        %v4743 = vrot.slane %v3376, %v4742
        %v4744 = vlaneseq
        %v4745 = vshrl.u32 %v4744, 7
        %v4746 = vsub.s32 %v3766, %v4745
        %v4747 = vrot.slane %v3378, %v4746
        %v4748 = vsel %vm3771, %v4747, %v4743
        %v4749 = vlaneseq
        %v4750 = vshrl.u32 %v4749, 7
        %v4751 = vsub.s32 %v3773, %v4750
        %v4752 = vrot.slane %v3380, %v4751
        %v4753 = vsel %vm3778, %v4752, %v4748
        %v4754 = vlaneseq
        %v4755 = vshrl.u32 %v4754, 7
        %v4756 = vsub.s32 %v3780, %v4755
        %v4757 = vrot.slane %v3382, %v4756
        %v4758 = vsel %vm3785, %v4757, %v4753
        %v4759 = vlaneseq
        %v4760 = vshrl.u32 %v4759, 7
        %v4761 = vsub.s32 %v3787, %v4760
        %v4762 = vrot.slane %v3384, %v4761
        %v4763 = vsel %vm3792, %v4762, %v4758
        %v4764 = vlaneseq
        %v4765 = vshrl.u32 %v4764, 7
        %v4766 = vsub.s32 %v3794, %v4765
        %v4767 = vrot.slane %v3386, %v4766
        %v4768 = vsel %vm3799, %v4767, %v4763
        %v4769 = vlaneseq
        %v4770 = vshrl.u32 %v4769, 7
        %v4771 = vsub.s32 %v3801, %v4770
        %v4772 = vrot.slane %v3388, %v4771
        %v4773 = vsel %vm3806, %v4772, %v4768
        %v4774 = vlaneseq
        %v4775 = vshrl.u32 %v4774, 7
        %v4776 = vsub.s32 %v3808, %v4775
        %v4777 = vrot.slane %v3390, %v4776
        %v4778 = vsel %vm3813, %v4777, %v4773
        %v4779 = vlaneseq
        %v4780 = vshrl.u32 %v4779, 7
        %v4781 = vsub.s32 %v3815, %v4780
        %v4782 = vrot.slane %v3392, %v4781
        %v4783 = vsel %vm3820, %v4782, %v4778
        %v4784 = vlaneseq
        %v4785 = vshrl.u32 %v4784, 7
        %v4786 = vsub.s32 %v3822, %v4785
        %v4787 = vrot.slane %v3394, %v4786
        %v4788 = vsel %vm3827, %v4787, %v4783
        %v4789 = vlaneseq
        %v4790 = vshrl.u32 %v4789, 7
        %v4791 = vsub.s32 %v3829, %v4790
        %v4792 = vrot.slane %v3396, %v4791
        %v4793 = vsel %vm3834, %v4792, %v4788
        %v4794 = vlaneseq
        %v4795 = vshrl.u32 %v4794, 7
        %v4796 = vsub.s32 %v3836, %v4795
        %v4797 = vrot.slane %v3398, %v4796
        %v4798 = vsel %vm3841, %v4797, %v4793
        %v4799 = vlaneseq
        %v4800 = vshrl.u32 %v4799, 7
        %v4801 = vsub.s32 %v3843, %v4800
        %v4802 = vrot.slane %v3400, %v4801
        %v4803 = vsel %vm3848, %v4802, %v4798
        %v4804 = vlaneseq
        %v4805 = vshrl.u32 %v4804, 7
        %v4806 = vsub.s32 %v3850, %v4805
        %v4807 = vrot.slane %v3402, %v4806
        %v4808 = vsel %vm3855, %v4807, %v4803
        %v4809 = vlaneseq
        %v4810 = vshrl.u32 %v4809, 7
        %v4811 = vsub.s32 %v3857, %v4810
        %v4812 = vrot.slane %v3404, %v4811
        %v4813 = vsel %vm3862, %v4812, %v4808
        %v4814 = vlaneseq
        %v4815 = vshrl.u32 %v4814, 7
        %v4816 = vsub.s32 %v3864, %v4815
        %v4817 = vrot.slane %v3406, %v4816
        %v4818 = vsel %vm3869, %v4817, %v4813
        %v4819 = vlaneseq
        %v4820 = vshrl.u32 %v4819, 7
        %v4821 = vsub.s32 %v3761, %v4820
        %v4822 = vrot.slane %v3408, %v4821
        %v4823 = vlaneseq
        %v4824 = vshrl.u32 %v4823, 7
        %v4825 = vsub.s32 %v3766, %v4824
        %v4826 = vrot.slane %v3410, %v4825
        %v4827 = vsel %vm3771, %v4826, %v4822
        %v4828 = vlaneseq
        %v4829 = vshrl.u32 %v4828, 7
        %v4830 = vsub.s32 %v3773, %v4829
        %v4831 = vrot.slane %v3412, %v4830
        %v4832 = vsel %vm3778, %v4831, %v4827
        %v4833 = vlaneseq
        %v4834 = vshrl.u32 %v4833, 7
        %v4835 = vsub.s32 %v3780, %v4834
        %v4836 = vrot.slane %v3414, %v4835
        %v4837 = vsel %vm3785, %v4836, %v4832
        %v4838 = vlaneseq
        %v4839 = vshrl.u32 %v4838, 7
        %v4840 = vsub.s32 %v3787, %v4839
        %v4841 = vrot.slane %v3416, %v4840
        %v4842 = vsel %vm3792, %v4841, %v4837
        %v4843 = vlaneseq
        %v4844 = vshrl.u32 %v4843, 7
        %v4845 = vsub.s32 %v3794, %v4844
        %v4846 = vrot.slane %v3418, %v4845
        %v4847 = vsel %vm3799, %v4846, %v4842
        %v4848 = vlaneseq
        %v4849 = vshrl.u32 %v4848, 7
        %v4850 = vsub.s32 %v3801, %v4849
        %v4851 = vrot.slane %v3420, %v4850
        %v4852 = vsel %vm3806, %v4851, %v4847
        %v4853 = vlaneseq
        %v4854 = vshrl.u32 %v4853, 7
        %v4855 = vsub.s32 %v3808, %v4854
        %v4856 = vrot.slane %v3422, %v4855
        %v4857 = vsel %vm3813, %v4856, %v4852
        %v4858 = vlaneseq
        %v4859 = vshrl.u32 %v4858, 7
        %v4860 = vsub.s32 %v3815, %v4859
        %v4861 = vrot.slane %v3424, %v4860
        %v4862 = vsel %vm3820, %v4861, %v4857
        %v4863 = vlaneseq
        %v4864 = vshrl.u32 %v4863, 7
        %v4865 = vsub.s32 %v3822, %v4864
        %v4866 = vrot.slane %v3426, %v4865
        %v4867 = vsel %vm3827, %v4866, %v4862
        %v4868 = vlaneseq
        %v4869 = vshrl.u32 %v4868, 7
        %v4870 = vsub.s32 %v3829, %v4869
        %v4871 = vrot.slane %v3428, %v4870
        %v4872 = vsel %vm3834, %v4871, %v4867
        %v4873 = vlaneseq
        %v4874 = vshrl.u32 %v4873, 7
        %v4875 = vsub.s32 %v3836, %v4874
        %v4876 = vrot.slane %v3430, %v4875
        %v4877 = vsel %vm3841, %v4876, %v4872
        %v4878 = vlaneseq
        %v4879 = vshrl.u32 %v4878, 7
        %v4880 = vsub.s32 %v3843, %v4879
        %v4881 = vrot.slane %v3432, %v4880
        %v4882 = vsel %vm3848, %v4881, %v4877
        %v4883 = vlaneseq
        %v4884 = vshrl.u32 %v4883, 7
        %v4885 = vsub.s32 %v3850, %v4884
        %v4886 = vrot.slane %v3434, %v4885
        %v4887 = vsel %vm3855, %v4886, %v4882
        %v4888 = vlaneseq
        %v4889 = vshrl.u32 %v4888, 7
        %v4890 = vsub.s32 %v3857, %v4889
        %v4891 = vrot.slane %v3436, %v4890
        %v4892 = vsel %vm3862, %v4891, %v4887
        %v4893 = vlaneseq
        %v4894 = vshrl.u32 %v4893, 7
        %v4895 = vsub.s32 %v3864, %v4894
        %v4896 = vrot.slane %v3438, %v4895
        %v4897 = vsel %vm3869, %v4896, %v4892
        %v4898 = vlaneseq
        %v4899 = vshrl.u32 %v4898, 7
        %v4900 = vsub.s32 %v3761, %v4899
        %v4901 = vrot.slane %v3440, %v4900
        %v4902 = vlaneseq
        %v4903 = vshrl.u32 %v4902, 7
        %v4904 = vsub.s32 %v3766, %v4903
        %v4905 = vrot.slane %v3442, %v4904
        %v4906 = vsel %vm3771, %v4905, %v4901
        %v4907 = vlaneseq
        %v4908 = vshrl.u32 %v4907, 7
        %v4909 = vsub.s32 %v3773, %v4908
        %v4910 = vrot.slane %v3444, %v4909
        %v4911 = vsel %vm3778, %v4910, %v4906
        %v4912 = vlaneseq
        %v4913 = vshrl.u32 %v4912, 7
        %v4914 = vsub.s32 %v3780, %v4913
        %v4915 = vrot.slane %v3446, %v4914
        %v4916 = vsel %vm3785, %v4915, %v4911
        %v4917 = vlaneseq
        %v4918 = vshrl.u32 %v4917, 7
        %v4919 = vsub.s32 %v3787, %v4918
        %v4920 = vrot.slane %v3448, %v4919
        %v4921 = vsel %vm3792, %v4920, %v4916
        %v4922 = vlaneseq
        %v4923 = vshrl.u32 %v4922, 7
        %v4924 = vsub.s32 %v3794, %v4923
        %v4925 = vrot.slane %v3450, %v4924
        %v4926 = vsel %vm3799, %v4925, %v4921
        %v4927 = vlaneseq
        %v4928 = vshrl.u32 %v4927, 7
        %v4929 = vsub.s32 %v3801, %v4928
        %v4930 = vrot.slane %v3452, %v4929
        %v4931 = vsel %vm3806, %v4930, %v4926
        %v4932 = vlaneseq
        %v4933 = vshrl.u32 %v4932, 7
        %v4934 = vsub.s32 %v3808, %v4933
        %v4935 = vrot.slane %v3454, %v4934
        %v4936 = vsel %vm3813, %v4935, %v4931
        %v4937 = vlaneseq
        %v4938 = vshrl.u32 %v4937, 7
        %v4939 = vsub.s32 %v3815, %v4938
        %v4940 = vrot.slane %v3456, %v4939
        %v4941 = vsel %vm3820, %v4940, %v4936
        %v4942 = vlaneseq
        %v4943 = vshrl.u32 %v4942, 7
        %v4944 = vsub.s32 %v3822, %v4943
        %v4945 = vrot.slane %v3458, %v4944
        %v4946 = vsel %vm3827, %v4945, %v4941
        %v4947 = vlaneseq
        %v4948 = vshrl.u32 %v4947, 7
        %v4949 = vsub.s32 %v3829, %v4948
        %v4950 = vrot.slane %v3460, %v4949
        %v4951 = vsel %vm3834, %v4950, %v4946
        %v4952 = vlaneseq
        %v4953 = vshrl.u32 %v4952, 7
        %v4954 = vsub.s32 %v3836, %v4953
        %v4955 = vrot.slane %v3462, %v4954
        %v4956 = vsel %vm3841, %v4955, %v4951
        %v4957 = vlaneseq
        %v4958 = vshrl.u32 %v4957, 7
        %v4959 = vsub.s32 %v3843, %v4958
        %v4960 = vrot.slane %v3464, %v4959
        %v4961 = vsel %vm3848, %v4960, %v4956
        %v4962 = vlaneseq
        %v4963 = vshrl.u32 %v4962, 7
        %v4964 = vsub.s32 %v3850, %v4963
        %v4965 = vrot.slane %v3466, %v4964
        %v4966 = vsel %vm3855, %v4965, %v4961
        %v4967 = vlaneseq
        %v4968 = vshrl.u32 %v4967, 7
        %v4969 = vsub.s32 %v3857, %v4968
        %v4970 = vrot.slane %v3468, %v4969
        %v4971 = vsel %vm3862, %v4970, %v4966
        %v4972 = vlaneseq
        %v4973 = vshrl.u32 %v4972, 7
        %v4974 = vsub.s32 %v3864, %v4973
        %v4975 = vrot.slane %v3470, %v4974
        %v4976 = vsel %vm3869, %v4975, %v4971
        %v4977 = vlaneseq
        %v4978 = vshrl.u32 %v4977, 7
        %v4979 = vsub.s32 %v3761, %v4978
        %v4980 = vrot.slane %v3472, %v4979
        %v4981 = vlaneseq
        %v4982 = vshrl.u32 %v4981, 7
        %v4983 = vsub.s32 %v3766, %v4982
        %v4984 = vrot.slane %v3474, %v4983
        %v4985 = vsel %vm3771, %v4984, %v4980
        %v4986 = vlaneseq
        %v4987 = vshrl.u32 %v4986, 7
        %v4988 = vsub.s32 %v3773, %v4987
        %v4989 = vrot.slane %v3476, %v4988
        %v4990 = vsel %vm3778, %v4989, %v4985
        %v4991 = vlaneseq
        %v4992 = vshrl.u32 %v4991, 7
        %v4993 = vsub.s32 %v3780, %v4992
        %v4994 = vrot.slane %v3478, %v4993
        %v4995 = vsel %vm3785, %v4994, %v4990
        %v4996 = vlaneseq
        %v4997 = vshrl.u32 %v4996, 7
        %v4998 = vsub.s32 %v3787, %v4997
        %v4999 = vrot.slane %v3480, %v4998
        %v5000 = vsel %vm3792, %v4999, %v4995
        %v5001 = vlaneseq
        %v5002 = vshrl.u32 %v5001, 7
        %v5003 = vsub.s32 %v3794, %v5002
        %v5004 = vrot.slane %v3482, %v5003
        %v5005 = vsel %vm3799, %v5004, %v5000
        %v5006 = vlaneseq
        %v5007 = vshrl.u32 %v5006, 7
        %v5008 = vsub.s32 %v3801, %v5007
        %v5009 = vrot.slane %v3484, %v5008
        %v5010 = vsel %vm3806, %v5009, %v5005
        %v5011 = vlaneseq
        %v5012 = vshrl.u32 %v5011, 7
        %v5013 = vsub.s32 %v3808, %v5012
        %v5014 = vrot.slane %v3486, %v5013
        %v5015 = vsel %vm3813, %v5014, %v5010
        %v5016 = vlaneseq
        %v5017 = vshrl.u32 %v5016, 7
        %v5018 = vsub.s32 %v3815, %v5017
        %v5019 = vrot.slane %v3488, %v5018
        %v5020 = vsel %vm3820, %v5019, %v5015
        %v5021 = vlaneseq
        %v5022 = vshrl.u32 %v5021, 7
        %v5023 = vsub.s32 %v3822, %v5022
        %v5024 = vrot.slane %v3490, %v5023
        %v5025 = vsel %vm3827, %v5024, %v5020
        %v5026 = vlaneseq
        %v5027 = vshrl.u32 %v5026, 7
        %v5028 = vsub.s32 %v3829, %v5027
        %v5029 = vrot.slane %v3492, %v5028
        %v5030 = vsel %vm3834, %v5029, %v5025
        %v5031 = vlaneseq
        %v5032 = vshrl.u32 %v5031, 7
        %v5033 = vsub.s32 %v3836, %v5032
        %v5034 = vrot.slane %v3494, %v5033
        %v5035 = vsel %vm3841, %v5034, %v5030
        %v5036 = vlaneseq
        %v5037 = vshrl.u32 %v5036, 7
        %v5038 = vsub.s32 %v3843, %v5037
        %v5039 = vrot.slane %v3496, %v5038
        %v5040 = vsel %vm3848, %v5039, %v5035
        %v5041 = vlaneseq
        %v5042 = vshrl.u32 %v5041, 7
        %v5043 = vsub.s32 %v3850, %v5042
        %v5044 = vrot.slane %v3498, %v5043
        %v5045 = vsel %vm3855, %v5044, %v5040
        %v5046 = vlaneseq
        %v5047 = vshrl.u32 %v5046, 7
        %v5048 = vsub.s32 %v3857, %v5047
        %v5049 = vrot.slane %v3500, %v5048
        %v5050 = vsel %vm3862, %v5049, %v5045
        %v5051 = vlaneseq
        %v5052 = vshrl.u32 %v5051, 7
        %v5053 = vsub.s32 %v3864, %v5052
        %v5054 = vrot.slane %v3502, %v5053
        %v5055 = vsel %vm3869, %v5054, %v5050
        %vm5056 = vcmask 1041409
        %v5057 = vsel %vm5056, %v4028, %v3870
        %vm5058 = vcmask 1042434
        %v5059 = vsel %vm5058, %v4186, %v5057
        %vm5060 = vcmask 1043459
        %v5061 = vsel %vm5060, %v4344, %v5059
        %vm5062 = vcmask 1044484
        %v5063 = vsel %vm5062, %v4502, %v5061
        %vm5064 = vcmask 1045509
        %v5065 = vsel %vm5064, %v4660, %v5063
        %vm5066 = vcmask 1046534
        %v5067 = vsel %vm5066, %v4818, %v5065
        %vm5068 = vcmask 1047559
        %v5069 = vsel %vm5068, %v4976, %v5067
        %v5070 = vsel %vm5056, %v4107, %v3949
        %v5071 = vsel %vm5058, %v4265, %v5070
        %v5072 = vsel %vm5060, %v4423, %v5071
        %v5073 = vsel %vm5062, %v4581, %v5072
        %v5074 = vsel %vm5064, %v4739, %v5073
        %v5075 = vsel %vm5066, %v4897, %v5074
        %v5076 = vsel %vm5068, %v5055, %v5075
        %v5079 = vmax.f32 %v5069, %v5076
        %5080 = vmax.xlane.f32.xlu0 %v5079
        %v5081 = vpop.xlane.xlu0 %5080
        %v5082 = vmax.f32 %v3503, %v5081
        %v5083 = vsub.f32 %v3503, %v5082
        %v5084 = vmul.f32 %v5083, 1.442695
        %v5085 = vpow.pop %v5084
        %5087 = vset.pattern.permute.xlu0 0
        %5088 = vperm.xlu0 %5087, %v5082
        %v5089 = vpop.permute.xlu0 %5088
        %v5090 = vlaneseq
        %v5091 = vshrl.u32 %v5090, 7
        %v5092 = vsub.s32 0, %v5091
        %v5093 = vrot.slane %v5089, %v5092
        %v5094 = vlaneseq
        %v5095 = vshrl.u32 %v5094, 7
        %v5096 = vsub.s32 1, %v5095
        %v5097 = vrot.slane %v5089, %v5096
        %v5098 = vlaneseq
        %v5099 = vshrl.u32 %v5098, 7
        %v5100 = vsub.s32 2, %v5099
        %v5101 = vrot.slane %v5089, %v5100
        %v5102 = vlaneseq
        %v5103 = vshrl.u32 %v5102, 7
        %v5104 = vsub.s32 3, %v5103
        %v5105 = vrot.slane %v5089, %v5104
        %v5106 = vlaneseq
        %v5107 = vshrl.u32 %v5106, 7
        %v5108 = vsub.s32 4, %v5107
        %v5109 = vrot.slane %v5089, %v5108
        %v5110 = vlaneseq
        %v5111 = vshrl.u32 %v5110, 7
        %v5112 = vsub.s32 5, %v5111
        %v5113 = vrot.slane %v5089, %v5112
        %v5114 = vlaneseq
        %v5115 = vshrl.u32 %v5114, 7
        %v5116 = vsub.s32 6, %v5115
        %v5117 = vrot.slane %v5089, %v5116
        %v5118 = vlaneseq
        %v5119 = vshrl.u32 %v5118, 7
        %v5120 = vsub.s32 7, %v5119
        %v5121 = vrot.slane %v5089, %v5120
        %v5130 = vsub.f32 %v2992, %v5093
        %v5131 = vsub.f32 %v2994, %v5093
        %v5132 = vsub.f32 %v2996, %v5093
        %v5133 = vsub.f32 %v2998, %v5093
        %v5134 = vsub.f32 %v3000, %v5093
        %v5135 = vsub.f32 %v3002, %v5093
        %v5136 = vsub.f32 %v3004, %v5093
        %v5137 = vsub.f32 %v3006, %v5093
        %v5138 = vsub.f32 %v3008, %v5093
        %v5139 = vsub.f32 %v3010, %v5093
        %v5140 = vsub.f32 %v3012, %v5093
        %v5141 = vsub.f32 %v3014, %v5093
        %v5142 = vsub.f32 %v3016, %v5093
        %v5143 = vsub.f32 %v3018, %v5093
        %v5144 = vsub.f32 %v3020, %v5093
        %v5145 = vsub.f32 %v3022, %v5093
        %v5146 = vsub.f32 %v3024, %v5093
        %v5147 = vsub.f32 %v3026, %v5093
        %v5148 = vsub.f32 %v3028, %v5093
        %v5149 = vsub.f32 %v3030, %v5093
        %v5150 = vsub.f32 %v3032, %v5093
        %v5151 = vsub.f32 %v3034, %v5093
        %v5152 = vsub.f32 %v3036, %v5093
        %v5153 = vsub.f32 %v3038, %v5093
        %v5154 = vsub.f32 %v3040, %v5093
        %v5155 = vsub.f32 %v3042, %v5093
        %v5156 = vsub.f32 %v3044, %v5093
        %v5157 = vsub.f32 %v3046, %v5093
        %v5158 = vsub.f32 %v3048, %v5093
        %v5159 = vsub.f32 %v3050, %v5093
        %v5160 = vsub.f32 %v3052, %v5093
        %v5161 = vsub.f32 %v3054, %v5093
        %v5162 = vsub.f32 %v3056, %v5097
        %v5163 = vsub.f32 %v3058, %v5097
        %v5164 = vsub.f32 %v3060, %v5097
        %v5165 = vsub.f32 %v3062, %v5097
        %v5166 = vsub.f32 %v3064, %v5097
        %v5167 = vsub.f32 %v3066, %v5097
        %v5168 = vsub.f32 %v3068, %v5097
        %v5169 = vsub.f32 %v3070, %v5097
        %v5170 = vsub.f32 %v3072, %v5097
        %v5171 = vsub.f32 %v3074, %v5097
        %v5172 = vsub.f32 %v3076, %v5097
        %v5173 = vsub.f32 %v3078, %v5097
        %v5174 = vsub.f32 %v3080, %v5097
        %v5175 = vsub.f32 %v3082, %v5097
        %v5176 = vsub.f32 %v3084, %v5097
        %v5177 = vsub.f32 %v3086, %v5097
        %v5178 = vsub.f32 %v3088, %v5097
        %v5179 = vsub.f32 %v3090, %v5097
        %v5180 = vsub.f32 %v3092, %v5097
        %v5181 = vsub.f32 %v3094, %v5097
        %v5182 = vsub.f32 %v3096, %v5097
        %v5183 = vsub.f32 %v3098, %v5097
        %v5184 = vsub.f32 %v3100, %v5097
        %v5185 = vsub.f32 %v3102, %v5097
        %v5186 = vsub.f32 %v3104, %v5097
        %v5187 = vsub.f32 %v3106, %v5097
        %v5188 = vsub.f32 %v3108, %v5097
        %v5189 = vsub.f32 %v3110, %v5097
        %v5190 = vsub.f32 %v3112, %v5097
        %v5191 = vsub.f32 %v3114, %v5097
        %v5192 = vsub.f32 %v3116, %v5097
        %v5193 = vsub.f32 %v3118, %v5097
        %v5194 = vsub.f32 %v3120, %v5101
        %v5195 = vsub.f32 %v3122, %v5101
        %v5196 = vsub.f32 %v3124, %v5101
        %v5197 = vsub.f32 %v3126, %v5101
        %v5198 = vsub.f32 %v3128, %v5101
        %v5199 = vsub.f32 %v3130, %v5101
        %v5200 = vsub.f32 %v3132, %v5101
        %v5201 = vsub.f32 %v3134, %v5101
        %v5202 = vsub.f32 %v3136, %v5101
        %v5203 = vsub.f32 %v3138, %v5101
        %v5204 = vsub.f32 %v3140, %v5101
        %v5205 = vsub.f32 %v3142, %v5101
        %v5206 = vsub.f32 %v3144, %v5101
        %v5207 = vsub.f32 %v3146, %v5101
        %v5208 = vsub.f32 %v3148, %v5101
        %v5209 = vsub.f32 %v3150, %v5101
        %v5210 = vsub.f32 %v3152, %v5101
        %v5211 = vsub.f32 %v3154, %v5101
        %v5212 = vsub.f32 %v3156, %v5101
        %v5213 = vsub.f32 %v3158, %v5101
        %v5214 = vsub.f32 %v3160, %v5101
        %v5215 = vsub.f32 %v3162, %v5101
        %v5216 = vsub.f32 %v3164, %v5101
        %v5217 = vsub.f32 %v3166, %v5101
        %v5218 = vsub.f32 %v3168, %v5101
        %v5219 = vsub.f32 %v3170, %v5101
        %v5220 = vsub.f32 %v3172, %v5101
        %v5221 = vsub.f32 %v3174, %v5101
        %v5222 = vsub.f32 %v3176, %v5101
        %v5223 = vsub.f32 %v3178, %v5101
        %v5224 = vsub.f32 %v3180, %v5101
        %v5225 = vsub.f32 %v3182, %v5101
        %v5226 = vsub.f32 %v3184, %v5105
        %v5227 = vsub.f32 %v3186, %v5105
        %v5228 = vsub.f32 %v3188, %v5105
        %v5229 = vsub.f32 %v3190, %v5105
        %v5230 = vsub.f32 %v3192, %v5105
        %v5231 = vsub.f32 %v3194, %v5105
        %v5232 = vsub.f32 %v3196, %v5105
        %v5233 = vsub.f32 %v3198, %v5105
        %v5234 = vsub.f32 %v3200, %v5105
        %v5235 = vsub.f32 %v3202, %v5105
        %v5236 = vsub.f32 %v3204, %v5105
        %v5237 = vsub.f32 %v3206, %v5105
        %v5238 = vsub.f32 %v3208, %v5105
        %v5239 = vsub.f32 %v3210, %v5105
        %v5240 = vsub.f32 %v3212, %v5105
        %v5241 = vsub.f32 %v3214, %v5105
        %v5242 = vsub.f32 %v3216, %v5105
        %v5243 = vsub.f32 %v3218, %v5105
        %v5244 = vsub.f32 %v3220, %v5105
        %v5245 = vsub.f32 %v3222, %v5105
        %v5246 = vsub.f32 %v3224, %v5105
        %v5247 = vsub.f32 %v3226, %v5105
        %v5248 = vsub.f32 %v3228, %v5105
        %v5249 = vsub.f32 %v3230, %v5105
        %v5250 = vsub.f32 %v3232, %v5105
        %v5251 = vsub.f32 %v3234, %v5105
        %v5252 = vsub.f32 %v3236, %v5105
        %v5253 = vsub.f32 %v3238, %v5105
        %v5254 = vsub.f32 %v3240, %v5105
        %v5255 = vsub.f32 %v3242, %v5105
        %v5256 = vsub.f32 %v3244, %v5105
        %v5257 = vsub.f32 %v3246, %v5105
        %v5258 = vsub.f32 %v3248, %v5109
        %v5259 = vsub.f32 %v3250, %v5109
        %v5260 = vsub.f32 %v3252, %v5109
        %v5261 = vsub.f32 %v3254, %v5109
        %v5262 = vsub.f32 %v3256, %v5109
        %v5263 = vsub.f32 %v3258, %v5109
        %v5264 = vsub.f32 %v3260, %v5109
        %v5265 = vsub.f32 %v3262, %v5109
        %v5266 = vsub.f32 %v3264, %v5109
        %v5267 = vsub.f32 %v3266, %v5109
        %v5268 = vsub.f32 %v3268, %v5109
        %v5269 = vsub.f32 %v3270, %v5109
        %v5270 = vsub.f32 %v3272, %v5109
        %v5271 = vsub.f32 %v3274, %v5109
        %v5272 = vsub.f32 %v3276, %v5109
        %v5273 = vsub.f32 %v3278, %v5109
        %v5274 = vsub.f32 %v3280, %v5109
        %v5275 = vsub.f32 %v3282, %v5109
        %v5276 = vsub.f32 %v3284, %v5109
        %v5277 = vsub.f32 %v3286, %v5109
        %v5278 = vsub.f32 %v3288, %v5109
        %v5279 = vsub.f32 %v3290, %v5109
        %v5280 = vsub.f32 %v3292, %v5109
        %v5281 = vsub.f32 %v3294, %v5109
        %v5282 = vsub.f32 %v3296, %v5109
        %v5283 = vsub.f32 %v3298, %v5109
        %v5284 = vsub.f32 %v3300, %v5109
        %v5285 = vsub.f32 %v3302, %v5109
        %v5286 = vsub.f32 %v3304, %v5109
        %v5287 = vsub.f32 %v3306, %v5109
        %v5288 = vsub.f32 %v3308, %v5109
        %v5289 = vsub.f32 %v3310, %v5109
        %v5290 = vsub.f32 %v3312, %v5113
        %v5291 = vsub.f32 %v3314, %v5113
        %v5292 = vsub.f32 %v3316, %v5113
        %v5293 = vsub.f32 %v3318, %v5113
        %v5294 = vsub.f32 %v3320, %v5113
        %v5295 = vsub.f32 %v3322, %v5113
        %v5296 = vsub.f32 %v3324, %v5113
        %v5297 = vsub.f32 %v3326, %v5113
        %v5298 = vsub.f32 %v3328, %v5113
        %v5299 = vsub.f32 %v3330, %v5113
        %v5300 = vsub.f32 %v3332, %v5113
        %v5301 = vsub.f32 %v3334, %v5113
        %v5302 = vsub.f32 %v3336, %v5113
        %v5303 = vsub.f32 %v3338, %v5113
        %v5304 = vsub.f32 %v3340, %v5113
        %v5305 = vsub.f32 %v3342, %v5113
        %v5306 = vsub.f32 %v3344, %v5113
        %v5307 = vsub.f32 %v3346, %v5113
        %v5308 = vsub.f32 %v3348, %v5113
        %v5309 = vsub.f32 %v3350, %v5113
        %v5310 = vsub.f32 %v3352, %v5113
        %v5311 = vsub.f32 %v3354, %v5113
        %v5312 = vsub.f32 %v3356, %v5113
        %v5313 = vsub.f32 %v3358, %v5113
        %v5314 = vsub.f32 %v3360, %v5113
        %v5315 = vsub.f32 %v3362, %v5113
        %v5316 = vsub.f32 %v3364, %v5113
        %v5317 = vsub.f32 %v3366, %v5113
        %v5318 = vsub.f32 %v3368, %v5113
        %v5319 = vsub.f32 %v3370, %v5113
        %v5320 = vsub.f32 %v3372, %v5113
        %v5321 = vsub.f32 %v3374, %v5113
        %v5322 = vsub.f32 %v3376, %v5117
        %v5323 = vsub.f32 %v3378, %v5117
        %v5324 = vsub.f32 %v3380, %v5117
        %v5325 = vsub.f32 %v3382, %v5117
        %v5326 = vsub.f32 %v3384, %v5117
        %v5327 = vsub.f32 %v3386, %v5117
        %v5328 = vsub.f32 %v3388, %v5117
        %v5329 = vsub.f32 %v3390, %v5117
        %v5330 = vsub.f32 %v3392, %v5117
        %v5331 = vsub.f32 %v3394, %v5117
        %v5332 = vsub.f32 %v3396, %v5117
        %v5333 = vsub.f32 %v3398, %v5117
        %v5334 = vsub.f32 %v3400, %v5117
        %v5335 = vsub.f32 %v3402, %v5117
        %v5336 = vsub.f32 %v3404, %v5117
        %v5337 = vsub.f32 %v3406, %v5117
        %v5338 = vsub.f32 %v3408, %v5117
        %v5339 = vsub.f32 %v3410, %v5117
        %v5340 = vsub.f32 %v3412, %v5117
        %v5341 = vsub.f32 %v3414, %v5117
        %v5342 = vsub.f32 %v3416, %v5117
        %v5343 = vsub.f32 %v3418, %v5117
        %v5344 = vsub.f32 %v3420, %v5117
        %v5345 = vsub.f32 %v3422, %v5117
        %v5346 = vsub.f32 %v3424, %v5117
        %v5347 = vsub.f32 %v3426, %v5117
        %v5348 = vsub.f32 %v3428, %v5117
        %v5349 = vsub.f32 %v3430, %v5117
        %v5350 = vsub.f32 %v3432, %v5117
        %v5351 = vsub.f32 %v3434, %v5117
        %v5352 = vsub.f32 %v3436, %v5117
        %v5353 = vsub.f32 %v3438, %v5117
        %v5354 = vsub.f32 %v3440, %v5121
        %v5355 = vsub.f32 %v3442, %v5121
        %v5356 = vsub.f32 %v3444, %v5121
        %v5357 = vsub.f32 %v3446, %v5121
        %v5358 = vsub.f32 %v3448, %v5121
        %v5359 = vsub.f32 %v3450, %v5121
        %v5360 = vsub.f32 %v3452, %v5121
        %v5361 = vsub.f32 %v3454, %v5121
        %v5362 = vsub.f32 %v3456, %v5121
        %v5363 = vsub.f32 %v3458, %v5121
        %v5364 = vsub.f32 %v3460, %v5121
        %v5365 = vsub.f32 %v3462, %v5121
        %v5366 = vsub.f32 %v3464, %v5121
        %v5367 = vsub.f32 %v3466, %v5121
        %v5368 = vsub.f32 %v3468, %v5121
        %v5369 = vsub.f32 %v3470, %v5121
        %v5370 = vsub.f32 %v3472, %v5121
        %v5371 = vsub.f32 %v3474, %v5121
        %v5372 = vsub.f32 %v3476, %v5121
        %v5373 = vsub.f32 %v3478, %v5121
        %v5374 = vsub.f32 %v3480, %v5121
        %v5375 = vsub.f32 %v3482, %v5121
        %v5376 = vsub.f32 %v3484, %v5121
        %v5377 = vsub.f32 %v3486, %v5121
        %v5378 = vsub.f32 %v3488, %v5121
        %v5379 = vsub.f32 %v3490, %v5121
        %v5380 = vsub.f32 %v3492, %v5121
        %v5381 = vsub.f32 %v3494, %v5121
        %v5382 = vsub.f32 %v3496, %v5121
        %v5383 = vsub.f32 %v3498, %v5121
        %v5384 = vsub.f32 %v3500, %v5121
        %v5385 = vsub.f32 %v3502, %v5121
        %v5386 = vmul.f32 %v5130, 1.442695
        %v5387 = vpow.pop %v5386
        %v5388 = vmul.f32 %v5131, 1.442695
        %v5389 = vpow.pop %v5388
        %v5390 = vmul.f32 %v5132, 1.442695
        %v5391 = vpow.pop %v5390
        %v5392 = vmul.f32 %v5133, 1.442695
        %v5393 = vpow.pop %v5392
        %v5394 = vmul.f32 %v5134, 1.442695
        %v5395 = vpow.pop %v5394
        %v5396 = vmul.f32 %v5135, 1.442695
        %v5397 = vpow.pop %v5396
        %v5398 = vmul.f32 %v5136, 1.442695
        %v5399 = vpow.pop %v5398
        %v5400 = vmul.f32 %v5137, 1.442695
        %v5401 = vpow.pop %v5400
        %v5402 = vmul.f32 %v5138, 1.442695
        %v5403 = vpow.pop %v5402
        %v5404 = vmul.f32 %v5139, 1.442695
        %v5405 = vpow.pop %v5404
        %v5406 = vmul.f32 %v5140, 1.442695
        %v5407 = vpow.pop %v5406
        %v5408 = vmul.f32 %v5141, 1.442695
        %v5409 = vpow.pop %v5408
        %v5410 = vmul.f32 %v5142, 1.442695
        %v5411 = vpow.pop %v5410
        %v5412 = vmul.f32 %v5143, 1.442695
        %v5413 = vpow.pop %v5412
        %v5414 = vmul.f32 %v5144, 1.442695
        %v5415 = vpow.pop %v5414
        %v5416 = vmul.f32 %v5145, 1.442695
        %v5417 = vpow.pop %v5416
        %v5418 = vmul.f32 %v5146, 1.442695
        %v5419 = vpow.pop %v5418
        %v5420 = vmul.f32 %v5147, 1.442695
        %v5421 = vpow.pop %v5420
        %v5422 = vmul.f32 %v5148, 1.442695
        %v5423 = vpow.pop %v5422
        %v5424 = vmul.f32 %v5149, 1.442695
        %v5425 = vpow.pop %v5424
        %v5426 = vmul.f32 %v5150, 1.442695
        %v5427 = vpow.pop %v5426
        %v5428 = vmul.f32 %v5151, 1.442695
        %v5429 = vpow.pop %v5428
        %v5430 = vmul.f32 %v5152, 1.442695
        %v5431 = vpow.pop %v5430
        %v5432 = vmul.f32 %v5153, 1.442695
        %v5433 = vpow.pop %v5432
        %v5434 = vmul.f32 %v5154, 1.442695
        %v5435 = vpow.pop %v5434
        %v5436 = vmul.f32 %v5155, 1.442695
        %v5437 = vpow.pop %v5436
        %v5438 = vmul.f32 %v5156, 1.442695
        %v5439 = vpow.pop %v5438
        %v5440 = vmul.f32 %v5157, 1.442695
        %v5441 = vpow.pop %v5440
        %v5442 = vmul.f32 %v5158, 1.442695
        %v5443 = vpow.pop %v5442
        %v5444 = vmul.f32 %v5159, 1.442695
        %v5445 = vpow.pop %v5444
        %v5446 = vmul.f32 %v5160, 1.442695
        %v5447 = vpow.pop %v5446
        %v5448 = vmul.f32 %v5161, 1.442695
        %v5449 = vpow.pop %v5448
        %v5450 = vmul.f32 %v5162, 1.442695
        %v5451 = vpow.pop %v5450
        %v5452 = vmul.f32 %v5163, 1.442695
        %v5453 = vpow.pop %v5452
        %v5454 = vmul.f32 %v5164, 1.442695
        %v5455 = vpow.pop %v5454
        %v5456 = vmul.f32 %v5165, 1.442695
        %v5457 = vpow.pop %v5456
        %v5458 = vmul.f32 %v5166, 1.442695
        %v5459 = vpow.pop %v5458
        %v5460 = vmul.f32 %v5167, 1.442695
        %v5461 = vpow.pop %v5460
        %v5462 = vmul.f32 %v5168, 1.442695
        %v5463 = vpow.pop %v5462
        %v5464 = vmul.f32 %v5169, 1.442695
        %v5465 = vpow.pop %v5464
        %v5466 = vmul.f32 %v5170, 1.442695
        %v5467 = vpow.pop %v5466
        %v5468 = vmul.f32 %v5171, 1.442695
        %v5469 = vpow.pop %v5468
        %v5470 = vmul.f32 %v5172, 1.442695
        %v5471 = vpow.pop %v5470
        %v5472 = vmul.f32 %v5173, 1.442695
        %v5473 = vpow.pop %v5472
        %v5474 = vmul.f32 %v5174, 1.442695
        %v5475 = vpow.pop %v5474
        %v5476 = vmul.f32 %v5175, 1.442695
        %v5477 = vpow.pop %v5476
        %v5478 = vmul.f32 %v5176, 1.442695
        %v5479 = vpow.pop %v5478
        %v5480 = vmul.f32 %v5177, 1.442695
        %v5481 = vpow.pop %v5480
        %v5482 = vmul.f32 %v5178, 1.442695
        %v5483 = vpow.pop %v5482
        %v5484 = vmul.f32 %v5179, 1.442695
        %v5485 = vpow.pop %v5484
        %v5486 = vmul.f32 %v5180, 1.442695
        %v5487 = vpow.pop %v5486
        %v5488 = vmul.f32 %v5181, 1.442695
        %v5489 = vpow.pop %v5488
        %v5490 = vmul.f32 %v5182, 1.442695
        %v5491 = vpow.pop %v5490
        %v5492 = vmul.f32 %v5183, 1.442695
        %v5493 = vpow.pop %v5492
        %v5494 = vmul.f32 %v5184, 1.442695
        %v5495 = vpow.pop %v5494
        %v5496 = vmul.f32 %v5185, 1.442695
        %v5497 = vpow.pop %v5496
        %v5498 = vmul.f32 %v5186, 1.442695
        %v5499 = vpow.pop %v5498
        %v5500 = vmul.f32 %v5187, 1.442695
        %v5501 = vpow.pop %v5500
        %v5502 = vmul.f32 %v5188, 1.442695
        %v5503 = vpow.pop %v5502
        %v5504 = vmul.f32 %v5189, 1.442695
        %v5505 = vpow.pop %v5504
        %v5506 = vmul.f32 %v5190, 1.442695
        %v5507 = vpow.pop %v5506
        %v5508 = vmul.f32 %v5191, 1.442695
        %v5509 = vpow.pop %v5508
        %v5510 = vmul.f32 %v5192, 1.442695
        %v5511 = vpow.pop %v5510
        %v5512 = vmul.f32 %v5193, 1.442695
        %v5513 = vpow.pop %v5512
        %v5514 = vmul.f32 %v5194, 1.442695
        %v5515 = vpow.pop %v5514
        %v5516 = vmul.f32 %v5195, 1.442695
        %v5517 = vpow.pop %v5516
        %v5518 = vmul.f32 %v5196, 1.442695
        %v5519 = vpow.pop %v5518
        %v5520 = vmul.f32 %v5197, 1.442695
        %v5521 = vpow.pop %v5520
        %v5522 = vmul.f32 %v5198, 1.442695
        %v5523 = vpow.pop %v5522
        %v5524 = vmul.f32 %v5199, 1.442695
        %v5525 = vpow.pop %v5524
        %v5526 = vmul.f32 %v5200, 1.442695
        %v5527 = vpow.pop %v5526
        %v5528 = vmul.f32 %v5201, 1.442695
        %v5529 = vpow.pop %v5528
        %v5530 = vmul.f32 %v5202, 1.442695
        %v5531 = vpow.pop %v5530
        %v5532 = vmul.f32 %v5203, 1.442695
        %v5533 = vpow.pop %v5532
        %v5534 = vmul.f32 %v5204, 1.442695
        %v5535 = vpow.pop %v5534
        %v5536 = vmul.f32 %v5205, 1.442695
        %v5537 = vpow.pop %v5536
        %v5538 = vmul.f32 %v5206, 1.442695
        %v5539 = vpow.pop %v5538
        %v5540 = vmul.f32 %v5207, 1.442695
        %v5541 = vpow.pop %v5540
        %v5542 = vmul.f32 %v5208, 1.442695
        %v5543 = vpow.pop %v5542
        %v5544 = vmul.f32 %v5209, 1.442695
        %v5545 = vpow.pop %v5544
        %v5546 = vmul.f32 %v5210, 1.442695
        %v5547 = vpow.pop %v5546
        %v5548 = vmul.f32 %v5211, 1.442695
        %v5549 = vpow.pop %v5548
        %v5550 = vmul.f32 %v5212, 1.442695
        %v5551 = vpow.pop %v5550
        %v5552 = vmul.f32 %v5213, 1.442695
        %v5553 = vpow.pop %v5552
        %v5554 = vmul.f32 %v5214, 1.442695
        %v5555 = vpow.pop %v5554
        %v5556 = vmul.f32 %v5215, 1.442695
        %v5557 = vpow.pop %v5556
        %v5558 = vmul.f32 %v5216, 1.442695
        %v5559 = vpow.pop %v5558
        %v5560 = vmul.f32 %v5217, 1.442695
        %v5561 = vpow.pop %v5560
        %v5562 = vmul.f32 %v5218, 1.442695
        %v5563 = vpow.pop %v5562
        %v5564 = vmul.f32 %v5219, 1.442695
        %v5565 = vpow.pop %v5564
        %v5566 = vmul.f32 %v5220, 1.442695
        %v5567 = vpow.pop %v5566
        %v5568 = vmul.f32 %v5221, 1.442695
        %v5569 = vpow.pop %v5568
        %v5570 = vmul.f32 %v5222, 1.442695
        %v5571 = vpow.pop %v5570
        %v5572 = vmul.f32 %v5223, 1.442695
        %v5573 = vpow.pop %v5572
        %v5574 = vmul.f32 %v5224, 1.442695
        %v5575 = vpow.pop %v5574
        %v5576 = vmul.f32 %v5225, 1.442695
        %v5577 = vpow.pop %v5576
        %v5578 = vmul.f32 %v5226, 1.442695
        %v5579 = vpow.pop %v5578
        %v5580 = vmul.f32 %v5227, 1.442695
        %v5581 = vpow.pop %v5580
        %v5582 = vmul.f32 %v5228, 1.442695
        %v5583 = vpow.pop %v5582
        %v5584 = vmul.f32 %v5229, 1.442695
        %v5585 = vpow.pop %v5584
        %v5586 = vmul.f32 %v5230, 1.442695
        %v5587 = vpow.pop %v5586
        %v5588 = vmul.f32 %v5231, 1.442695
        %v5589 = vpow.pop %v5588
        %v5590 = vmul.f32 %v5232, 1.442695
        %v5591 = vpow.pop %v5590
        %v5592 = vmul.f32 %v5233, 1.442695
        %v5593 = vpow.pop %v5592
        %v5594 = vmul.f32 %v5234, 1.442695
        %v5595 = vpow.pop %v5594
        %v5596 = vmul.f32 %v5235, 1.442695
        %v5597 = vpow.pop %v5596
        %v5598 = vmul.f32 %v5236, 1.442695
        %v5599 = vpow.pop %v5598
        %v5600 = vmul.f32 %v5237, 1.442695
        %v5601 = vpow.pop %v5600
        %v5602 = vmul.f32 %v5238, 1.442695
        %v5603 = vpow.pop %v5602
        %v5604 = vmul.f32 %v5239, 1.442695
        %v5605 = vpow.pop %v5604
        %v5606 = vmul.f32 %v5240, 1.442695
        %v5607 = vpow.pop %v5606
        %v5608 = vmul.f32 %v5241, 1.442695
        %v5609 = vpow.pop %v5608
        %v5610 = vmul.f32 %v5242, 1.442695
        %v5611 = vpow.pop %v5610
        %v5612 = vmul.f32 %v5243, 1.442695
        %v5613 = vpow.pop %v5612
        %v5614 = vmul.f32 %v5244, 1.442695
        %v5615 = vpow.pop %v5614
        %v5616 = vmul.f32 %v5245, 1.442695
        %v5617 = vpow.pop %v5616
        %v5618 = vmul.f32 %v5246, 1.442695
        %v5619 = vpow.pop %v5618
        %v5620 = vmul.f32 %v5247, 1.442695
        %v5621 = vpow.pop %v5620
        %v5622 = vmul.f32 %v5248, 1.442695
        %v5623 = vpow.pop %v5622
        %v5624 = vmul.f32 %v5249, 1.442695
        %v5625 = vpow.pop %v5624
        %v5626 = vmul.f32 %v5250, 1.442695
        %v5627 = vpow.pop %v5626
        %v5628 = vmul.f32 %v5251, 1.442695
        %v5629 = vpow.pop %v5628
        %v5630 = vmul.f32 %v5252, 1.442695
        %v5631 = vpow.pop %v5630
        %v5632 = vmul.f32 %v5253, 1.442695
        %v5633 = vpow.pop %v5632
        %v5634 = vmul.f32 %v5254, 1.442695
        %v5635 = vpow.pop %v5634
        %v5636 = vmul.f32 %v5255, 1.442695
        %v5637 = vpow.pop %v5636
        %v5638 = vmul.f32 %v5256, 1.442695
        %v5639 = vpow.pop %v5638
        %v5640 = vmul.f32 %v5257, 1.442695
        %v5641 = vpow.pop %v5640
        %v5642 = vmul.f32 %v5258, 1.442695
        %v5643 = vpow.pop %v5642
        %v5644 = vmul.f32 %v5259, 1.442695
        %v5645 = vpow.pop %v5644
        %v5646 = vmul.f32 %v5260, 1.442695
        %v5647 = vpow.pop %v5646
        %v5648 = vmul.f32 %v5261, 1.442695
        %v5649 = vpow.pop %v5648
        %v5650 = vmul.f32 %v5262, 1.442695
        %v5651 = vpow.pop %v5650
        %v5652 = vmul.f32 %v5263, 1.442695
        %v5653 = vpow.pop %v5652
        %v5654 = vmul.f32 %v5264, 1.442695
        %v5655 = vpow.pop %v5654
        %v5656 = vmul.f32 %v5265, 1.442695
        %v5657 = vpow.pop %v5656
        %v5658 = vmul.f32 %v5266, 1.442695
        %v5659 = vpow.pop %v5658
        %v5660 = vmul.f32 %v5267, 1.442695
        %v5661 = vpow.pop %v5660
        %v5662 = vmul.f32 %v5268, 1.442695
        %v5663 = vpow.pop %v5662
        %v5664 = vmul.f32 %v5269, 1.442695
        %v5665 = vpow.pop %v5664
        %v5666 = vmul.f32 %v5270, 1.442695
        %v5667 = vpow.pop %v5666
        %v5668 = vmul.f32 %v5271, 1.442695
        %v5669 = vpow.pop %v5668
        %v5670 = vmul.f32 %v5272, 1.442695
        %v5671 = vpow.pop %v5670
        %v5672 = vmul.f32 %v5273, 1.442695
        %v5673 = vpow.pop %v5672
        %v5674 = vmul.f32 %v5274, 1.442695
        %v5675 = vpow.pop %v5674
        %v5676 = vmul.f32 %v5275, 1.442695
        %v5677 = vpow.pop %v5676
        %v5678 = vmul.f32 %v5276, 1.442695
        %v5679 = vpow.pop %v5678
        %v5680 = vmul.f32 %v5277, 1.442695
        %v5681 = vpow.pop %v5680
        %v5682 = vmul.f32 %v5278, 1.442695
        %v5683 = vpow.pop %v5682
        %v5684 = vmul.f32 %v5279, 1.442695
        %v5685 = vpow.pop %v5684
        %v5686 = vmul.f32 %v5280, 1.442695
        %v5687 = vpow.pop %v5686
        %v5688 = vmul.f32 %v5281, 1.442695
        %v5689 = vpow.pop %v5688
        %v5690 = vmul.f32 %v5282, 1.442695
        %v5691 = vpow.pop %v5690
        %v5692 = vmul.f32 %v5283, 1.442695
        %v5693 = vpow.pop %v5692
        %v5694 = vmul.f32 %v5284, 1.442695
        %v5695 = vpow.pop %v5694
        %v5696 = vmul.f32 %v5285, 1.442695
        %v5697 = vpow.pop %v5696
        %v5698 = vmul.f32 %v5286, 1.442695
        %v5699 = vpow.pop %v5698
        %v5700 = vmul.f32 %v5287, 1.442695
        %v5701 = vpow.pop %v5700
        %v5702 = vmul.f32 %v5288, 1.442695
        %v5703 = vpow.pop %v5702
        %v5704 = vmul.f32 %v5289, 1.442695
        %v5705 = vpow.pop %v5704
        %v5706 = vmul.f32 %v5290, 1.442695
        %v5707 = vpow.pop %v5706
        %v5708 = vmul.f32 %v5291, 1.442695
        %v5709 = vpow.pop %v5708
        %v5710 = vmul.f32 %v5292, 1.442695
        %v5711 = vpow.pop %v5710
        %v5712 = vmul.f32 %v5293, 1.442695
        %v5713 = vpow.pop %v5712
        %v5714 = vmul.f32 %v5294, 1.442695
        %v5715 = vpow.pop %v5714
        %v5716 = vmul.f32 %v5295, 1.442695
        %v5717 = vpow.pop %v5716
        %v5718 = vmul.f32 %v5296, 1.442695
        %v5719 = vpow.pop %v5718
        %v5720 = vmul.f32 %v5297, 1.442695
        %v5721 = vpow.pop %v5720
        %v5722 = vmul.f32 %v5298, 1.442695
        %v5723 = vpow.pop %v5722
        %v5724 = vmul.f32 %v5299, 1.442695
        %v5725 = vpow.pop %v5724
        %v5726 = vmul.f32 %v5300, 1.442695
        %v5727 = vpow.pop %v5726
        %v5728 = vmul.f32 %v5301, 1.442695
        %v5729 = vpow.pop %v5728
        %v5730 = vmul.f32 %v5302, 1.442695
        %v5731 = vpow.pop %v5730
        %v5732 = vmul.f32 %v5303, 1.442695
        %v5733 = vpow.pop %v5732
        %v5734 = vmul.f32 %v5304, 1.442695
        %v5735 = vpow.pop %v5734
        %v5736 = vmul.f32 %v5305, 1.442695
        %v5737 = vpow.pop %v5736
        %v5738 = vmul.f32 %v5306, 1.442695
        %v5739 = vpow.pop %v5738
        %v5740 = vmul.f32 %v5307, 1.442695
        %v5741 = vpow.pop %v5740
        %v5742 = vmul.f32 %v5308, 1.442695
        %v5743 = vpow.pop %v5742
        %v5744 = vmul.f32 %v5309, 1.442695
        %v5745 = vpow.pop %v5744
        %v5746 = vmul.f32 %v5310, 1.442695
        %v5747 = vpow.pop %v5746
        %v5748 = vmul.f32 %v5311, 1.442695
        %v5749 = vpow.pop %v5748
        %v5750 = vmul.f32 %v5312, 1.442695
        %v5751 = vpow.pop %v5750
        %v5752 = vmul.f32 %v5313, 1.442695
        %v5753 = vpow.pop %v5752
        %v5754 = vmul.f32 %v5314, 1.442695
        %v5755 = vpow.pop %v5754
        %v5756 = vmul.f32 %v5315, 1.442695
        %v5757 = vpow.pop %v5756
        %v5758 = vmul.f32 %v5316, 1.442695
        %v5759 = vpow.pop %v5758
        %v5760 = vmul.f32 %v5317, 1.442695
        %v5761 = vpow.pop %v5760
        %v5762 = vmul.f32 %v5318, 1.442695
        %v5763 = vpow.pop %v5762
        %v5764 = vmul.f32 %v5319, 1.442695
        %v5765 = vpow.pop %v5764
        %v5766 = vmul.f32 %v5320, 1.442695
        %v5767 = vpow.pop %v5766
        %v5768 = vmul.f32 %v5321, 1.442695
        %v5769 = vpow.pop %v5768
        %v5770 = vmul.f32 %v5322, 1.442695
        %v5771 = vpow.pop %v5770
        %v5772 = vmul.f32 %v5323, 1.442695
        %v5773 = vpow.pop %v5772
        %v5774 = vmul.f32 %v5324, 1.442695
        %v5775 = vpow.pop %v5774
        %v5776 = vmul.f32 %v5325, 1.442695
        %v5777 = vpow.pop %v5776
        %v5778 = vmul.f32 %v5326, 1.442695
        %v5779 = vpow.pop %v5778
        %v5780 = vmul.f32 %v5327, 1.442695
        %v5781 = vpow.pop %v5780
        %v5782 = vmul.f32 %v5328, 1.442695
        %v5783 = vpow.pop %v5782
        %v5784 = vmul.f32 %v5329, 1.442695
        %v5785 = vpow.pop %v5784
        %v5786 = vmul.f32 %v5330, 1.442695
        %v5787 = vpow.pop %v5786
        %v5788 = vmul.f32 %v5331, 1.442695
        %v5789 = vpow.pop %v5788
        %v5790 = vmul.f32 %v5332, 1.442695
        %v5791 = vpow.pop %v5790
        %v5792 = vmul.f32 %v5333, 1.442695
        %v5793 = vpow.pop %v5792
        %v5794 = vmul.f32 %v5334, 1.442695
        %v5795 = vpow.pop %v5794
        %v5796 = vmul.f32 %v5335, 1.442695
        %v5797 = vpow.pop %v5796
        %v5798 = vmul.f32 %v5336, 1.442695
        %v5799 = vpow.pop %v5798
        %v5800 = vmul.f32 %v5337, 1.442695
        %v5801 = vpow.pop %v5800
        %v5802 = vmul.f32 %v5338, 1.442695
        %v5803 = vpow.pop %v5802
        %v5804 = vmul.f32 %v5339, 1.442695
        %v5805 = vpow.pop %v5804
        %v5806 = vmul.f32 %v5340, 1.442695
        %v5807 = vpow.pop %v5806
        %v5808 = vmul.f32 %v5341, 1.442695
        %v5809 = vpow.pop %v5808
        %v5810 = vmul.f32 %v5342, 1.442695
        %v5811 = vpow.pop %v5810
        %v5812 = vmul.f32 %v5343, 1.442695
        %v5813 = vpow.pop %v5812
        %v5814 = vmul.f32 %v5344, 1.442695
        %v5815 = vpow.pop %v5814
        %v5816 = vmul.f32 %v5345, 1.442695
        %v5817 = vpow.pop %v5816
        %v5818 = vmul.f32 %v5346, 1.442695
        %v5819 = vpow.pop %v5818
        %v5820 = vmul.f32 %v5347, 1.442695
        %v5821 = vpow.pop %v5820
        %v5822 = vmul.f32 %v5348, 1.442695
        %v5823 = vpow.pop %v5822
        %v5824 = vmul.f32 %v5349, 1.442695
        %v5825 = vpow.pop %v5824
        %v5826 = vmul.f32 %v5350, 1.442695
        %v5827 = vpow.pop %v5826
        %v5828 = vmul.f32 %v5351, 1.442695
        %v5829 = vpow.pop %v5828
        %v5830 = vmul.f32 %v5352, 1.442695
        %v5831 = vpow.pop %v5830
        %v5832 = vmul.f32 %v5353, 1.442695
        %v5833 = vpow.pop %v5832
        %v5834 = vmul.f32 %v5354, 1.442695
        %v5835 = vpow.pop %v5834
        %v5836 = vmul.f32 %v5355, 1.442695
        %v5837 = vpow.pop %v5836
        %v5838 = vmul.f32 %v5356, 1.442695
        %v5839 = vpow.pop %v5838
        %v5840 = vmul.f32 %v5357, 1.442695
        %v5841 = vpow.pop %v5840
        %v5842 = vmul.f32 %v5358, 1.442695
        %v5843 = vpow.pop %v5842
        %v5844 = vmul.f32 %v5359, 1.442695
        %v5845 = vpow.pop %v5844
        %v5846 = vmul.f32 %v5360, 1.442695
        %v5847 = vpow.pop %v5846
        %v5848 = vmul.f32 %v5361, 1.442695
        %v5849 = vpow.pop %v5848
        %v5850 = vmul.f32 %v5362, 1.442695
        %v5851 = vpow.pop %v5850
        %v5852 = vmul.f32 %v5363, 1.442695
        %v5853 = vpow.pop %v5852
        %v5854 = vmul.f32 %v5364, 1.442695
        %v5855 = vpow.pop %v5854
        %v5856 = vmul.f32 %v5365, 1.442695
        %v5857 = vpow.pop %v5856
        %v5858 = vmul.f32 %v5366, 1.442695
        %v5859 = vpow.pop %v5858
        %v5860 = vmul.f32 %v5367, 1.442695
        %v5861 = vpow.pop %v5860
        %v5862 = vmul.f32 %v5368, 1.442695
        %v5863 = vpow.pop %v5862
        %v5864 = vmul.f32 %v5369, 1.442695
        %v5865 = vpow.pop %v5864
        %v5866 = vmul.f32 %v5370, 1.442695
        %v5867 = vpow.pop %v5866
        %v5868 = vmul.f32 %v5371, 1.442695
        %v5869 = vpow.pop %v5868
        %v5870 = vmul.f32 %v5372, 1.442695
        %v5871 = vpow.pop %v5870
        %v5872 = vmul.f32 %v5373, 1.442695
        %v5873 = vpow.pop %v5872
        %v5874 = vmul.f32 %v5374, 1.442695
        %v5875 = vpow.pop %v5874
        %v5876 = vmul.f32 %v5375, 1.442695
        %v5877 = vpow.pop %v5876
        %v5878 = vmul.f32 %v5376, 1.442695
        %v5879 = vpow.pop %v5878
        %v5880 = vmul.f32 %v5377, 1.442695
        %v5881 = vpow.pop %v5880
        %v5882 = vmul.f32 %v5378, 1.442695
        %v5883 = vpow.pop %v5882
        %v5884 = vmul.f32 %v5379, 1.442695
        %v5885 = vpow.pop %v5884
        %v5886 = vmul.f32 %v5380, 1.442695
        %v5887 = vpow.pop %v5886
        %v5888 = vmul.f32 %v5381, 1.442695
        %v5889 = vpow.pop %v5888
        %v5890 = vmul.f32 %v5382, 1.442695
        %v5891 = vpow.pop %v5890
        %v5892 = vmul.f32 %v5383, 1.442695
        %v5893 = vpow.pop %v5892
        %v5894 = vmul.f32 %v5384, 1.442695
        %v5895 = vpow.pop %v5894
        %v5896 = vmul.f32 %v5385, 1.442695
        %v5897 = vpow.pop %v5896
        %v5898 = vld [vmem:[#allocation3] sm:$0xff]
        %v5899 = vmul.f32 %v5085, %v5898
        %6156 = vset.pattern.permute.xlu0 0
        %6157 = vperm.xlu0 %6156, %v5387
        %v6158 = vpop.permute.xlu0 %6157
        %6159 = vset.pattern.permute.xlu0 0
        %6160 = vperm.xlu0 %6159, %v5389
        %v6161 = vpop.permute.xlu0 %6160
        %6162 = vset.pattern.permute.xlu0 0
        %6163 = vperm.xlu0 %6162, %v5391
        %v6164 = vpop.permute.xlu0 %6163
        %6165 = vset.pattern.permute.xlu0 0
        %6166 = vperm.xlu0 %6165, %v5393
        %v6167 = vpop.permute.xlu0 %6166
        %6168 = vset.pattern.permute.xlu0 0
        %6169 = vperm.xlu0 %6168, %v5395
        %v6170 = vpop.permute.xlu0 %6169
        %6171 = vset.pattern.permute.xlu0 0
        %6172 = vperm.xlu0 %6171, %v5397
        %v6173 = vpop.permute.xlu0 %6172
        %6174 = vset.pattern.permute.xlu0 0
        %6175 = vperm.xlu0 %6174, %v5399
        %v6176 = vpop.permute.xlu0 %6175
        %6177 = vset.pattern.permute.xlu0 0
        %6178 = vperm.xlu0 %6177, %v5401
        %v6179 = vpop.permute.xlu0 %6178
        %6180 = vset.pattern.permute.xlu0 0
        %6181 = vperm.xlu0 %6180, %v5403
        %v6182 = vpop.permute.xlu0 %6181
        %6183 = vset.pattern.permute.xlu0 0
        %6184 = vperm.xlu0 %6183, %v5405
        %v6185 = vpop.permute.xlu0 %6184
        %6186 = vset.pattern.permute.xlu0 0
        %6187 = vperm.xlu0 %6186, %v5407
        %v6188 = vpop.permute.xlu0 %6187
        %6189 = vset.pattern.permute.xlu0 0
        %6190 = vperm.xlu0 %6189, %v5409
        %v6191 = vpop.permute.xlu0 %6190
        %6192 = vset.pattern.permute.xlu0 0
        %6193 = vperm.xlu0 %6192, %v5411
        %v6194 = vpop.permute.xlu0 %6193
        %6195 = vset.pattern.permute.xlu0 0
        %6196 = vperm.xlu0 %6195, %v5413
        %v6197 = vpop.permute.xlu0 %6196
        %6198 = vset.pattern.permute.xlu0 0
        %6199 = vperm.xlu0 %6198, %v5415
        %v6200 = vpop.permute.xlu0 %6199
        %6201 = vset.pattern.permute.xlu0 0
        %6202 = vperm.xlu0 %6201, %v5417
        %v6203 = vpop.permute.xlu0 %6202
        %6204 = vset.pattern.permute.xlu0 0
        %6205 = vperm.xlu0 %6204, %v5419
        %v6206 = vpop.permute.xlu0 %6205
        %6207 = vset.pattern.permute.xlu0 0
        %6208 = vperm.xlu0 %6207, %v5421
        %v6209 = vpop.permute.xlu0 %6208
        %6210 = vset.pattern.permute.xlu0 0
        %6211 = vperm.xlu0 %6210, %v5423
        %v6212 = vpop.permute.xlu0 %6211
        %6213 = vset.pattern.permute.xlu0 0
        %6214 = vperm.xlu0 %6213, %v5425
        %v6215 = vpop.permute.xlu0 %6214
        %6216 = vset.pattern.permute.xlu0 0
        %6217 = vperm.xlu0 %6216, %v5427
        %v6218 = vpop.permute.xlu0 %6217
        %6219 = vset.pattern.permute.xlu0 0
        %6220 = vperm.xlu0 %6219, %v5429
        %v6221 = vpop.permute.xlu0 %6220
        %6222 = vset.pattern.permute.xlu0 0
        %6223 = vperm.xlu0 %6222, %v5431
        %v6224 = vpop.permute.xlu0 %6223
        %6225 = vset.pattern.permute.xlu0 0
        %6226 = vperm.xlu0 %6225, %v5433
        %v6227 = vpop.permute.xlu0 %6226
        %6228 = vset.pattern.permute.xlu0 0
        %6229 = vperm.xlu0 %6228, %v5435
        %v6230 = vpop.permute.xlu0 %6229
        %6231 = vset.pattern.permute.xlu0 0
        %6232 = vperm.xlu0 %6231, %v5437
        %v6233 = vpop.permute.xlu0 %6232
        %6234 = vset.pattern.permute.xlu0 0
        %6235 = vperm.xlu0 %6234, %v5439
        %v6236 = vpop.permute.xlu0 %6235
        %6237 = vset.pattern.permute.xlu0 0
        %6238 = vperm.xlu0 %6237, %v5441
        %v6239 = vpop.permute.xlu0 %6238
        %6240 = vset.pattern.permute.xlu0 0
        %6241 = vperm.xlu0 %6240, %v5443
        %v6242 = vpop.permute.xlu0 %6241
        %6243 = vset.pattern.permute.xlu0 0
        %6244 = vperm.xlu0 %6243, %v5445
        %v6245 = vpop.permute.xlu0 %6244
        %6246 = vset.pattern.permute.xlu0 0
        %6247 = vperm.xlu0 %6246, %v5447
        %v6248 = vpop.permute.xlu0 %6247
        %6249 = vset.pattern.permute.xlu0 0
        %6250 = vperm.xlu0 %6249, %v5449
        %v6251 = vpop.permute.xlu0 %6250
        %6252 = vset.pattern.permute.xlu0 0
        %6253 = vperm.xlu0 %6252, %v5451
        %v6254 = vpop.permute.xlu0 %6253
        %6255 = vset.pattern.permute.xlu0 0
        %6256 = vperm.xlu0 %6255, %v5453
        %v6257 = vpop.permute.xlu0 %6256
        %6258 = vset.pattern.permute.xlu0 0
        %6259 = vperm.xlu0 %6258, %v5455
        %v6260 = vpop.permute.xlu0 %6259
        %6261 = vset.pattern.permute.xlu0 0
        %6262 = vperm.xlu0 %6261, %v5457
        %v6263 = vpop.permute.xlu0 %6262
        %6264 = vset.pattern.permute.xlu0 0
        %6265 = vperm.xlu0 %6264, %v5459
        %v6266 = vpop.permute.xlu0 %6265
        %6267 = vset.pattern.permute.xlu0 0
        %6268 = vperm.xlu0 %6267, %v5461
        %v6269 = vpop.permute.xlu0 %6268
        %6270 = vset.pattern.permute.xlu0 0
        %6271 = vperm.xlu0 %6270, %v5463
        %v6272 = vpop.permute.xlu0 %6271
        %6273 = vset.pattern.permute.xlu0 0
        %6274 = vperm.xlu0 %6273, %v5465
        %v6275 = vpop.permute.xlu0 %6274
        %6276 = vset.pattern.permute.xlu0 0
        %6277 = vperm.xlu0 %6276, %v5467
        %v6278 = vpop.permute.xlu0 %6277
        %6279 = vset.pattern.permute.xlu0 0
        %6280 = vperm.xlu0 %6279, %v5469
        %v6281 = vpop.permute.xlu0 %6280
        %6282 = vset.pattern.permute.xlu0 0
        %6283 = vperm.xlu0 %6282, %v5471
        %v6284 = vpop.permute.xlu0 %6283
        %6285 = vset.pattern.permute.xlu0 0
        %6286 = vperm.xlu0 %6285, %v5473
        %v6287 = vpop.permute.xlu0 %6286
        %6288 = vset.pattern.permute.xlu0 0
        %6289 = vperm.xlu0 %6288, %v5475
        %v6290 = vpop.permute.xlu0 %6289
        %6291 = vset.pattern.permute.xlu0 0
        %6292 = vperm.xlu0 %6291, %v5477
        %v6293 = vpop.permute.xlu0 %6292
        %6294 = vset.pattern.permute.xlu0 0
        %6295 = vperm.xlu0 %6294, %v5479
        %v6296 = vpop.permute.xlu0 %6295
        %6297 = vset.pattern.permute.xlu0 0
        %6298 = vperm.xlu0 %6297, %v5481
        %v6299 = vpop.permute.xlu0 %6298
        %6300 = vset.pattern.permute.xlu0 0
        %6301 = vperm.xlu0 %6300, %v5483
        %v6302 = vpop.permute.xlu0 %6301
        %6303 = vset.pattern.permute.xlu0 0
        %6304 = vperm.xlu0 %6303, %v5485
        %v6305 = vpop.permute.xlu0 %6304
        %6306 = vset.pattern.permute.xlu0 0
        %6307 = vperm.xlu0 %6306, %v5487
        %v6308 = vpop.permute.xlu0 %6307
        %6309 = vset.pattern.permute.xlu0 0
        %6310 = vperm.xlu0 %6309, %v5489
        %v6311 = vpop.permute.xlu0 %6310
        %6312 = vset.pattern.permute.xlu0 0
        %6313 = vperm.xlu0 %6312, %v5491
        %v6314 = vpop.permute.xlu0 %6313
        %6315 = vset.pattern.permute.xlu0 0
        %6316 = vperm.xlu0 %6315, %v5493
        %v6317 = vpop.permute.xlu0 %6316
        %6318 = vset.pattern.permute.xlu0 0
        %6319 = vperm.xlu0 %6318, %v5495
        %v6320 = vpop.permute.xlu0 %6319
        %6321 = vset.pattern.permute.xlu0 0
        %6322 = vperm.xlu0 %6321, %v5497
        %v6323 = vpop.permute.xlu0 %6322
        %6324 = vset.pattern.permute.xlu0 0
        %6325 = vperm.xlu0 %6324, %v5499
        %v6326 = vpop.permute.xlu0 %6325
        %6327 = vset.pattern.permute.xlu0 0
        %6328 = vperm.xlu0 %6327, %v5501
        %v6329 = vpop.permute.xlu0 %6328
        %6330 = vset.pattern.permute.xlu0 0
        %6331 = vperm.xlu0 %6330, %v5503
        %v6332 = vpop.permute.xlu0 %6331
        %6333 = vset.pattern.permute.xlu0 0
        %6334 = vperm.xlu0 %6333, %v5505
        %v6335 = vpop.permute.xlu0 %6334
        %6336 = vset.pattern.permute.xlu0 0
        %6337 = vperm.xlu0 %6336, %v5507
        %v6338 = vpop.permute.xlu0 %6337
        %6339 = vset.pattern.permute.xlu0 0
        %6340 = vperm.xlu0 %6339, %v5509
        %v6341 = vpop.permute.xlu0 %6340
        %6342 = vset.pattern.permute.xlu0 0
        %6343 = vperm.xlu0 %6342, %v5511
        %v6344 = vpop.permute.xlu0 %6343
        %6345 = vset.pattern.permute.xlu0 0
        %6346 = vperm.xlu0 %6345, %v5513
        %v6347 = vpop.permute.xlu0 %6346
        %6348 = vset.pattern.permute.xlu0 0
        %6349 = vperm.xlu0 %6348, %v5515
        %v6350 = vpop.permute.xlu0 %6349
        %6351 = vset.pattern.permute.xlu0 0
        %6352 = vperm.xlu0 %6351, %v5517
        %v6353 = vpop.permute.xlu0 %6352
        %6354 = vset.pattern.permute.xlu0 0
        %6355 = vperm.xlu0 %6354, %v5519
        %v6356 = vpop.permute.xlu0 %6355
        %6357 = vset.pattern.permute.xlu0 0
        %6358 = vperm.xlu0 %6357, %v5521
        %v6359 = vpop.permute.xlu0 %6358
        %6360 = vset.pattern.permute.xlu0 0
        %6361 = vperm.xlu0 %6360, %v5523
        %v6362 = vpop.permute.xlu0 %6361
        %6363 = vset.pattern.permute.xlu0 0
        %6364 = vperm.xlu0 %6363, %v5525
        %v6365 = vpop.permute.xlu0 %6364
        %6366 = vset.pattern.permute.xlu0 0
        %6367 = vperm.xlu0 %6366, %v5527
        %v6368 = vpop.permute.xlu0 %6367
        %6369 = vset.pattern.permute.xlu0 0
        %6370 = vperm.xlu0 %6369, %v5529
        %v6371 = vpop.permute.xlu0 %6370
        %6372 = vset.pattern.permute.xlu0 0
        %6373 = vperm.xlu0 %6372, %v5531
        %v6374 = vpop.permute.xlu0 %6373
        %6375 = vset.pattern.permute.xlu0 0
        %6376 = vperm.xlu0 %6375, %v5533
        %v6377 = vpop.permute.xlu0 %6376
        %6378 = vset.pattern.permute.xlu0 0
        %6379 = vperm.xlu0 %6378, %v5535
        %v6380 = vpop.permute.xlu0 %6379
        %6381 = vset.pattern.permute.xlu0 0
        %6382 = vperm.xlu0 %6381, %v5537
        %v6383 = vpop.permute.xlu0 %6382
        %6384 = vset.pattern.permute.xlu0 0
        %6385 = vperm.xlu0 %6384, %v5539
        %v6386 = vpop.permute.xlu0 %6385
        %6387 = vset.pattern.permute.xlu0 0
        %6388 = vperm.xlu0 %6387, %v5541
        %v6389 = vpop.permute.xlu0 %6388
        %6390 = vset.pattern.permute.xlu0 0
        %6391 = vperm.xlu0 %6390, %v5543
        %v6392 = vpop.permute.xlu0 %6391
        %6393 = vset.pattern.permute.xlu0 0
        %6394 = vperm.xlu0 %6393, %v5545
        %v6395 = vpop.permute.xlu0 %6394
        %6396 = vset.pattern.permute.xlu0 0
        %6397 = vperm.xlu0 %6396, %v5547
        %v6398 = vpop.permute.xlu0 %6397
        %6399 = vset.pattern.permute.xlu0 0
        %6400 = vperm.xlu0 %6399, %v5549
        %v6401 = vpop.permute.xlu0 %6400
        %6402 = vset.pattern.permute.xlu0 0
        %6403 = vperm.xlu0 %6402, %v5551
        %v6404 = vpop.permute.xlu0 %6403
        %6405 = vset.pattern.permute.xlu0 0
        %6406 = vperm.xlu0 %6405, %v5553
        %v6407 = vpop.permute.xlu0 %6406
        %6408 = vset.pattern.permute.xlu0 0
        %6409 = vperm.xlu0 %6408, %v5555
        %v6410 = vpop.permute.xlu0 %6409
        %6411 = vset.pattern.permute.xlu0 0
        %6412 = vperm.xlu0 %6411, %v5557
        %v6413 = vpop.permute.xlu0 %6412
        %6414 = vset.pattern.permute.xlu0 0
        %6415 = vperm.xlu0 %6414, %v5559
        %v6416 = vpop.permute.xlu0 %6415
        %6417 = vset.pattern.permute.xlu0 0
        %6418 = vperm.xlu0 %6417, %v5561
        %v6419 = vpop.permute.xlu0 %6418
        %6420 = vset.pattern.permute.xlu0 0
        %6421 = vperm.xlu0 %6420, %v5563
        %v6422 = vpop.permute.xlu0 %6421
        %6423 = vset.pattern.permute.xlu0 0
        %6424 = vperm.xlu0 %6423, %v5565
        %v6425 = vpop.permute.xlu0 %6424
        %6426 = vset.pattern.permute.xlu0 0
        %6427 = vperm.xlu0 %6426, %v5567
        %v6428 = vpop.permute.xlu0 %6427
        %6429 = vset.pattern.permute.xlu0 0
        %6430 = vperm.xlu0 %6429, %v5569
        %v6431 = vpop.permute.xlu0 %6430
        %6432 = vset.pattern.permute.xlu0 0
        %6433 = vperm.xlu0 %6432, %v5571
        %v6434 = vpop.permute.xlu0 %6433
        %6435 = vset.pattern.permute.xlu0 0
        %6436 = vperm.xlu0 %6435, %v5573
        %v6437 = vpop.permute.xlu0 %6436
        %6438 = vset.pattern.permute.xlu0 0
        %6439 = vperm.xlu0 %6438, %v5575
        %v6440 = vpop.permute.xlu0 %6439
        %6441 = vset.pattern.permute.xlu0 0
        %6442 = vperm.xlu0 %6441, %v5577
        %v6443 = vpop.permute.xlu0 %6442
        %6444 = vset.pattern.permute.xlu0 0
        %6445 = vperm.xlu0 %6444, %v5579
        %v6446 = vpop.permute.xlu0 %6445
        %6447 = vset.pattern.permute.xlu0 0
        %6448 = vperm.xlu0 %6447, %v5581
        %v6449 = vpop.permute.xlu0 %6448
        %6450 = vset.pattern.permute.xlu0 0
        %6451 = vperm.xlu0 %6450, %v5583
        %v6452 = vpop.permute.xlu0 %6451
        %6453 = vset.pattern.permute.xlu0 0
        %6454 = vperm.xlu0 %6453, %v5585
        %v6455 = vpop.permute.xlu0 %6454
        %6456 = vset.pattern.permute.xlu0 0
        %6457 = vperm.xlu0 %6456, %v5587
        %v6458 = vpop.permute.xlu0 %6457
        %6459 = vset.pattern.permute.xlu0 0
        %6460 = vperm.xlu0 %6459, %v5589
        %v6461 = vpop.permute.xlu0 %6460
        %6462 = vset.pattern.permute.xlu0 0
        %6463 = vperm.xlu0 %6462, %v5591
        %v6464 = vpop.permute.xlu0 %6463
        %6465 = vset.pattern.permute.xlu0 0
        %6466 = vperm.xlu0 %6465, %v5593
        %v6467 = vpop.permute.xlu0 %6466
        %6468 = vset.pattern.permute.xlu0 0
        %6469 = vperm.xlu0 %6468, %v5595
        %v6470 = vpop.permute.xlu0 %6469
        %6471 = vset.pattern.permute.xlu0 0
        %6472 = vperm.xlu0 %6471, %v5597
        %v6473 = vpop.permute.xlu0 %6472
        %6474 = vset.pattern.permute.xlu0 0
        %6475 = vperm.xlu0 %6474, %v5599
        %v6476 = vpop.permute.xlu0 %6475
        %6477 = vset.pattern.permute.xlu0 0
        %6478 = vperm.xlu0 %6477, %v5601
        %v6479 = vpop.permute.xlu0 %6478
        %6480 = vset.pattern.permute.xlu0 0
        %6481 = vperm.xlu0 %6480, %v5603
        %v6482 = vpop.permute.xlu0 %6481
        %6483 = vset.pattern.permute.xlu0 0
        %6484 = vperm.xlu0 %6483, %v5605
        %v6485 = vpop.permute.xlu0 %6484
        %6486 = vset.pattern.permute.xlu0 0
        %6487 = vperm.xlu0 %6486, %v5607
        %v6488 = vpop.permute.xlu0 %6487
        %6489 = vset.pattern.permute.xlu0 0
        %6490 = vperm.xlu0 %6489, %v5609
        %v6491 = vpop.permute.xlu0 %6490
        %6492 = vset.pattern.permute.xlu0 0
        %6493 = vperm.xlu0 %6492, %v5611
        %v6494 = vpop.permute.xlu0 %6493
        %6495 = vset.pattern.permute.xlu0 0
        %6496 = vperm.xlu0 %6495, %v5613
        %v6497 = vpop.permute.xlu0 %6496
        %6498 = vset.pattern.permute.xlu0 0
        %6499 = vperm.xlu0 %6498, %v5615
        %v6500 = vpop.permute.xlu0 %6499
        %6501 = vset.pattern.permute.xlu0 0
        %6502 = vperm.xlu0 %6501, %v5617
        %v6503 = vpop.permute.xlu0 %6502
        %6504 = vset.pattern.permute.xlu0 0
        %6505 = vperm.xlu0 %6504, %v5619
        %v6506 = vpop.permute.xlu0 %6505
        %6507 = vset.pattern.permute.xlu0 0
        %6508 = vperm.xlu0 %6507, %v5621
        %v6509 = vpop.permute.xlu0 %6508
        %6510 = vset.pattern.permute.xlu0 0
        %6511 = vperm.xlu0 %6510, %v5623
        %v6512 = vpop.permute.xlu0 %6511
        %6513 = vset.pattern.permute.xlu0 0
        %6514 = vperm.xlu0 %6513, %v5625
        %v6515 = vpop.permute.xlu0 %6514
        %6516 = vset.pattern.permute.xlu0 0
        %6517 = vperm.xlu0 %6516, %v5627
        %v6518 = vpop.permute.xlu0 %6517
        %6519 = vset.pattern.permute.xlu0 0
        %6520 = vperm.xlu0 %6519, %v5629
        %v6521 = vpop.permute.xlu0 %6520
        %6522 = vset.pattern.permute.xlu0 0
        %6523 = vperm.xlu0 %6522, %v5631
        %v6524 = vpop.permute.xlu0 %6523
        %6525 = vset.pattern.permute.xlu0 0
        %6526 = vperm.xlu0 %6525, %v5633
        %v6527 = vpop.permute.xlu0 %6526
        %6528 = vset.pattern.permute.xlu0 0
        %6529 = vperm.xlu0 %6528, %v5635
        %v6530 = vpop.permute.xlu0 %6529
        %6531 = vset.pattern.permute.xlu0 0
        %6532 = vperm.xlu0 %6531, %v5637
        %v6533 = vpop.permute.xlu0 %6532
        %6534 = vset.pattern.permute.xlu0 0
        %6535 = vperm.xlu0 %6534, %v5639
        %v6536 = vpop.permute.xlu0 %6535
        %6537 = vset.pattern.permute.xlu0 0
        %6538 = vperm.xlu0 %6537, %v5641
        %v6539 = vpop.permute.xlu0 %6538
        %6540 = vset.pattern.permute.xlu0 0
        %6541 = vperm.xlu0 %6540, %v5643
        %v6542 = vpop.permute.xlu0 %6541
        %6543 = vset.pattern.permute.xlu0 0
        %6544 = vperm.xlu0 %6543, %v5645
        %v6545 = vpop.permute.xlu0 %6544
        %6546 = vset.pattern.permute.xlu0 0
        %6547 = vperm.xlu0 %6546, %v5647
        %v6548 = vpop.permute.xlu0 %6547
        %6549 = vset.pattern.permute.xlu0 0
        %6550 = vperm.xlu0 %6549, %v5649
        %v6551 = vpop.permute.xlu0 %6550
        %6552 = vset.pattern.permute.xlu0 0
        %6553 = vperm.xlu0 %6552, %v5651
        %v6554 = vpop.permute.xlu0 %6553
        %6555 = vset.pattern.permute.xlu0 0
        %6556 = vperm.xlu0 %6555, %v5653
        %v6557 = vpop.permute.xlu0 %6556
        %6558 = vset.pattern.permute.xlu0 0
        %6559 = vperm.xlu0 %6558, %v5655
        %v6560 = vpop.permute.xlu0 %6559
        %6561 = vset.pattern.permute.xlu0 0
        %6562 = vperm.xlu0 %6561, %v5657
        %v6563 = vpop.permute.xlu0 %6562
        %6564 = vset.pattern.permute.xlu0 0
        %6565 = vperm.xlu0 %6564, %v5659
        %v6566 = vpop.permute.xlu0 %6565
        %6567 = vset.pattern.permute.xlu0 0
        %6568 = vperm.xlu0 %6567, %v5661
        %v6569 = vpop.permute.xlu0 %6568
        %6570 = vset.pattern.permute.xlu0 0
        %6571 = vperm.xlu0 %6570, %v5663
        %v6572 = vpop.permute.xlu0 %6571
        %6573 = vset.pattern.permute.xlu0 0
        %6574 = vperm.xlu0 %6573, %v5665
        %v6575 = vpop.permute.xlu0 %6574
        %6576 = vset.pattern.permute.xlu0 0
        %6577 = vperm.xlu0 %6576, %v5667
        %v6578 = vpop.permute.xlu0 %6577
        %6579 = vset.pattern.permute.xlu0 0
        %6580 = vperm.xlu0 %6579, %v5669
        %v6581 = vpop.permute.xlu0 %6580
        %6582 = vset.pattern.permute.xlu0 0
        %6583 = vperm.xlu0 %6582, %v5671
        %v6584 = vpop.permute.xlu0 %6583
        %6585 = vset.pattern.permute.xlu0 0
        %6586 = vperm.xlu0 %6585, %v5673
        %v6587 = vpop.permute.xlu0 %6586
        %6588 = vset.pattern.permute.xlu0 0
        %6589 = vperm.xlu0 %6588, %v5675
        %v6590 = vpop.permute.xlu0 %6589
        %6591 = vset.pattern.permute.xlu0 0
        %6592 = vperm.xlu0 %6591, %v5677
        %v6593 = vpop.permute.xlu0 %6592
        %6594 = vset.pattern.permute.xlu0 0
        %6595 = vperm.xlu0 %6594, %v5679
        %v6596 = vpop.permute.xlu0 %6595
        %6597 = vset.pattern.permute.xlu0 0
        %6598 = vperm.xlu0 %6597, %v5681
        %v6599 = vpop.permute.xlu0 %6598
        %6600 = vset.pattern.permute.xlu0 0
        %6601 = vperm.xlu0 %6600, %v5683
        %v6602 = vpop.permute.xlu0 %6601
        %6603 = vset.pattern.permute.xlu0 0
        %6604 = vperm.xlu0 %6603, %v5685
        %v6605 = vpop.permute.xlu0 %6604
        %6606 = vset.pattern.permute.xlu0 0
        %6607 = vperm.xlu0 %6606, %v5687
        %v6608 = vpop.permute.xlu0 %6607
        %6609 = vset.pattern.permute.xlu0 0
        %6610 = vperm.xlu0 %6609, %v5689
        %v6611 = vpop.permute.xlu0 %6610
        %6612 = vset.pattern.permute.xlu0 0
        %6613 = vperm.xlu0 %6612, %v5691
        %v6614 = vpop.permute.xlu0 %6613
        %6615 = vset.pattern.permute.xlu0 0
        %6616 = vperm.xlu0 %6615, %v5693
        %v6617 = vpop.permute.xlu0 %6616
        %6618 = vset.pattern.permute.xlu0 0
        %6619 = vperm.xlu0 %6618, %v5695
        %v6620 = vpop.permute.xlu0 %6619
        %6621 = vset.pattern.permute.xlu0 0
        %6622 = vperm.xlu0 %6621, %v5697
        %v6623 = vpop.permute.xlu0 %6622
        %6624 = vset.pattern.permute.xlu0 0
        %6625 = vperm.xlu0 %6624, %v5699
        %v6626 = vpop.permute.xlu0 %6625
        %6627 = vset.pattern.permute.xlu0 0
        %6628 = vperm.xlu0 %6627, %v5701
        %v6629 = vpop.permute.xlu0 %6628
        %6630 = vset.pattern.permute.xlu0 0
        %6631 = vperm.xlu0 %6630, %v5703
        %v6632 = vpop.permute.xlu0 %6631
        %6633 = vset.pattern.permute.xlu0 0
        %6634 = vperm.xlu0 %6633, %v5705
        %v6635 = vpop.permute.xlu0 %6634
        %6636 = vset.pattern.permute.xlu0 0
        %6637 = vperm.xlu0 %6636, %v5707
        %v6638 = vpop.permute.xlu0 %6637
        %6639 = vset.pattern.permute.xlu0 0
        %6640 = vperm.xlu0 %6639, %v5709
        %v6641 = vpop.permute.xlu0 %6640
        %6642 = vset.pattern.permute.xlu0 0
        %6643 = vperm.xlu0 %6642, %v5711
        %v6644 = vpop.permute.xlu0 %6643
        %6645 = vset.pattern.permute.xlu0 0
        %6646 = vperm.xlu0 %6645, %v5713
        %v6647 = vpop.permute.xlu0 %6646
        %6648 = vset.pattern.permute.xlu0 0
        %6649 = vperm.xlu0 %6648, %v5715
        %v6650 = vpop.permute.xlu0 %6649
        %6651 = vset.pattern.permute.xlu0 0
        %6652 = vperm.xlu0 %6651, %v5717
        %v6653 = vpop.permute.xlu0 %6652
        %6654 = vset.pattern.permute.xlu0 0
        %6655 = vperm.xlu0 %6654, %v5719
        %v6656 = vpop.permute.xlu0 %6655
        %6657 = vset.pattern.permute.xlu0 0
        %6658 = vperm.xlu0 %6657, %v5721
        %v6659 = vpop.permute.xlu0 %6658
        %6660 = vset.pattern.permute.xlu0 0
        %6661 = vperm.xlu0 %6660, %v5723
        %v6662 = vpop.permute.xlu0 %6661
        %6663 = vset.pattern.permute.xlu0 0
        %6664 = vperm.xlu0 %6663, %v5725
        %v6665 = vpop.permute.xlu0 %6664
        %6666 = vset.pattern.permute.xlu0 0
        %6667 = vperm.xlu0 %6666, %v5727
        %v6668 = vpop.permute.xlu0 %6667
        %6669 = vset.pattern.permute.xlu0 0
        %6670 = vperm.xlu0 %6669, %v5729
        %v6671 = vpop.permute.xlu0 %6670
        %6672 = vset.pattern.permute.xlu0 0
        %6673 = vperm.xlu0 %6672, %v5731
        %v6674 = vpop.permute.xlu0 %6673
        %6675 = vset.pattern.permute.xlu0 0
        %6676 = vperm.xlu0 %6675, %v5733
        %v6677 = vpop.permute.xlu0 %6676
        %6678 = vset.pattern.permute.xlu0 0
        %6679 = vperm.xlu0 %6678, %v5735
        %v6680 = vpop.permute.xlu0 %6679
        %6681 = vset.pattern.permute.xlu0 0
        %6682 = vperm.xlu0 %6681, %v5737
        %v6683 = vpop.permute.xlu0 %6682
        %6684 = vset.pattern.permute.xlu0 0
        %6685 = vperm.xlu0 %6684, %v5739
        %v6686 = vpop.permute.xlu0 %6685
        %6687 = vset.pattern.permute.xlu0 0
        %6688 = vperm.xlu0 %6687, %v5741
        %v6689 = vpop.permute.xlu0 %6688
        %6690 = vset.pattern.permute.xlu0 0
        %6691 = vperm.xlu0 %6690, %v5743
        %v6692 = vpop.permute.xlu0 %6691
        %6693 = vset.pattern.permute.xlu0 0
        %6694 = vperm.xlu0 %6693, %v5745
        %v6695 = vpop.permute.xlu0 %6694
        %6696 = vset.pattern.permute.xlu0 0
        %6697 = vperm.xlu0 %6696, %v5747
        %v6698 = vpop.permute.xlu0 %6697
        %6699 = vset.pattern.permute.xlu0 0
        %6700 = vperm.xlu0 %6699, %v5749
        %v6701 = vpop.permute.xlu0 %6700
        %6702 = vset.pattern.permute.xlu0 0
        %6703 = vperm.xlu0 %6702, %v5751
        %v6704 = vpop.permute.xlu0 %6703
        %6705 = vset.pattern.permute.xlu0 0
        %6706 = vperm.xlu0 %6705, %v5753
        %v6707 = vpop.permute.xlu0 %6706
        %6708 = vset.pattern.permute.xlu0 0
        %6709 = vperm.xlu0 %6708, %v5755
        %v6710 = vpop.permute.xlu0 %6709
        %6711 = vset.pattern.permute.xlu0 0
        %6712 = vperm.xlu0 %6711, %v5757
        %v6713 = vpop.permute.xlu0 %6712
        %6714 = vset.pattern.permute.xlu0 0
        %6715 = vperm.xlu0 %6714, %v5759
        %v6716 = vpop.permute.xlu0 %6715
        %6717 = vset.pattern.permute.xlu0 0
        %6718 = vperm.xlu0 %6717, %v5761
        %v6719 = vpop.permute.xlu0 %6718
        %6720 = vset.pattern.permute.xlu0 0
        %6721 = vperm.xlu0 %6720, %v5763
        %v6722 = vpop.permute.xlu0 %6721
        %6723 = vset.pattern.permute.xlu0 0
        %6724 = vperm.xlu0 %6723, %v5765
        %v6725 = vpop.permute.xlu0 %6724
        %6726 = vset.pattern.permute.xlu0 0
        %6727 = vperm.xlu0 %6726, %v5767
        %v6728 = vpop.permute.xlu0 %6727
        %6729 = vset.pattern.permute.xlu0 0
        %6730 = vperm.xlu0 %6729, %v5769
        %v6731 = vpop.permute.xlu0 %6730
        %6732 = vset.pattern.permute.xlu0 0
        %6733 = vperm.xlu0 %6732, %v5771
        %v6734 = vpop.permute.xlu0 %6733
        %6735 = vset.pattern.permute.xlu0 0
        %6736 = vperm.xlu0 %6735, %v5773
        %v6737 = vpop.permute.xlu0 %6736
        %6738 = vset.pattern.permute.xlu0 0
        %6739 = vperm.xlu0 %6738, %v5775
        %v6740 = vpop.permute.xlu0 %6739
        %6741 = vset.pattern.permute.xlu0 0
        %6742 = vperm.xlu0 %6741, %v5777
        %v6743 = vpop.permute.xlu0 %6742
        %6744 = vset.pattern.permute.xlu0 0
        %6745 = vperm.xlu0 %6744, %v5779
        %v6746 = vpop.permute.xlu0 %6745
        %6747 = vset.pattern.permute.xlu0 0
        %6748 = vperm.xlu0 %6747, %v5781
        %v6749 = vpop.permute.xlu0 %6748
        %6750 = vset.pattern.permute.xlu0 0
        %6751 = vperm.xlu0 %6750, %v5783
        %v6752 = vpop.permute.xlu0 %6751
        %6753 = vset.pattern.permute.xlu0 0
        %6754 = vperm.xlu0 %6753, %v5785
        %v6755 = vpop.permute.xlu0 %6754
        %6756 = vset.pattern.permute.xlu0 0
        %6757 = vperm.xlu0 %6756, %v5787
        %v6758 = vpop.permute.xlu0 %6757
        %6759 = vset.pattern.permute.xlu0 0
        %6760 = vperm.xlu0 %6759, %v5789
        %v6761 = vpop.permute.xlu0 %6760
        %6762 = vset.pattern.permute.xlu0 0
        %6763 = vperm.xlu0 %6762, %v5791
        %v6764 = vpop.permute.xlu0 %6763
        %6765 = vset.pattern.permute.xlu0 0
        %6766 = vperm.xlu0 %6765, %v5793
        %v6767 = vpop.permute.xlu0 %6766
        %6768 = vset.pattern.permute.xlu0 0
        %6769 = vperm.xlu0 %6768, %v5795
        %v6770 = vpop.permute.xlu0 %6769
        %6771 = vset.pattern.permute.xlu0 0
        %6772 = vperm.xlu0 %6771, %v5797
        %v6773 = vpop.permute.xlu0 %6772
        %6774 = vset.pattern.permute.xlu0 0
        %6775 = vperm.xlu0 %6774, %v5799
        %v6776 = vpop.permute.xlu0 %6775
        %6777 = vset.pattern.permute.xlu0 0
        %6778 = vperm.xlu0 %6777, %v5801
        %v6779 = vpop.permute.xlu0 %6778
        %6780 = vset.pattern.permute.xlu0 0
        %6781 = vperm.xlu0 %6780, %v5803
        %v6782 = vpop.permute.xlu0 %6781
        %6783 = vset.pattern.permute.xlu0 0
        %6784 = vperm.xlu0 %6783, %v5805
        %v6785 = vpop.permute.xlu0 %6784
        %6786 = vset.pattern.permute.xlu0 0
        %6787 = vperm.xlu0 %6786, %v5807
        %v6788 = vpop.permute.xlu0 %6787
        %6789 = vset.pattern.permute.xlu0 0
        %6790 = vperm.xlu0 %6789, %v5809
        %v6791 = vpop.permute.xlu0 %6790
        %6792 = vset.pattern.permute.xlu0 0
        %6793 = vperm.xlu0 %6792, %v5811
        %v6794 = vpop.permute.xlu0 %6793
        %6795 = vset.pattern.permute.xlu0 0
        %6796 = vperm.xlu0 %6795, %v5813
        %v6797 = vpop.permute.xlu0 %6796
        %6798 = vset.pattern.permute.xlu0 0
        %6799 = vperm.xlu0 %6798, %v5815
        %v6800 = vpop.permute.xlu0 %6799
        %6801 = vset.pattern.permute.xlu0 0
        %6802 = vperm.xlu0 %6801, %v5817
        %v6803 = vpop.permute.xlu0 %6802
        %6804 = vset.pattern.permute.xlu0 0
        %6805 = vperm.xlu0 %6804, %v5819
        %v6806 = vpop.permute.xlu0 %6805
        %6807 = vset.pattern.permute.xlu0 0
        %6808 = vperm.xlu0 %6807, %v5821
        %v6809 = vpop.permute.xlu0 %6808
        %6810 = vset.pattern.permute.xlu0 0
        %6811 = vperm.xlu0 %6810, %v5823
        %v6812 = vpop.permute.xlu0 %6811
        %6813 = vset.pattern.permute.xlu0 0
        %6814 = vperm.xlu0 %6813, %v5825
        %v6815 = vpop.permute.xlu0 %6814
        %6816 = vset.pattern.permute.xlu0 0
        %6817 = vperm.xlu0 %6816, %v5827
        %v6818 = vpop.permute.xlu0 %6817
        %6819 = vset.pattern.permute.xlu0 0
        %6820 = vperm.xlu0 %6819, %v5829
        %v6821 = vpop.permute.xlu0 %6820
        %6822 = vset.pattern.permute.xlu0 0
        %6823 = vperm.xlu0 %6822, %v5831
        %v6824 = vpop.permute.xlu0 %6823
        %6825 = vset.pattern.permute.xlu0 0
        %6826 = vperm.xlu0 %6825, %v5833
        %v6827 = vpop.permute.xlu0 %6826
        %6828 = vset.pattern.permute.xlu0 0
        %6829 = vperm.xlu0 %6828, %v5835
        %v6830 = vpop.permute.xlu0 %6829
        %6831 = vset.pattern.permute.xlu0 0
        %6832 = vperm.xlu0 %6831, %v5837
        %v6833 = vpop.permute.xlu0 %6832
        %6834 = vset.pattern.permute.xlu0 0
        %6835 = vperm.xlu0 %6834, %v5839
        %v6836 = vpop.permute.xlu0 %6835
        %6837 = vset.pattern.permute.xlu0 0
        %6838 = vperm.xlu0 %6837, %v5841
        %v6839 = vpop.permute.xlu0 %6838
        %6840 = vset.pattern.permute.xlu0 0
        %6841 = vperm.xlu0 %6840, %v5843
        %v6842 = vpop.permute.xlu0 %6841
        %6843 = vset.pattern.permute.xlu0 0
        %6844 = vperm.xlu0 %6843, %v5845
        %v6845 = vpop.permute.xlu0 %6844
        %6846 = vset.pattern.permute.xlu0 0
        %6847 = vperm.xlu0 %6846, %v5847
        %v6848 = vpop.permute.xlu0 %6847
        %6849 = vset.pattern.permute.xlu0 0
        %6850 = vperm.xlu0 %6849, %v5849
        %v6851 = vpop.permute.xlu0 %6850
        %6852 = vset.pattern.permute.xlu0 0
        %6853 = vperm.xlu0 %6852, %v5851
        %v6854 = vpop.permute.xlu0 %6853
        %6855 = vset.pattern.permute.xlu0 0
        %6856 = vperm.xlu0 %6855, %v5853
        %v6857 = vpop.permute.xlu0 %6856
        %6858 = vset.pattern.permute.xlu0 0
        %6859 = vperm.xlu0 %6858, %v5855
        %v6860 = vpop.permute.xlu0 %6859
        %6861 = vset.pattern.permute.xlu0 0
        %6862 = vperm.xlu0 %6861, %v5857
        %v6863 = vpop.permute.xlu0 %6862
        %6864 = vset.pattern.permute.xlu0 0
        %6865 = vperm.xlu0 %6864, %v5859
        %v6866 = vpop.permute.xlu0 %6865
        %6867 = vset.pattern.permute.xlu0 0
        %6868 = vperm.xlu0 %6867, %v5861
        %v6869 = vpop.permute.xlu0 %6868
        %6870 = vset.pattern.permute.xlu0 0
        %6871 = vperm.xlu0 %6870, %v5863
        %v6872 = vpop.permute.xlu0 %6871
        %6873 = vset.pattern.permute.xlu0 0
        %6874 = vperm.xlu0 %6873, %v5865
        %v6875 = vpop.permute.xlu0 %6874
        %6876 = vset.pattern.permute.xlu0 0
        %6877 = vperm.xlu0 %6876, %v5867
        %v6878 = vpop.permute.xlu0 %6877
        %6879 = vset.pattern.permute.xlu0 0
        %6880 = vperm.xlu0 %6879, %v5869
        %v6881 = vpop.permute.xlu0 %6880
        %6882 = vset.pattern.permute.xlu0 0
        %6883 = vperm.xlu0 %6882, %v5871
        %v6884 = vpop.permute.xlu0 %6883
        %6885 = vset.pattern.permute.xlu0 0
        %6886 = vperm.xlu0 %6885, %v5873
        %v6887 = vpop.permute.xlu0 %6886
        %6888 = vset.pattern.permute.xlu0 0
        %6889 = vperm.xlu0 %6888, %v5875
        %v6890 = vpop.permute.xlu0 %6889
        %6891 = vset.pattern.permute.xlu0 0
        %6892 = vperm.xlu0 %6891, %v5877
        %v6893 = vpop.permute.xlu0 %6892
        %6894 = vset.pattern.permute.xlu0 0
        %6895 = vperm.xlu0 %6894, %v5879
        %v6896 = vpop.permute.xlu0 %6895
        %6897 = vset.pattern.permute.xlu0 0
        %6898 = vperm.xlu0 %6897, %v5881
        %v6899 = vpop.permute.xlu0 %6898
        %6900 = vset.pattern.permute.xlu0 0
        %6901 = vperm.xlu0 %6900, %v5883
        %v6902 = vpop.permute.xlu0 %6901
        %6903 = vset.pattern.permute.xlu0 0
        %6904 = vperm.xlu0 %6903, %v5885
        %v6905 = vpop.permute.xlu0 %6904
        %6906 = vset.pattern.permute.xlu0 0
        %6907 = vperm.xlu0 %6906, %v5887
        %v6908 = vpop.permute.xlu0 %6907
        %6909 = vset.pattern.permute.xlu0 0
        %6910 = vperm.xlu0 %6909, %v5889
        %v6911 = vpop.permute.xlu0 %6910
        %6912 = vset.pattern.permute.xlu0 0
        %6913 = vperm.xlu0 %6912, %v5891
        %v6914 = vpop.permute.xlu0 %6913
        %6915 = vset.pattern.permute.xlu0 0
        %6916 = vperm.xlu0 %6915, %v5893
        %v6917 = vpop.permute.xlu0 %6916
        %6918 = vset.pattern.permute.xlu0 0
        %6919 = vperm.xlu0 %6918, %v5895
        %v6920 = vpop.permute.xlu0 %6919
        %6921 = vset.pattern.permute.xlu0 0
        %6922 = vperm.xlu0 %6921, %v5897
        %v6923 = vpop.permute.xlu0 %6922
        %v6924 = vlaneseq
        %v6925 = vshrl.u32 %v6924, 7
        %v6926 = vsub.s32 %v3761, %v6925
        %v6927 = vrot.slane %v6158, %v6926
        %v6928 = vlaneseq
        %v6929 = vshrl.u32 %v6928, 7
        %v6930 = vsub.s32 %v3766, %v6929
        %v6931 = vrot.slane %v6161, %v6930
        %v6932 = vsel %vm3771, %v6931, %v6927
        %v6933 = vlaneseq
        %v6934 = vshrl.u32 %v6933, 7
        %v6935 = vsub.s32 %v3773, %v6934
        %v6936 = vrot.slane %v6164, %v6935
        %v6937 = vsel %vm3778, %v6936, %v6932
        %v6938 = vlaneseq
        %v6939 = vshrl.u32 %v6938, 7
        %v6940 = vsub.s32 %v3780, %v6939
        %v6941 = vrot.slane %v6167, %v6940
        %v6942 = vsel %vm3785, %v6941, %v6937
        %v6943 = vlaneseq
        %v6944 = vshrl.u32 %v6943, 7
        %v6945 = vsub.s32 %v3787, %v6944
        %v6946 = vrot.slane %v6170, %v6945
        %v6947 = vsel %vm3792, %v6946, %v6942
        %v6948 = vlaneseq
        %v6949 = vshrl.u32 %v6948, 7
        %v6950 = vsub.s32 %v3794, %v6949
        %v6951 = vrot.slane %v6173, %v6950
        %v6952 = vsel %vm3799, %v6951, %v6947
        %v6953 = vlaneseq
        %v6954 = vshrl.u32 %v6953, 7
        %v6955 = vsub.s32 %v3801, %v6954
        %v6956 = vrot.slane %v6176, %v6955
        %v6957 = vsel %vm3806, %v6956, %v6952
        %v6958 = vlaneseq
        %v6959 = vshrl.u32 %v6958, 7
        %v6960 = vsub.s32 %v3808, %v6959
        %v6961 = vrot.slane %v6179, %v6960
        %v6962 = vsel %vm3813, %v6961, %v6957
        %v6963 = vlaneseq
        %v6964 = vshrl.u32 %v6963, 7
        %v6965 = vsub.s32 %v3815, %v6964
        %v6966 = vrot.slane %v6182, %v6965
        %v6967 = vsel %vm3820, %v6966, %v6962
        %v6968 = vlaneseq
        %v6969 = vshrl.u32 %v6968, 7
        %v6970 = vsub.s32 %v3822, %v6969
        %v6971 = vrot.slane %v6185, %v6970
        %v6972 = vsel %vm3827, %v6971, %v6967
        %v6973 = vlaneseq
        %v6974 = vshrl.u32 %v6973, 7
        %v6975 = vsub.s32 %v3829, %v6974
        %v6976 = vrot.slane %v6188, %v6975
        %v6977 = vsel %vm3834, %v6976, %v6972
        %v6978 = vlaneseq
        %v6979 = vshrl.u32 %v6978, 7
        %v6980 = vsub.s32 %v3836, %v6979
        %v6981 = vrot.slane %v6191, %v6980
        %v6982 = vsel %vm3841, %v6981, %v6977
        %v6983 = vlaneseq
        %v6984 = vshrl.u32 %v6983, 7
        %v6985 = vsub.s32 %v3843, %v6984
        %v6986 = vrot.slane %v6194, %v6985
        %v6987 = vsel %vm3848, %v6986, %v6982
        %v6988 = vlaneseq
        %v6989 = vshrl.u32 %v6988, 7
        %v6990 = vsub.s32 %v3850, %v6989
        %v6991 = vrot.slane %v6197, %v6990
        %v6992 = vsel %vm3855, %v6991, %v6987
        %v6993 = vlaneseq
        %v6994 = vshrl.u32 %v6993, 7
        %v6995 = vsub.s32 %v3857, %v6994
        %v6996 = vrot.slane %v6200, %v6995
        %v6997 = vsel %vm3862, %v6996, %v6992
        %v6998 = vlaneseq
        %v6999 = vshrl.u32 %v6998, 7
        %v7000 = vsub.s32 %v3864, %v6999
        %v7001 = vrot.slane %v6203, %v7000
        %v7002 = vsel %vm3869, %v7001, %v6997
        %v7003 = vlaneseq
        %v7004 = vshrl.u32 %v7003, 7
        %v7005 = vsub.s32 %v3761, %v7004
        %v7006 = vrot.slane %v6206, %v7005
        %v7007 = vlaneseq
        %v7008 = vshrl.u32 %v7007, 7
        %v7009 = vsub.s32 %v3766, %v7008
        %v7010 = vrot.slane %v6209, %v7009
        %v7011 = vsel %vm3771, %v7010, %v7006
        %v7012 = vlaneseq
        %v7013 = vshrl.u32 %v7012, 7
        %v7014 = vsub.s32 %v3773, %v7013
        %v7015 = vrot.slane %v6212, %v7014
        %v7016 = vsel %vm3778, %v7015, %v7011
        %v7017 = vlaneseq
        %v7018 = vshrl.u32 %v7017, 7
        %v7019 = vsub.s32 %v3780, %v7018
        %v7020 = vrot.slane %v6215, %v7019
        %v7021 = vsel %vm3785, %v7020, %v7016
        %v7022 = vlaneseq
        %v7023 = vshrl.u32 %v7022, 7
        %v7024 = vsub.s32 %v3787, %v7023
        %v7025 = vrot.slane %v6218, %v7024
        %v7026 = vsel %vm3792, %v7025, %v7021
        %v7027 = vlaneseq
        %v7028 = vshrl.u32 %v7027, 7
        %v7029 = vsub.s32 %v3794, %v7028
        %v7030 = vrot.slane %v6221, %v7029
        %v7031 = vsel %vm3799, %v7030, %v7026
        %v7032 = vlaneseq
        %v7033 = vshrl.u32 %v7032, 7
        %v7034 = vsub.s32 %v3801, %v7033
        %v7035 = vrot.slane %v6224, %v7034
        %v7036 = vsel %vm3806, %v7035, %v7031
        %v7037 = vlaneseq
        %v7038 = vshrl.u32 %v7037, 7
        %v7039 = vsub.s32 %v3808, %v7038
        %v7040 = vrot.slane %v6227, %v7039
        %v7041 = vsel %vm3813, %v7040, %v7036
        %v7042 = vlaneseq
        %v7043 = vshrl.u32 %v7042, 7
        %v7044 = vsub.s32 %v3815, %v7043
        %v7045 = vrot.slane %v6230, %v7044
        %v7046 = vsel %vm3820, %v7045, %v7041
        %v7047 = vlaneseq
        %v7048 = vshrl.u32 %v7047, 7
        %v7049 = vsub.s32 %v3822, %v7048
        %v7050 = vrot.slane %v6233, %v7049
        %v7051 = vsel %vm3827, %v7050, %v7046
        %v7052 = vlaneseq
        %v7053 = vshrl.u32 %v7052, 7
        %v7054 = vsub.s32 %v3829, %v7053
        %v7055 = vrot.slane %v6236, %v7054
        %v7056 = vsel %vm3834, %v7055, %v7051
        %v7057 = vlaneseq
        %v7058 = vshrl.u32 %v7057, 7
        %v7059 = vsub.s32 %v3836, %v7058
        %v7060 = vrot.slane %v6239, %v7059
        %v7061 = vsel %vm3841, %v7060, %v7056
        %v7062 = vlaneseq
        %v7063 = vshrl.u32 %v7062, 7
        %v7064 = vsub.s32 %v3843, %v7063
        %v7065 = vrot.slane %v6242, %v7064
        %v7066 = vsel %vm3848, %v7065, %v7061
        %v7067 = vlaneseq
        %v7068 = vshrl.u32 %v7067, 7
        %v7069 = vsub.s32 %v3850, %v7068
        %v7070 = vrot.slane %v6245, %v7069
        %v7071 = vsel %vm3855, %v7070, %v7066
        %v7072 = vlaneseq
        %v7073 = vshrl.u32 %v7072, 7
        %v7074 = vsub.s32 %v3857, %v7073
        %v7075 = vrot.slane %v6248, %v7074
        %v7076 = vsel %vm3862, %v7075, %v7071
        %v7077 = vlaneseq
        %v7078 = vshrl.u32 %v7077, 7
        %v7079 = vsub.s32 %v3864, %v7078
        %v7080 = vrot.slane %v6251, %v7079
        %v7081 = vsel %vm3869, %v7080, %v7076
        %v7082 = vlaneseq
        %v7083 = vshrl.u32 %v7082, 7
        %v7084 = vsub.s32 %v3761, %v7083
        %v7085 = vrot.slane %v6254, %v7084
        %v7086 = vlaneseq
        %v7087 = vshrl.u32 %v7086, 7
        %v7088 = vsub.s32 %v3766, %v7087
        %v7089 = vrot.slane %v6257, %v7088
        %v7090 = vsel %vm3771, %v7089, %v7085
        %v7091 = vlaneseq
        %v7092 = vshrl.u32 %v7091, 7
        %v7093 = vsub.s32 %v3773, %v7092
        %v7094 = vrot.slane %v6260, %v7093
        %v7095 = vsel %vm3778, %v7094, %v7090
        %v7096 = vlaneseq
        %v7097 = vshrl.u32 %v7096, 7
        %v7098 = vsub.s32 %v3780, %v7097
        %v7099 = vrot.slane %v6263, %v7098
        %v7100 = vsel %vm3785, %v7099, %v7095
        %v7101 = vlaneseq
        %v7102 = vshrl.u32 %v7101, 7
        %v7103 = vsub.s32 %v3787, %v7102
        %v7104 = vrot.slane %v6266, %v7103
        %v7105 = vsel %vm3792, %v7104, %v7100
        %v7106 = vlaneseq
        %v7107 = vshrl.u32 %v7106, 7
        %v7108 = vsub.s32 %v3794, %v7107
        %v7109 = vrot.slane %v6269, %v7108
        %v7110 = vsel %vm3799, %v7109, %v7105
        %v7111 = vlaneseq
        %v7112 = vshrl.u32 %v7111, 7
        %v7113 = vsub.s32 %v3801, %v7112
        %v7114 = vrot.slane %v6272, %v7113
        %v7115 = vsel %vm3806, %v7114, %v7110
        %v7116 = vlaneseq
        %v7117 = vshrl.u32 %v7116, 7
        %v7118 = vsub.s32 %v3808, %v7117
        %v7119 = vrot.slane %v6275, %v7118
        %v7120 = vsel %vm3813, %v7119, %v7115
        %v7121 = vlaneseq
        %v7122 = vshrl.u32 %v7121, 7
        %v7123 = vsub.s32 %v3815, %v7122
        %v7124 = vrot.slane %v6278, %v7123
        %v7125 = vsel %vm3820, %v7124, %v7120
        %v7126 = vlaneseq
        %v7127 = vshrl.u32 %v7126, 7
        %v7128 = vsub.s32 %v3822, %v7127
        %v7129 = vrot.slane %v6281, %v7128
        %v7130 = vsel %vm3827, %v7129, %v7125
        %v7131 = vlaneseq
        %v7132 = vshrl.u32 %v7131, 7
        %v7133 = vsub.s32 %v3829, %v7132
        %v7134 = vrot.slane %v6284, %v7133
        %v7135 = vsel %vm3834, %v7134, %v7130
        %v7136 = vlaneseq
        %v7137 = vshrl.u32 %v7136, 7
        %v7138 = vsub.s32 %v3836, %v7137
        %v7139 = vrot.slane %v6287, %v7138
        %v7140 = vsel %vm3841, %v7139, %v7135
        %v7141 = vlaneseq
        %v7142 = vshrl.u32 %v7141, 7
        %v7143 = vsub.s32 %v3843, %v7142
        %v7144 = vrot.slane %v6290, %v7143
        %v7145 = vsel %vm3848, %v7144, %v7140
        %v7146 = vlaneseq
        %v7147 = vshrl.u32 %v7146, 7
        %v7148 = vsub.s32 %v3850, %v7147
        %v7149 = vrot.slane %v6293, %v7148
        %v7150 = vsel %vm3855, %v7149, %v7145
        %v7151 = vlaneseq
        %v7152 = vshrl.u32 %v7151, 7
        %v7153 = vsub.s32 %v3857, %v7152
        %v7154 = vrot.slane %v6296, %v7153
        %v7155 = vsel %vm3862, %v7154, %v7150
        %v7156 = vlaneseq
        %v7157 = vshrl.u32 %v7156, 7
        %v7158 = vsub.s32 %v3864, %v7157
        %v7159 = vrot.slane %v6299, %v7158
        %v7160 = vsel %vm3869, %v7159, %v7155
        %v7161 = vlaneseq
        %v7162 = vshrl.u32 %v7161, 7
        %v7163 = vsub.s32 %v3761, %v7162
        %v7164 = vrot.slane %v6302, %v7163
        %v7165 = vlaneseq
        %v7166 = vshrl.u32 %v7165, 7
        %v7167 = vsub.s32 %v3766, %v7166
        %v7168 = vrot.slane %v6305, %v7167
        %v7169 = vsel %vm3771, %v7168, %v7164
        %v7170 = vlaneseq
        %v7171 = vshrl.u32 %v7170, 7
        %v7172 = vsub.s32 %v3773, %v7171
        %v7173 = vrot.slane %v6308, %v7172
        %v7174 = vsel %vm3778, %v7173, %v7169
        %v7175 = vlaneseq
        %v7176 = vshrl.u32 %v7175, 7
        %v7177 = vsub.s32 %v3780, %v7176
        %v7178 = vrot.slane %v6311, %v7177
        %v7179 = vsel %vm3785, %v7178, %v7174
        %v7180 = vlaneseq
        %v7181 = vshrl.u32 %v7180, 7
        %v7182 = vsub.s32 %v3787, %v7181
        %v7183 = vrot.slane %v6314, %v7182
        %v7184 = vsel %vm3792, %v7183, %v7179
        %v7185 = vlaneseq
        %v7186 = vshrl.u32 %v7185, 7
        %v7187 = vsub.s32 %v3794, %v7186
        %v7188 = vrot.slane %v6317, %v7187
        %v7189 = vsel %vm3799, %v7188, %v7184
        %v7190 = vlaneseq
        %v7191 = vshrl.u32 %v7190, 7
        %v7192 = vsub.s32 %v3801, %v7191
        %v7193 = vrot.slane %v6320, %v7192
        %v7194 = vsel %vm3806, %v7193, %v7189
        %v7195 = vlaneseq
        %v7196 = vshrl.u32 %v7195, 7
        %v7197 = vsub.s32 %v3808, %v7196
        %v7198 = vrot.slane %v6323, %v7197
        %v7199 = vsel %vm3813, %v7198, %v7194
        %v7200 = vlaneseq
        %v7201 = vshrl.u32 %v7200, 7
        %v7202 = vsub.s32 %v3815, %v7201
        %v7203 = vrot.slane %v6326, %v7202
        %v7204 = vsel %vm3820, %v7203, %v7199
        %v7205 = vlaneseq
        %v7206 = vshrl.u32 %v7205, 7
        %v7207 = vsub.s32 %v3822, %v7206
        %v7208 = vrot.slane %v6329, %v7207
        %v7209 = vsel %vm3827, %v7208, %v7204
        %v7210 = vlaneseq
        %v7211 = vshrl.u32 %v7210, 7
        %v7212 = vsub.s32 %v3829, %v7211
        %v7213 = vrot.slane %v6332, %v7212
        %v7214 = vsel %vm3834, %v7213, %v7209
        %v7215 = vlaneseq
        %v7216 = vshrl.u32 %v7215, 7
        %v7217 = vsub.s32 %v3836, %v7216
        %v7218 = vrot.slane %v6335, %v7217
        %v7219 = vsel %vm3841, %v7218, %v7214
        %v7220 = vlaneseq
        %v7221 = vshrl.u32 %v7220, 7
        %v7222 = vsub.s32 %v3843, %v7221
        %v7223 = vrot.slane %v6338, %v7222
        %v7224 = vsel %vm3848, %v7223, %v7219
        %v7225 = vlaneseq
        %v7226 = vshrl.u32 %v7225, 7
        %v7227 = vsub.s32 %v3850, %v7226
        %v7228 = vrot.slane %v6341, %v7227
        %v7229 = vsel %vm3855, %v7228, %v7224
        %v7230 = vlaneseq
        %v7231 = vshrl.u32 %v7230, 7
        %v7232 = vsub.s32 %v3857, %v7231
        %v7233 = vrot.slane %v6344, %v7232
        %v7234 = vsel %vm3862, %v7233, %v7229
        %v7235 = vlaneseq
        %v7236 = vshrl.u32 %v7235, 7
        %v7237 = vsub.s32 %v3864, %v7236
        %v7238 = vrot.slane %v6347, %v7237
        %v7239 = vsel %vm3869, %v7238, %v7234
        %v7240 = vlaneseq
        %v7241 = vshrl.u32 %v7240, 7
        %v7242 = vsub.s32 %v3761, %v7241
        %v7243 = vrot.slane %v6350, %v7242
        %v7244 = vlaneseq
        %v7245 = vshrl.u32 %v7244, 7
        %v7246 = vsub.s32 %v3766, %v7245
        %v7247 = vrot.slane %v6353, %v7246
        %v7248 = vsel %vm3771, %v7247, %v7243
        %v7249 = vlaneseq
        %v7250 = vshrl.u32 %v7249, 7
        %v7251 = vsub.s32 %v3773, %v7250
        %v7252 = vrot.slane %v6356, %v7251
        %v7253 = vsel %vm3778, %v7252, %v7248
        %v7254 = vlaneseq
        %v7255 = vshrl.u32 %v7254, 7
        %v7256 = vsub.s32 %v3780, %v7255
        %v7257 = vrot.slane %v6359, %v7256
        %v7258 = vsel %vm3785, %v7257, %v7253
        %v7259 = vlaneseq
        %v7260 = vshrl.u32 %v7259, 7
        %v7261 = vsub.s32 %v3787, %v7260
        %v7262 = vrot.slane %v6362, %v7261
        %v7263 = vsel %vm3792, %v7262, %v7258
        %v7264 = vlaneseq
        %v7265 = vshrl.u32 %v7264, 7
        %v7266 = vsub.s32 %v3794, %v7265
        %v7267 = vrot.slane %v6365, %v7266
        %v7268 = vsel %vm3799, %v7267, %v7263
        %v7269 = vlaneseq
        %v7270 = vshrl.u32 %v7269, 7
        %v7271 = vsub.s32 %v3801, %v7270
        %v7272 = vrot.slane %v6368, %v7271
        %v7273 = vsel %vm3806, %v7272, %v7268
        %v7274 = vlaneseq
        %v7275 = vshrl.u32 %v7274, 7
        %v7276 = vsub.s32 %v3808, %v7275
        %v7277 = vrot.slane %v6371, %v7276
        %v7278 = vsel %vm3813, %v7277, %v7273
        %v7279 = vlaneseq
        %v7280 = vshrl.u32 %v7279, 7
        %v7281 = vsub.s32 %v3815, %v7280
        %v7282 = vrot.slane %v6374, %v7281
        %v7283 = vsel %vm3820, %v7282, %v7278
        %v7284 = vlaneseq
        %v7285 = vshrl.u32 %v7284, 7
        %v7286 = vsub.s32 %v3822, %v7285
        %v7287 = vrot.slane %v6377, %v7286
        %v7288 = vsel %vm3827, %v7287, %v7283
        %v7289 = vlaneseq
        %v7290 = vshrl.u32 %v7289, 7
        %v7291 = vsub.s32 %v3829, %v7290
        %v7292 = vrot.slane %v6380, %v7291
        %v7293 = vsel %vm3834, %v7292, %v7288
        %v7294 = vlaneseq
        %v7295 = vshrl.u32 %v7294, 7
        %v7296 = vsub.s32 %v3836, %v7295
        %v7297 = vrot.slane %v6383, %v7296
        %v7298 = vsel %vm3841, %v7297, %v7293
        %v7299 = vlaneseq
        %v7300 = vshrl.u32 %v7299, 7
        %v7301 = vsub.s32 %v3843, %v7300
        %v7302 = vrot.slane %v6386, %v7301
        %v7303 = vsel %vm3848, %v7302, %v7298
        %v7304 = vlaneseq
        %v7305 = vshrl.u32 %v7304, 7
        %v7306 = vsub.s32 %v3850, %v7305
        %v7307 = vrot.slane %v6389, %v7306
        %v7308 = vsel %vm3855, %v7307, %v7303
        %v7309 = vlaneseq
        %v7310 = vshrl.u32 %v7309, 7
        %v7311 = vsub.s32 %v3857, %v7310
        %v7312 = vrot.slane %v6392, %v7311
        %v7313 = vsel %vm3862, %v7312, %v7308
        %v7314 = vlaneseq
        %v7315 = vshrl.u32 %v7314, 7
        %v7316 = vsub.s32 %v3864, %v7315
        %v7317 = vrot.slane %v6395, %v7316
        %v7318 = vsel %vm3869, %v7317, %v7313
        %v7319 = vlaneseq
        %v7320 = vshrl.u32 %v7319, 7
        %v7321 = vsub.s32 %v3761, %v7320
        %v7322 = vrot.slane %v6398, %v7321
        %v7323 = vlaneseq
        %v7324 = vshrl.u32 %v7323, 7
        %v7325 = vsub.s32 %v3766, %v7324
        %v7326 = vrot.slane %v6401, %v7325
        %v7327 = vsel %vm3771, %v7326, %v7322
        %v7328 = vlaneseq
        %v7329 = vshrl.u32 %v7328, 7
        %v7330 = vsub.s32 %v3773, %v7329
        %v7331 = vrot.slane %v6404, %v7330
        %v7332 = vsel %vm3778, %v7331, %v7327
        %v7333 = vlaneseq
        %v7334 = vshrl.u32 %v7333, 7
        %v7335 = vsub.s32 %v3780, %v7334
        %v7336 = vrot.slane %v6407, %v7335
        %v7337 = vsel %vm3785, %v7336, %v7332
        %v7338 = vlaneseq
        %v7339 = vshrl.u32 %v7338, 7
        %v7340 = vsub.s32 %v3787, %v7339
        %v7341 = vrot.slane %v6410, %v7340
        %v7342 = vsel %vm3792, %v7341, %v7337
        %v7343 = vlaneseq
        %v7344 = vshrl.u32 %v7343, 7
        %v7345 = vsub.s32 %v3794, %v7344
        %v7346 = vrot.slane %v6413, %v7345
        %v7347 = vsel %vm3799, %v7346, %v7342
        %v7348 = vlaneseq
        %v7349 = vshrl.u32 %v7348, 7
        %v7350 = vsub.s32 %v3801, %v7349
        %v7351 = vrot.slane %v6416, %v7350
        %v7352 = vsel %vm3806, %v7351, %v7347
        %v7353 = vlaneseq
        %v7354 = vshrl.u32 %v7353, 7
        %v7355 = vsub.s32 %v3808, %v7354
        %v7356 = vrot.slane %v6419, %v7355
        %v7357 = vsel %vm3813, %v7356, %v7352
        %v7358 = vlaneseq
        %v7359 = vshrl.u32 %v7358, 7
        %v7360 = vsub.s32 %v3815, %v7359
        %v7361 = vrot.slane %v6422, %v7360
        %v7362 = vsel %vm3820, %v7361, %v7357
        %v7363 = vlaneseq
        %v7364 = vshrl.u32 %v7363, 7
        %v7365 = vsub.s32 %v3822, %v7364
        %v7366 = vrot.slane %v6425, %v7365
        %v7367 = vsel %vm3827, %v7366, %v7362
        %v7368 = vlaneseq
        %v7369 = vshrl.u32 %v7368, 7
        %v7370 = vsub.s32 %v3829, %v7369
        %v7371 = vrot.slane %v6428, %v7370
        %v7372 = vsel %vm3834, %v7371, %v7367
        %v7373 = vlaneseq
        %v7374 = vshrl.u32 %v7373, 7
        %v7375 = vsub.s32 %v3836, %v7374
        %v7376 = vrot.slane %v6431, %v7375
        %v7377 = vsel %vm3841, %v7376, %v7372
        %v7378 = vlaneseq
        %v7379 = vshrl.u32 %v7378, 7
        %v7380 = vsub.s32 %v3843, %v7379
        %v7381 = vrot.slane %v6434, %v7380
        %v7382 = vsel %vm3848, %v7381, %v7377
        %v7383 = vlaneseq
        %v7384 = vshrl.u32 %v7383, 7
        %v7385 = vsub.s32 %v3850, %v7384
        %v7386 = vrot.slane %v6437, %v7385
        %v7387 = vsel %vm3855, %v7386, %v7382
        %v7388 = vlaneseq
        %v7389 = vshrl.u32 %v7388, 7
        %v7390 = vsub.s32 %v3857, %v7389
        %v7391 = vrot.slane %v6440, %v7390
        %v7392 = vsel %vm3862, %v7391, %v7387
        %v7393 = vlaneseq
        %v7394 = vshrl.u32 %v7393, 7
        %v7395 = vsub.s32 %v3864, %v7394
        %v7396 = vrot.slane %v6443, %v7395
        %v7397 = vsel %vm3869, %v7396, %v7392
        %v7398 = vlaneseq
        %v7399 = vshrl.u32 %v7398, 7
        %v7400 = vsub.s32 %v3761, %v7399
        %v7401 = vrot.slane %v6446, %v7400
        %v7402 = vlaneseq
        %v7403 = vshrl.u32 %v7402, 7
        %v7404 = vsub.s32 %v3766, %v7403
        %v7405 = vrot.slane %v6449, %v7404
        %v7406 = vsel %vm3771, %v7405, %v7401
        %v7407 = vlaneseq
        %v7408 = vshrl.u32 %v7407, 7
        %v7409 = vsub.s32 %v3773, %v7408
        %v7410 = vrot.slane %v6452, %v7409
        %v7411 = vsel %vm3778, %v7410, %v7406
        %v7412 = vlaneseq
        %v7413 = vshrl.u32 %v7412, 7
        %v7414 = vsub.s32 %v3780, %v7413
        %v7415 = vrot.slane %v6455, %v7414
        %v7416 = vsel %vm3785, %v7415, %v7411
        %v7417 = vlaneseq
        %v7418 = vshrl.u32 %v7417, 7
        %v7419 = vsub.s32 %v3787, %v7418
        %v7420 = vrot.slane %v6458, %v7419
        %v7421 = vsel %vm3792, %v7420, %v7416
        %v7422 = vlaneseq
        %v7423 = vshrl.u32 %v7422, 7
        %v7424 = vsub.s32 %v3794, %v7423
        %v7425 = vrot.slane %v6461, %v7424
        %v7426 = vsel %vm3799, %v7425, %v7421
        %v7427 = vlaneseq
        %v7428 = vshrl.u32 %v7427, 7
        %v7429 = vsub.s32 %v3801, %v7428
        %v7430 = vrot.slane %v6464, %v7429
        %v7431 = vsel %vm3806, %v7430, %v7426
        %v7432 = vlaneseq
        %v7433 = vshrl.u32 %v7432, 7
        %v7434 = vsub.s32 %v3808, %v7433
        %v7435 = vrot.slane %v6467, %v7434
        %v7436 = vsel %vm3813, %v7435, %v7431
        %v7437 = vlaneseq
        %v7438 = vshrl.u32 %v7437, 7
        %v7439 = vsub.s32 %v3815, %v7438
        %v7440 = vrot.slane %v6470, %v7439
        %v7441 = vsel %vm3820, %v7440, %v7436
        %v7442 = vlaneseq
        %v7443 = vshrl.u32 %v7442, 7
        %v7444 = vsub.s32 %v3822, %v7443
        %v7445 = vrot.slane %v6473, %v7444
        %v7446 = vsel %vm3827, %v7445, %v7441
        %v7447 = vlaneseq
        %v7448 = vshrl.u32 %v7447, 7
        %v7449 = vsub.s32 %v3829, %v7448
        %v7450 = vrot.slane %v6476, %v7449
        %v7451 = vsel %vm3834, %v7450, %v7446
        %v7452 = vlaneseq
        %v7453 = vshrl.u32 %v7452, 7
        %v7454 = vsub.s32 %v3836, %v7453
        %v7455 = vrot.slane %v6479, %v7454
        %v7456 = vsel %vm3841, %v7455, %v7451
        %v7457 = vlaneseq
        %v7458 = vshrl.u32 %v7457, 7
        %v7459 = vsub.s32 %v3843, %v7458
        %v7460 = vrot.slane %v6482, %v7459
        %v7461 = vsel %vm3848, %v7460, %v7456
        %v7462 = vlaneseq
        %v7463 = vshrl.u32 %v7462, 7
        %v7464 = vsub.s32 %v3850, %v7463
        %v7465 = vrot.slane %v6485, %v7464
        %v7466 = vsel %vm3855, %v7465, %v7461
        %v7467 = vlaneseq
        %v7468 = vshrl.u32 %v7467, 7
        %v7469 = vsub.s32 %v3857, %v7468
        %v7470 = vrot.slane %v6488, %v7469
        %v7471 = vsel %vm3862, %v7470, %v7466
        %v7472 = vlaneseq
        %v7473 = vshrl.u32 %v7472, 7
        %v7474 = vsub.s32 %v3864, %v7473
        %v7475 = vrot.slane %v6491, %v7474
        %v7476 = vsel %vm3869, %v7475, %v7471
        %v7477 = vlaneseq
        %v7478 = vshrl.u32 %v7477, 7
        %v7479 = vsub.s32 %v3761, %v7478
        %v7480 = vrot.slane %v6494, %v7479
        %v7481 = vlaneseq
        %v7482 = vshrl.u32 %v7481, 7
        %v7483 = vsub.s32 %v3766, %v7482
        %v7484 = vrot.slane %v6497, %v7483
        %v7485 = vsel %vm3771, %v7484, %v7480
        %v7486 = vlaneseq
        %v7487 = vshrl.u32 %v7486, 7
        %v7488 = vsub.s32 %v3773, %v7487
        %v7489 = vrot.slane %v6500, %v7488
        %v7490 = vsel %vm3778, %v7489, %v7485
        %v7491 = vlaneseq
        %v7492 = vshrl.u32 %v7491, 7
        %v7493 = vsub.s32 %v3780, %v7492
        %v7494 = vrot.slane %v6503, %v7493
        %v7495 = vsel %vm3785, %v7494, %v7490
        %v7496 = vlaneseq
        %v7497 = vshrl.u32 %v7496, 7
        %v7498 = vsub.s32 %v3787, %v7497
        %v7499 = vrot.slane %v6506, %v7498
        %v7500 = vsel %vm3792, %v7499, %v7495
        %v7501 = vlaneseq
        %v7502 = vshrl.u32 %v7501, 7
        %v7503 = vsub.s32 %v3794, %v7502
        %v7504 = vrot.slane %v6509, %v7503
        %v7505 = vsel %vm3799, %v7504, %v7500
        %v7506 = vlaneseq
        %v7507 = vshrl.u32 %v7506, 7
        %v7508 = vsub.s32 %v3801, %v7507
        %v7509 = vrot.slane %v6512, %v7508
        %v7510 = vsel %vm3806, %v7509, %v7505
        %v7511 = vlaneseq
        %v7512 = vshrl.u32 %v7511, 7
        %v7513 = vsub.s32 %v3808, %v7512
        %v7514 = vrot.slane %v6515, %v7513
        %v7515 = vsel %vm3813, %v7514, %v7510
        %v7516 = vlaneseq
        %v7517 = vshrl.u32 %v7516, 7
        %v7518 = vsub.s32 %v3815, %v7517
        %v7519 = vrot.slane %v6518, %v7518
        %v7520 = vsel %vm3820, %v7519, %v7515
        %v7521 = vlaneseq
        %v7522 = vshrl.u32 %v7521, 7
        %v7523 = vsub.s32 %v3822, %v7522
        %v7524 = vrot.slane %v6521, %v7523
        %v7525 = vsel %vm3827, %v7524, %v7520
        %v7526 = vlaneseq
        %v7527 = vshrl.u32 %v7526, 7
        %v7528 = vsub.s32 %v3829, %v7527
        %v7529 = vrot.slane %v6524, %v7528
        %v7530 = vsel %vm3834, %v7529, %v7525
        %v7531 = vlaneseq
        %v7532 = vshrl.u32 %v7531, 7
        %v7533 = vsub.s32 %v3836, %v7532
        %v7534 = vrot.slane %v6527, %v7533
        %v7535 = vsel %vm3841, %v7534, %v7530
        %v7536 = vlaneseq
        %v7537 = vshrl.u32 %v7536, 7
        %v7538 = vsub.s32 %v3843, %v7537
        %v7539 = vrot.slane %v6530, %v7538
        %v7540 = vsel %vm3848, %v7539, %v7535
        %v7541 = vlaneseq
        %v7542 = vshrl.u32 %v7541, 7
        %v7543 = vsub.s32 %v3850, %v7542
        %v7544 = vrot.slane %v6533, %v7543
        %v7545 = vsel %vm3855, %v7544, %v7540
        %v7546 = vlaneseq
        %v7547 = vshrl.u32 %v7546, 7
        %v7548 = vsub.s32 %v3857, %v7547
        %v7549 = vrot.slane %v6536, %v7548
        %v7550 = vsel %vm3862, %v7549, %v7545
        %v7551 = vlaneseq
        %v7552 = vshrl.u32 %v7551, 7
        %v7553 = vsub.s32 %v3864, %v7552
        %v7554 = vrot.slane %v6539, %v7553
        %v7555 = vsel %vm3869, %v7554, %v7550
        %v7556 = vlaneseq
        %v7557 = vshrl.u32 %v7556, 7
        %v7558 = vsub.s32 %v3761, %v7557
        %v7559 = vrot.slane %v6542, %v7558
        %v7560 = vlaneseq
        %v7561 = vshrl.u32 %v7560, 7
        %v7562 = vsub.s32 %v3766, %v7561
        %v7563 = vrot.slane %v6545, %v7562
        %v7564 = vsel %vm3771, %v7563, %v7559
        %v7565 = vlaneseq
        %v7566 = vshrl.u32 %v7565, 7
        %v7567 = vsub.s32 %v3773, %v7566
        %v7568 = vrot.slane %v6548, %v7567
        %v7569 = vsel %vm3778, %v7568, %v7564
        %v7570 = vlaneseq
        %v7571 = vshrl.u32 %v7570, 7
        %v7572 = vsub.s32 %v3780, %v7571
        %v7573 = vrot.slane %v6551, %v7572
        %v7574 = vsel %vm3785, %v7573, %v7569
        %v7575 = vlaneseq
        %v7576 = vshrl.u32 %v7575, 7
        %v7577 = vsub.s32 %v3787, %v7576
        %v7578 = vrot.slane %v6554, %v7577
        %v7579 = vsel %vm3792, %v7578, %v7574
        %v7580 = vlaneseq
        %v7581 = vshrl.u32 %v7580, 7
        %v7582 = vsub.s32 %v3794, %v7581
        %v7583 = vrot.slane %v6557, %v7582
        %v7584 = vsel %vm3799, %v7583, %v7579
        %v7585 = vlaneseq
        %v7586 = vshrl.u32 %v7585, 7
        %v7587 = vsub.s32 %v3801, %v7586
        %v7588 = vrot.slane %v6560, %v7587
        %v7589 = vsel %vm3806, %v7588, %v7584
        %v7590 = vlaneseq
        %v7591 = vshrl.u32 %v7590, 7
        %v7592 = vsub.s32 %v3808, %v7591
        %v7593 = vrot.slane %v6563, %v7592
        %v7594 = vsel %vm3813, %v7593, %v7589
        %v7595 = vlaneseq
        %v7596 = vshrl.u32 %v7595, 7
        %v7597 = vsub.s32 %v3815, %v7596
        %v7598 = vrot.slane %v6566, %v7597
        %v7599 = vsel %vm3820, %v7598, %v7594
        %v7600 = vlaneseq
        %v7601 = vshrl.u32 %v7600, 7
        %v7602 = vsub.s32 %v3822, %v7601
        %v7603 = vrot.slane %v6569, %v7602
        %v7604 = vsel %vm3827, %v7603, %v7599
        %v7605 = vlaneseq
        %v7606 = vshrl.u32 %v7605, 7
        %v7607 = vsub.s32 %v3829, %v7606
        %v7608 = vrot.slane %v6572, %v7607
        %v7609 = vsel %vm3834, %v7608, %v7604
        %v7610 = vlaneseq
        %v7611 = vshrl.u32 %v7610, 7
        %v7612 = vsub.s32 %v3836, %v7611
        %v7613 = vrot.slane %v6575, %v7612
        %v7614 = vsel %vm3841, %v7613, %v7609
        %v7615 = vlaneseq
        %v7616 = vshrl.u32 %v7615, 7
        %v7617 = vsub.s32 %v3843, %v7616
        %v7618 = vrot.slane %v6578, %v7617
        %v7619 = vsel %vm3848, %v7618, %v7614
        %v7620 = vlaneseq
        %v7621 = vshrl.u32 %v7620, 7
        %v7622 = vsub.s32 %v3850, %v7621
        %v7623 = vrot.slane %v6581, %v7622
        %v7624 = vsel %vm3855, %v7623, %v7619
        %v7625 = vlaneseq
        %v7626 = vshrl.u32 %v7625, 7
        %v7627 = vsub.s32 %v3857, %v7626
        %v7628 = vrot.slane %v6584, %v7627
        %v7629 = vsel %vm3862, %v7628, %v7624
        %v7630 = vlaneseq
        %v7631 = vshrl.u32 %v7630, 7
        %v7632 = vsub.s32 %v3864, %v7631
        %v7633 = vrot.slane %v6587, %v7632
        %v7634 = vsel %vm3869, %v7633, %v7629
        %v7635 = vlaneseq
        %v7636 = vshrl.u32 %v7635, 7
        %v7637 = vsub.s32 %v3761, %v7636
        %v7638 = vrot.slane %v6590, %v7637
        %v7639 = vlaneseq
        %v7640 = vshrl.u32 %v7639, 7
        %v7641 = vsub.s32 %v3766, %v7640
        %v7642 = vrot.slane %v6593, %v7641
        %v7643 = vsel %vm3771, %v7642, %v7638
        %v7644 = vlaneseq
        %v7645 = vshrl.u32 %v7644, 7
        %v7646 = vsub.s32 %v3773, %v7645
        %v7647 = vrot.slane %v6596, %v7646
        %v7648 = vsel %vm3778, %v7647, %v7643
        %v7649 = vlaneseq
        %v7650 = vshrl.u32 %v7649, 7
        %v7651 = vsub.s32 %v3780, %v7650
        %v7652 = vrot.slane %v6599, %v7651
        %v7653 = vsel %vm3785, %v7652, %v7648
        %v7654 = vlaneseq
        %v7655 = vshrl.u32 %v7654, 7
        %v7656 = vsub.s32 %v3787, %v7655
        %v7657 = vrot.slane %v6602, %v7656
        %v7658 = vsel %vm3792, %v7657, %v7653
        %v7659 = vlaneseq
        %v7660 = vshrl.u32 %v7659, 7
        %v7661 = vsub.s32 %v3794, %v7660
        %v7662 = vrot.slane %v6605, %v7661
        %v7663 = vsel %vm3799, %v7662, %v7658
        %v7664 = vlaneseq
        %v7665 = vshrl.u32 %v7664, 7
        %v7666 = vsub.s32 %v3801, %v7665
        %v7667 = vrot.slane %v6608, %v7666
        %v7668 = vsel %vm3806, %v7667, %v7663
        %v7669 = vlaneseq
        %v7670 = vshrl.u32 %v7669, 7
        %v7671 = vsub.s32 %v3808, %v7670
        %v7672 = vrot.slane %v6611, %v7671
        %v7673 = vsel %vm3813, %v7672, %v7668
        %v7674 = vlaneseq
        %v7675 = vshrl.u32 %v7674, 7
        %v7676 = vsub.s32 %v3815, %v7675
        %v7677 = vrot.slane %v6614, %v7676
        %v7678 = vsel %vm3820, %v7677, %v7673
        %v7679 = vlaneseq
        %v7680 = vshrl.u32 %v7679, 7
        %v7681 = vsub.s32 %v3822, %v7680
        %v7682 = vrot.slane %v6617, %v7681
        %v7683 = vsel %vm3827, %v7682, %v7678
        %v7684 = vlaneseq
        %v7685 = vshrl.u32 %v7684, 7
        %v7686 = vsub.s32 %v3829, %v7685
        %v7687 = vrot.slane %v6620, %v7686
        %v7688 = vsel %vm3834, %v7687, %v7683
        %v7689 = vlaneseq
        %v7690 = vshrl.u32 %v7689, 7
        %v7691 = vsub.s32 %v3836, %v7690
        %v7692 = vrot.slane %v6623, %v7691
        %v7693 = vsel %vm3841, %v7692, %v7688
        %v7694 = vlaneseq
        %v7695 = vshrl.u32 %v7694, 7
        %v7696 = vsub.s32 %v3843, %v7695
        %v7697 = vrot.slane %v6626, %v7696
        %v7698 = vsel %vm3848, %v7697, %v7693
        %v7699 = vlaneseq
        %v7700 = vshrl.u32 %v7699, 7
        %v7701 = vsub.s32 %v3850, %v7700
        %v7702 = vrot.slane %v6629, %v7701
        %v7703 = vsel %vm3855, %v7702, %v7698
        %v7704 = vlaneseq
        %v7705 = vshrl.u32 %v7704, 7
        %v7706 = vsub.s32 %v3857, %v7705
        %v7707 = vrot.slane %v6632, %v7706
        %v7708 = vsel %vm3862, %v7707, %v7703
        %v7709 = vlaneseq
        %v7710 = vshrl.u32 %v7709, 7
        %v7711 = vsub.s32 %v3864, %v7710
        %v7712 = vrot.slane %v6635, %v7711
        %v7713 = vsel %vm3869, %v7712, %v7708
        %v7714 = vlaneseq
        %v7715 = vshrl.u32 %v7714, 7
        %v7716 = vsub.s32 %v3761, %v7715
        %v7717 = vrot.slane %v6638, %v7716
        %v7718 = vlaneseq
        %v7719 = vshrl.u32 %v7718, 7
        %v7720 = vsub.s32 %v3766, %v7719
        %v7721 = vrot.slane %v6641, %v7720
        %v7722 = vsel %vm3771, %v7721, %v7717
        %v7723 = vlaneseq
        %v7724 = vshrl.u32 %v7723, 7
        %v7725 = vsub.s32 %v3773, %v7724
        %v7726 = vrot.slane %v6644, %v7725
        %v7727 = vsel %vm3778, %v7726, %v7722
        %v7728 = vlaneseq
        %v7729 = vshrl.u32 %v7728, 7
        %v7730 = vsub.s32 %v3780, %v7729
        %v7731 = vrot.slane %v6647, %v7730
        %v7732 = vsel %vm3785, %v7731, %v7727
        %v7733 = vlaneseq
        %v7734 = vshrl.u32 %v7733, 7
        %v7735 = vsub.s32 %v3787, %v7734
        %v7736 = vrot.slane %v6650, %v7735
        %v7737 = vsel %vm3792, %v7736, %v7732
        %v7738 = vlaneseq
        %v7739 = vshrl.u32 %v7738, 7
        %v7740 = vsub.s32 %v3794, %v7739
        %v7741 = vrot.slane %v6653, %v7740
        %v7742 = vsel %vm3799, %v7741, %v7737
        %v7743 = vlaneseq
        %v7744 = vshrl.u32 %v7743, 7
        %v7745 = vsub.s32 %v3801, %v7744
        %v7746 = vrot.slane %v6656, %v7745
        %v7747 = vsel %vm3806, %v7746, %v7742
        %v7748 = vlaneseq
        %v7749 = vshrl.u32 %v7748, 7
        %v7750 = vsub.s32 %v3808, %v7749
        %v7751 = vrot.slane %v6659, %v7750
        %v7752 = vsel %vm3813, %v7751, %v7747
        %v7753 = vlaneseq
        %v7754 = vshrl.u32 %v7753, 7
        %v7755 = vsub.s32 %v3815, %v7754
        %v7756 = vrot.slane %v6662, %v7755
        %v7757 = vsel %vm3820, %v7756, %v7752
        %v7758 = vlaneseq
        %v7759 = vshrl.u32 %v7758, 7
        %v7760 = vsub.s32 %v3822, %v7759
        %v7761 = vrot.slane %v6665, %v7760
        %v7762 = vsel %vm3827, %v7761, %v7757
        %v7763 = vlaneseq
        %v7764 = vshrl.u32 %v7763, 7
        %v7765 = vsub.s32 %v3829, %v7764
        %v7766 = vrot.slane %v6668, %v7765
        %v7767 = vsel %vm3834, %v7766, %v7762
        %v7768 = vlaneseq
        %v7769 = vshrl.u32 %v7768, 7
        %v7770 = vsub.s32 %v3836, %v7769
        %v7771 = vrot.slane %v6671, %v7770
        %v7772 = vsel %vm3841, %v7771, %v7767
        %v7773 = vlaneseq
        %v7774 = vshrl.u32 %v7773, 7
        %v7775 = vsub.s32 %v3843, %v7774
        %v7776 = vrot.slane %v6674, %v7775
        %v7777 = vsel %vm3848, %v7776, %v7772
        %v7778 = vlaneseq
        %v7779 = vshrl.u32 %v7778, 7
        %v7780 = vsub.s32 %v3850, %v7779
        %v7781 = vrot.slane %v6677, %v7780
        %v7782 = vsel %vm3855, %v7781, %v7777
        %v7783 = vlaneseq
        %v7784 = vshrl.u32 %v7783, 7
        %v7785 = vsub.s32 %v3857, %v7784
        %v7786 = vrot.slane %v6680, %v7785
        %v7787 = vsel %vm3862, %v7786, %v7782
        %v7788 = vlaneseq
        %v7789 = vshrl.u32 %v7788, 7
        %v7790 = vsub.s32 %v3864, %v7789
        %v7791 = vrot.slane %v6683, %v7790
        %v7792 = vsel %vm3869, %v7791, %v7787
        %v7793 = vlaneseq
        %v7794 = vshrl.u32 %v7793, 7
        %v7795 = vsub.s32 %v3761, %v7794
        %v7796 = vrot.slane %v6686, %v7795
        %v7797 = vlaneseq
        %v7798 = vshrl.u32 %v7797, 7
        %v7799 = vsub.s32 %v3766, %v7798
        %v7800 = vrot.slane %v6689, %v7799
        %v7801 = vsel %vm3771, %v7800, %v7796
        %v7802 = vlaneseq
        %v7803 = vshrl.u32 %v7802, 7
        %v7804 = vsub.s32 %v3773, %v7803
        %v7805 = vrot.slane %v6692, %v7804
        %v7806 = vsel %vm3778, %v7805, %v7801
        %v7807 = vlaneseq
        %v7808 = vshrl.u32 %v7807, 7
        %v7809 = vsub.s32 %v3780, %v7808
        %v7810 = vrot.slane %v6695, %v7809
        %v7811 = vsel %vm3785, %v7810, %v7806
        %v7812 = vlaneseq
        %v7813 = vshrl.u32 %v7812, 7
        %v7814 = vsub.s32 %v3787, %v7813
        %v7815 = vrot.slane %v6698, %v7814
        %v7816 = vsel %vm3792, %v7815, %v7811
        %v7817 = vlaneseq
        %v7818 = vshrl.u32 %v7817, 7
        %v7819 = vsub.s32 %v3794, %v7818
        %v7820 = vrot.slane %v6701, %v7819
        %v7821 = vsel %vm3799, %v7820, %v7816
        %v7822 = vlaneseq
        %v7823 = vshrl.u32 %v7822, 7
        %v7824 = vsub.s32 %v3801, %v7823
        %v7825 = vrot.slane %v6704, %v7824
        %v7826 = vsel %vm3806, %v7825, %v7821
        %v7827 = vlaneseq
        %v7828 = vshrl.u32 %v7827, 7
        %v7829 = vsub.s32 %v3808, %v7828
        %v7830 = vrot.slane %v6707, %v7829
        %v7831 = vsel %vm3813, %v7830, %v7826
        %v7832 = vlaneseq
        %v7833 = vshrl.u32 %v7832, 7
        %v7834 = vsub.s32 %v3815, %v7833
        %v7835 = vrot.slane %v6710, %v7834
        %v7836 = vsel %vm3820, %v7835, %v7831
        %v7837 = vlaneseq
        %v7838 = vshrl.u32 %v7837, 7
        %v7839 = vsub.s32 %v3822, %v7838
        %v7840 = vrot.slane %v6713, %v7839
        %v7841 = vsel %vm3827, %v7840, %v7836
        %v7842 = vlaneseq
        %v7843 = vshrl.u32 %v7842, 7
        %v7844 = vsub.s32 %v3829, %v7843
        %v7845 = vrot.slane %v6716, %v7844
        %v7846 = vsel %vm3834, %v7845, %v7841
        %v7847 = vlaneseq
        %v7848 = vshrl.u32 %v7847, 7
        %v7849 = vsub.s32 %v3836, %v7848
        %v7850 = vrot.slane %v6719, %v7849
        %v7851 = vsel %vm3841, %v7850, %v7846
        %v7852 = vlaneseq
        %v7853 = vshrl.u32 %v7852, 7
        %v7854 = vsub.s32 %v3843, %v7853
        %v7855 = vrot.slane %v6722, %v7854
        %v7856 = vsel %vm3848, %v7855, %v7851
        %v7857 = vlaneseq
        %v7858 = vshrl.u32 %v7857, 7
        %v7859 = vsub.s32 %v3850, %v7858
        %v7860 = vrot.slane %v6725, %v7859
        %v7861 = vsel %vm3855, %v7860, %v7856
        %v7862 = vlaneseq
        %v7863 = vshrl.u32 %v7862, 7
        %v7864 = vsub.s32 %v3857, %v7863
        %v7865 = vrot.slane %v6728, %v7864
        %v7866 = vsel %vm3862, %v7865, %v7861
        %v7867 = vlaneseq
        %v7868 = vshrl.u32 %v7867, 7
        %v7869 = vsub.s32 %v3864, %v7868
        %v7870 = vrot.slane %v6731, %v7869
        %v7871 = vsel %vm3869, %v7870, %v7866
        %v7872 = vlaneseq
        %v7873 = vshrl.u32 %v7872, 7
        %v7874 = vsub.s32 %v3761, %v7873
        %v7875 = vrot.slane %v6734, %v7874
        %v7876 = vlaneseq
        %v7877 = vshrl.u32 %v7876, 7
        %v7878 = vsub.s32 %v3766, %v7877
        %v7879 = vrot.slane %v6737, %v7878
        %v7880 = vsel %vm3771, %v7879, %v7875
        %v7881 = vlaneseq
        %v7882 = vshrl.u32 %v7881, 7
        %v7883 = vsub.s32 %v3773, %v7882
        %v7884 = vrot.slane %v6740, %v7883
        %v7885 = vsel %vm3778, %v7884, %v7880
        %v7886 = vlaneseq
        %v7887 = vshrl.u32 %v7886, 7
        %v7888 = vsub.s32 %v3780, %v7887
        %v7889 = vrot.slane %v6743, %v7888
        %v7890 = vsel %vm3785, %v7889, %v7885
        %v7891 = vlaneseq
        %v7892 = vshrl.u32 %v7891, 7
        %v7893 = vsub.s32 %v3787, %v7892
        %v7894 = vrot.slane %v6746, %v7893
        %v7895 = vsel %vm3792, %v7894, %v7890
        %v7896 = vlaneseq
        %v7897 = vshrl.u32 %v7896, 7
        %v7898 = vsub.s32 %v3794, %v7897
        %v7899 = vrot.slane %v6749, %v7898
        %v7900 = vsel %vm3799, %v7899, %v7895
        %v7901 = vlaneseq
        %v7902 = vshrl.u32 %v7901, 7
        %v7903 = vsub.s32 %v3801, %v7902
        %v7904 = vrot.slane %v6752, %v7903
        %v7905 = vsel %vm3806, %v7904, %v7900
        %v7906 = vlaneseq
        %v7907 = vshrl.u32 %v7906, 7
        %v7908 = vsub.s32 %v3808, %v7907
        %v7909 = vrot.slane %v6755, %v7908
        %v7910 = vsel %vm3813, %v7909, %v7905
        %v7911 = vlaneseq
        %v7912 = vshrl.u32 %v7911, 7
        %v7913 = vsub.s32 %v3815, %v7912
        %v7914 = vrot.slane %v6758, %v7913
        %v7915 = vsel %vm3820, %v7914, %v7910
        %v7916 = vlaneseq
        %v7917 = vshrl.u32 %v7916, 7
        %v7918 = vsub.s32 %v3822, %v7917
        %v7919 = vrot.slane %v6761, %v7918
        %v7920 = vsel %vm3827, %v7919, %v7915
        %v7921 = vlaneseq
        %v7922 = vshrl.u32 %v7921, 7
        %v7923 = vsub.s32 %v3829, %v7922
        %v7924 = vrot.slane %v6764, %v7923
        %v7925 = vsel %vm3834, %v7924, %v7920
        %v7926 = vlaneseq
        %v7927 = vshrl.u32 %v7926, 7
        %v7928 = vsub.s32 %v3836, %v7927
        %v7929 = vrot.slane %v6767, %v7928
        %v7930 = vsel %vm3841, %v7929, %v7925
        %v7931 = vlaneseq
        %v7932 = vshrl.u32 %v7931, 7
        %v7933 = vsub.s32 %v3843, %v7932
        %v7934 = vrot.slane %v6770, %v7933
        %v7935 = vsel %vm3848, %v7934, %v7930
        %v7936 = vlaneseq
        %v7937 = vshrl.u32 %v7936, 7
        %v7938 = vsub.s32 %v3850, %v7937
        %v7939 = vrot.slane %v6773, %v7938
        %v7940 = vsel %vm3855, %v7939, %v7935
        %v7941 = vlaneseq
        %v7942 = vshrl.u32 %v7941, 7
        %v7943 = vsub.s32 %v3857, %v7942
        %v7944 = vrot.slane %v6776, %v7943
        %v7945 = vsel %vm3862, %v7944, %v7940
        %v7946 = vlaneseq
        %v7947 = vshrl.u32 %v7946, 7
        %v7948 = vsub.s32 %v3864, %v7947
        %v7949 = vrot.slane %v6779, %v7948
        %v7950 = vsel %vm3869, %v7949, %v7945
        %v7951 = vlaneseq
        %v7952 = vshrl.u32 %v7951, 7
        %v7953 = vsub.s32 %v3761, %v7952
        %v7954 = vrot.slane %v6782, %v7953
        %v7955 = vlaneseq
        %v7956 = vshrl.u32 %v7955, 7
        %v7957 = vsub.s32 %v3766, %v7956
        %v7958 = vrot.slane %v6785, %v7957
        %v7959 = vsel %vm3771, %v7958, %v7954
        %v7960 = vlaneseq
        %v7961 = vshrl.u32 %v7960, 7
        %v7962 = vsub.s32 %v3773, %v7961
        %v7963 = vrot.slane %v6788, %v7962
        %v7964 = vsel %vm3778, %v7963, %v7959
        %v7965 = vlaneseq
        %v7966 = vshrl.u32 %v7965, 7
        %v7967 = vsub.s32 %v3780, %v7966
        %v7968 = vrot.slane %v6791, %v7967
        %v7969 = vsel %vm3785, %v7968, %v7964
        %v7970 = vlaneseq
        %v7971 = vshrl.u32 %v7970, 7
        %v7972 = vsub.s32 %v3787, %v7971
        %v7973 = vrot.slane %v6794, %v7972
        %v7974 = vsel %vm3792, %v7973, %v7969
        %v7975 = vlaneseq
        %v7976 = vshrl.u32 %v7975, 7
        %v7977 = vsub.s32 %v3794, %v7976
        %v7978 = vrot.slane %v6797, %v7977
        %v7979 = vsel %vm3799, %v7978, %v7974
        %v7980 = vlaneseq
        %v7981 = vshrl.u32 %v7980, 7
        %v7982 = vsub.s32 %v3801, %v7981
        %v7983 = vrot.slane %v6800, %v7982
        %v7984 = vsel %vm3806, %v7983, %v7979
        %v7985 = vlaneseq
        %v7986 = vshrl.u32 %v7985, 7
        %v7987 = vsub.s32 %v3808, %v7986
        %v7988 = vrot.slane %v6803, %v7987
        %v7989 = vsel %vm3813, %v7988, %v7984
        %v7990 = vlaneseq
        %v7991 = vshrl.u32 %v7990, 7
        %v7992 = vsub.s32 %v3815, %v7991
        %v7993 = vrot.slane %v6806, %v7992
        %v7994 = vsel %vm3820, %v7993, %v7989
        %v7995 = vlaneseq
        %v7996 = vshrl.u32 %v7995, 7
        %v7997 = vsub.s32 %v3822, %v7996
        %v7998 = vrot.slane %v6809, %v7997
        %v7999 = vsel %vm3827, %v7998, %v7994
        %v8000 = vlaneseq
        %v8001 = vshrl.u32 %v8000, 7
        %v8002 = vsub.s32 %v3829, %v8001
        %v8003 = vrot.slane %v6812, %v8002
        %v8004 = vsel %vm3834, %v8003, %v7999
        %v8005 = vlaneseq
        %v8006 = vshrl.u32 %v8005, 7
        %v8007 = vsub.s32 %v3836, %v8006
        %v8008 = vrot.slane %v6815, %v8007
        %v8009 = vsel %vm3841, %v8008, %v8004
        %v8010 = vlaneseq
        %v8011 = vshrl.u32 %v8010, 7
        %v8012 = vsub.s32 %v3843, %v8011
        %v8013 = vrot.slane %v6818, %v8012
        %v8014 = vsel %vm3848, %v8013, %v8009
        %v8015 = vlaneseq
        %v8016 = vshrl.u32 %v8015, 7
        %v8017 = vsub.s32 %v3850, %v8016
        %v8018 = vrot.slane %v6821, %v8017
        %v8019 = vsel %vm3855, %v8018, %v8014
        %v8020 = vlaneseq
        %v8021 = vshrl.u32 %v8020, 7
        %v8022 = vsub.s32 %v3857, %v8021
        %v8023 = vrot.slane %v6824, %v8022
        %v8024 = vsel %vm3862, %v8023, %v8019
        %v8025 = vlaneseq
        %v8026 = vshrl.u32 %v8025, 7
        %v8027 = vsub.s32 %v3864, %v8026
        %v8028 = vrot.slane %v6827, %v8027
        %v8029 = vsel %vm3869, %v8028, %v8024
        %v8030 = vlaneseq
        %v8031 = vshrl.u32 %v8030, 7
        %v8032 = vsub.s32 %v3761, %v8031
        %v8033 = vrot.slane %v6830, %v8032
        %v8034 = vlaneseq
        %v8035 = vshrl.u32 %v8034, 7
        %v8036 = vsub.s32 %v3766, %v8035
        %v8037 = vrot.slane %v6833, %v8036
        %v8038 = vsel %vm3771, %v8037, %v8033
        %v8039 = vlaneseq
        %v8040 = vshrl.u32 %v8039, 7
        %v8041 = vsub.s32 %v3773, %v8040
        %v8042 = vrot.slane %v6836, %v8041
        %v8043 = vsel %vm3778, %v8042, %v8038
        %v8044 = vlaneseq
        %v8045 = vshrl.u32 %v8044, 7
        %v8046 = vsub.s32 %v3780, %v8045
        %v8047 = vrot.slane %v6839, %v8046
        %v8048 = vsel %vm3785, %v8047, %v8043
        %v8049 = vlaneseq
        %v8050 = vshrl.u32 %v8049, 7
        %v8051 = vsub.s32 %v3787, %v8050
        %v8052 = vrot.slane %v6842, %v8051
        %v8053 = vsel %vm3792, %v8052, %v8048
        %v8054 = vlaneseq
        %v8055 = vshrl.u32 %v8054, 7
        %v8056 = vsub.s32 %v3794, %v8055
        %v8057 = vrot.slane %v6845, %v8056
        %v8058 = vsel %vm3799, %v8057, %v8053
        %v8059 = vlaneseq
        %v8060 = vshrl.u32 %v8059, 7
        %v8061 = vsub.s32 %v3801, %v8060
        %v8062 = vrot.slane %v6848, %v8061
        %v8063 = vsel %vm3806, %v8062, %v8058
        %v8064 = vlaneseq
        %v8065 = vshrl.u32 %v8064, 7
        %v8066 = vsub.s32 %v3808, %v8065
        %v8067 = vrot.slane %v6851, %v8066
        %v8068 = vsel %vm3813, %v8067, %v8063
        %v8069 = vlaneseq
        %v8070 = vshrl.u32 %v8069, 7
        %v8071 = vsub.s32 %v3815, %v8070
        %v8072 = vrot.slane %v6854, %v8071
        %v8073 = vsel %vm3820, %v8072, %v8068
        %v8074 = vlaneseq
        %v8075 = vshrl.u32 %v8074, 7
        %v8076 = vsub.s32 %v3822, %v8075
        %v8077 = vrot.slane %v6857, %v8076
        %v8078 = vsel %vm3827, %v8077, %v8073
        %v8079 = vlaneseq
        %v8080 = vshrl.u32 %v8079, 7
        %v8081 = vsub.s32 %v3829, %v8080
        %v8082 = vrot.slane %v6860, %v8081
        %v8083 = vsel %vm3834, %v8082, %v8078
        %v8084 = vlaneseq
        %v8085 = vshrl.u32 %v8084, 7
        %v8086 = vsub.s32 %v3836, %v8085
        %v8087 = vrot.slane %v6863, %v8086
        %v8088 = vsel %vm3841, %v8087, %v8083
        %v8089 = vlaneseq
        %v8090 = vshrl.u32 %v8089, 7
        %v8091 = vsub.s32 %v3843, %v8090
        %v8092 = vrot.slane %v6866, %v8091
        %v8093 = vsel %vm3848, %v8092, %v8088
        %v8094 = vlaneseq
        %v8095 = vshrl.u32 %v8094, 7
        %v8096 = vsub.s32 %v3850, %v8095
        %v8097 = vrot.slane %v6869, %v8096
        %v8098 = vsel %vm3855, %v8097, %v8093
        %v8099 = vlaneseq
        %v8100 = vshrl.u32 %v8099, 7
        %v8101 = vsub.s32 %v3857, %v8100
        %v8102 = vrot.slane %v6872, %v8101
        %v8103 = vsel %vm3862, %v8102, %v8098
        %v8104 = vlaneseq
        %v8105 = vshrl.u32 %v8104, 7
        %v8106 = vsub.s32 %v3864, %v8105
        %v8107 = vrot.slane %v6875, %v8106
        %v8108 = vsel %vm3869, %v8107, %v8103
        %v8109 = vlaneseq
        %v8110 = vshrl.u32 %v8109, 7
        %v8111 = vsub.s32 %v3761, %v8110
        %v8112 = vrot.slane %v6878, %v8111
        %v8113 = vlaneseq
        %v8114 = vshrl.u32 %v8113, 7
        %v8115 = vsub.s32 %v3766, %v8114
        %v8116 = vrot.slane %v6881, %v8115
        %v8117 = vsel %vm3771, %v8116, %v8112
        %v8118 = vlaneseq
        %v8119 = vshrl.u32 %v8118, 7
        %v8120 = vsub.s32 %v3773, %v8119
        %v8121 = vrot.slane %v6884, %v8120
        %v8122 = vsel %vm3778, %v8121, %v8117
        %v8123 = vlaneseq
        %v8124 = vshrl.u32 %v8123, 7
        %v8125 = vsub.s32 %v3780, %v8124
        %v8126 = vrot.slane %v6887, %v8125
        %v8127 = vsel %vm3785, %v8126, %v8122
        %v8128 = vlaneseq
        %v8129 = vshrl.u32 %v8128, 7
        %v8130 = vsub.s32 %v3787, %v8129
        %v8131 = vrot.slane %v6890, %v8130
        %v8132 = vsel %vm3792, %v8131, %v8127
        %v8133 = vlaneseq
        %v8134 = vshrl.u32 %v8133, 7
        %v8135 = vsub.s32 %v3794, %v8134
        %v8136 = vrot.slane %v6893, %v8135
        %v8137 = vsel %vm3799, %v8136, %v8132
        %v8138 = vlaneseq
        %v8139 = vshrl.u32 %v8138, 7
        %v8140 = vsub.s32 %v3801, %v8139
        %v8141 = vrot.slane %v6896, %v8140
        %v8142 = vsel %vm3806, %v8141, %v8137
        %v8143 = vlaneseq
        %v8144 = vshrl.u32 %v8143, 7
        %v8145 = vsub.s32 %v3808, %v8144
        %v8146 = vrot.slane %v6899, %v8145
        %v8147 = vsel %vm3813, %v8146, %v8142
        %v8148 = vlaneseq
        %v8149 = vshrl.u32 %v8148, 7
        %v8150 = vsub.s32 %v3815, %v8149
        %v8151 = vrot.slane %v6902, %v8150
        %v8152 = vsel %vm3820, %v8151, %v8147
        %v8153 = vlaneseq
        %v8154 = vshrl.u32 %v8153, 7
        %v8155 = vsub.s32 %v3822, %v8154
        %v8156 = vrot.slane %v6905, %v8155
        %v8157 = vsel %vm3827, %v8156, %v8152
        %v8158 = vlaneseq
        %v8159 = vshrl.u32 %v8158, 7
        %v8160 = vsub.s32 %v3829, %v8159
        %v8161 = vrot.slane %v6908, %v8160
        %v8162 = vsel %vm3834, %v8161, %v8157
        %v8163 = vlaneseq
        %v8164 = vshrl.u32 %v8163, 7
        %v8165 = vsub.s32 %v3836, %v8164
        %v8166 = vrot.slane %v6911, %v8165
        %v8167 = vsel %vm3841, %v8166, %v8162
        %v8168 = vlaneseq
        %v8169 = vshrl.u32 %v8168, 7
        %v8170 = vsub.s32 %v3843, %v8169
        %v8171 = vrot.slane %v6914, %v8170
        %v8172 = vsel %vm3848, %v8171, %v8167
        %v8173 = vlaneseq
        %v8174 = vshrl.u32 %v8173, 7
        %v8175 = vsub.s32 %v3850, %v8174
        %v8176 = vrot.slane %v6917, %v8175
        %v8177 = vsel %vm3855, %v8176, %v8172
        %v8178 = vlaneseq
        %v8179 = vshrl.u32 %v8178, 7
        %v8180 = vsub.s32 %v3857, %v8179
        %v8181 = vrot.slane %v6920, %v8180
        %v8182 = vsel %vm3862, %v8181, %v8177
        %v8183 = vlaneseq
        %v8184 = vshrl.u32 %v8183, 7
        %v8185 = vsub.s32 %v3864, %v8184
        %v8186 = vrot.slane %v6923, %v8185
        %v8187 = vsel %vm3869, %v8186, %v8182
        %v8188 = vsel %vm5056, %v7160, %v7002
        %v8189 = vsel %vm5058, %v7318, %v8188
        %v8190 = vsel %vm5060, %v7476, %v8189
        %v8191 = vsel %vm5062, %v7634, %v8190
        %v8192 = vsel %vm5064, %v7792, %v8191
        %v8193 = vsel %vm5066, %v7950, %v8192
        %v8194 = vsel %vm5068, %v8108, %v8193
        %v8195 = vsel %vm5056, %v7239, %v7081
        %v8196 = vsel %vm5058, %v7397, %v8195
        %v8197 = vsel %vm5060, %v7555, %v8196
        %v8198 = vsel %vm5062, %v7713, %v8197
        %v8199 = vsel %vm5064, %v7871, %v8198
        %v8200 = vsel %vm5066, %v8029, %v8199
        %v8201 = vsel %vm5068, %v8187, %v8200
        %v8204 = vadd.f32 %v8194, %v8201
        %8205 = vadd.xlane.f32.xlu0 %v8204
        %v8206 = vpop.xlane.xlu0 %8205
        %v8207 = vadd.f32 %v5899, %v8206
        %vm8208 = vcmask 7168
        %8209 = vst.msk [vmem:[#allocation3] sm:$0xff] %vm8208, %v8207
        %8212 = vmatprep.subr.mxu0 0.0
        %8213 = vmatpush1.msra.mxu0 %v508
        %8214 = vmatprep.subr.mxu0 0.0
        %8215 = vmatpush1.msra.mxu0 %v509
        %8216 = vmatprep.subr.mxu0 0.0
        %8217 = vmatpush1.msra.mxu0 %v510
        %8218 = vmatprep.subr.mxu0 0.0
        %8219 = vmatpush1.msra.mxu0 %v511
        %8220 = vmatprep.subr.mxu0 0.0
        %8221 = vmatpush1.msra.mxu0 %v512
        %8222 = vmatprep.subr.mxu0 0.0
        %8223 = vmatpush1.msra.mxu0 %v513
        %8224 = vmatprep.subr.mxu0 0.0
        %8225 = vmatpush1.msra.mxu0 %v514
        %8226 = vmatprep.subr.mxu0 0.0
        %8227 = vmatpush1.msra.mxu0 %v515
        %8228 = vmatprep.subr.mxu0 0.0
        %8229 = vmatpush1.msra.mxu0 %v516
        %8230 = vmatprep.subr.mxu0 0.0
        %8231 = vmatpush1.msra.mxu0 %v517
        %8232 = vmatprep.subr.mxu0 0.0
        %8233 = vmatpush1.msra.mxu0 %v518
        %8234 = vmatprep.subr.mxu0 0.0
        %8235 = vmatpush1.msra.mxu0 %v519
        %8236 = vmatprep.subr.mxu0 0.0
        %8237 = vmatpush1.msra.mxu0 %v520
        %8238 = vmatprep.subr.mxu0 0.0
        %8239 = vmatpush1.msra.mxu0 %v521
        %8240 = vmatprep.subr.mxu0 0.0
        %8241 = vmatpush1.msra.mxu0 %v522
        %8242 = vmatprep.subr.mxu0 0.0
        %8243 = vmatpush1.msra.mxu0 %v523
        %8244 = vmatprep.subr.mxu0 0.0
        %8245 = vmatpush1.msra.mxu0 %v524
        %8246 = vmatprep.subr.mxu0 0.0
        %8247 = vmatpush1.msra.mxu0 %v525
        %8248 = vmatprep.subr.mxu0 0.0
        %8249 = vmatpush1.msra.mxu0 %v526
        %8250 = vmatprep.subr.mxu0 0.0
        %8251 = vmatpush1.msra.mxu0 %v527
        %8252 = vmatprep.subr.mxu0 0.0
        %8253 = vmatpush1.msra.mxu0 %v528
        %8254 = vmatprep.subr.mxu0 0.0
        %8255 = vmatpush1.msra.mxu0 %v529
        %8256 = vmatprep.subr.mxu0 0.0
        %8257 = vmatpush1.msra.mxu0 %v530
        %8258 = vmatprep.subr.mxu0 0.0
        %8259 = vmatpush1.msra.mxu0 %v531
        %8260 = vmatprep.subr.mxu0 0.0
        %8261 = vmatpush1.msra.mxu0 %v532
        %8262 = vmatprep.subr.mxu0 0.0
        %8263 = vmatpush1.msra.mxu0 %v533
        %8264 = vmatprep.subr.mxu0 0.0
        %8265 = vmatpush1.msra.mxu0 %v534
        %8266 = vmatprep.subr.mxu0 0.0
        %8267 = vmatpush1.msra.mxu0 %v535
        %8268 = vmatprep.subr.mxu0 0.0
        %8269 = vmatpush1.msra.mxu0 %v536
        %8270 = vmatprep.subr.mxu0 0.0
        %8271 = vmatpush1.msra.mxu0 %v537
        %8272 = vmatprep.subr.mxu0 0.0
        %8273 = vmatpush1.msra.mxu0 %v538
        %8274 = vmatprep.subr.mxu0 0.0
        %8275 = vmatpush1.msra.mxu0 %v539
        %8276 = vmatprep.mubr.f32.mxu0 %v7081
        %8277 = vmatmul.mubr.f32.gmra.mrb[0].mxu0 %v7002
        %v8278 = vpop.f32.mrb[0].mxu0
        %v8279 = vadd.f32 0.0, %v8278
        %v8280 = vpop.f32.mrb[0].mxu0
        %8281 = vdwg.mxu0
        %8284 = vmatprep.subr.mxu0 0.0
        %8285 = vmatpush1.msra.mxu0 %v540
        %8286 = vmatprep.subr.mxu0 0.0
        %8287 = vmatpush1.msra.mxu0 %v541
        %8288 = vmatprep.subr.mxu0 0.0
        %8289 = vmatpush1.msra.mxu0 %v542
        %8290 = vmatprep.subr.mxu0 0.0
        %8291 = vmatpush1.msra.mxu0 %v543
        %8292 = vmatprep.subr.mxu0 0.0
        %8293 = vmatpush1.msra.mxu0 %v544
        %8294 = vmatprep.subr.mxu0 0.0
        %8295 = vmatpush1.msra.mxu0 %v545
        %8296 = vmatprep.subr.mxu0 0.0
        %8297 = vmatpush1.msra.mxu0 %v546
        %8298 = vmatprep.subr.mxu0 0.0
        %8299 = vmatpush1.msra.mxu0 %v547
        %8300 = vmatprep.subr.mxu0 0.0
        %8301 = vmatpush1.msra.mxu0 %v548
        %8302 = vmatprep.subr.mxu0 0.0
        %8303 = vmatpush1.msra.mxu0 %v549
        %8304 = vmatprep.subr.mxu0 0.0
        %8305 = vmatpush1.msra.mxu0 %v550
        %8306 = vmatprep.subr.mxu0 0.0
        %8307 = vmatpush1.msra.mxu0 %v551
        %8308 = vmatprep.subr.mxu0 0.0
        %8309 = vmatpush1.msra.mxu0 %v552
        %8310 = vmatprep.subr.mxu0 0.0
        %8311 = vmatpush1.msra.mxu0 %v553
        %8312 = vmatprep.subr.mxu0 0.0
        %8313 = vmatpush1.msra.mxu0 %v554
        %8314 = vmatprep.subr.mxu0 0.0
        %8315 = vmatpush1.msra.mxu0 %v555
        %8316 = vmatprep.subr.mxu0 0.0
        %8317 = vmatpush1.msra.mxu0 %v556
        %8318 = vmatprep.subr.mxu0 0.0
        %8319 = vmatpush1.msra.mxu0 %v557
        %8320 = vmatprep.subr.mxu0 0.0
        %8321 = vmatpush1.msra.mxu0 %v558
        %8322 = vmatprep.subr.mxu0 0.0
        %8323 = vmatpush1.msra.mxu0 %v559
        %8324 = vmatprep.subr.mxu0 0.0
        %8325 = vmatpush1.msra.mxu0 %v560
        %8326 = vmatprep.subr.mxu0 0.0
        %8327 = vmatpush1.msra.mxu0 %v561
        %8328 = vmatprep.subr.mxu0 0.0
        %8329 = vmatpush1.msra.mxu0 %v562
        %8330 = vmatprep.subr.mxu0 0.0
        %8331 = vmatpush1.msra.mxu0 %v563
        %8332 = vmatprep.subr.mxu0 0.0
        %8333 = vmatpush1.msra.mxu0 %v564
        %8334 = vmatprep.subr.mxu0 0.0
        %8335 = vmatpush1.msra.mxu0 %v565
        %8336 = vmatprep.subr.mxu0 0.0
        %8337 = vmatpush1.msra.mxu0 %v566
        %8338 = vmatprep.subr.mxu0 0.0
        %8339 = vmatpush1.msra.mxu0 %v567
        %8340 = vmatprep.subr.mxu0 0.0
        %8341 = vmatpush1.msra.mxu0 %v568
        %8342 = vmatprep.subr.mxu0 0.0
        %8343 = vmatpush1.msra.mxu0 %v569
        %8344 = vmatprep.subr.mxu0 0.0
        %8345 = vmatpush1.msra.mxu0 %v570
        %8346 = vmatprep.subr.mxu0 0.0
        %8347 = vmatpush1.msra.mxu0 %v571
        %8348 = vmatprep.mubr.f32.mxu0 %v7239
        %8349 = vmatmul.mubr.f32.gmra.mrb[0].mxu0 %v7160
        %v8350 = vpop.f32.mrb[0].mxu0
        %v8351 = vadd.f32 0.0, %v8350
        %v8352 = vpop.f32.mrb[0].mxu0
        %8353 = vdwg.mxu0
        %8356 = vmatprep.subr.mxu0 0.0
        %8357 = vmatpush1.msra.mxu0 %v572
        %8358 = vmatprep.subr.mxu0 0.0
        %8359 = vmatpush1.msra.mxu0 %v573
        %8360 = vmatprep.subr.mxu0 0.0
        %8361 = vmatpush1.msra.mxu0 %v574
        %8362 = vmatprep.subr.mxu0 0.0
        %8363 = vmatpush1.msra.mxu0 %v575
        %8364 = vmatprep.subr.mxu0 0.0
        %8365 = vmatpush1.msra.mxu0 %v576
        %8366 = vmatprep.subr.mxu0 0.0
        %8367 = vmatpush1.msra.mxu0 %v577
        %8368 = vmatprep.subr.mxu0 0.0
        %8369 = vmatpush1.msra.mxu0 %v578
        %8370 = vmatprep.subr.mxu0 0.0
        %8371 = vmatpush1.msra.mxu0 %v579
        %8372 = vmatprep.subr.mxu0 0.0
        %8373 = vmatpush1.msra.mxu0 %v580
        %8374 = vmatprep.subr.mxu0 0.0
        %8375 = vmatpush1.msra.mxu0 %v581
        %8376 = vmatprep.subr.mxu0 0.0
        %8377 = vmatpush1.msra.mxu0 %v582
        %8378 = vmatprep.subr.mxu0 0.0
        %8379 = vmatpush1.msra.mxu0 %v583
        %8380 = vmatprep.subr.mxu0 0.0
        %8381 = vmatpush1.msra.mxu0 %v584
        %8382 = vmatprep.subr.mxu0 0.0
        %8383 = vmatpush1.msra.mxu0 %v585
        %8384 = vmatprep.subr.mxu0 0.0
        %8385 = vmatpush1.msra.mxu0 %v586
        %8386 = vmatprep.subr.mxu0 0.0
        %8387 = vmatpush1.msra.mxu0 %v587
        %8388 = vmatprep.subr.mxu0 0.0
        %8389 = vmatpush1.msra.mxu0 %v588
        %8390 = vmatprep.subr.mxu0 0.0
        %8391 = vmatpush1.msra.mxu0 %v589
        %8392 = vmatprep.subr.mxu0 0.0
        %8393 = vmatpush1.msra.mxu0 %v590
        %8394 = vmatprep.subr.mxu0 0.0
        %8395 = vmatpush1.msra.mxu0 %v591
        %8396 = vmatprep.subr.mxu0 0.0
        %8397 = vmatpush1.msra.mxu0 %v592
        %8398 = vmatprep.subr.mxu0 0.0
        %8399 = vmatpush1.msra.mxu0 %v593
        %8400 = vmatprep.subr.mxu0 0.0
        %8401 = vmatpush1.msra.mxu0 %v594
        %8402 = vmatprep.subr.mxu0 0.0
        %8403 = vmatpush1.msra.mxu0 %v595
        %8404 = vmatprep.subr.mxu0 0.0
        %8405 = vmatpush1.msra.mxu0 %v596
        %8406 = vmatprep.subr.mxu0 0.0
        %8407 = vmatpush1.msra.mxu0 %v597
        %8408 = vmatprep.subr.mxu0 0.0
        %8409 = vmatpush1.msra.mxu0 %v598
        %8410 = vmatprep.subr.mxu0 0.0
        %8411 = vmatpush1.msra.mxu0 %v599
        %8412 = vmatprep.subr.mxu0 0.0
        %8413 = vmatpush1.msra.mxu0 %v600
        %8414 = vmatprep.subr.mxu0 0.0
        %8415 = vmatpush1.msra.mxu0 %v601
        %8416 = vmatprep.subr.mxu0 0.0
        %8417 = vmatpush1.msra.mxu0 %v602
        %8418 = vmatprep.subr.mxu0 0.0
        %8419 = vmatpush1.msra.mxu0 %v603
        %8420 = vmatprep.mubr.f32.mxu0 %v7397
        %8421 = vmatmul.mubr.f32.gmra.mrb[0].mxu0 %v7318
        %v8422 = vpop.f32.mrb[0].mxu0
        %v8423 = vadd.f32 0.0, %v8422
        %v8424 = vpop.f32.mrb[0].mxu0
        %8425 = vdwg.mxu0
        %8428 = vmatprep.subr.mxu0 0.0
        %8429 = vmatpush1.msra.mxu0 %v604
        %8430 = vmatprep.subr.mxu0 0.0
        %8431 = vmatpush1.msra.mxu0 %v605
        %8432 = vmatprep.subr.mxu0 0.0
        %8433 = vmatpush1.msra.mxu0 %v606
        %8434 = vmatprep.subr.mxu0 0.0
        %8435 = vmatpush1.msra.mxu0 %v607
        %8436 = vmatprep.subr.mxu0 0.0
        %8437 = vmatpush1.msra.mxu0 %v608
        %8438 = vmatprep.subr.mxu0 0.0
        %8439 = vmatpush1.msra.mxu0 %v609
        %8440 = vmatprep.subr.mxu0 0.0
        %8441 = vmatpush1.msra.mxu0 %v610
        %8442 = vmatprep.subr.mxu0 0.0
        %8443 = vmatpush1.msra.mxu0 %v611
        %8444 = vmatprep.subr.mxu0 0.0
        %8445 = vmatpush1.msra.mxu0 %v612
        %8446 = vmatprep.subr.mxu0 0.0
        %8447 = vmatpush1.msra.mxu0 %v613
        %8448 = vmatprep.subr.mxu0 0.0
        %8449 = vmatpush1.msra.mxu0 %v614
        %8450 = vmatprep.subr.mxu0 0.0
        %8451 = vmatpush1.msra.mxu0 %v615
        %8452 = vmatprep.subr.mxu0 0.0
        %8453 = vmatpush1.msra.mxu0 %v616
        %8454 = vmatprep.subr.mxu0 0.0
        %8455 = vmatpush1.msra.mxu0 %v617
        %8456 = vmatprep.subr.mxu0 0.0
        %8457 = vmatpush1.msra.mxu0 %v618
        %8458 = vmatprep.subr.mxu0 0.0
        %8459 = vmatpush1.msra.mxu0 %v619
        %8460 = vmatprep.subr.mxu0 0.0
        %8461 = vmatpush1.msra.mxu0 %v620
        %8462 = vmatprep.subr.mxu0 0.0
        %8463 = vmatpush1.msra.mxu0 %v621
        %8464 = vmatprep.subr.mxu0 0.0
        %8465 = vmatpush1.msra.mxu0 %v622
        %8466 = vmatprep.subr.mxu0 0.0
        %8467 = vmatpush1.msra.mxu0 %v623
        %8468 = vmatprep.subr.mxu0 0.0
        %8469 = vmatpush1.msra.mxu0 %v624
        %8470 = vmatprep.subr.mxu0 0.0
        %8471 = vmatpush1.msra.mxu0 %v625
        %8472 = vmatprep.subr.mxu0 0.0
        %8473 = vmatpush1.msra.mxu0 %v626
        %8474 = vmatprep.subr.mxu0 0.0
        %8475 = vmatpush1.msra.mxu0 %v627
        %8476 = vmatprep.subr.mxu0 0.0
        %8477 = vmatpush1.msra.mxu0 %v628
        %8478 = vmatprep.subr.mxu0 0.0
        %8479 = vmatpush1.msra.mxu0 %v629
        %8480 = vmatprep.subr.mxu0 0.0
        %8481 = vmatpush1.msra.mxu0 %v630
        %8482 = vmatprep.subr.mxu0 0.0
        %8483 = vmatpush1.msra.mxu0 %v631
        %8484 = vmatprep.subr.mxu0 0.0
        %8485 = vmatpush1.msra.mxu0 %v632
        %8486 = vmatprep.subr.mxu0 0.0
        %8487 = vmatpush1.msra.mxu0 %v633
        %8488 = vmatprep.subr.mxu0 0.0
        %8489 = vmatpush1.msra.mxu0 %v634
        %8490 = vmatprep.subr.mxu0 0.0
        %8491 = vmatpush1.msra.mxu0 %v635
        %8492 = vmatprep.mubr.f32.mxu0 %v7555
        %8493 = vmatmul.mubr.f32.gmra.mrb[0].mxu0 %v7476
        %v8494 = vpop.f32.mrb[0].mxu0
        %v8495 = vadd.f32 0.0, %v8494
        %v8496 = vpop.f32.mrb[0].mxu0
        %8497 = vdwg.mxu0
        %8500 = vmatprep.subr.mxu0 0.0
        %8501 = vmatpush1.msra.mxu0 %v636
        %8502 = vmatprep.subr.mxu0 0.0
        %8503 = vmatpush1.msra.mxu0 %v637
        %8504 = vmatprep.subr.mxu0 0.0
        %8505 = vmatpush1.msra.mxu0 %v638
        %8506 = vmatprep.subr.mxu0 0.0
        %8507 = vmatpush1.msra.mxu0 %v639
        %8508 = vmatprep.subr.mxu0 0.0
        %8509 = vmatpush1.msra.mxu0 %v640
        %8510 = vmatprep.subr.mxu0 0.0
        %8511 = vmatpush1.msra.mxu0 %v641
        %8512 = vmatprep.subr.mxu0 0.0
        %8513 = vmatpush1.msra.mxu0 %v642
        %8514 = vmatprep.subr.mxu0 0.0
        %8515 = vmatpush1.msra.mxu0 %v643
        %8516 = vmatprep.subr.mxu0 0.0
        %8517 = vmatpush1.msra.mxu0 %v644
        %8518 = vmatprep.subr.mxu0 0.0
        %8519 = vmatpush1.msra.mxu0 %v645
        %8520 = vmatprep.subr.mxu0 0.0
        %8521 = vmatpush1.msra.mxu0 %v646
        %8522 = vmatprep.subr.mxu0 0.0
        %8523 = vmatpush1.msra.mxu0 %v647
        %8524 = vmatprep.subr.mxu0 0.0
        %8525 = vmatpush1.msra.mxu0 %v648
        %8526 = vmatprep.subr.mxu0 0.0
        %8527 = vmatpush1.msra.mxu0 %v649
        %8528 = vmatprep.subr.mxu0 0.0
        %8529 = vmatpush1.msra.mxu0 %v650
        %8530 = vmatprep.subr.mxu0 0.0
        %8531 = vmatpush1.msra.mxu0 %v651
        %8532 = vmatprep.subr.mxu0 0.0
        %8533 = vmatpush1.msra.mxu0 %v652
        %8534 = vmatprep.subr.mxu0 0.0
        %8535 = vmatpush1.msra.mxu0 %v653
        %8536 = vmatprep.subr.mxu0 0.0
        %8537 = vmatpush1.msra.mxu0 %v654
        %8538 = vmatprep.subr.mxu0 0.0
        %8539 = vmatpush1.msra.mxu0 %v655
        %8540 = vmatprep.subr.mxu0 0.0
        %8541 = vmatpush1.msra.mxu0 %v656
        %8542 = vmatprep.subr.mxu0 0.0
        %8543 = vmatpush1.msra.mxu0 %v657
        %8544 = vmatprep.subr.mxu0 0.0
        %8545 = vmatpush1.msra.mxu0 %v658
        %8546 = vmatprep.subr.mxu0 0.0
        %8547 = vmatpush1.msra.mxu0 %v659
        %8548 = vmatprep.subr.mxu0 0.0
        %8549 = vmatpush1.msra.mxu0 %v660
        %8550 = vmatprep.subr.mxu0 0.0
        %8551 = vmatpush1.msra.mxu0 %v661
        %8552 = vmatprep.subr.mxu0 0.0
        %8553 = vmatpush1.msra.mxu0 %v662
        %8554 = vmatprep.subr.mxu0 0.0
        %8555 = vmatpush1.msra.mxu0 %v663
        %8556 = vmatprep.subr.mxu0 0.0
        %8557 = vmatpush1.msra.mxu0 %v664
        %8558 = vmatprep.subr.mxu0 0.0
        %8559 = vmatpush1.msra.mxu0 %v665
        %8560 = vmatprep.subr.mxu0 0.0
        %8561 = vmatpush1.msra.mxu0 %v666
        %8562 = vmatprep.subr.mxu0 0.0
        %8563 = vmatpush1.msra.mxu0 %v667
        %8564 = vmatprep.mubr.f32.mxu0 %v7713
        %8565 = vmatmul.mubr.f32.gmra.mrb[0].mxu0 %v7634
        %v8566 = vpop.f32.mrb[0].mxu0
        %v8567 = vadd.f32 0.0, %v8566
        %v8568 = vpop.f32.mrb[0].mxu0
        %8569 = vdwg.mxu0
        %8572 = vmatprep.subr.mxu0 0.0
        %8573 = vmatpush1.msra.mxu0 %v668
        %8574 = vmatprep.subr.mxu0 0.0
        %8575 = vmatpush1.msra.mxu0 %v669
        %8576 = vmatprep.subr.mxu0 0.0
        %8577 = vmatpush1.msra.mxu0 %v670
        %8578 = vmatprep.subr.mxu0 0.0
        %8579 = vmatpush1.msra.mxu0 %v671
        %8580 = vmatprep.subr.mxu0 0.0
        %8581 = vmatpush1.msra.mxu0 %v672
        %8582 = vmatprep.subr.mxu0 0.0
        %8583 = vmatpush1.msra.mxu0 %v673
        %8584 = vmatprep.subr.mxu0 0.0
        %8585 = vmatpush1.msra.mxu0 %v674
        %8586 = vmatprep.subr.mxu0 0.0
        %8587 = vmatpush1.msra.mxu0 %v675
        %8588 = vmatprep.subr.mxu0 0.0
        %8589 = vmatpush1.msra.mxu0 %v676
        %8590 = vmatprep.subr.mxu0 0.0
        %8591 = vmatpush1.msra.mxu0 %v677
        %8592 = vmatprep.subr.mxu0 0.0
        %8593 = vmatpush1.msra.mxu0 %v678
        %8594 = vmatprep.subr.mxu0 0.0
        %8595 = vmatpush1.msra.mxu0 %v679
        %8596 = vmatprep.subr.mxu0 0.0
        %8597 = vmatpush1.msra.mxu0 %v680
        %8598 = vmatprep.subr.mxu0 0.0
        %8599 = vmatpush1.msra.mxu0 %v681
        %8600 = vmatprep.subr.mxu0 0.0
        %8601 = vmatpush1.msra.mxu0 %v682
        %8602 = vmatprep.subr.mxu0 0.0
        %8603 = vmatpush1.msra.mxu0 %v683
        %8604 = vmatprep.subr.mxu0 0.0
        %8605 = vmatpush1.msra.mxu0 %v684
        %8606 = vmatprep.subr.mxu0 0.0
        %8607 = vmatpush1.msra.mxu0 %v685
        %8608 = vmatprep.subr.mxu0 0.0
        %8609 = vmatpush1.msra.mxu0 %v686
        %8610 = vmatprep.subr.mxu0 0.0
        %8611 = vmatpush1.msra.mxu0 %v687
        %8612 = vmatprep.subr.mxu0 0.0
        %8613 = vmatpush1.msra.mxu0 %v688
        %8614 = vmatprep.subr.mxu0 0.0
        %8615 = vmatpush1.msra.mxu0 %v689
        %8616 = vmatprep.subr.mxu0 0.0
        %8617 = vmatpush1.msra.mxu0 %v690
        %8618 = vmatprep.subr.mxu0 0.0
        %8619 = vmatpush1.msra.mxu0 %v691
        %8620 = vmatprep.subr.mxu0 0.0
        %8621 = vmatpush1.msra.mxu0 %v692
        %8622 = vmatprep.subr.mxu0 0.0
        %8623 = vmatpush1.msra.mxu0 %v693
        %8624 = vmatprep.subr.mxu0 0.0
        %8625 = vmatpush1.msra.mxu0 %v694
        %8626 = vmatprep.subr.mxu0 0.0
        %8627 = vmatpush1.msra.mxu0 %v695
        %8628 = vmatprep.subr.mxu0 0.0
        %8629 = vmatpush1.msra.mxu0 %v696
        %8630 = vmatprep.subr.mxu0 0.0
        %8631 = vmatpush1.msra.mxu0 %v697
        %8632 = vmatprep.subr.mxu0 0.0
        %8633 = vmatpush1.msra.mxu0 %v698
        %8634 = vmatprep.subr.mxu0 0.0
        %8635 = vmatpush1.msra.mxu0 %v699
        %8636 = vmatprep.mubr.f32.mxu0 %v7871
        %8637 = vmatmul.mubr.f32.gmra.mrb[0].mxu0 %v7792
        %v8638 = vpop.f32.mrb[0].mxu0
        %v8639 = vadd.f32 0.0, %v8638
        %v8640 = vpop.f32.mrb[0].mxu0
        %8641 = vdwg.mxu0
        %8644 = vmatprep.subr.mxu0 0.0
        %8645 = vmatpush1.msra.mxu0 %v700
        %8646 = vmatprep.subr.mxu0 0.0
        %8647 = vmatpush1.msra.mxu0 %v701
        %8648 = vmatprep.subr.mxu0 0.0
        %8649 = vmatpush1.msra.mxu0 %v702
        %8650 = vmatprep.subr.mxu0 0.0
        %8651 = vmatpush1.msra.mxu0 %v703
        %8652 = vmatprep.subr.mxu0 0.0
        %8653 = vmatpush1.msra.mxu0 %v704
        %8654 = vmatprep.subr.mxu0 0.0
        %8655 = vmatpush1.msra.mxu0 %v705
        %8656 = vmatprep.subr.mxu0 0.0
        %8657 = vmatpush1.msra.mxu0 %v706
        %8658 = vmatprep.subr.mxu0 0.0
        %8659 = vmatpush1.msra.mxu0 %v707
        %8660 = vmatprep.subr.mxu0 0.0
        %8661 = vmatpush1.msra.mxu0 %v708
        %8662 = vmatprep.subr.mxu0 0.0
        %8663 = vmatpush1.msra.mxu0 %v709
        %8664 = vmatprep.subr.mxu0 0.0
        %8665 = vmatpush1.msra.mxu0 %v710
        %8666 = vmatprep.subr.mxu0 0.0
        %8667 = vmatpush1.msra.mxu0 %v711
        %8668 = vmatprep.subr.mxu0 0.0
        %8669 = vmatpush1.msra.mxu0 %v712
        %8670 = vmatprep.subr.mxu0 0.0
        %8671 = vmatpush1.msra.mxu0 %v713
        %8672 = vmatprep.subr.mxu0 0.0
        %8673 = vmatpush1.msra.mxu0 %v714
        %8674 = vmatprep.subr.mxu0 0.0
        %8675 = vmatpush1.msra.mxu0 %v715
        %8676 = vmatprep.subr.mxu0 0.0
        %8677 = vmatpush1.msra.mxu0 %v716
        %8678 = vmatprep.subr.mxu0 0.0
        %8679 = vmatpush1.msra.mxu0 %v717
        %8680 = vmatprep.subr.mxu0 0.0
        %8681 = vmatpush1.msra.mxu0 %v718
        %8682 = vmatprep.subr.mxu0 0.0
        %8683 = vmatpush1.msra.mxu0 %v719
        %8684 = vmatprep.subr.mxu0 0.0
        %8685 = vmatpush1.msra.mxu0 %v720
        %8686 = vmatprep.subr.mxu0 0.0
        %8687 = vmatpush1.msra.mxu0 %v721
        %8688 = vmatprep.subr.mxu0 0.0
        %8689 = vmatpush1.msra.mxu0 %v722
        %8690 = vmatprep.subr.mxu0 0.0
        %8691 = vmatpush1.msra.mxu0 %v723
        %8692 = vmatprep.subr.mxu0 0.0
        %8693 = vmatpush1.msra.mxu0 %v724
        %8694 = vmatprep.subr.mxu0 0.0
        %8695 = vmatpush1.msra.mxu0 %v725
        %8696 = vmatprep.subr.mxu0 0.0
        %8697 = vmatpush1.msra.mxu0 %v726
        %8698 = vmatprep.subr.mxu0 0.0
        %8699 = vmatpush1.msra.mxu0 %v727
        %8700 = vmatprep.subr.mxu0 0.0
        %8701 = vmatpush1.msra.mxu0 %v728
        %8702 = vmatprep.subr.mxu0 0.0
        %8703 = vmatpush1.msra.mxu0 %v729
        %8704 = vmatprep.subr.mxu0 0.0
        %8705 = vmatpush1.msra.mxu0 %v730
        %8706 = vmatprep.subr.mxu0 0.0
        %8707 = vmatpush1.msra.mxu0 %v731
        %8708 = vmatprep.mubr.f32.mxu0 %v8029
        %8709 = vmatmul.mubr.f32.gmra.mrb[0].mxu0 %v7950
        %v8710 = vpop.f32.mrb[0].mxu0
        %v8711 = vadd.f32 0.0, %v8710
        %v8712 = vpop.f32.mrb[0].mxu0
        %8713 = vdwg.mxu0
        %8716 = vmatprep.subr.mxu0 0.0
        %8717 = vmatpush1.msra.mxu0 %v732
        %8718 = vmatprep.subr.mxu0 0.0
        %8719 = vmatpush1.msra.mxu0 %v733
        %8720 = vmatprep.subr.mxu0 0.0
        %8721 = vmatpush1.msra.mxu0 %v734
        %8722 = vmatprep.subr.mxu0 0.0
        %8723 = vmatpush1.msra.mxu0 %v735
        %8724 = vmatprep.subr.mxu0 0.0
        %8725 = vmatpush1.msra.mxu0 %v736
        %8726 = vmatprep.subr.mxu0 0.0
        %8727 = vmatpush1.msra.mxu0 %v737
        %8728 = vmatprep.subr.mxu0 0.0
        %8729 = vmatpush1.msra.mxu0 %v738
        %8730 = vmatprep.subr.mxu0 0.0
        %8731 = vmatpush1.msra.mxu0 %v739
        %8732 = vmatprep.subr.mxu0 0.0
        %8733 = vmatpush1.msra.mxu0 %v740
        %8734 = vmatprep.subr.mxu0 0.0
        %8735 = vmatpush1.msra.mxu0 %v741
        %8736 = vmatprep.subr.mxu0 0.0
        %8737 = vmatpush1.msra.mxu0 %v742
        %8738 = vmatprep.subr.mxu0 0.0
        %8739 = vmatpush1.msra.mxu0 %v743
        %8740 = vmatprep.subr.mxu0 0.0
        %8741 = vmatpush1.msra.mxu0 %v744
        %8742 = vmatprep.subr.mxu0 0.0
        %8743 = vmatpush1.msra.mxu0 %v745
        %8744 = vmatprep.subr.mxu0 0.0
        %8745 = vmatpush1.msra.mxu0 %v746
        %8746 = vmatprep.subr.mxu0 0.0
        %8747 = vmatpush1.msra.mxu0 %v747
        %8748 = vmatprep.subr.mxu0 0.0
        %8749 = vmatpush1.msra.mxu0 %v748
        %8750 = vmatprep.subr.mxu0 0.0
        %8751 = vmatpush1.msra.mxu0 %v749
        %8752 = vmatprep.subr.mxu0 0.0
        %8753 = vmatpush1.msra.mxu0 %v750
        %8754 = vmatprep.subr.mxu0 0.0
        %8755 = vmatpush1.msra.mxu0 %v751
        %8756 = vmatprep.subr.mxu0 0.0
        %8757 = vmatpush1.msra.mxu0 %v752
        %8758 = vmatprep.subr.mxu0 0.0
        %8759 = vmatpush1.msra.mxu0 %v753
        %8760 = vmatprep.subr.mxu0 0.0
        %8761 = vmatpush1.msra.mxu0 %v754
        %8762 = vmatprep.subr.mxu0 0.0
        %8763 = vmatpush1.msra.mxu0 %v755
        %8764 = vmatprep.subr.mxu0 0.0
        %8765 = vmatpush1.msra.mxu0 %v756
        %8766 = vmatprep.subr.mxu0 0.0
        %8767 = vmatpush1.msra.mxu0 %v757
        %8768 = vmatprep.subr.mxu0 0.0
        %8769 = vmatpush1.msra.mxu0 %v758
        %8770 = vmatprep.subr.mxu0 0.0
        %8771 = vmatpush1.msra.mxu0 %v759
        %8772 = vmatprep.subr.mxu0 0.0
        %8773 = vmatpush1.msra.mxu0 %v760
        %8774 = vmatprep.subr.mxu0 0.0
        %8775 = vmatpush1.msra.mxu0 %v761
        %8776 = vmatprep.subr.mxu0 0.0
        %8777 = vmatpush1.msra.mxu0 %v762
        %8778 = vmatprep.subr.mxu0 0.0
        %8779 = vmatpush1.msra.mxu0 %v763
        %8780 = vmatprep.mubr.f32.mxu0 %v8187
        %8781 = vmatmul.mubr.f32.gmra.mrb[0].mxu0 %v8108
        %v8782 = vpop.f32.mrb[0].mxu0
        %v8783 = vadd.f32 0.0, %v8782
        %v8784 = vpop.f32.mrb[0].mxu0
        %8785 = vdwg.mxu0
        %v8786 = vld [vmem:[#allocation4] sm:$0xff]
        %8788 = vset.pattern.permute.xlu0 0
        %8789 = vperm.xlu0 %8788, %v5085
        %v8790 = vpop.permute.xlu0 %8789
        %v8792 = vmul.f32 %v8790, %v8786
        %v8801 = vrot.slane %v8351, 7
        %v8802 = vsel %vm5056, %v8801, %v8279
        %v8803 = vrot.slane %v8423, 6
        %v8804 = vsel %vm5058, %v8803, %v8802
        %v8805 = vrot.slane %v8495, 5
        %v8806 = vsel %vm5060, %v8805, %v8804
        %v8807 = vrot.slane %v8567, 4
        %v8808 = vsel %vm5062, %v8807, %v8806
        %v8809 = vrot.slane %v8639, 3
        %v8810 = vsel %vm5064, %v8809, %v8808
        %v8811 = vrot.slane %v8711, 2
        %v8812 = vsel %vm5066, %v8811, %v8810
        %v8813 = vrot.slane %v8783, 1
        %v8814 = vsel %vm5068, %v8813, %v8812
        %v8816 = vadd.f32 %v8792, %v8814
        %8817 = vst [vmem:[#allocation4] sm:$0xff] %v8816
        %8818 = vst.msk [vmem:[#allocation2] sm:$0xff] %vm8208, %v5082
        %p8819 = scmp.eq.s32.totalorder %s33, 1
        // Predicated region
        $region73: #{tpu_custom_call.1} parent=43 // pred_check
          %p8820 = pneg %p8819
        $region74: #{tpu_custom_call.1} parent=43 // pred_check_branch
          %8822 = sbr.rel (%p8820) target = $region76
        $region75: #{tpu_custom_call.1} parent=43 // pred_region
          %v8823 = vld [vmem:[#allocation4] sm:$0xff]
          %v8824 = vld [vmem:[#allocation3] sm:$0xff]
          %v8825 = vrcp.pop %v8824
          %8827 = vset.pattern.permute.xlu0 0
          %8828 = vperm.xlu0 %8827, %v8825
          %v8829 = vpop.permute.xlu0 %8828
          %v8831 = vmul.f32 %v8823, %v8829
          %8832 = vst [vmem:[%s402] sm:$0xff] %v8831
        $region76: #{tpu_custom_call.1} parent=43 // pred_fallthru
          _
        %s8833 = sand.u32 %s186, 1
        %s8834 = scalar_lea.sflag [#allocation8], %s8833
        %s8835 = sand.u32 %s186, 1
        %s8836 = smul.addr %s8835, 8
        %s8837 = scalar_lea.vmem [#allocation17], %s8836
        // Predicated region
        $region77: #{tpu_custom_call.1} parent=43 // pred_check
          %p8838 = pneg %p196
        $region78: #{tpu_custom_call.1} parent=43 // pred_check_branch
          %8840 = sbr.rel (%p8838) target = $region80
        $region79: #{tpu_custom_call.1} parent=43 // pred_region
          %s8842 = ssub.s32 128, 128
          %8843 = vsyncadd %s8834, %s8842
          %s8844 = smul.addr %s32, 128
          %s8845 = scalar_lea.hbm %s6, %s8844
          %s8847 = sshll.u32 %s8837, 4
          %s8848 = int_to_ptr.vmem [resolvable:$true] %s8847
          %8850 = dma.vmem_to_hbm [thread:$0]  %s8848, 128, %s8845, %s8834
        $region80: #{tpu_custom_call.1} parent=43 // pred_fallthru
          _
      $region44: #{tpu_custom_call.1} parent=5 // pred_fallthru
        _
      %p8851 = scmp.le.s32.totalorder 2, %s23
      // Predicated region
      $region81: #{tpu_custom_call.1} parent=5 // pred_check
        %p8852 = pneg %p8851
      $region82: #{tpu_custom_call.1} parent=5 // pred_check_branch
        %8854 = sbr.rel (%p8852) target = $region84
      $region83: #{tpu_custom_call.1} parent=5 // pred_region
        %s8855 = ssub.s32 %s23, 2
        // Predicated region
        $region85: #{tpu_custom_call.1} parent=83 // pred_check
          %p8856 = pneg %p202
        $region86: #{tpu_custom_call.1} parent=83 // pred_check_branch
          %8858 = sbr.rel (%p8856) target = $region88
        $region87: #{tpu_custom_call.1} parent=83 // pred_region
          %s8859 = sand.u32 %s187, 1
          %s8860 = scalar_lea.sflag [#allocation8], %s8859
          %s8861 = sand.u32 %s187, 1
          %s8862 = smul.addr %s8861, 8
          %s8863 = scalar_lea.vmem [#allocation17], %s8862
          %8864 = dma.done %s8860, 128
        $region88: #{tpu_custom_call.1} parent=83 // pred_fallthru
          _
      $region84: #{tpu_custom_call.1} parent=5 // pred_fallthru
        _
    $region6: #{tpu_custom_call.1} parent=1 // loop_footer
      %s27 = sadd.s32 1, %s23
    $region7: #{tpu_custom_call.1} parent=1 // loop_footer_branch
      %22 = sbr.rel target = $region3
    $region8: #{tpu_custom_call.1} parent=1 // loop_exit
      _
    %8865 = vsyncpa [#allocation7], 1
    %s8866 = scalar_lea.sflag [#allocation7], 1
    %8867 = vsyncpa %s8866, 1
    %8868 = vsyncpa [#allocation10], 1
    %s8869 = scalar_lea.sflag [#allocation10], 1
    %8870 = vsyncpa %s8869, 1
    %8871 = vsyncpa [#allocation13], 1
    %8872 = vsyncpa [#allocation16], 1
    %8873 = vsyncpa [#allocation8], 1
    %s8874 = scalar_lea.sflag [#allocation8], 1
    %8875 = vsyncpa %s8874, 1

</llo_original>
